<compile_context>
chip_gen: v6e
topology: v6e:2x2x1
jax: 0.10.0
libtpu: 0.0.40
codegen_flags: <defaults>
</compile_context>

<pallas_src>
import jax
import jax.numpy as jnp
from jax.experimental import pallas as pl
from jax.experimental.pallas import tpu as pltpu


def _round_up(v, m):
    return (v + m - 1) // m * m


# ------------------------ fused 1x1 GEMM (gated ReLU) -------------------------

def _mm_gate_kernel(x_ref, w_ref, b_ref, g_ref, o_ref):
    acc = jnp.dot(x_ref[...], w_ref[...], preferred_element_type=jnp.float32)
    v = acc + b_ref[...]
    o_ref[...] = jnp.where(g_ref[...] > 0.0, jnp.maximum(v, 0.0), v).astype(o_ref.dtype)


def fused_1x1_gemm(x_mat, w_mat, bias, relu_gate, out_dtype=jnp.bfloat16, tm=512):
    """(M,K)@(K,Cout) + bias with per-column gated ReLU.  Weights VMEM-resident."""
    M, K = x_mat.shape
    Cout = w_mat.shape[1]
    Np = _round_up(Cout, 128)                 # lane-dense output stores
    tm = min(tm, _round_up(M, 8))
    Mp = _round_up(M, tm)

    x_p = jnp.pad(x_mat.astype(jnp.bfloat16), ((0, Mp - M), (0, 0)))
    w_p = jnp.pad(w_mat.astype(jnp.bfloat16), ((0, 0), (0, Np - Cout)))
    b_p = jnp.pad(bias.astype(jnp.float32).reshape(1, Cout), ((0, 0), (0, Np - Cout)))
    g_p = jnp.pad(relu_gate.astype(jnp.float32).reshape(1, Cout), ((0, 0), (0, Np - Cout)))

    out = pl.pallas_call(
        _mm_gate_kernel,
        out_shape=jax.ShapeDtypeStruct((Mp, Np), out_dtype),
        grid=(Mp // tm,),
        in_specs=[
            pl.BlockSpec((tm, K), lambda i: (i, 0)),
            pl.BlockSpec((K, Np), lambda i: (0, 0)),    # resident weights
            pl.BlockSpec((1, Np), lambda i: (0, 0)),    # bias (folded BN)
            pl.BlockSpec((1, Np), lambda i: (0, 0)),    # per-column ReLU gate
        ],
        out_specs=pl.BlockSpec((tm, Np), lambda i: (i, 0)),
        compiler_params=pltpu.CompilerParams(
            dimension_semantics=("parallel",),
            vmem_limit_bytes=32 * 1024 * 1024),
    )(x_p, w_p, b_p, g_p)
    return out[:M, :Cout]


# --------------------- spatial conv kernel (tap accumulation) -----------------

def _make_conv_kernel(n_groups, row_count, tap_offsets, col_offsets, couts):
    """Conv(+BN folded)+ReLU for one or more kernel-size groups sharing one input.

    tap_offsets[g]: static flat row offsets (dy*Wp + dx) into the padded image.
    """
    def kernel(*refs):
        x_ref = refs[0]
        w_refs = refs[1:1 + n_groups]
        b_refs = refs[1 + n_groups:1 + 2 * n_groups]
        o_ref = refs[1 + 2 * n_groups]
        for g in range(n_groups):
            acc = None
            for t, off in enumerate(tap_offsets[g]):
                xt = x_ref[0, off:off + row_count, :]           # row-shifted window
                c = jnp.dot(xt, w_refs[g][t], preferred_element_type=jnp.float32)
                acc = c if acc is None else acc + c
            v = jnp.maximum(acc + b_refs[g][...], 0.0)          # folded-BN bias + ReLU
            c0 = col_offsets[g]
            o_ref[0, :, c0:c0 + couts[g]] = v.astype(o_ref.dtype)
    return kernel


def conv_spatial(x_nhwc, groups, out_dtype=jnp.float32):
    """Stride-1 'same' conv+BN+ReLU for a list of groups sharing the same input.

    Each group: dict(w=(Cout,Cin,kh,kw), scale=(Cout,), bias=(Cout,)).
    Output: (N, H, W, sum(Cout)) with group outputs concatenated along channels.
    """
    N, H, W, C = x_nhwc.shape
    ph = max((g["w"].shape[2] - 1) // 2 for g in groups)
    pw = max((g["w"].shape[3] - 1) // 2 for g in groups)
    Hp, Wp = H + 2 * ph, W + 2 * pw
    Mrow = H * Wp                                   # outputs on the width-padded grid

    tap_offsets, w_list, b_list, couts = [], [], [], []
    max_off = 0
    for g in groups:
        w, scale, bias = g["w"], g["scale"], g["bias"]
        cout, cin, kh, kw = w.shape
        dph, dpw = ph - (kh - 1) // 2, pw - (kw - 1) // 2
        offs = tuple((a + dph) * Wp + (b + dpw) for a in range(kh) for b in range(kw))
        max_off = max(max_off, max(offs))
        wt = jnp.transpose(w, (2, 3, 1, 0)).reshape(kh * kw, cin, cout)
        wt = (wt * scale[None, None, :]).astype(jnp.bfloat16)   # fold BN scale
        tap_offsets.append(offs)
        w_list.append(wt)
        b_list.append(bias.astype(jnp.float32).reshape(1, cout))
        couts.append(cout)

    # padded image, flattened (h_p, w_p) -> rows; pad/trim rows so every tap read
    # stays in-bounds and the row count is sublane aligned.
    R_in = _round_up(Mrow + max_off, 8)
    xp = jnp.pad(x_nhwc.astype(jnp.bfloat16), ((0, 0), (ph, ph), (pw, pw), (0, 0)))
    x2 = xp.reshape(N, Hp * Wp, C)
    if R_in >= Hp * Wp:
        x2 = jnp.pad(x2, ((0, 0), (0, R_in - Hp * Wp), (0, 0)))
    else:
        x2 = x2[:, :R_in, :]

    Ct = sum(couts)
    col_off = [0]
    for c in couts[:-1]:
        col_off.append(col_off[-1] + c)

    kernel = _make_conv_kernel(len(groups), Mrow, tuple(tap_offsets),
                               tuple(col_off), tuple(couts))

    in_specs = [pl.BlockSpec((1, R_in, C), lambda n: (n, 0, 0))]
    for wt in w_list:                                           # resident weights
        in_specs.append(pl.BlockSpec(wt.shape, lambda n: (0, 0, 0)))
    for b in b_list:
        in_specs.append(pl.BlockSpec(b.shape, lambda n: (0, 0)))

    out = pl.pallas_call(
        kernel,
        out_shape=jax.ShapeDtypeStruct((N, Mrow, Ct), out_dtype),
        grid=(N,),
        in_specs=in_specs,
        out_specs=pl.BlockSpec((1, Mrow, Ct), lambda n: (n, 0, 0)),
        compiler_params=pltpu.CompilerParams(
            dimension_semantics=("parallel",),
            vmem_limit_bytes=32 * 1024 * 1024),
    )(x2, *w_list, *b_list)

    # drop the 2*pw garbage columns per row produced by the flat-grid trick
    return out.reshape(N, H, Wp, Ct)[:, :, :W, :]


# ------------------------------ BN folding helpers ----------------------------

def fold_bn(gamma, beta, mean, var, eps=1e-3):
    scale = gamma / jnp.sqrt(var + eps)
    return scale, beta - mean * scale


def _fold_w1x1(w_oihw, scale):
    # (Cout, Cin, 1, 1) -> (Cin, Cout) with BN scale folded into columns.
    return w_oihw[:, :, 0, 0].T * scale[None, :]


# --------------------------------- inceptionC ---------------------------------

def inception_c_forward(x_nchw, p):
    x = jnp.transpose(x_nchw, (0, 2, 3, 1))                     # NHWC
    N, H, W, Cin = x.shape
    M = N * H * W

    c1 = p["b1_w"].shape[0]
    c2 = p["b3x3_1_w"].shape[0]
    c3 = p["b3dbl_1_w"].shape[0]
    c4 = p["b4_w"].shape[0]

    # ---- fused 1x1 stage: branch1 | branch3x3_1 | branch3x3dbl_1 | branch4 proj
    wA = jnp.concatenate([
        _fold_w1x1(p["b1_w"], p["b1_sb"][0]),
        _fold_w1x1(p["b3x3_1_w"], p["b3x3_1_sb"][0]),
        _fold_w1x1(p["b3dbl_1_w"], p["b3dbl_1_sb"][0]),
        _fold_w1x1(p["b4_w"], p["b4_sb"][0]),
    ], axis=1)
    bA = jnp.concatenate([p["b1_sb"][1], p["b3x3_1_sb"][1], p["b3dbl_1_sb"][1],
                          jnp.zeros((c4,), jnp.float32)])
    gA = jnp.concatenate([jnp.ones((c1 + c2 + c3,), jnp.float32),
                          jnp.zeros((c4,), jnp.float32)])        # no bias/ReLU pre-pool
    yA = fused_1x1_gemm(x.reshape(M, Cin), wA, bA, gA, out_dtype=jnp.bfloat16)

    b1 = yA[:, :c1].reshape(N, H, W, c1)
    t3 = yA[:, c1:c1 + c2].reshape(N, H, W, c2)
    td = yA[:, c1 + c2:c1 + c2 + c3].reshape(N, H, W, c3)
    z4 = yA[:, c1 + c2 + c3:].reshape(N, H, W, c4)

    # ---- branch3x3: (1,3) + (3,1) over shared t3, one kernel, concat output
    b2ab = conv_spatial(t3, [
        dict(w=p["b3x3_2a_w"], scale=p["b3x3_2a_sb"][0], bias=p["b3x3_2a_sb"][1]),
        dict(w=p["b3x3_2b_w"], scale=p["b3x3_2b_sb"][0], bias=p["b3x3_2b_sb"][1]),
    ], out_dtype=jnp.float32)

    # ---- branch3x3dbl: 3x3 (bf16 intermediate) -> fused (1,3) + (3,1)
    d2 = conv_spatial(td, [
        dict(w=p["b3dbl_2_w"], scale=p["b3dbl_2_sb"][0], bias=p["b3dbl_2_sb"][1]),
    ], out_dtype=jnp.bfloat16)
    b3ab = conv_spatial(d2, [
        dict(w=p["b3dbl_3a_w"], scale=p["b3dbl_3a_sb"][0], bias=p["b3dbl_3a_sb"][1]),
        dict(w=p["b3dbl_3b_w"], scale=p["b3dbl_3b_sb"][0], bias=p["b3dbl_3b_sb"][1]),
    ], out_dtype=jnp.float32)

    # ---- branch4 (pool_proj != 0): conv1x1 commutes with AvgPool, so z4 = x @ Ws
    # was computed in the fused GEMM; pool the small map, then bias + ReLU.
    # TODO(synk): the 3x3 average pool + bias/ReLU epilogue is plain-JAX glue.
    # TODO(synk): pool_proj == 0 variant (bare MaxPool2d branch) not implemented.
    z4f = z4.astype(jnp.float32)
    z4p = jnp.pad(z4f, ((0, 0), (1, 1), (1, 1), (0, 0)))
    pooled = jax.lax.reduce_window(z4p, 0.0, jax.lax.add,
                                   (1, 3, 3, 1), (1, 1, 1, 1), "VALID") / 9.0
    b4 = jnp.maximum(pooled + p["b4_sb"][1], 0.0)

    out = jnp.concatenate([b1.astype(jnp.float32), b2ab, b3ab, b4], axis=-1)
    return jnp.transpose(out, (0, 3, 1, 2))                      # back to NCHW


# ------------------------------ pure-JAX reference ----------------------------

def _ref_conv_bn_relu(x, w, scale, bias, pad):
    y = jax.lax.conv_general_dilated(
        x, w, (1, 1), pad, dimension_numbers=("NCHW", "OIHW", "NCHW"),
        precision=jax.lax.Precision.HIGHEST)
    y = y * scale[None, :, None, None] + bias[None, :, None, None]
    return jnp.maximum(y, 0.0)


def ref_forward(x, p):
    b1 = _ref_conv_bn_relu(x, p["b1_w"], *p["b1_sb"], "VALID")
    t = _ref_conv_bn_relu(x, p["b3x3_1_w"], *p["b3x3_1_sb"], "VALID")
    b2a = _ref_conv_bn_relu(t, p["b3x3_2a_w"], *p["b3x3_2a_sb"], [(0, 0), (1, 1)])
    b2b = _ref_conv_bn_relu(t, p["b3x3_2b_w"], *p["b3x3_2b_sb"], [(1, 1), (0, 0)])
    t = _ref_conv_bn_relu(x, p["b3dbl_1_w"], *p["b3dbl_1_sb"], "VALID")
    t = _ref_conv_bn_relu(t, p["b3dbl_2_w"], *p["b3dbl_2_sb"], [(1, 1), (1, 1)])
    b3a = _ref_conv_bn_relu(t, p["b3dbl_3a_w"], *p["b3dbl_3a_sb"], [(0, 0), (1, 1)])
    b3b = _ref_conv_bn_relu(t, p["b3dbl_3b_w"], *p["b3dbl_3b_sb"], [(1, 1), (0, 0)])
    xp = jnp.pad(x, ((0, 0), (0, 0), (1, 1), (1, 1)))
    pooled = jax.lax.reduce_window(xp, 0.0, jax.lax.add,
                                   (1, 1, 3, 3), (1, 1, 1, 1), "VALID") / 9.0
    b4 = _ref_conv_bn_relu(pooled, p["b4_w"], *p["b4_sb"], "VALID")
    return jnp.concatenate([b1, b2a, b2b, b3a, b3b, b4], axis=1)


# ---------------------------------- driver ------------------------------------

def make_params(key, in_channels, ch1x1, ch3x3red, ch3x3, ch3x3dbl_red,
                dch3x3dbl, pool_proj):
    def conv_bn(key, cout, cin, kh, kw):
        k1, k2, k3, k4, k5 = jax.random.split(key, 5)
        w = 0.1 * jax.random.normal(k1, (cout, cin, kh, kw), jnp.float32)
        gamma = 1.0 + 0.1 * jax.random.normal(k2, (cout,), jnp.float32)
        beta = 0.1 * jax.random.normal(k3, (cout,), jnp.float32)
        mean = 0.1 * jax.random.normal(k4, (cout,), jnp.float32)
        var = 1.0 + 0.1 * jax.random.uniform(k5, (cout,), jnp.float32)
        return w, fold_bn(gamma, beta, mean, var, eps=1e-3)

    keys = jax.random.split(key, 9)
    p = {}
    p["b1_w"], p["b1_sb"] = conv_bn(keys[0], ch1x1, in_channels, 1, 1)
    p["b3x3_1_w"], p["b3x3_1_sb"] = conv_bn(keys[1], ch3x3red, in_channels, 1, 1)
    p["b3x3_2a_w"], p["b3x3_2a_sb"] = conv_bn(keys[2], ch3x3, ch3x3red, 1, 3)
    p["b3x3_2b_w"], p["b3x3_2b_sb"] = conv_bn(keys[3], ch3x3, ch3x3red, 3, 1)
    p["b3dbl_1_w"], p["b3dbl_1_sb"] = conv_bn(keys[4], ch3x3dbl_red, in_channels, 1, 1)
    p["b3dbl_2_w"], p["b3dbl_2_sb"] = conv_bn(keys[5], dch3x3dbl, ch3x3dbl_red, 3, 3)
    p["b3dbl_3a_w"], p["b3dbl_3a_sb"] = conv_bn(keys[6], dch3x3dbl, dch3x3dbl, 1, 3)
    p["b3dbl_3b_w"], p["b3dbl_3b_sb"] = conv_bn(keys[7], dch3x3dbl, dch3x3dbl, 3, 1)
    p["b4_w"], p["b4_sb"] = conv_bn(keys[8], pool_proj, in_channels, 1, 1)
    return p


if __name__ == "__main__":
    key = jax.random.PRNGKey(0)
    kx, kp = jax.random.split(key)

    # Small shapes: N=2, C_in=4, H=W=16; inceptionC(4, 8, 4, 8, 4, 8, 8)
    x = jax.random.normal(kx, (2, 4, 16, 16), jnp.float32)
    params = make_params(kp, in_channels=4, ch1x1=8, ch3x3red=4, ch3x3=8,
                         ch3x3dbl_red=4, dch3x3dbl=8, pool_proj=8)

    out = jax.jit(inception_c_forward)(x, params)
    out = jax.block_until_ready(out)
    assert out.shape == (2, 48, 16, 16), out.shape

    ref = jax.block_until_ready(ref_forward(x, params))
    max_err = float(jnp.max(jnp.abs(out - ref)))
    assert jnp.allclose(out, ref, atol=3e-2, rtol=3e-2), max_err

    print("KERNEL_OK")
</pallas_src>

<mosaic_0001>
module attributes {stable_mosaic.version = 11 : i64} {
  func.func @_mm_gate_kernel(%arg0: i32, %arg1: memref<512x4xbf16, #tpu.memory_space<vmem>>, %arg2: memref<4x128xbf16, #tpu.memory_space<vmem>>, %arg3: memref<1x128xf32, #tpu.memory_space<vmem>>, %arg4: memref<1x128xf32, #tpu.memory_space<vmem>>, %arg5: memref<512x128xbf16, #tpu.memory_space<vmem>>) attributes {dimension_semantics = [#tpu.dimension_semantics<parallel>], iteration_bounds = array<i64: 1>, scalar_prefetch = 0 : i64, scratch_operands = 0 : i64, tpu.core_type = #tpu.core_type<tc>, window_params = [{transform_indices = @transform_0, window_bounds = array<i64: 512, 4>}, {pipeline_mode = #tpu.pipeline_mode<synchronous>, transform_indices = @transform_1, window_bounds = array<i64: 4, 128>}, {pipeline_mode = #tpu.pipeline_mode<synchronous>, transform_indices = @transform_2, window_bounds = array<i64: 1, 128>}, {pipeline_mode = #tpu.pipeline_mode<synchronous>, transform_indices = @transform_3, window_bounds = array<i64: 1, 128>}, {transform_indices = @transform_4, window_bounds = array<i64: 512, 128>}]} {
    %c0 = arith.constant 0 : index
    %c0_0 = arith.constant 0 : index
    %0 = vector.load %arg1[%c0, %c0_0] : memref<512x4xbf16, #tpu.memory_space<vmem>>, vector<512x4xbf16>
    %c0_1 = arith.constant 0 : index
    %c0_2 = arith.constant 0 : index
    %1 = vector.load %arg2[%c0_1, %c0_2] : memref<4x128xbf16, #tpu.memory_space<vmem>>, vector<4x128xbf16>
    %cst = arith.constant dense<0.000000e+00> : vector<512x128xf32>
    %2 = tpu.matmul %0, %1, %cst {dimension_numbers = #tpu.dot_dimension_numbers<[1], [0], [0], [1], [0, 0, 1, 1], [], []>} : vector<512x4xbf16>, vector<4x128xbf16>, vector<512x128xf32> -> vector<512x128xf32>
    %c0_3 = arith.constant 0 : index
    %c0_4 = arith.constant 0 : index
    %3 = vector.load %arg3[%c0_3, %c0_4] : memref<1x128xf32, #tpu.memory_space<vmem>>, vector<1x128xf32>
    %4 = vector.broadcast %3 : vector<1x128xf32> to vector<512x128xf32>
    %5 = arith.addf %2, %4 : vector<512x128xf32>
    %c0_5 = arith.constant 0 : index
    %c0_6 = arith.constant 0 : index
    %6 = vector.load %arg4[%c0_5, %c0_6] : memref<1x128xf32, #tpu.memory_space<vmem>>, vector<1x128xf32>
    %cst_7 = arith.constant 0.000000e+00 : f32
    %7 = vector.broadcast %cst_7 : f32 to vector<1x128xf32>
    %8 = arith.cmpf ogt, %6, %7 : vector<1x128xf32>
    %cst_8 = arith.constant 0.000000e+00 : f32
    %9 = vector.broadcast %cst_8 : f32 to vector<512x128xf32>
    %10 = arith.maximumf %5, %9 : vector<512x128xf32>
    %11 = vector.shape_cast %8 : vector<1x128xi1> to vector<1x128xi1>
    %12 = vector.broadcast %11 : vector<1x128xi1> to vector<512x128xi1>
    %13 = arith.select %12, %10, %5 : vector<512x128xi1>, vector<512x128xf32>
    %14 = arith.truncf %13 : vector<512x128xf32> to vector<512x128xbf16>
    %c0_9 = arith.constant 0 : index
    %c0_10 = arith.constant 0 : index
    %15 = vector.load %arg5[%c0_9, %c0_10] : memref<512x128xbf16, #tpu.memory_space<vmem>>, vector<512x128xbf16>
    tpu.vector_store %arg5[%c0_9, %c0_10], %14 {strides = array<i32>} : memref<512x128xbf16, #tpu.memory_space<vmem>>, vector<512x128xbf16>,
    return
  }
  func.func @transform_0(%arg0: i32) -> (i32, i32) {
    %c0_i32 = arith.constant 0 : i32
    %c0_i32_0 = arith.constant 0 : i32
    return %arg0, %c0_i32 : i32, i32
  }
  func.func @transform_1(%arg0: i32) -> (i32, i32) {
    %c0_i32 = arith.constant 0 : i32
    %c0_i32_0 = arith.constant 0 : i32
    %c0_i32_1 = arith.constant 0 : i32
    return %c0_i32, %c0_i32_0 : i32, i32
  }
  func.func @transform_2(%arg0: i32) -> (i32, i32) {
    %c0_i32 = arith.constant 0 : i32
    %c0_i32_0 = arith.constant 0 : i32
    %c0_i32_1 = arith.constant 0 : i32
    return %c0_i32, %c0_i32_0 : i32, i32
  }
  func.func @transform_3(%arg0: i32) -> (i32, i32) {
    %c0_i32 = arith.constant 0 : i32
    %c0_i32_0 = arith.constant 0 : i32
    %c0_i32_1 = arith.constant 0 : i32
    return %c0_i32, %c0_i32_0 : i32, i32
  }
  func.func @transform_4(%arg0: i32) -> (i32, i32) {
    %c0_i32 = arith.constant 0 : i32
    %c0_i32_0 = arith.constant 0 : i32
    return %arg0, %c0_i32 : i32, i32
  }
}

module attributes {stable_mosaic.version = 11 : i64} {
  func.func @kernel(%arg0: i32, %arg1: memref<1x328x4xbf16, #tpu.memory_space<vmem>>, %arg2: memref<3x4x8xbf16, #tpu.memory_space<vmem>>, %arg3: memref<3x4x8xbf16, #tpu.memory_space<vmem>>, %arg4: memref<1x8xf32, #tpu.memory_space<vmem>>, %arg5: memref<1x8xf32, #tpu.memory_space<vmem>>, %arg6: memref<1x288x16xf32, #tpu.memory_space<vmem>>) attributes {dimension_semantics = [#tpu.dimension_semantics<parallel>], iteration_bounds = array<i64: 2>, scalar_prefetch = 0 : i64, scratch_operands = 0 : i64, tpu.core_type = #tpu.core_type<tc>, window_params = [{transform_indices = @transform_0, window_bounds = array<i64: 1, 328, 4>}, {pipeline_mode = #tpu.pipeline_mode<synchronous>, transform_indices = @transform_1, window_bounds = array<i64: 3, 4, 8>}, {pipeline_mode = #tpu.pipeline_mode<synchronous>, transform_indices = @transform_2, window_bounds = array<i64: 3, 4, 8>}, {pipeline_mode = #tpu.pipeline_mode<synchronous>, transform_indices = @transform_3, window_bounds = array<i64: 1, 8>}, {pipeline_mode = #tpu.pipeline_mode<synchronous>, transform_indices = @transform_4, window_bounds = array<i64: 1, 8>}, {transform_indices = @transform_5, window_bounds = array<i64: 1, 288, 16>}]} {
    %c0 = arith.constant 0 : index
    %c18 = arith.constant 18 : index
    %c0_0 = arith.constant 0 : index
    %0 = vector.load %arg1[%c0, %c18, %c0_0] : memref<1x328x4xbf16, #tpu.memory_space<vmem>>, vector<1x288x4xbf16>
    %1 = vector.shape_cast %0 : vector<1x288x4xbf16> to vector<288x4xbf16>
    %c0_1 = arith.constant 0 : index
    %c0_2 = arith.constant 0 : index
    %c0_3 = arith.constant 0 : index
    %2 = vector.load %arg2[%c0_1, %c0_2, %c0_3] : memref<3x4x8xbf16, #tpu.memory_space<vmem>>, vector<1x4x8xbf16>
    %3 = vector.shape_cast %2 : vector<1x4x8xbf16> to vector<4x8xbf16>
    %cst = arith.constant dense<0.000000e+00> : vector<288x8xf32>
    %4 = tpu.matmul %1, %3, %cst {dimension_numbers = #tpu.dot_dimension_numbers<[1], [0], [0], [1], [0, 0, 1, 1], [], []>} : vector<288x4xbf16>, vector<4x8xbf16>, vector<288x8xf32> -> vector<288x8xf32>
    %c0_4 = arith.constant 0 : index
    %c19 = arith.constant 19 : index
    %c0_5 = arith.constant 0 : index
    %5 = vector.load %arg1[%c0_4, %c19, %c0_5] : memref<1x328x4xbf16, #tpu.memory_space<vmem>>, vector<1x288x4xbf16>
    %6 = vector.shape_cast %5 : vector<1x288x4xbf16> to vector<288x4xbf16>
    %c1 = arith.constant 1 : index
    %c0_6 = arith.constant 0 : index
    %c0_7 = arith.constant 0 : index
    %7 = vector.load %arg2[%c1, %c0_6, %c0_7] : memref<3x4x8xbf16, #tpu.memory_space<vmem>>, vector<1x4x8xbf16>
    %8 = vector.shape_cast %7 : vector<1x4x8xbf16> to vector<4x8xbf16>
    %cst_8 = arith.constant dense<0.000000e+00> : vector<288x8xf32>
    %9 = tpu.matmul %6, %8, %cst_8 {dimension_numbers = #tpu.dot_dimension_numbers<[1], [0], [0], [1], [0, 0, 1, 1], [], []>} : vector<288x4xbf16>, vector<4x8xbf16>, vector<288x8xf32> -> vector<288x8xf32>
    %10 = arith.addf %4, %9 : vector<288x8xf32>
    %c0_9 = arith.constant 0 : index
    %c20 = arith.constant 20 : index
    %c0_10 = arith.constant 0 : index
    %11 = vector.load %arg1[%c0_9, %c20, %c0_10] : memref<1x328x4xbf16, #tpu.memory_space<vmem>>, vector<1x288x4xbf16>
    %12 = vector.shape_cast %11 : vector<1x288x4xbf16> to vector<288x4xbf16>
    %c2 = arith.constant 2 : index
    %c0_11 = arith.constant 0 : index
    %c0_12 = arith.constant 0 : index
    %13 = vector.load %arg2[%c2, %c0_11, %c0_12] : memref<3x4x8xbf16, #tpu.memory_space<vmem>>, vector<1x4x8xbf16>
    %14 = vector.shape_cast %13 : vector<1x4x8xbf16> to vector<4x8xbf16>
    %cst_13 = arith.constant dense<0.000000e+00> : vector<288x8xf32>
    %15 = tpu.matmul %12, %14, %cst_13 {dimension_numbers = #tpu.dot_dimension_numbers<[1], [0], [0], [1], [0, 0, 1, 1], [], []>} : vector<288x4xbf16>, vector<4x8xbf16>, vector<288x8xf32> -> vector<288x8xf32>
    %16 = arith.addf %10, %15 : vector<288x8xf32>
    %c0_14 = arith.constant 0 : index
    %c0_15 = arith.constant 0 : index
    %17 = vector.load %arg4[%c0_14, %c0_15] : memref<1x8xf32, #tpu.memory_space<vmem>>, vector<1x8xf32>
    %18 = vector.broadcast %17 : vector<1x8xf32> to vector<288x8xf32>
    %19 = arith.addf %16, %18 : vector<288x8xf32>
    %cst_16 = arith.constant 0.000000e+00 : f32
    %20 = vector.broadcast %cst_16 : f32 to vector<288x8xf32>
    %21 = arith.maximumf %19, %20 : vector<288x8xf32>
    %c0_17 = arith.constant 0 : index
    %c0_18 = arith.constant 0 : index
    %c0_19 = arith.constant 0 : index
    %22 = vector.load %arg6[%c0_17, %c0_18, %c0_19] : memref<1x288x16xf32, #tpu.memory_space<vmem>>, vector<1x288x8xf32>
    %23 = vector.shape_cast %22 : vector<1x288x8xf32> to vector<288x8xf32>
    %24 = vector.shape_cast %21 : vector<288x8xf32> to vector<1x288x8xf32>
    tpu.vector_store %arg6[%c0_17, %c0_18, %c0_19], %24 {strides = array<i32>} : memref<1x288x16xf32, #tpu.memory_space<vmem>>, vector<1x288x8xf32>,
    %c0_20 = arith.constant 0 : index
    %c1_21 = arith.constant 1 : index
    %c0_22 = arith.constant 0 : index
    %25 = vector.load %arg1[%c0_20, %c1_21, %c0_22] : memref<1x328x4xbf16, #tpu.memory_space<vmem>>, vector<1x288x4xbf16>
    %26 = vector.shape_cast %25 : vector<1x288x4xbf16> to vector<288x4xbf16>
    %c0_23 = arith.constant 0 : index
    %c0_24 = arith.constant 0 : index
    %c0_25 = arith.constant 0 : index
    %27 = vector.load %arg3[%c0_23, %c0_24, %c0_25] : memref<3x4x8xbf16, #tpu.memory_space<vmem>>, vector<1x4x8xbf16>
    %28 = vector.shape_cast %27 : vector<1x4x8xbf16> to vector<4x8xbf16>
    %cst_26 = arith.constant dense<0.000000e+00> : vector<288x8xf32>
    %29 = tpu.matmul %26, %28, %cst_26 {dimension_numbers = #tpu.dot_dimension_numbers<[1], [0], [0], [1], [0, 0, 1, 1], [], []>} : vector<288x4xbf16>, vector<4x8xbf16>, vector<288x8xf32> -> vector<288x8xf32>
    %c0_27 = arith.constant 0 : index
    %c19_28 = arith.constant 19 : index
    %c0_29 = arith.constant 0 : index
    %30 = vector.load %arg1[%c0_27, %c19_28, %c0_29] : memref<1x328x4xbf16, #tpu.memory_space<vmem>>, vector<1x288x4xbf16>
    %31 = vector.shape_cast %30 : vector<1x288x4xbf16> to vector<288x4xbf16>
    %c1_30 = arith.constant 1 : index
    %c0_31 = arith.constant 0 : index
    %c0_32 = arith.constant 0 : index
    %32 = vector.load %arg3[%c1_30, %c0_31, %c0_32] : memref<3x4x8xbf16, #tpu.memory_space<vmem>>, vector<1x4x8xbf16>
    %33 = vector.shape_cast %32 : vector<1x4x8xbf16> to vector<4x8xbf16>
    %cst_33 = arith.constant dense<0.000000e+00> : vector<288x8xf32>
    %34 = tpu.matmul %31, %33, %cst_33 {dimension_numbers = #tpu.dot_dimension_numbers<[1], [0], [0], [1], [0, 0, 1, 1], [], []>} : vector<288x4xbf16>, vector<4x8xbf16>, vector<288x8xf32> -> vector<288x8xf32>
    %35 = arith.addf %29, %34 : vector<288x8xf32>
    %c0_34 = arith.constant 0 : index
    %c37 = arith.constant 37 : index
    %c0_35 = arith.constant 0 : index
    %36 = vector.load %arg1[%c0_34, %c37, %c0_35] : memref<1x328x4xbf16, #tpu.memory_space<vmem>>, vector<1x288x4xbf16>
    %37 = vector.shape_cast %36 : vector<1x288x4xbf16> to vector<288x4xbf16>
    %c2_36 = arith.constant 2 : index
    %c0_37 = arith.constant 0 : index
    %c0_38 = arith.constant 0 : index
    %38 = vector.load %arg3[%c2_36, %c0_37, %c0_38] : memref<3x4x8xbf16, #tpu.memory_space<vmem>>, vector<1x4x8xbf16>
    %39 = vector.shape_cast %38 : vector<1x4x8xbf16> to vector<4x8xbf16>
    %cst_39 = arith.constant dense<0.000000e+00> : vector<288x8xf32>
    %40 = tpu.matmul %37, %39, %cst_39 {dimension_numbers = #tpu.dot_dimension_numbers<[1], [0], [0], [1], [0, 0, 1, 1], [], []>} : vector<288x4xbf16>, vector<4x8xbf16>, vector<288x8xf32> -> vector<288x8xf32>
    %41 = arith.addf %35, %40 : vector<288x8xf32>
    %c0_40 = arith.constant 0 : index
    %c0_41 = arith.constant 0 : index
    %42 = vector.load %arg5[%c0_40, %c0_41] : memref<1x8xf32, #tpu.memory_space<vmem>>, vector<1x8xf32>
    %43 = vector.broadcast %42 : vector<1x8xf32> to vector<288x8xf32>
    %44 = arith.addf %41, %43 : vector<288x8xf32>
    %cst_42 = arith.constant 0.000000e+00 : f32
    %45 = vector.broadcast %cst_42 : f32 to vector<288x8xf32>
    %46 = arith.maximumf %44, %45 : vector<288x8xf32>
    %c0_43 = arith.constant 0 : index
    %c0_44 = arith.constant 0 : index
    %c8 = arith.constant 8 : index
    %47 = vector.load %arg6[%c0_43, %c0_44, %c8] : memref<1x288x16xf32, #tpu.memory_space<vmem>>, vector<1x288x8xf32>
    %48 = vector.shape_cast %47 : vector<1x288x8xf32> to vector<288x8xf32>
    %49 = vector.shape_cast %46 : vector<288x8xf32> to vector<1x288x8xf32>
    tpu.vector_store %arg6[%c0_43, %c0_44, %c8], %49 {strides = array<i32>} : memref<1x288x16xf32, #tpu.memory_space<vmem>>, vector<1x288x8xf32>,
    return
  }
  func.func @transform_0(%arg0: i32) -> (i32, i32, i32) {
    %c0_i32 = arith.constant 0 : i32
    %c0_i32_0 = arith.constant 0 : i32
    %c0_i32_1 = arith.constant 0 : i32
    return %arg0, %c0_i32, %c0_i32_0 : i32, i32, i32
  }
  func.func @transform_1(%arg0: i32) -> (i32, i32, i32) {
    %c0_i32 = arith.constant 0 : i32
    %c0_i32_0 = arith.constant 0 : i32
    %c0_i32_1 = arith.constant 0 : i32
    %c0_i32_2 = arith.constant 0 : i32
    return %c0_i32, %c0_i32_0, %c0_i32_1 : i32, i32, i32
  }
  func.func @transform_2(%arg0: i32) -> (i32, i32, i32) {
    %c0_i32 = arith.constant 0 : i32
    %c0_i32_0 = arith.constant 0 : i32
    %c0_i32_1 = arith.constant 0 : i32
    %c0_i32_2 = arith.constant 0 : i32
    return %c0_i32, %c0_i32_0, %c0_i32_1 : i32, i32, i32
  }
  func.func @transform_3(%arg0: i32) -> (i32, i32) {
    %c0_i32 = arith.constant 0 : i32
    %c0_i32_0 = arith.constant 0 : i32
    %c0_i32_1 = arith.constant 0 : i32
    return %c0_i32, %c0_i32_0 : i32, i32
  }
  func.func @transform_4(%arg0: i32) -> (i32, i32) {
    %c0_i32 = arith.constant 0 : i32
    %c0_i32_0 = arith.constant 0 : i32
    %c0_i32_1 = arith.constant 0 : i32
    return %c0_i32, %c0_i32_0 : i32, i32
  }
  func.func @transform_5(%arg0: i32) -> (i32, i32, i32) {
    %c0_i32 = arith.constant 0 : i32
    %c0_i32_0 = arith.constant 0 : i32
    %c0_i32_1 = arith.constant 0 : i32
    return %arg0, %c0_i32, %c0_i32_0 : i32, i32, i32
  }
}

module attributes {stable_mosaic.version = 11 : i64} {
  func.func @kernel(%arg0: i32, %arg1: memref<1x328x4xbf16, #tpu.memory_space<vmem>>, %arg2: memref<9x4x8xbf16, #tpu.memory_space<vmem>>, %arg3: memref<1x8xf32, #tpu.memory_space<vmem>>, %arg4: memref<1x288x8xbf16, #tpu.memory_space<vmem>>) attributes {dimension_semantics = [#tpu.dimension_semantics<parallel>], iteration_bounds = array<i64: 2>, scalar_prefetch = 0 : i64, scratch_operands = 0 : i64, tpu.core_type = #tpu.core_type<tc>, window_params = [{transform_indices = @transform_0, window_bounds = array<i64: 1, 328, 4>}, {pipeline_mode = #tpu.pipeline_mode<synchronous>, transform_indices = @transform_1, window_bounds = array<i64: 9, 4, 8>}, {pipeline_mode = #tpu.pipeline_mode<synchronous>, transform_indices = @transform_2, window_bounds = array<i64: 1, 8>}, {transform_indices = @transform_3, window_bounds = array<i64: 1, 288, 8>}]} {
    %c0 = arith.constant 0 : index
    %c0_0 = arith.constant 0 : index
    %c0_1 = arith.constant 0 : index
    %0 = vector.load %arg1[%c0, %c0_0, %c0_1] : memref<1x328x4xbf16, #tpu.memory_space<vmem>>, vector<1x288x4xbf16>
    %1 = vector.shape_cast %0 : vector<1x288x4xbf16> to vector<288x4xbf16>
    %c0_2 = arith.constant 0 : index
    %c0_3 = arith.constant 0 : index
    %c0_4 = arith.constant 0 : index
    %2 = vector.load %arg2[%c0_2, %c0_3, %c0_4] : memref<9x4x8xbf16, #tpu.memory_space<vmem>>, vector<1x4x8xbf16>
    %3 = vector.shape_cast %2 : vector<1x4x8xbf16> to vector<4x8xbf16>
    %cst = arith.constant dense<0.000000e+00> : vector<288x8xf32>
    %4 = tpu.matmul %1, %3, %cst {dimension_numbers = #tpu.dot_dimension_numbers<[1], [0], [0], [1], [0, 0, 1, 1], [], []>} : vector<288x4xbf16>, vector<4x8xbf16>, vector<288x8xf32> -> vector<288x8xf32>
    %c0_5 = arith.constant 0 : index
    %c1 = arith.constant 1 : index
    %c0_6 = arith.constant 0 : index
    %5 = vector.load %arg1[%c0_5, %c1, %c0_6] : memref<1x328x4xbf16, #tpu.memory_space<vmem>>, vector<1x288x4xbf16>
    %6 = vector.shape_cast %5 : vector<1x288x4xbf16> to vector<288x4xbf16>
    %c1_7 = arith.constant 1 : index
    %c0_8 = arith.constant 0 : index
    %c0_9 = arith.constant 0 : index
    %7 = vector.load %arg2[%c1_7, %c0_8, %c0_9] : memref<9x4x8xbf16, #tpu.memory_space<vmem>>, vector<1x4x8xbf16>
    %8 = vector.shape_cast %7 : vector<1x4x8xbf16> to vector<4x8xbf16>
    %cst_10 = arith.constant dense<0.000000e+00> : vector<288x8xf32>
    %9 = tpu.matmul %6, %8, %cst_10 {dimension_numbers = #tpu.dot_dimension_numbers<[1], [0], [0], [1], [0, 0, 1, 1], [], []>} : vector<288x4xbf16>, vector<4x8xbf16>, vector<288x8xf32> -> vector<288x8xf32>
    %10 = arith.addf %4, %9 : vector<288x8xf32>
    %c0_11 = arith.constant 0 : index
    %c2 = arith.constant 2 : index
    %c0_12 = arith.constant 0 : index
    %11 = vector.load %arg1[%c0_11, %c2, %c0_12] : memref<1x328x4xbf16, #tpu.memory_space<vmem>>, vector<1x288x4xbf16>
    %12 = vector.shape_cast %11 : vector<1x288x4xbf16> to vector<288x4xbf16>
    %c2_13 = arith.constant 2 : index
    %c0_14 = arith.constant 0 : index
    %c0_15 = arith.constant 0 : index
    %13 = vector.load %arg2[%c2_13, %c0_14, %c0_15] : memref<9x4x8xbf16, #tpu.memory_space<vmem>>, vector<1x4x8xbf16>
    %14 = vector.shape_cast %13 : vector<1x4x8xbf16> to vector<4x8xbf16>
    %cst_16 = arith.constant dense<0.000000e+00> : vector<288x8xf32>
    %15 = tpu.matmul %12, %14, %cst_16 {dimension_numbers = #tpu.dot_dimension_numbers<[1], [0], [0], [1], [0, 0, 1, 1], [], []>} : vector<288x4xbf16>, vector<4x8xbf16>, vector<288x8xf32> -> vector<288x8xf32>
    %16 = arith.addf %10, %15 : vector<288x8xf32>
    %c0_17 = arith.constant 0 : index
    %c18 = arith.constant 18 : index
    %c0_18 = arith.constant 0 : index
    %17 = vector.load %arg1[%c0_17, %c18, %c0_18] : memref<1x328x4xbf16, #tpu.memory_space<vmem>>, vector<1x288x4xbf16>
    %18 = vector.shape_cast %17 : vector<1x288x4xbf16> to vector<288x4xbf16>
    %c3 = arith.constant 3 : index
    %c0_19 = arith.constant 0 : index
    %c0_20 = arith.constant 0 : index
    %19 = vector.load %arg2[%c3, %c0_19, %c0_20] : memref<9x4x8xbf16, #tpu.memory_space<vmem>>, vector<1x4x8xbf16>
    %20 = vector.shape_cast %19 : vector<1x4x8xbf16> to vector<4x8xbf16>
    %cst_21 = arith.constant dense<0.000000e+00> : vector<288x8xf32>
    %21 = tpu.matmul %18, %20, %cst_21 {dimension_numbers = #tpu.dot_dimension_numbers<[1], [0], [0], [1], [0, 0, 1, 1], [], []>} : vector<288x4xbf16>, vector<4x8xbf16>, vector<288x8xf32> -> vector<288x8xf32>
    %22 = arith.addf %16, %21 : vector<288x8xf32>
    %c0_22 = arith.constant 0 : index
    %c19 = arith.constant 19 : index
    %c0_23 = arith.constant 0 : index
    %23 = vector.load %arg1[%c0_22, %c19, %c0_23] : memref<1x328x4xbf16, #tpu.memory_space<vmem>>, vector<1x288x4xbf16>
    %24 = vector.shape_cast %23 : vector<1x288x4xbf16> to vector<288x4xbf16>
    %c4 = arith.constant 4 : index
    %c0_24 = arith.constant 0 : index
    %c0_25 = arith.constant 0 : index
    %25 = vector.load %arg2[%c4, %c0_24, %c0_25] : memref<9x4x8xbf16, #tpu.memory_space<vmem>>, vector<1x4x8xbf16>
    %26 = vector.shape_cast %25 : vector<1x4x8xbf16> to vector<4x8xbf16>
    %cst_26 = arith.constant dense<0.000000e+00> : vector<288x8xf32>
    %27 = tpu.matmul %24, %26, %cst_26 {dimension_numbers = #tpu.dot_dimension_numbers<[1], [0], [0], [1], [0, 0, 1, 1], [], []>} : vector<288x4xbf16>, vector<4x8xbf16>, vector<288x8xf32> -> vector<288x8xf32>
    %28 = arith.addf %22, %27 : vector<288x8xf32>
    %c0_27 = arith.constant 0 : index
    %c20 = arith.constant 20 : index
    %c0_28 = arith.constant 0 : index
    %29 = vector.load %arg1[%c0_27, %c20, %c0_28] : memref<1x328x4xbf16, #tpu.memory_space<vmem>>, vector<1x288x4xbf16>
    %30 = vector.shape_cast %29 : vector<1x288x4xbf16> to vector<288x4xbf16>
    %c5 = arith.constant 5 : index
    %c0_29 = arith.constant 0 : index
    %c0_30 = arith.constant 0 : index
    %31 = vector.load %arg2[%c5, %c0_29, %c0_30] : memref<9x4x8xbf16, #tpu.memory_space<vmem>>, vector<1x4x8xbf16>
    %32 = vector.shape_cast %31 : vector<1x4x8xbf16> to vector<4x8xbf16>
    %cst_31 = arith.constant dense<0.000000e+00> : vector<288x8xf32>
    %33 = tpu.matmul %30, %32, %cst_31 {dimension_numbers = #tpu.dot_dimension_numbers<[1], [0], [0], [1], [0, 0, 1, 1], [], []>} : vector<288x4xbf16>, vector<4x8xbf16>, vector<288x8xf32> -> vector<288x8xf32>
    %34 = arith.addf %28, %33 : vector<288x8xf32>
    %c0_32 = arith.constant 0 : index
    %c36 = arith.constant 36 : index
    %c0_33 = arith.constant 0 : index
    %35 = vector.load %arg1[%c0_32, %c36, %c0_33] : memref<1x328x4xbf16, #tpu.memory_space<vmem>>, vector<1x288x4xbf16>
    %36 = vector.shape_cast %35 : vector<1x288x4xbf16> to vector<288x4xbf16>
    %c6 = arith.constant 6 : index
    %c0_34 = arith.constant 0 : index
    %c0_35 = arith.constant 0 : index
    %37 = vector.load %arg2[%c6, %c0_34, %c0_35] : memref<9x4x8xbf16, #tpu.memory_space<vmem>>, vector<1x4x8xbf16>
    %38 = vector.shape_cast %37 : vector<1x4x8xbf16> to vector<4x8xbf16>
    %cst_36 = arith.constant dense<0.000000e+00> : vector<288x8xf32>
    %39 = tpu.matmul %36, %38, %cst_36 {dimension_numbers = #tpu.dot_dimension_numbers<[1], [0], [0], [1], [0, 0, 1, 1], [], []>} : vector<288x4xbf16>, vector<4x8xbf16>, vector<288x8xf32> -> vector<288x8xf32>
    %40 = arith.addf %34, %39 : vector<288x8xf32>
    %c0_37 = arith.constant 0 : index
    %c37 = arith.constant 37 : index
    %c0_38 = arith.constant 0 : index
    %41 = vector.load %arg1[%c0_37, %c37, %c0_38] : memref<1x328x4xbf16, #tpu.memory_space<vmem>>, vector<1x288x4xbf16>
    %42 = vector.shape_cast %41 : vector<1x288x4xbf16> to vector<288x4xbf16>
    %c7 = arith.constant 7 : index
    %c0_39 = arith.constant 0 : index
    %c0_40 = arith.constant 0 : index
    %43 = vector.load %arg2[%c7, %c0_39, %c0_40] : memref<9x4x8xbf16, #tpu.memory_space<vmem>>, vector<1x4x8xbf16>
    %44 = vector.shape_cast %43 : vector<1x4x8xbf16> to vector<4x8xbf16>
    %cst_41 = arith.constant dense<0.000000e+00> : vector<288x8xf32>
    %45 = tpu.matmul %42, %44, %cst_41 {dimension_numbers = #tpu.dot_dimension_numbers<[1], [0], [0], [1], [0, 0, 1, 1], [], []>} : vector<288x4xbf16>, vector<4x8xbf16>, vector<288x8xf32> -> vector<288x8xf32>
    %46 = arith.addf %40, %45 : vector<288x8xf32>
    %c0_42 = arith.constant 0 : index
    %c38 = arith.constant 38 : index
    %c0_43 = arith.constant 0 : index
    %47 = vector.load %arg1[%c0_42, %c38, %c0_43] : memref<1x328x4xbf16, #tpu.memory_space<vmem>>, vector<1x288x4xbf16>
    %48 = vector.shape_cast %47 : vector<1x288x4xbf16> to vector<288x4xbf16>
    %c8 = arith.constant 8 : index
    %c0_44 = arith.constant 0 : index
    %c0_45 = arith.constant 0 : index
    %49 = vector.load %arg2[%c8, %c0_44, %c0_45] : memref<9x4x8xbf16, #tpu.memory_space<vmem>>, vector<1x4x8xbf16>
    %50 = vector.shape_cast %49 : vector<1x4x8xbf16> to vector<4x8xbf16>
    %cst_46 = arith.constant dense<0.000000e+00> : vector<288x8xf32>
    %51 = tpu.matmul %48, %50, %cst_46 {dimension_numbers = #tpu.dot_dimension_numbers<[1], [0], [0], [1], [0, 0, 1, 1], [], []>} : vector<288x4xbf16>, vector<4x8xbf16>, vector<288x8xf32> -> vector<288x8xf32>
    %52 = arith.addf %46, %51 : vector<288x8xf32>
    %c0_47 = arith.constant 0 : index
    %c0_48 = arith.constant 0 : index
    %53 = vector.load %arg3[%c0_47, %c0_48] : memref<1x8xf32, #tpu.memory_space<vmem>>, vector<1x8xf32>
    %54 = vector.broadcast %53 : vector<1x8xf32> to vector<288x8xf32>
    %55 = arith.addf %52, %54 : vector<288x8xf32>
    %cst_49 = arith.constant 0.000000e+00 : f32
    %56 = vector.broadcast %cst_49 : f32 to vector<288x8xf32>
    %57 = arith.maximumf %55, %56 : vector<288x8xf32>
    %58 = arith.truncf %57 : vector<288x8xf32> to vector<288x8xbf16>
    %c0_50 = arith.constant 0 : index
    %c0_51 = arith.constant 0 : index
    %c0_52 = arith.constant 0 : index
    %59 = vector.load %arg4[%c0_50, %c0_51, %c0_52] : memref<1x288x8xbf16, #tpu.memory_space<vmem>>, vector<1x288x8xbf16>
    %60 = vector.shape_cast %59 : vector<1x288x8xbf16> to vector<288x8xbf16>
    %61 = vector.shape_cast %58 : vector<288x8xbf16> to vector<1x288x8xbf16>
    tpu.vector_store %arg4[%c0_50, %c0_51, %c0_52], %61 {strides = array<i32>} : memref<1x288x8xbf16, #tpu.memory_space<vmem>>, vector<1x288x8xbf16>,
    return
  }
  func.func @transform_0(%arg0: i32) -> (i32, i32, i32) {
    %c0_i32 = arith.constant 0 : i32
    %c0_i32_0 = arith.constant 0 : i32
    %c0_i32_1 = arith.constant 0 : i32
    return %arg0, %c0_i32, %c0_i32_0 : i32, i32, i32
  }
  func.func @transform_1(%arg0: i32) -> (i32, i32, i32) {
    %c0_i32 = arith.constant 0 : i32
    %c0_i32_0 = arith.constant 0 : i32
    %c0_i32_1 = arith.constant 0 : i32
    %c0_i32_2 = arith.constant 0 : i32
    return %c0_i32, %c0_i32_0, %c0_i32_1 : i32, i32, i32
  }
  func.func @transform_2(%arg0: i32) -> (i32, i32) {
    %c0_i32 = arith.constant 0 : i32
    %c0_i32_0 = arith.constant 0 : i32
    %c0_i32_1 = arith.constant 0 : i32
    return %c0_i32, %c0_i32_0 : i32, i32
  }
  func.func @transform_3(%arg0: i32) -> (i32, i32, i32) {
    %c0_i32 = arith.constant 0 : i32
    %c0_i32_0 = arith.constant 0 : i32
    %c0_i32_1 = arith.constant 0 : i32
    return %arg0, %c0_i32, %c0_i32_0 : i32, i32, i32
  }
}

module attributes {stable_mosaic.version = 11 : i64} {
  func.func @kernel(%arg0: i32, %arg1: memref<1x328x8xbf16, #tpu.memory_space<vmem>>, %arg2: memref<3x8x8xbf16, #tpu.memory_space<vmem>>, %arg3: memref<3x8x8xbf16, #tpu.memory_space<vmem>>, %arg4: memref<1x8xf32, #tpu.memory_space<vmem>>, %arg5: memref<1x8xf32, #tpu.memory_space<vmem>>, %arg6: memref<1x288x16xf32, #tpu.memory_space<vmem>>) attributes {dimension_semantics = [#tpu.dimension_semantics<parallel>], iteration_bounds = array<i64: 2>, scalar_prefetch = 0 : i64, scratch_operands = 0 : i64, tpu.core_type = #tpu.core_type<tc>, window_params = [{transform_indices = @transform_0, window_bounds = array<i64: 1, 328, 8>}, {pipeline_mode = #tpu.pipeline_mode<synchronous>, transform_indices = @transform_1, window_bounds = array<i64: 3, 8, 8>}, {pipeline_mode = #tpu.pipeline_mode<synchronous>, transform_indices = @transform_2, window_bounds = array<i64: 3, 8, 8>}, {pipeline_mode = #tpu.pipeline_mode<synchronous>, transform_indices = @transform_3, window_bounds = array<i64: 1, 8>}, {pipeline_mode = #tpu.pipeline_mode<synchronous>, transform_indices = @transform_4, window_bounds = array<i64: 1, 8>}, {transform_indices = @transform_5, window_bounds = array<i64: 1, 288, 16>}]} {
    %c0 = arith.constant 0 : index
    %c18 = arith.constant 18 : index
    %c0_0 = arith.constant 0 : index
    %0 = vector.load %arg1[%c0, %c18, %c0_0] : memref<1x328x8xbf16, #tpu.memory_space<vmem>>, vector<1x288x8xbf16>
    %1 = vector.shape_cast %0 : vector<1x288x8xbf16> to vector<288x8xbf16>
    %c0_1 = arith.constant 0 : index
    %c0_2 = arith.constant 0 : index
    %c0_3 = arith.constant 0 : index
    %2 = vector.load %arg2[%c0_1, %c0_2, %c0_3] : memref<3x8x8xbf16, #tpu.memory_space<vmem>>, vector<1x8x8xbf16>
    %3 = vector.shape_cast %2 : vector<1x8x8xbf16> to vector<8x8xbf16>
    %cst = arith.constant dense<0.000000e+00> : vector<288x8xf32>
    %4 = tpu.matmul %1, %3, %cst {dimension_numbers = #tpu.dot_dimension_numbers<[1], [0], [0], [1], [0, 0, 1, 1], [], []>} : vector<288x8xbf16>, vector<8x8xbf16>, vector<288x8xf32> -> vector<288x8xf32>
    %c0_4 = arith.constant 0 : index
    %c19 = arith.constant 19 : index
    %c0_5 = arith.constant 0 : index
    %5 = vector.load %arg1[%c0_4, %c19, %c0_5] : memref<1x328x8xbf16, #tpu.memory_space<vmem>>, vector<1x288x8xbf16>
    %6 = vector.shape_cast %5 : vector<1x288x8xbf16> to vector<288x8xbf16>
    %c1 = arith.constant 1 : index
    %c0_6 = arith.constant 0 : index
    %c0_7 = arith.constant 0 : index
    %7 = vector.load %arg2[%c1, %c0_6, %c0_7] : memref<3x8x8xbf16, #tpu.memory_space<vmem>>, vector<1x8x8xbf16>
    %8 = vector.shape_cast %7 : vector<1x8x8xbf16> to vector<8x8xbf16>
    %cst_8 = arith.constant dense<0.000000e+00> : vector<288x8xf32>
    %9 = tpu.matmul %6, %8, %cst_8 {dimension_numbers = #tpu.dot_dimension_numbers<[1], [0], [0], [1], [0, 0, 1, 1], [], []>} : vector<288x8xbf16>, vector<8x8xbf16>, vector<288x8xf32> -> vector<288x8xf32>
    %10 = arith.addf %4, %9 : vector<288x8xf32>
    %c0_9 = arith.constant 0 : index
    %c20 = arith.constant 20 : index
    %c0_10 = arith.constant 0 : index
    %11 = vector.load %arg1[%c0_9, %c20, %c0_10] : memref<1x328x8xbf16, #tpu.memory_space<vmem>>, vector<1x288x8xbf16>
    %12 = vector.shape_cast %11 : vector<1x288x8xbf16> to vector<288x8xbf16>
    %c2 = arith.constant 2 : index
    %c0_11 = arith.constant 0 : index
    %c0_12 = arith.constant 0 : index
    %13 = vector.load %arg2[%c2, %c0_11, %c0_12] : memref<3x8x8xbf16, #tpu.memory_space<vmem>>, vector<1x8x8xbf16>
    %14 = vector.shape_cast %13 : vector<1x8x8xbf16> to vector<8x8xbf16>
    %cst_13 = arith.constant dense<0.000000e+00> : vector<288x8xf32>
    %15 = tpu.matmul %12, %14, %cst_13 {dimension_numbers = #tpu.dot_dimension_numbers<[1], [0], [0], [1], [0, 0, 1, 1], [], []>} : vector<288x8xbf16>, vector<8x8xbf16>, vector<288x8xf32> -> vector<288x8xf32>
    %16 = arith.addf %10, %15 : vector<288x8xf32>
    %c0_14 = arith.constant 0 : index
    %c0_15 = arith.constant 0 : index
    %17 = vector.load %arg4[%c0_14, %c0_15] : memref<1x8xf32, #tpu.memory_space<vmem>>, vector<1x8xf32>
    %18 = vector.broadcast %17 : vector<1x8xf32> to vector<288x8xf32>
    %19 = arith.addf %16, %18 : vector<288x8xf32>
    %cst_16 = arith.constant 0.000000e+00 : f32
    %20 = vector.broadcast %cst_16 : f32 to vector<288x8xf32>
    %21 = arith.maximumf %19, %20 : vector<288x8xf32>
    %c0_17 = arith.constant 0 : index
    %c0_18 = arith.constant 0 : index
    %c0_19 = arith.constant 0 : index
    %22 = vector.load %arg6[%c0_17, %c0_18, %c0_19] : memref<1x288x16xf32, #tpu.memory_space<vmem>>, vector<1x288x8xf32>
    %23 = vector.shape_cast %22 : vector<1x288x8xf32> to vector<288x8xf32>
    %24 = vector.shape_cast %21 : vector<288x8xf32> to vector<1x288x8xf32>
    tpu.vector_store %arg6[%c0_17, %c0_18, %c0_19], %24 {strides = array<i32>} : memref<1x288x16xf32, #tpu.memory_space<vmem>>, vector<1x288x8xf32>,
    %c0_20 = arith.constant 0 : index
    %c1_21 = arith.constant 1 : index
    %c0_22 = arith.constant 0 : index
    %25 = vector.load %arg1[%c0_20, %c1_21, %c0_22] : memref<1x328x8xbf16, #tpu.memory_space<vmem>>, vector<1x288x8xbf16>
    %26 = vector.shape_cast %25 : vector<1x288x8xbf16> to vector<288x8xbf16>
    %c0_23 = arith.constant 0 : index
    %c0_24 = arith.constant 0 : index
    %c0_25 = arith.constant 0 : index
    %27 = vector.load %arg3[%c0_23, %c0_24, %c0_25] : memref<3x8x8xbf16, #tpu.memory_space<vmem>>, vector<1x8x8xbf16>
    %28 = vector.shape_cast %27 : vector<1x8x8xbf16> to vector<8x8xbf16>
    %cst_26 = arith.constant dense<0.000000e+00> : vector<288x8xf32>
    %29 = tpu.matmul %26, %28, %cst_26 {dimension_numbers = #tpu.dot_dimension_numbers<[1], [0], [0], [1], [0, 0, 1, 1], [], []>} : vector<288x8xbf16>, vector<8x8xbf16>, vector<288x8xf32> -> vector<288x8xf32>
    %c0_27 = arith.constant 0 : index
    %c19_28 = arith.constant 19 : index
    %c0_29 = arith.constant 0 : index
    %30 = vector.load %arg1[%c0_27, %c19_28, %c0_29] : memref<1x328x8xbf16, #tpu.memory_space<vmem>>, vector<1x288x8xbf16>
    %31 = vector.shape_cast %30 : vector<1x288x8xbf16> to vector<288x8xbf16>
    %c1_30 = arith.constant 1 : index
    %c0_31 = arith.constant 0 : index
    %c0_32 = arith.constant 0 : index
    %32 = vector.load %arg3[%c1_30, %c0_31, %c0_32] : memref<3x8x8xbf16, #tpu.memory_space<vmem>>, vector<1x8x8xbf16>
    %33 = vector.shape_cast %32 : vector<1x8x8xbf16> to vector<8x8xbf16>
    %cst_33 = arith.constant dense<0.000000e+00> : vector<288x8xf32>
    %34 = tpu.matmul %31, %33, %cst_33 {dimension_numbers = #tpu.dot_dimension_numbers<[1], [0], [0], [1], [0, 0, 1, 1], [], []>} : vector<288x8xbf16>, vector<8x8xbf16>, vector<288x8xf32> -> vector<288x8xf32>
    %35 = arith.addf %29, %34 : vector<288x8xf32>
    %c0_34 = arith.constant 0 : index
    %c37 = arith.constant 37 : index
    %c0_35 = arith.constant 0 : index
    %36 = vector.load %arg1[%c0_34, %c37, %c0_35] : memref<1x328x8xbf16, #tpu.memory_space<vmem>>, vector<1x288x8xbf16>
    %37 = vector.shape_cast %36 : vector<1x288x8xbf16> to vector<288x8xbf16>
    %c2_36 = arith.constant 2 : index
    %c0_37 = arith.constant 0 : index
    %c0_38 = arith.constant 0 : index
    %38 = vector.load %arg3[%c2_36, %c0_37, %c0_38] : memref<3x8x8xbf16, #tpu.memory_space<vmem>>, vector<1x8x8xbf16>
    %39 = vector.shape_cast %38 : vector<1x8x8xbf16> to vector<8x8xbf16>
    %cst_39 = arith.constant dense<0.000000e+00> : vector<288x8xf32>
    %40 = tpu.matmul %37, %39, %cst_39 {dimension_numbers = #tpu.dot_dimension_numbers<[1], [0], [0], [1], [0, 0, 1, 1], [], []>} : vector<288x8xbf16>, vector<8x8xbf16>, vector<288x8xf32> -> vector<288x8xf32>
    %41 = arith.addf %35, %40 : vector<288x8xf32>
    %c0_40 = arith.constant 0 : index
    %c0_41 = arith.constant 0 : index
    %42 = vector.load %arg5[%c0_40, %c0_41] : memref<1x8xf32, #tpu.memory_space<vmem>>, vector<1x8xf32>
    %43 = vector.broadcast %42 : vector<1x8xf32> to vector<288x8xf32>
    %44 = arith.addf %41, %43 : vector<288x8xf32>
    %cst_42 = arith.constant 0.000000e+00 : f32
    %45 = vector.broadcast %cst_42 : f32 to vector<288x8xf32>
    %46 = arith.maximumf %44, %45 : vector<288x8xf32>
    %c0_43 = arith.constant 0 : index
    %c0_44 = arith.constant 0 : index
    %c8 = arith.constant 8 : index
    %47 = vector.load %arg6[%c0_43, %c0_44, %c8] : memref<1x288x16xf32, #tpu.memory_space<vmem>>, vector<1x288x8xf32>
    %48 = vector.shape_cast %47 : vector<1x288x8xf32> to vector<288x8xf32>
    %49 = vector.shape_cast %46 : vector<288x8xf32> to vector<1x288x8xf32>
    tpu.vector_store %arg6[%c0_43, %c0_44, %c8], %49 {strides = array<i32>} : memref<1x288x16xf32, #tpu.memory_space<vmem>>, vector<1x288x8xf32>,
    return
  }
  func.func @transform_0(%arg0: i32) -> (i32, i32, i32) {
    %c0_i32 = arith.constant 0 : i32
    %c0_i32_0 = arith.constant 0 : i32
    %c0_i32_1 = arith.constant 0 : i32
    return %arg0, %c0_i32, %c0_i32_0 : i32, i32, i32
  }
  func.func @transform_1(%arg0: i32) -> (i32, i32, i32) {
    %c0_i32 = arith.constant 0 : i32
    %c0_i32_0 = arith.constant 0 : i32
    %c0_i32_1 = arith.constant 0 : i32
    %c0_i32_2 = arith.constant 0 : i32
    return %c0_i32, %c0_i32_0, %c0_i32_1 : i32, i32, i32
  }
  func.func @transform_2(%arg0: i32) -> (i32, i32, i32) {
    %c0_i32 = arith.constant 0 : i32
    %c0_i32_0 = arith.constant 0 : i32
    %c0_i32_1 = arith.constant 0 : i32
    %c0_i32_2 = arith.constant 0 : i32
    return %c0_i32, %c0_i32_0, %c0_i32_1 : i32, i32, i32
  }
  func.func @transform_3(%arg0: i32) -> (i32, i32) {
    %c0_i32 = arith.constant 0 : i32
    %c0_i32_0 = arith.constant 0 : i32
    %c0_i32_1 = arith.constant 0 : i32
    return %c0_i32, %c0_i32_0 : i32, i32
  }
  func.func @transform_4(%arg0: i32) -> (i32, i32) {
    %c0_i32 = arith.constant 0 : i32
    %c0_i32_0 = arith.constant 0 : i32
    %c0_i32_1 = arith.constant 0 : i32
    return %c0_i32, %c0_i32_0 : i32, i32
  }
  func.func @transform_5(%arg0: i32) -> (i32, i32, i32) {
    %c0_i32 = arith.constant 0 : i32
    %c0_i32_0 = arith.constant 0 : i32
    %c0_i32_1 = arith.constant 0 : i32
    return %arg0, %c0_i32, %c0_i32_0 : i32, i32, i32
  }
}

</mosaic_0001>

<llo_original>
// kernel: inception_c_forward.4
$region0: #{inception_c_forward.4}
  #allocation0 [shape = 'u32[]', space=smem, size = 0x4, offset = 0x4, fixed_abs, tag = 'smem constant byte address 0x4 - core index']
  #allocation1 [shape = 'u32[144,128]{1,0:T(1,128)}', space=vmem, size = 0x12000, scoped, tag = 'internal scratch']
  %s0 = inlined_call_operand.vmem [shape: bf16[512,4], index: 0, kind: input, shape index: {}]
  %s1 = inlined_call_operand.vmem [shape: bf16[4,128], index: 1, kind: input, shape index: {}]
  %s2 = inlined_call_operand.vmem [shape: f32[1,128], index: 2, kind: input, shape index: {}]
  %s3 = inlined_call_operand.vmem [shape: f32[1,128], index: 3, kind: input, shape index: {}]
  %s4 = inlined_call_operand.vmem [shape: bf16[512,128], index: 4, kind: output, shape index: {}]
  %s5 = sld [smem:[#allocation0]]
  $region26: #{inception_c_forward.4} parent=0
    _
  %s7 = ssub.s32 1, %s5
  %s8 = scalar_select 0, %s7, %s5
  // Predicated region
  $region2: #{inception_c_forward.4} parent=0 // pred_check
    _
  $region3: #{inception_c_forward.4} parent=0 // pred_check_branch
    %10 = sbr.rel (0) target = $region5
  $region4: #{inception_c_forward.4} parent=0 // pred_region
    _
  $region5: #{inception_c_forward.4} parent=0 // pred_fallthru
    _
  // Predicated region
  $region6: #{inception_c_forward.4} parent=0 // pred_check
    _
  $region7: #{inception_c_forward.4} parent=0 // pred_check_branch
    %12 = sbr.rel (0) target = $region9
  $region8: #{inception_c_forward.4} parent=0 // pred_region
    _
  $region9: #{inception_c_forward.4} parent=0 // pred_fallthru
    _
  // Predicated region
  $region10: #{inception_c_forward.4} parent=0 // pred_check
    _
  $region11: #{inception_c_forward.4} parent=0 // pred_check_branch
    %14 = sbr.rel (0) target = $region13
  $region12: #{inception_c_forward.4} parent=0 // pred_region
    _
  $region13: #{inception_c_forward.4} parent=0 // pred_fallthru
    _
  // Predicated region
  $region14: #{inception_c_forward.4} parent=0 // pred_check
    _
  $region15: #{inception_c_forward.4} parent=0 // pred_check_branch
    %16 = sbr.rel (0) target = $region17
  $region16: #{inception_c_forward.4} parent=0 // pred_region
    _
  $region17: #{inception_c_forward.4} parent=0 // pred_fallthru
    _
  %v18 = vld [vmem:[%s0] sm:$0xf]
  %v19 = vld [vmem:[%s0 + $0x4] sm:$0xf]
  %v20 = vld [vmem:[%s0 + $0x8] sm:$0xf]
  %v21 = vld [vmem:[%s0 + $0xc] sm:$0xf]
  %v22 = vld [vmem:[%s0 + $0x10] sm:$0xf]
  %v23 = vld [vmem:[%s0 + $0x14] sm:$0xf]
  %v24 = vld [vmem:[%s0 + $0x18] sm:$0xf]
  %v25 = vld [vmem:[%s0 + $0x1c] sm:$0xf]
  %v26 = vld [vmem:[%s0 + $0x20] sm:$0xf]
  %v27 = vld [vmem:[%s0 + $0x24] sm:$0xf]
  %v28 = vld [vmem:[%s0 + $0x28] sm:$0xf]
  %v29 = vld [vmem:[%s0 + $0x2c] sm:$0xf]
  %v30 = vld [vmem:[%s0 + $0x30] sm:$0xf]
  %v31 = vld [vmem:[%s0 + $0x34] sm:$0xf]
  %v32 = vld [vmem:[%s0 + $0x38] sm:$0xf]
  %v33 = vld [vmem:[%s0 + $0x3c] sm:$0xf]
  %v34 = vld [vmem:[%s0 + $0x40] sm:$0xf]
  %v35 = vld [vmem:[%s0 + $0x44] sm:$0xf]
  %v36 = vld [vmem:[%s0 + $0x48] sm:$0xf]
  %v37 = vld [vmem:[%s0 + $0x4c] sm:$0xf]
  %v38 = vld [vmem:[%s0 + $0x50] sm:$0xf]
  %v39 = vld [vmem:[%s0 + $0x54] sm:$0xf]
  %v40 = vld [vmem:[%s0 + $0x58] sm:$0xf]
  %v41 = vld [vmem:[%s0 + $0x5c] sm:$0xf]
  %v42 = vld [vmem:[%s0 + $0x60] sm:$0xf]
  %v43 = vld [vmem:[%s0 + $0x64] sm:$0xf]
  %v44 = vld [vmem:[%s0 + $0x68] sm:$0xf]
  %v45 = vld [vmem:[%s0 + $0x6c] sm:$0xf]
  %v46 = vld [vmem:[%s0 + $0x70] sm:$0xf]
  %v47 = vld [vmem:[%s0 + $0x74] sm:$0xf]
  %v48 = vld [vmem:[%s0 + $0x78] sm:$0xf]
  %v49 = vld [vmem:[%s0 + $0x7c] sm:$0xf]
  %v50 = vld [vmem:[%s0 + $0x80] sm:$0xf]
  %v51 = vld [vmem:[%s0 + $0x84] sm:$0xf]
  %v52 = vld [vmem:[%s0 + $0x88] sm:$0xf]
  %v53 = vld [vmem:[%s0 + $0x8c] sm:$0xf]
  %v54 = vld [vmem:[%s0 + $0x90] sm:$0xf]
  %v55 = vld [vmem:[%s0 + $0x94] sm:$0xf]
  %v56 = vld [vmem:[%s0 + $0x98] sm:$0xf]
  %v57 = vld [vmem:[%s0 + $0x9c] sm:$0xf]
  %v58 = vld [vmem:[%s0 + $0xa0] sm:$0xf]
  %v59 = vld [vmem:[%s0 + $0xa4] sm:$0xf]
  %v60 = vld [vmem:[%s0 + $0xa8] sm:$0xf]
  %v61 = vld [vmem:[%s0 + $0xac] sm:$0xf]
  %v62 = vld [vmem:[%s0 + $0xb0] sm:$0xf]
  %v63 = vld [vmem:[%s0 + $0xb4] sm:$0xf]
  %v64 = vld [vmem:[%s0 + $0xb8] sm:$0xf]
  %v65 = vld [vmem:[%s0 + $0xbc] sm:$0xf]
  %v66 = vld [vmem:[%s0 + $0xc0] sm:$0xf]
  %v67 = vld [vmem:[%s0 + $0xc4] sm:$0xf]
  %v68 = vld [vmem:[%s0 + $0xc8] sm:$0xf]
  %v69 = vld [vmem:[%s0 + $0xcc] sm:$0xf]
  %v70 = vld [vmem:[%s0 + $0xd0] sm:$0xf]
  %v71 = vld [vmem:[%s0 + $0xd4] sm:$0xf]
  %v72 = vld [vmem:[%s0 + $0xd8] sm:$0xf]
  %v73 = vld [vmem:[%s0 + $0xdc] sm:$0xf]
  %v74 = vld [vmem:[%s0 + $0xe0] sm:$0xf]
  %v75 = vld [vmem:[%s0 + $0xe4] sm:$0xf]
  %v76 = vld [vmem:[%s0 + $0xe8] sm:$0xf]
  %v77 = vld [vmem:[%s0 + $0xec] sm:$0xf]
  %v78 = vld [vmem:[%s0 + $0xf0] sm:$0xf]
  %v79 = vld [vmem:[%s0 + $0xf4] sm:$0xf]
  %v80 = vld [vmem:[%s0 + $0xf8] sm:$0xf]
  %v81 = vld [vmem:[%s0 + $0xfc] sm:$0xf]
  %v82 = vld [vmem:[%s1] sm:$0x3]
  %v83 = vld [vmem:[%s2] sm:$0x1]
  %v85 = vlaneseq
  %v86 = vshrl.u32 %v85, 7
  %v87 = vsub.s32 0, %v86
  %v88 = vrot.slane %v83, %v87
  %v154 = vunpack.c.l.b16 %v18
  %v155 = vunpack.c.l.b16 %v19
  %v156 = vunpack.c.l.b16 %v20
  %v157 = vunpack.c.l.b16 %v21
  %v158 = vunpack.c.l.b16 %v22
  %v159 = vunpack.c.l.b16 %v23
  %v160 = vunpack.c.l.b16 %v24
  %v161 = vunpack.c.l.b16 %v25
  %v162 = vunpack.c.l.b16 %v26
  %v163 = vunpack.c.l.b16 %v27
  %v164 = vunpack.c.l.b16 %v28
  %v165 = vunpack.c.l.b16 %v29
  %v166 = vunpack.c.l.b16 %v30
  %v167 = vunpack.c.l.b16 %v31
  %v168 = vunpack.c.l.b16 %v32
  %v169 = vunpack.c.l.b16 %v33
  %v170 = vunpack.c.l.b16 %v34
  %v171 = vunpack.c.l.b16 %v35
  %v172 = vunpack.c.l.b16 %v36
  %v173 = vunpack.c.l.b16 %v37
  %v174 = vunpack.c.l.b16 %v38
  %v175 = vunpack.c.l.b16 %v39
  %v176 = vunpack.c.l.b16 %v40
  %v177 = vunpack.c.l.b16 %v41
  %v178 = vunpack.c.l.b16 %v42
  %v179 = vunpack.c.l.b16 %v43
  %v180 = vunpack.c.l.b16 %v44
  %v181 = vunpack.c.l.b16 %v45
  %v182 = vunpack.c.l.b16 %v46
  %v183 = vunpack.c.l.b16 %v47
  %v184 = vunpack.c.l.b16 %v48
  %v185 = vunpack.c.l.b16 %v49
  %v186 = vunpack.c.l.b16 %v50
  %v187 = vunpack.c.l.b16 %v51
  %v188 = vunpack.c.l.b16 %v52
  %v189 = vunpack.c.l.b16 %v53
  %v190 = vunpack.c.l.b16 %v54
  %v191 = vunpack.c.l.b16 %v55
  %v192 = vunpack.c.l.b16 %v56
  %v193 = vunpack.c.l.b16 %v57
  %v194 = vunpack.c.l.b16 %v58
  %v195 = vunpack.c.l.b16 %v59
  %v196 = vunpack.c.l.b16 %v60
  %v197 = vunpack.c.l.b16 %v61
  %v198 = vunpack.c.l.b16 %v62
  %v199 = vunpack.c.l.b16 %v63
  %v200 = vunpack.c.l.b16 %v64
  %v201 = vunpack.c.l.b16 %v65
  %v202 = vunpack.c.l.b16 %v66
  %v203 = vunpack.c.l.b16 %v67
  %v204 = vunpack.c.l.b16 %v68
  %v205 = vunpack.c.l.b16 %v69
  %v206 = vunpack.c.l.b16 %v70
  %v207 = vunpack.c.l.b16 %v71
  %v208 = vunpack.c.l.b16 %v72
  %v209 = vunpack.c.l.b16 %v73
  %v210 = vunpack.c.l.b16 %v74
  %v211 = vunpack.c.l.b16 %v75
  %v212 = vunpack.c.l.b16 %v76
  %v213 = vunpack.c.l.b16 %v77
  %v214 = vunpack.c.l.b16 %v78
  %v215 = vunpack.c.l.b16 %v79
  %v216 = vunpack.c.l.b16 %v80
  %v217 = vunpack.c.l.b16 %v81
  %v218 = vpack.c.b16 %v155, %v154
  %v219 = vpack.c.b16 %v157, %v156
  %v220 = vpack.c.b16 %v159, %v158
  %v221 = vpack.c.b16 %v161, %v160
  %v222 = vpack.c.b16 %v163, %v162
  %v223 = vpack.c.b16 %v165, %v164
  %v224 = vpack.c.b16 %v167, %v166
  %v225 = vpack.c.b16 %v169, %v168
  %v226 = vpack.c.b16 %v171, %v170
  %v227 = vpack.c.b16 %v173, %v172
  %v228 = vpack.c.b16 %v175, %v174
  %v229 = vpack.c.b16 %v177, %v176
  %v230 = vpack.c.b16 %v179, %v178
  %v231 = vpack.c.b16 %v181, %v180
  %v232 = vpack.c.b16 %v183, %v182
  %v233 = vpack.c.b16 %v185, %v184
  %v234 = vpack.c.b16 %v187, %v186
  %v235 = vpack.c.b16 %v189, %v188
  %v236 = vpack.c.b16 %v191, %v190
  %v237 = vpack.c.b16 %v193, %v192
  %v238 = vpack.c.b16 %v195, %v194
  %v239 = vpack.c.b16 %v197, %v196
  %v240 = vpack.c.b16 %v199, %v198
  %v241 = vpack.c.b16 %v201, %v200
  %v242 = vpack.c.b16 %v203, %v202
  %v243 = vpack.c.b16 %v205, %v204
  %v244 = vpack.c.b16 %v207, %v206
  %v245 = vpack.c.b16 %v209, %v208
  %v246 = vpack.c.b16 %v211, %v210
  %v247 = vpack.c.b16 %v213, %v212
  %v248 = vpack.c.b16 %v215, %v214
  %v249 = vpack.c.b16 %v217, %v216
  %vm250 = vcmask 31744
  %v252 = vsel %vm250, %v218, 0
  %v255 = vsel %vm250, %v219, 0
  %v258 = vsel %vm250, %v220, 0
  %v261 = vsel %vm250, %v221, 0
  %v264 = vsel %vm250, %v222, 0
  %v267 = vsel %vm250, %v223, 0
  %v270 = vsel %vm250, %v224, 0
  %v273 = vsel %vm250, %v225, 0
  %v276 = vsel %vm250, %v226, 0
  %v279 = vsel %vm250, %v227, 0
  %v282 = vsel %vm250, %v228, 0
  %v285 = vsel %vm250, %v229, 0
  %v288 = vsel %vm250, %v230, 0
  %v291 = vsel %vm250, %v231, 0
  %v294 = vsel %vm250, %v232, 0
  %v297 = vsel %vm250, %v233, 0
  %v300 = vsel %vm250, %v234, 0
  %v303 = vsel %vm250, %v235, 0
  %v306 = vsel %vm250, %v236, 0
  %v309 = vsel %vm250, %v237, 0
  %v312 = vsel %vm250, %v238, 0
  %v315 = vsel %vm250, %v239, 0
  %v318 = vsel %vm250, %v240, 0
  %v321 = vsel %vm250, %v241, 0
  %v324 = vsel %vm250, %v242, 0
  %v327 = vsel %vm250, %v243, 0
  %v330 = vsel %vm250, %v244, 0
  %v333 = vsel %vm250, %v245, 0
  %v336 = vsel %vm250, %v246, 0
  %v339 = vsel %vm250, %v247, 0
  %v342 = vsel %vm250, %v248, 0
  %v345 = vsel %vm250, %v249, 0
  %vm347 = vcmask 1041408
  %v349 = vsel %vm347, %v82, 0
  %351 = vmatprep.subr.bf16.mxu0 0
  %352 = vmatpush1.bf16.msra.mxu0 0
  %353 = vmatprep.subr.bf16.mxu0 0
  %354 = vmatpush1.bf16.msra.mxu0 0
  %355 = vmatprep.subr.bf16.mxu0 0
  %356 = vmatpush1.bf16.msra.mxu0 0
  %357 = vmatprep.subr.bf16.mxu0 0
  %358 = vmatpush1.bf16.msra.mxu0 0
  %359 = vmatprep.subr.bf16.mxu0 0
  %360 = vmatpush1.bf16.msra.mxu0 0
  %361 = vmatprep.subr.bf16.mxu0 0
  %362 = vmatpush1.bf16.msra.mxu0 0
  %363 = vmatprep.subr.bf16.mxu0 0
  %364 = vmatpush1.bf16.msra.mxu0 0
  %365 = vmatprep.subr.bf16.mxu0 0
  %366 = vmatpush1.bf16.msra.mxu0 %v349
  %367 = vmatprep.subr.bf16.mxu0 0
  %368 = vmatpush2.bf16.msra.mxu0 0
  %369 = vmatprep.subr.bf16.mxu0 0
  %370 = vmatpush2.bf16.msra.mxu0 0
  %371 = vmatprep.subr.bf16.mxu0 0
  %372 = vmatpush2.bf16.msra.mxu0 0
  %373 = vmatprep.subr.bf16.mxu0 0
  %374 = vmatpush2.bf16.msra.mxu0 0
  %375 = vmatprep.subr.bf16.mxu0 0
  %376 = vmatpush2.bf16.msra.mxu0 0
  %377 = vmatprep.subr.bf16.mxu0 0
  %378 = vmatpush2.bf16.msra.mxu0 0
  %379 = vmatprep.subr.bf16.mxu0 0
  %380 = vmatpush2.bf16.msra.mxu0 0
  %381 = vmatprep.subr.bf16.mxu0 0
  %382 = vmatpush2.bf16.msra.mxu0 0
  %383 = vmatprep.mubr.bf16.mxu0 0
  %384 = vmatmul.mubr.bf16.gmra.mxu0 %v252
  %v385 = vpop.f32.mrf.mxu0
  %v386 = vadd.f32 %v88, %v385
  %v387 = vpop.f32.mrf.mxu0
  %v388 = vpop.f32.mrf.mxu0
  %v389 = vadd.f32 %v88, %v388
  %v390 = vpop.f32.mrf.mxu0
  %391 = vmatprep.mubr.bf16.mxu0 0
  %392 = vmatmul.mubr.bf16.gmra.mxu0 %v255
  %v393 = vpop.f32.mrf.mxu0
  %v394 = vadd.f32 %v88, %v393
  %v395 = vpop.f32.mrf.mxu0
  %v396 = vpop.f32.mrf.mxu0
  %v397 = vadd.f32 %v88, %v396
  %v398 = vpop.f32.mrf.mxu0
  %399 = vmatprep.mubr.bf16.mxu0 0
  %400 = vmatmul.mubr.bf16.gmra.mxu0 %v258
  %v401 = vpop.f32.mrf.mxu0
  %v402 = vadd.f32 %v88, %v401
  %v403 = vpop.f32.mrf.mxu0
  %v404 = vpop.f32.mrf.mxu0
  %v405 = vadd.f32 %v88, %v404
  %v406 = vpop.f32.mrf.mxu0
  %407 = vmatprep.mubr.bf16.mxu0 0
  %408 = vmatmul.mubr.bf16.gmra.mxu0 %v261
  %v409 = vpop.f32.mrf.mxu0
  %v410 = vadd.f32 %v88, %v409
  %v411 = vpop.f32.mrf.mxu0
  %v412 = vpop.f32.mrf.mxu0
  %v413 = vadd.f32 %v88, %v412
  %v414 = vpop.f32.mrf.mxu0
  %415 = vmatprep.mubr.bf16.mxu0 0
  %416 = vmatmul.mubr.bf16.gmra.mxu0 %v264
  %v417 = vpop.f32.mrf.mxu0
  %v418 = vadd.f32 %v88, %v417
  %v419 = vpop.f32.mrf.mxu0
  %v420 = vpop.f32.mrf.mxu0
  %v421 = vadd.f32 %v88, %v420
  %v422 = vpop.f32.mrf.mxu0
  %423 = vmatprep.mubr.bf16.mxu0 0
  %424 = vmatmul.mubr.bf16.gmra.mxu0 %v267
  %v425 = vpop.f32.mrf.mxu0
  %v426 = vadd.f32 %v88, %v425
  %v427 = vpop.f32.mrf.mxu0
  %v428 = vpop.f32.mrf.mxu0
  %v429 = vadd.f32 %v88, %v428
  %v430 = vpop.f32.mrf.mxu0
  %431 = vmatprep.mubr.bf16.mxu0 0
  %432 = vmatmul.mubr.bf16.gmra.mxu0 %v270
  %v433 = vpop.f32.mrf.mxu0
  %v434 = vadd.f32 %v88, %v433
  %v435 = vpop.f32.mrf.mxu0
  %v436 = vpop.f32.mrf.mxu0
  %v437 = vadd.f32 %v88, %v436
  %v438 = vpop.f32.mrf.mxu0
  %439 = vmatprep.mubr.bf16.mxu0 0
  %440 = vmatmul.mubr.bf16.gmra.mxu0 %v273
  %v441 = vpop.f32.mrf.mxu0
  %v442 = vadd.f32 %v88, %v441
  %v443 = vpop.f32.mrf.mxu0
  %v444 = vpop.f32.mrf.mxu0
  %v445 = vadd.f32 %v88, %v444
  %v446 = vpop.f32.mrf.mxu0
  %447 = vmatprep.mubr.bf16.mxu0 0
  %448 = vmatmul.mubr.bf16.gmra.mxu0 %v276
  %v449 = vpop.f32.mrf.mxu0
  %v450 = vadd.f32 %v88, %v449
  %v451 = vpop.f32.mrf.mxu0
  %v452 = vpop.f32.mrf.mxu0
  %v453 = vadd.f32 %v88, %v452
  %v454 = vpop.f32.mrf.mxu0
  %455 = vmatprep.mubr.bf16.mxu0 0
  %456 = vmatmul.mubr.bf16.gmra.mxu0 %v279
  %v457 = vpop.f32.mrf.mxu0
  %v458 = vadd.f32 %v88, %v457
  %v459 = vpop.f32.mrf.mxu0
  %v460 = vpop.f32.mrf.mxu0
  %v461 = vadd.f32 %v88, %v460
  %v462 = vpop.f32.mrf.mxu0
  %463 = vmatprep.mubr.bf16.mxu0 0
  %464 = vmatmul.mubr.bf16.gmra.mxu0 %v282
  %v465 = vpop.f32.mrf.mxu0
  %v466 = vadd.f32 %v88, %v465
  %v467 = vpop.f32.mrf.mxu0
  %v468 = vpop.f32.mrf.mxu0
  %v469 = vadd.f32 %v88, %v468
  %v470 = vpop.f32.mrf.mxu0
  %471 = vmatprep.mubr.bf16.mxu0 0
  %472 = vmatmul.mubr.bf16.gmra.mxu0 %v285
  %v473 = vpop.f32.mrf.mxu0
  %v474 = vadd.f32 %v88, %v473
  %v475 = vpop.f32.mrf.mxu0
  %v476 = vpop.f32.mrf.mxu0
  %v477 = vadd.f32 %v88, %v476
  %v478 = vpop.f32.mrf.mxu0
  %479 = vmatprep.mubr.bf16.mxu0 0
  %480 = vmatmul.mubr.bf16.gmra.mxu0 %v288
  %v481 = vpop.f32.mrf.mxu0
  %v482 = vadd.f32 %v88, %v481
  %v483 = vpop.f32.mrf.mxu0
  %v484 = vpop.f32.mrf.mxu0
  %v485 = vadd.f32 %v88, %v484
  %v486 = vpop.f32.mrf.mxu0
  %487 = vmatprep.mubr.bf16.mxu0 0
  %488 = vmatmul.mubr.bf16.gmra.mxu0 %v291
  %v489 = vpop.f32.mrf.mxu0
  %v490 = vadd.f32 %v88, %v489
  %v491 = vpop.f32.mrf.mxu0
  %v492 = vpop.f32.mrf.mxu0
  %v493 = vadd.f32 %v88, %v492
  %v494 = vpop.f32.mrf.mxu0
  %495 = vmatprep.mubr.bf16.mxu0 0
  %496 = vmatmul.mubr.bf16.gmra.mxu0 %v294
  %v497 = vpop.f32.mrf.mxu0
  %v498 = vadd.f32 %v88, %v497
  %v499 = vpop.f32.mrf.mxu0
  %v500 = vpop.f32.mrf.mxu0
  %v501 = vadd.f32 %v88, %v500
  %v502 = vpop.f32.mrf.mxu0
  %503 = vmatprep.mubr.bf16.mxu0 0
  %504 = vmatmul.mubr.bf16.gmra.mxu0 %v297
  %v505 = vpop.f32.mrf.mxu0
  %v506 = vadd.f32 %v88, %v505
  %v507 = vpop.f32.mrf.mxu0
  %v508 = vpop.f32.mrf.mxu0
  %v509 = vadd.f32 %v88, %v508
  %v510 = vpop.f32.mrf.mxu0
  %511 = vmatprep.mubr.bf16.mxu0 0
  %512 = vmatmul.mubr.bf16.gmra.mxu0 %v300
  %v513 = vpop.f32.mrf.mxu0
  %v514 = vadd.f32 %v88, %v513
  %v515 = vpop.f32.mrf.mxu0
  %v516 = vpop.f32.mrf.mxu0
  %v517 = vadd.f32 %v88, %v516
  %v518 = vpop.f32.mrf.mxu0
  %519 = vmatprep.mubr.bf16.mxu0 0
  %520 = vmatmul.mubr.bf16.gmra.mxu0 %v303
  %v521 = vpop.f32.mrf.mxu0
  %v522 = vadd.f32 %v88, %v521
  %v523 = vpop.f32.mrf.mxu0
  %v524 = vpop.f32.mrf.mxu0
  %v525 = vadd.f32 %v88, %v524
  %v526 = vpop.f32.mrf.mxu0
  %527 = vmatprep.mubr.bf16.mxu0 0
  %528 = vmatmul.mubr.bf16.gmra.mxu0 %v306
  %v529 = vpop.f32.mrf.mxu0
  %v530 = vadd.f32 %v88, %v529
  %v531 = vpop.f32.mrf.mxu0
  %v532 = vpop.f32.mrf.mxu0
  %v533 = vadd.f32 %v88, %v532
  %v534 = vpop.f32.mrf.mxu0
  %535 = vmatprep.mubr.bf16.mxu0 0
  %536 = vmatmul.mubr.bf16.gmra.mxu0 %v309
  %v537 = vpop.f32.mrf.mxu0
  %v538 = vadd.f32 %v88, %v537
  %v539 = vpop.f32.mrf.mxu0
  %v540 = vpop.f32.mrf.mxu0
  %v541 = vadd.f32 %v88, %v540
  %v542 = vpop.f32.mrf.mxu0
  %543 = vmatprep.mubr.bf16.mxu0 0
  %544 = vmatmul.mubr.bf16.gmra.mxu0 %v312
  %v545 = vpop.f32.mrf.mxu0
  %v546 = vadd.f32 %v88, %v545
  %v547 = vpop.f32.mrf.mxu0
  %v548 = vpop.f32.mrf.mxu0
  %v549 = vadd.f32 %v88, %v548
  %v550 = vpop.f32.mrf.mxu0
  %551 = vmatprep.mubr.bf16.mxu0 0
  %552 = vmatmul.mubr.bf16.gmra.mxu0 %v315
  %v553 = vpop.f32.mrf.mxu0
  %v554 = vadd.f32 %v88, %v553
  %v555 = vpop.f32.mrf.mxu0
  %v556 = vpop.f32.mrf.mxu0
  %v557 = vadd.f32 %v88, %v556
  %v558 = vpop.f32.mrf.mxu0
  %559 = vmatprep.mubr.bf16.mxu0 0
  %560 = vmatmul.mubr.bf16.gmra.mxu0 %v318
  %v561 = vpop.f32.mrf.mxu0
  %v562 = vadd.f32 %v88, %v561
  %v563 = vpop.f32.mrf.mxu0
  %v564 = vpop.f32.mrf.mxu0
  %v565 = vadd.f32 %v88, %v564
  %v566 = vpop.f32.mrf.mxu0
  %567 = vmatprep.mubr.bf16.mxu0 0
  %568 = vmatmul.mubr.bf16.gmra.mxu0 %v321
  %v569 = vpop.f32.mrf.mxu0
  %v570 = vadd.f32 %v88, %v569
  %v571 = vpop.f32.mrf.mxu0
  %v572 = vpop.f32.mrf.mxu0
  %v573 = vadd.f32 %v88, %v572
  %v574 = vpop.f32.mrf.mxu0
  %575 = vmatprep.mubr.bf16.mxu0 0
  %576 = vmatmul.mubr.bf16.gmra.mxu0 %v324
  %v577 = vpop.f32.mrf.mxu0
  %v578 = vadd.f32 %v88, %v577
  %v579 = vpop.f32.mrf.mxu0
  %v580 = vpop.f32.mrf.mxu0
  %v581 = vadd.f32 %v88, %v580
  %v582 = vpop.f32.mrf.mxu0
  %583 = vmatprep.mubr.bf16.mxu0 0
  %584 = vmatmul.mubr.bf16.gmra.mxu0 %v327
  %v585 = vpop.f32.mrf.mxu0
  %v586 = vadd.f32 %v88, %v585
  %v587 = vpop.f32.mrf.mxu0
  %v588 = vpop.f32.mrf.mxu0
  %v589 = vadd.f32 %v88, %v588
  %v590 = vpop.f32.mrf.mxu0
  %591 = vmatprep.mubr.bf16.mxu0 0
  %592 = vmatmul.mubr.bf16.gmra.mxu0 %v330
  %v593 = vpop.f32.mrf.mxu0
  %v594 = vadd.f32 %v88, %v593
  %v595 = vpop.f32.mrf.mxu0
  %v596 = vpop.f32.mrf.mxu0
  %v597 = vadd.f32 %v88, %v596
  %v598 = vpop.f32.mrf.mxu0
  %599 = vmatprep.mubr.bf16.mxu0 0
  %600 = vmatmul.mubr.bf16.gmra.mxu0 %v333
  %v601 = vpop.f32.mrf.mxu0
  %v602 = vadd.f32 %v88, %v601
  %v603 = vpop.f32.mrf.mxu0
  %v604 = vpop.f32.mrf.mxu0
  %v605 = vadd.f32 %v88, %v604
  %v606 = vpop.f32.mrf.mxu0
  %607 = vmatprep.mubr.bf16.mxu0 0
  %608 = vmatmul.mubr.bf16.gmra.mxu0 %v336
  %v609 = vpop.f32.mrf.mxu0
  %v610 = vadd.f32 %v88, %v609
  %v611 = vpop.f32.mrf.mxu0
  %v612 = vpop.f32.mrf.mxu0
  %v613 = vadd.f32 %v88, %v612
  %v614 = vpop.f32.mrf.mxu0
  %615 = vmatprep.mubr.bf16.mxu0 0
  %616 = vmatmul.mubr.bf16.gmra.mxu0 %v339
  %v617 = vpop.f32.mrf.mxu0
  %v618 = vadd.f32 %v88, %v617
  %v619 = vpop.f32.mrf.mxu0
  %v620 = vpop.f32.mrf.mxu0
  %v621 = vadd.f32 %v88, %v620
  %v622 = vpop.f32.mrf.mxu0
  %623 = vmatprep.mubr.bf16.mxu0 0
  %624 = vmatmul.mubr.bf16.gmra.mxu0 %v342
  %v625 = vpop.f32.mrf.mxu0
  %v626 = vadd.f32 %v88, %v625
  %v627 = vpop.f32.mrf.mxu0
  %v628 = vpop.f32.mrf.mxu0
  %v629 = vadd.f32 %v88, %v628
  %v630 = vpop.f32.mrf.mxu0
  %631 = vmatprep.mubr.bf16.mxu0 0
  %632 = vmatmul.mubr.bf16.gmra.mxu0 %v345
  %v633 = vpop.f32.mrf.mxu0
  %v634 = vadd.f32 %v88, %v633
  %v635 = vpop.f32.mrf.mxu0
  %v636 = vpop.f32.mrf.mxu0
  %v637 = vadd.f32 %v88, %v636
  %v638 = vpop.f32.mrf.mxu0
  %639 = vdwg.mxu0
  %v640 = vld [vmem:[%s3] sm:$0x1]
  %vm641 = vcmp.gt.f32.partialorder %v640, 0.0
  %v642 = vmax.f32 %v386, 0.0
  %v643 = vmax.f32 %v389, 0.0
  %v644 = vmax.f32 %v394, 0.0
  %v645 = vmax.f32 %v397, 0.0
  %v646 = vmax.f32 %v402, 0.0
  %v647 = vmax.f32 %v405, 0.0
  %v648 = vmax.f32 %v410, 0.0
  %v649 = vmax.f32 %v413, 0.0
  %v650 = vmax.f32 %v418, 0.0
  %v651 = vmax.f32 %v421, 0.0
  %v652 = vmax.f32 %v426, 0.0
  %v653 = vmax.f32 %v429, 0.0
  %v654 = vmax.f32 %v434, 0.0
  %v655 = vmax.f32 %v437, 0.0
  %v656 = vmax.f32 %v442, 0.0
  %v657 = vmax.f32 %v445, 0.0
  %v658 = vmax.f32 %v450, 0.0
  %v659 = vmax.f32 %v453, 0.0
  %v660 = vmax.f32 %v458, 0.0
  %v661 = vmax.f32 %v461, 0.0
  %v662 = vmax.f32 %v466, 0.0
  %v663 = vmax.f32 %v469, 0.0
  %v664 = vmax.f32 %v474, 0.0
  %v665 = vmax.f32 %v477, 0.0
  %v666 = vmax.f32 %v482, 0.0
  %v667 = vmax.f32 %v485, 0.0
  %v668 = vmax.f32 %v490, 0.0
  %v669 = vmax.f32 %v493, 0.0
  %v670 = vmax.f32 %v498, 0.0
  %v671 = vmax.f32 %v501, 0.0
  %v672 = vmax.f32 %v506, 0.0
  %v673 = vmax.f32 %v509, 0.0
  %v674 = vmax.f32 %v514, 0.0
  %v675 = vmax.f32 %v517, 0.0
  %v676 = vmax.f32 %v522, 0.0
  %v677 = vmax.f32 %v525, 0.0
  %v678 = vmax.f32 %v530, 0.0
  %v679 = vmax.f32 %v533, 0.0
  %v680 = vmax.f32 %v538, 0.0
  %v681 = vmax.f32 %v541, 0.0
  %v682 = vmax.f32 %v546, 0.0
  %v683 = vmax.f32 %v549, 0.0
  %v684 = vmax.f32 %v554, 0.0
  %v685 = vmax.f32 %v557, 0.0
  %v686 = vmax.f32 %v562, 0.0
  %v687 = vmax.f32 %v565, 0.0
  %v688 = vmax.f32 %v570, 0.0
  %v689 = vmax.f32 %v573, 0.0
  %v690 = vmax.f32 %v578, 0.0
  %v691 = vmax.f32 %v581, 0.0
  %v692 = vmax.f32 %v586, 0.0
  %v693 = vmax.f32 %v589, 0.0
  %v694 = vmax.f32 %v594, 0.0
  %v695 = vmax.f32 %v597, 0.0
  %v696 = vmax.f32 %v602, 0.0
  %v697 = vmax.f32 %v605, 0.0
  %v698 = vmax.f32 %v610, 0.0
  %v699 = vmax.f32 %v613, 0.0
  %v700 = vmax.f32 %v618, 0.0
  %v701 = vmax.f32 %v621, 0.0
  %v702 = vmax.f32 %v626, 0.0
  %v703 = vmax.f32 %v629, 0.0
  %v704 = vmax.f32 %v634, 0.0
  %v705 = vmax.f32 %v637, 0.0
  %v706 = vsel %vm641, 1, 0
  %v707 = vlaneseq
  %v708 = vshrl.u32 %v707, 7
  %v709 = vsub.s32 0, %v708
  %v710 = vrot.slane %v706, %v709
  %vm711 = vcmp.eq.s32.totalorder %v710, 1
  %v712 = vsel %vm711, %v642, %v386
  %v713 = vsel %vm711, %v643, %v389
  %v714 = vsel %vm711, %v644, %v394
  %v715 = vsel %vm711, %v645, %v397
  %v716 = vsel %vm711, %v646, %v402
  %v717 = vsel %vm711, %v647, %v405
  %v718 = vsel %vm711, %v648, %v410
  %v719 = vsel %vm711, %v649, %v413
  %v720 = vsel %vm711, %v650, %v418
  %v721 = vsel %vm711, %v651, %v421
  %v722 = vsel %vm711, %v652, %v426
  %v723 = vsel %vm711, %v653, %v429
  %v724 = vsel %vm711, %v654, %v434
  %v725 = vsel %vm711, %v655, %v437
  %v726 = vsel %vm711, %v656, %v442
  %v727 = vsel %vm711, %v657, %v445
  %v728 = vsel %vm711, %v658, %v450
  %v729 = vsel %vm711, %v659, %v453
  %v730 = vsel %vm711, %v660, %v458
  %v731 = vsel %vm711, %v661, %v461
  %v732 = vsel %vm711, %v662, %v466
  %v733 = vsel %vm711, %v663, %v469
  %v734 = vsel %vm711, %v664, %v474
  %v735 = vsel %vm711, %v665, %v477
  %v736 = vsel %vm711, %v666, %v482
  %v737 = vsel %vm711, %v667, %v485
  %v738 = vsel %vm711, %v668, %v490
  %v739 = vsel %vm711, %v669, %v493
  %v740 = vsel %vm711, %v670, %v498
  %v741 = vsel %vm711, %v671, %v501
  %v742 = vsel %vm711, %v672, %v506
  %v743 = vsel %vm711, %v673, %v509
  %v744 = vsel %vm711, %v674, %v514
  %v745 = vsel %vm711, %v675, %v517
  %v746 = vsel %vm711, %v676, %v522
  %v747 = vsel %vm711, %v677, %v525
  %v748 = vsel %vm711, %v678, %v530
  %v749 = vsel %vm711, %v679, %v533
  %v750 = vsel %vm711, %v680, %v538
  %v751 = vsel %vm711, %v681, %v541
  %v752 = vsel %vm711, %v682, %v546
  %v753 = vsel %vm711, %v683, %v549
  %v754 = vsel %vm711, %v684, %v554
  %v755 = vsel %vm711, %v685, %v557
  %v756 = vsel %vm711, %v686, %v562
  %v757 = vsel %vm711, %v687, %v565
  %v758 = vsel %vm711, %v688, %v570
  %v759 = vsel %vm711, %v689, %v573
  %v760 = vsel %vm711, %v690, %v578
  %v761 = vsel %vm711, %v691, %v581
  %v762 = vsel %vm711, %v692, %v586
  %v763 = vsel %vm711, %v693, %v589
  %v764 = vsel %vm711, %v694, %v594
  %v765 = vsel %vm711, %v695, %v597
  %v766 = vsel %vm711, %v696, %v602
  %v767 = vsel %vm711, %v697, %v605
  %v768 = vsel %vm711, %v698, %v610
  %v769 = vsel %vm711, %v699, %v613
  %v770 = vsel %vm711, %v700, %v618
  %v771 = vsel %vm711, %v701, %v621
  %v772 = vsel %vm711, %v702, %v626
  %v773 = vsel %vm711, %v703, %v629
  %v774 = vsel %vm711, %v704, %v634
  %v775 = vsel %vm711, %v705, %v637
  %v776 = vpack.c.bf16 %v713, %v712
  %v777 = vpack.c.bf16 %v715, %v714
  %v778 = vpack.c.bf16 %v717, %v716
  %v779 = vpack.c.bf16 %v719, %v718
  %v780 = vpack.c.bf16 %v721, %v720
  %v781 = vpack.c.bf16 %v723, %v722
  %v782 = vpack.c.bf16 %v725, %v724
  %v783 = vpack.c.bf16 %v727, %v726
  %v784 = vpack.c.bf16 %v729, %v728
  %v785 = vpack.c.bf16 %v731, %v730
  %v786 = vpack.c.bf16 %v733, %v732
  %v787 = vpack.c.bf16 %v735, %v734
  %v788 = vpack.c.bf16 %v737, %v736
  %v789 = vpack.c.bf16 %v739, %v738
  %v790 = vpack.c.bf16 %v741, %v740
  %v791 = vpack.c.bf16 %v743, %v742
  %v792 = vpack.c.bf16 %v745, %v744
  %v793 = vpack.c.bf16 %v747, %v746
  %v794 = vpack.c.bf16 %v749, %v748
  %v795 = vpack.c.bf16 %v751, %v750
  %v796 = vpack.c.bf16 %v753, %v752
  %v797 = vpack.c.bf16 %v755, %v754
  %v798 = vpack.c.bf16 %v757, %v756
  %v799 = vpack.c.bf16 %v759, %v758
  %v800 = vpack.c.bf16 %v761, %v760
  %v801 = vpack.c.bf16 %v763, %v762
  %v802 = vpack.c.bf16 %v765, %v764
  %v803 = vpack.c.bf16 %v767, %v766
  %v804 = vpack.c.bf16 %v769, %v768
  %v805 = vpack.c.bf16 %v771, %v770
  %v806 = vpack.c.bf16 %v773, %v772
  %v807 = vpack.c.bf16 %v775, %v774
  %v840 = vunpack.c.l.b16 %v776
  %v841 = vunpack.c.h.b16 %v776
  %v842 = vunpack.c.l.b16 %v777
  %v843 = vunpack.c.h.b16 %v777
  %v844 = vunpack.c.l.b16 %v778
  %v845 = vunpack.c.h.b16 %v778
  %v846 = vunpack.c.l.b16 %v779
  %v847 = vunpack.c.h.b16 %v779
  %v848 = vunpack.c.l.b16 %v780
  %v849 = vunpack.c.h.b16 %v780
  %v850 = vunpack.c.l.b16 %v781
  %v851 = vunpack.c.h.b16 %v781
  %v852 = vunpack.c.l.b16 %v782
  %v853 = vunpack.c.h.b16 %v782
  %v854 = vunpack.c.l.b16 %v783
  %v855 = vunpack.c.h.b16 %v783
  %v856 = vunpack.c.l.b16 %v784
  %v857 = vunpack.c.h.b16 %v784
  %v858 = vunpack.c.l.b16 %v785
  %v859 = vunpack.c.h.b16 %v785
  %v860 = vunpack.c.l.b16 %v786
  %v861 = vunpack.c.h.b16 %v786
  %v862 = vunpack.c.l.b16 %v787
  %v863 = vunpack.c.h.b16 %v787
  %v864 = vunpack.c.l.b16 %v788
  %v865 = vunpack.c.h.b16 %v788
  %v866 = vunpack.c.l.b16 %v789
  %v867 = vunpack.c.h.b16 %v789
  %v868 = vunpack.c.l.b16 %v790
  %v869 = vunpack.c.h.b16 %v790
  %v870 = vunpack.c.l.b16 %v791
  %v871 = vunpack.c.h.b16 %v791
  %v872 = vunpack.c.l.b16 %v792
  %v873 = vunpack.c.h.b16 %v792
  %v874 = vunpack.c.l.b16 %v793
  %v875 = vunpack.c.h.b16 %v793
  %v876 = vunpack.c.l.b16 %v794
  %v877 = vunpack.c.h.b16 %v794
  %v878 = vunpack.c.l.b16 %v795
  %v879 = vunpack.c.h.b16 %v795
  %v880 = vunpack.c.l.b16 %v796
  %v881 = vunpack.c.h.b16 %v796
  %v882 = vunpack.c.l.b16 %v797
  %v883 = vunpack.c.h.b16 %v797
  %v884 = vunpack.c.l.b16 %v798
  %v885 = vunpack.c.h.b16 %v798
  %v886 = vunpack.c.l.b16 %v799
  %v887 = vunpack.c.h.b16 %v799
  %v888 = vunpack.c.l.b16 %v800
  %v889 = vunpack.c.h.b16 %v800
  %v890 = vunpack.c.l.b16 %v801
  %v891 = vunpack.c.h.b16 %v801
  %v892 = vunpack.c.l.b16 %v802
  %v893 = vunpack.c.h.b16 %v802
  %v894 = vunpack.c.l.b16 %v803
  %v895 = vunpack.c.h.b16 %v803
  %v896 = vunpack.c.l.b16 %v804
  %v897 = vunpack.c.h.b16 %v804
  %v898 = vunpack.c.l.b16 %v805
  %v899 = vunpack.c.h.b16 %v805
  %v900 = vunpack.c.l.b16 %v806
  %v901 = vunpack.c.h.b16 %v806
  %v902 = vunpack.c.l.b16 %v807
  %v903 = vunpack.c.h.b16 %v807
  %v904 = vpack.c.b16 %v840, %v840
  %v905 = vpack.c.b16 %v841, %v841
  %v906 = vpack.c.b16 %v842, %v842
  %v907 = vpack.c.b16 %v843, %v843
  %v908 = vpack.c.b16 %v844, %v844
  %v909 = vpack.c.b16 %v845, %v845
  %v910 = vpack.c.b16 %v846, %v846
  %v911 = vpack.c.b16 %v847, %v847
  %v912 = vpack.c.b16 %v848, %v848
  %v913 = vpack.c.b16 %v849, %v849
  %v914 = vpack.c.b16 %v850, %v850
  %v915 = vpack.c.b16 %v851, %v851
  %v916 = vpack.c.b16 %v852, %v852
  %v917 = vpack.c.b16 %v853, %v853
  %v918 = vpack.c.b16 %v854, %v854
  %v919 = vpack.c.b16 %v855, %v855
  %v920 = vpack.c.b16 %v856, %v856
  %v921 = vpack.c.b16 %v857, %v857
  %v922 = vpack.c.b16 %v858, %v858
  %v923 = vpack.c.b16 %v859, %v859
  %v924 = vpack.c.b16 %v860, %v860
  %v925 = vpack.c.b16 %v861, %v861
  %v926 = vpack.c.b16 %v862, %v862
  %v927 = vpack.c.b16 %v863, %v863
  %v928 = vpack.c.b16 %v864, %v864
  %v929 = vpack.c.b16 %v865, %v865
  %v930 = vpack.c.b16 %v866, %v866
  %v931 = vpack.c.b16 %v867, %v867
  %v932 = vpack.c.b16 %v868, %v868
  %v933 = vpack.c.b16 %v869, %v869
  %v934 = vpack.c.b16 %v870, %v870
  %v935 = vpack.c.b16 %v871, %v871
  %v936 = vpack.c.b16 %v872, %v872
  %v937 = vpack.c.b16 %v873, %v873
  %v938 = vpack.c.b16 %v874, %v874
  %v939 = vpack.c.b16 %v875, %v875
  %v940 = vpack.c.b16 %v876, %v876
  %v941 = vpack.c.b16 %v877, %v877
  %v942 = vpack.c.b16 %v878, %v878
  %v943 = vpack.c.b16 %v879, %v879
  %v944 = vpack.c.b16 %v880, %v880
  %v945 = vpack.c.b16 %v881, %v881
  %v946 = vpack.c.b16 %v882, %v882
  %v947 = vpack.c.b16 %v883, %v883
  %v948 = vpack.c.b16 %v884, %v884
  %v949 = vpack.c.b16 %v885, %v885
  %v950 = vpack.c.b16 %v886, %v886
  %v951 = vpack.c.b16 %v887, %v887
  %v952 = vpack.c.b16 %v888, %v888
  %v953 = vpack.c.b16 %v889, %v889
  %v954 = vpack.c.b16 %v890, %v890
  %v955 = vpack.c.b16 %v891, %v891
  %v956 = vpack.c.b16 %v892, %v892
  %v957 = vpack.c.b16 %v893, %v893
  %v958 = vpack.c.b16 %v894, %v894
  %v959 = vpack.c.b16 %v895, %v895
  %v960 = vpack.c.b16 %v896, %v896
  %v961 = vpack.c.b16 %v897, %v897
  %v962 = vpack.c.b16 %v898, %v898
  %v963 = vpack.c.b16 %v899, %v899
  %v964 = vpack.c.b16 %v900, %v900
  %v965 = vpack.c.b16 %v901, %v901
  %v966 = vpack.c.b16 %v902, %v902
  %v967 = vpack.c.b16 %v903, %v903
  %1032 = vst [vmem:[%s4] sm:$0xf] %v904
  %1033 = vst [vmem:[%s4 + $0x4] sm:$0xf] %v905
  %1034 = vst [vmem:[%s4 + $0x8] sm:$0xf] %v906
  %1035 = vst [vmem:[%s4 + $0xc] sm:$0xf] %v907
  %1036 = vst [vmem:[%s4 + $0x10] sm:$0xf] %v908
  %1037 = vst [vmem:[%s4 + $0x14] sm:$0xf] %v909
  %1038 = vst [vmem:[%s4 + $0x18] sm:$0xf] %v910
  %1039 = vst [vmem:[%s4 + $0x1c] sm:$0xf] %v911
  %1040 = vst [vmem:[%s4 + $0x20] sm:$0xf] %v912
  %1041 = vst [vmem:[%s4 + $0x24] sm:$0xf] %v913
  %1042 = vst [vmem:[%s4 + $0x28] sm:$0xf] %v914
  %1043 = vst [vmem:[%s4 + $0x2c] sm:$0xf] %v915
  %1044 = vst [vmem:[%s4 + $0x30] sm:$0xf] %v916
  %1045 = vst [vmem:[%s4 + $0x34] sm:$0xf] %v917
  %1046 = vst [vmem:[%s4 + $0x38] sm:$0xf] %v918
  %1047 = vst [vmem:[%s4 + $0x3c] sm:$0xf] %v919
  %1048 = vst [vmem:[%s4 + $0x40] sm:$0xf] %v920
  %1049 = vst [vmem:[%s4 + $0x44] sm:$0xf] %v921
  %1050 = vst [vmem:[%s4 + $0x48] sm:$0xf] %v922
  %1051 = vst [vmem:[%s4 + $0x4c] sm:$0xf] %v923
  %1052 = vst [vmem:[%s4 + $0x50] sm:$0xf] %v924
  %1053 = vst [vmem:[%s4 + $0x54] sm:$0xf] %v925
  %1054 = vst [vmem:[%s4 + $0x58] sm:$0xf] %v926
  %1055 = vst [vmem:[%s4 + $0x5c] sm:$0xf] %v927
  %1056 = vst [vmem:[%s4 + $0x60] sm:$0xf] %v928
  %1057 = vst [vmem:[%s4 + $0x64] sm:$0xf] %v929
  %1058 = vst [vmem:[%s4 + $0x68] sm:$0xf] %v930
  %1059 = vst [vmem:[%s4 + $0x6c] sm:$0xf] %v931
  %1060 = vst [vmem:[%s4 + $0x70] sm:$0xf] %v932
  %1061 = vst [vmem:[%s4 + $0x74] sm:$0xf] %v933
  %1062 = vst [vmem:[%s4 + $0x78] sm:$0xf] %v934
  %1063 = vst [vmem:[%s4 + $0x7c] sm:$0xf] %v935
  %1064 = vst [vmem:[%s4 + $0x80] sm:$0xf] %v936
  %1065 = vst [vmem:[%s4 + $0x84] sm:$0xf] %v937
  %1066 = vst [vmem:[%s4 + $0x88] sm:$0xf] %v938
  %1067 = vst [vmem:[%s4 + $0x8c] sm:$0xf] %v939
  %1068 = vst [vmem:[%s4 + $0x90] sm:$0xf] %v940
  %1069 = vst [vmem:[%s4 + $0x94] sm:$0xf] %v941
  %1070 = vst [vmem:[%s4 + $0x98] sm:$0xf] %v942
  %1071 = vst [vmem:[%s4 + $0x9c] sm:$0xf] %v943
  %1072 = vst [vmem:[%s4 + $0xa0] sm:$0xf] %v944
  %1073 = vst [vmem:[%s4 + $0xa4] sm:$0xf] %v945
  %1074 = vst [vmem:[%s4 + $0xa8] sm:$0xf] %v946
  %1075 = vst [vmem:[%s4 + $0xac] sm:$0xf] %v947
  %1076 = vst [vmem:[%s4 + $0xb0] sm:$0xf] %v948
  %1077 = vst [vmem:[%s4 + $0xb4] sm:$0xf] %v949
  %1078 = vst [vmem:[%s4 + $0xb8] sm:$0xf] %v950
  %1079 = vst [vmem:[%s4 + $0xbc] sm:$0xf] %v951
  %1080 = vst [vmem:[%s4 + $0xc0] sm:$0xf] %v952
  %1081 = vst [vmem:[%s4 + $0xc4] sm:$0xf] %v953
  %1082 = vst [vmem:[%s4 + $0xc8] sm:$0xf] %v954
  %1083 = vst [vmem:[%s4 + $0xcc] sm:$0xf] %v955
  %1084 = vst [vmem:[%s4 + $0xd0] sm:$0xf] %v956
  %1085 = vst [vmem:[%s4 + $0xd4] sm:$0xf] %v957
  %1086 = vst [vmem:[%s4 + $0xd8] sm:$0xf] %v958
  %1087 = vst [vmem:[%s4 + $0xdc] sm:$0xf] %v959
  %1088 = vst [vmem:[%s4 + $0xe0] sm:$0xf] %v960
  %1089 = vst [vmem:[%s4 + $0xe4] sm:$0xf] %v961
  %1090 = vst [vmem:[%s4 + $0xe8] sm:$0xf] %v962
  %1091 = vst [vmem:[%s4 + $0xec] sm:$0xf] %v963
  %1092 = vst [vmem:[%s4 + $0xf0] sm:$0xf] %v964
  %1093 = vst [vmem:[%s4 + $0xf4] sm:$0xf] %v965
  %1094 = vst [vmem:[%s4 + $0xf8] sm:$0xf] %v966
  %1095 = vst [vmem:[%s4 + $0xfc] sm:$0xf] %v967
  // Predicated region
  $region18: #{inception_c_forward.4} parent=0 // pred_check
    _
  $region19: #{inception_c_forward.4} parent=0 // pred_check_branch
    %1097 = sbr.rel (0) target = $region21
  $region20: #{inception_c_forward.4} parent=0 // pred_region
    _
  $region21: #{inception_c_forward.4} parent=0 // pred_fallthru
    _
  // Predicated region
  $region22: #{inception_c_forward.4} parent=0 // pred_check
    _
  $region23: #{inception_c_forward.4} parent=0 // pred_check_branch
    %1099 = sbr.rel (0) target = $region25
  $region24: #{inception_c_forward.4} parent=0 // pred_region
    _
  $region25: #{inception_c_forward.4} parent=0 // pred_fallthru
    _

// kernel: inception_c_forward.5
$region0: #{inception_c_forward.5}
  #allocation0 [shape = 'u32[]', space=smem, size = 0x4, offset = 0x4, fixed_abs, tag = 'smem constant byte address 0x4 - core index']
  #allocation1 [shape = 'u32[144,128]{1,0:T(1,128)}', space=vmem, size = 0x12000, scoped, tag = 'internal scratch']
  %s0 = inlined_call_operand.vmem [shape: bf16[2,328,4], index: 0, kind: input, shape index: {}]
  %s1 = inlined_call_operand.vmem [shape: bf16[3,4,8], index: 1, kind: input, shape index: {}]
  %s2 = inlined_call_operand.vmem [shape: bf16[3,4,8], index: 2, kind: input, shape index: {}]
  %s3 = inlined_call_operand.vmem [shape: f32[1,8], index: 3, kind: input, shape index: {}]
  %s4 = inlined_call_operand.vmem [shape: f32[1,8], index: 4, kind: input, shape index: {}]
  %s5 = inlined_call_operand.vmem [shape: f32[2,288,16], index: 5, kind: output, shape index: {}]
  %s6 = sld [smem:[#allocation0]]
  $region53: #{inception_c_forward.5} parent=0
    _
  %s8 = ssub.s32 1, %s6
  %s9 = scalar_select 0, %s8, %s6
  loop: start=0, step=1, limit=4
  $region2: #{inception_c_forward.5} parent=0 // loop_pre_header
    _
  $region3: #{inception_c_forward.5} parent=0 // loop_header
    %s11 = sphi 0, %s15
    %p12 = scmp.ge.s32.totalorder %s11, 4
    %s21 = sphi 0, %s23
    %s24 = sphi 0, %s21
    %s25 = sphi 0, %s24
    %s41 = sphi 0, %s25
    %s45 = sphi 0, %s45
    %s47 = sphi 0, %s45
    %s48 = sphi 0, %s47
    %s62 = sphi 0, %s48
    %s66 = sphi 0, %s66
    %s68 = sphi 0, %s66
    %s69 = sphi 0, %s68
    %s83 = sphi 0, %s69
    %s87 = sphi 0, %s87
    %s89 = sphi 0, %s87
    %s90 = sphi 0, %s89
    %s104 = sphi 0, %s90
    %s108 = sphi 0, %s108
    %s110 = sphi 0, %s108
    %s111 = sphi 0, %s110
    %s125 = sphi 0, %s111
    %s131 = sphi 0, %s133
    %s134 = sphi 0, %s131
    %s135 = sphi 0, %s134
    %s151 = sphi 0, %s135
  $region4: #{inception_c_forward.5} parent=0 // loop_header_branch
    %14 = sbr.rel (%p12) target = $region8
  $region5: #{inception_c_forward.5} parent=0 // loop_body
    %s16 = ssub.s32 %s11, 1
    %s17 = ssub.s32 %s11, 2
    %s18 = sadd.s32 %s11, 1
    %s19 = ssub.s32 %s11, %s18
    %p20 = scmp.eq.s32.totalorder %s19, 0
    %s22 = sadd.s32 %s21, 1
    %s23 = scalar_select %p20, %s21, %s22
    %p26 = pneg %p20
    %p27 = scmp.eq.s32.totalorder %s11, 1
    %p28 = por %p26, %p27
    %p29 = scmp.ne.s32.totalorder %s21, %s24
    %p30 = scmp.eq.s32.totalorder %s11, 0
    %p31 = por %p29, %p30
    %p32 = scmp.ne.s32.totalorder %s21, %s24
    %p33 = scmp.eq.s32.totalorder %s16, 1
    %p34 = por %p32, %p33
    %p35 = scmp.ne.s32.totalorder %s24, %s25
    %p36 = scmp.eq.s32.totalorder %s16, 0
    %p37 = por %p35, %p36
    %p38 = scmp.ne.s32.totalorder %s24, %s25
    %p39 = scmp.eq.s32.totalorder %s17, 1
    %p40 = por %p38, %p39
    %p42 = scmp.ne.s32.totalorder %s25, %s41
    %p43 = scmp.eq.s32.totalorder %s17, 0
    %p44 = por %p42, %p43
    %s46 = sadd.s32 %s45, 1
    %p49 = scmp.eq.s32.totalorder %s11, 1
    %p50 = scmp.ne.s32.totalorder %s45, %s47
    %p51 = scmp.eq.s32.totalorder %s11, 0
    %p52 = por %p50, %p51
    %p53 = scmp.ne.s32.totalorder %s45, %s47
    %p54 = scmp.eq.s32.totalorder %s16, 1
    %p55 = por %p53, %p54
    %p56 = scmp.ne.s32.totalorder %s47, %s48
    %p57 = scmp.eq.s32.totalorder %s16, 0
    %p58 = por %p56, %p57
    %p59 = scmp.ne.s32.totalorder %s47, %s48
    %p60 = scmp.eq.s32.totalorder %s17, 1
    %p61 = por %p59, %p60
    %p63 = scmp.ne.s32.totalorder %s48, %s62
    %p64 = scmp.eq.s32.totalorder %s17, 0
    %p65 = por %p63, %p64
    %s67 = sadd.s32 %s66, 1
    %p70 = scmp.eq.s32.totalorder %s11, 1
    %p71 = scmp.ne.s32.totalorder %s66, %s68
    %p72 = scmp.eq.s32.totalorder %s11, 0
    %p73 = por %p71, %p72
    %p74 = scmp.ne.s32.totalorder %s66, %s68
    %p75 = scmp.eq.s32.totalorder %s16, 1
    %p76 = por %p74, %p75
    %p77 = scmp.ne.s32.totalorder %s68, %s69
    %p78 = scmp.eq.s32.totalorder %s16, 0
    %p79 = por %p77, %p78
    %p80 = scmp.ne.s32.totalorder %s68, %s69
    %p81 = scmp.eq.s32.totalorder %s17, 1
    %p82 = por %p80, %p81
    %p84 = scmp.ne.s32.totalorder %s69, %s83
    %p85 = scmp.eq.s32.totalorder %s17, 0
    %p86 = por %p84, %p85
    %s88 = sadd.s32 %s87, 1
    %p91 = scmp.eq.s32.totalorder %s11, 1
    %p92 = scmp.ne.s32.totalorder %s87, %s89
    %p93 = scmp.eq.s32.totalorder %s11, 0
    %p94 = por %p92, %p93
    %p95 = scmp.ne.s32.totalorder %s87, %s89
    %p96 = scmp.eq.s32.totalorder %s16, 1
    %p97 = por %p95, %p96
    %p98 = scmp.ne.s32.totalorder %s89, %s90
    %p99 = scmp.eq.s32.totalorder %s16, 0
    %p100 = por %p98, %p99
    %p101 = scmp.ne.s32.totalorder %s89, %s90
    %p102 = scmp.eq.s32.totalorder %s17, 1
    %p103 = por %p101, %p102
    %p105 = scmp.ne.s32.totalorder %s90, %s104
    %p106 = scmp.eq.s32.totalorder %s17, 0
    %p107 = por %p105, %p106
    %s109 = sadd.s32 %s108, 1
    %p112 = scmp.eq.s32.totalorder %s11, 1
    %p113 = scmp.ne.s32.totalorder %s108, %s110
    %p114 = scmp.eq.s32.totalorder %s11, 0
    %p115 = por %p113, %p114
    %p116 = scmp.ne.s32.totalorder %s108, %s110
    %p117 = scmp.eq.s32.totalorder %s16, 1
    %p118 = por %p116, %p117
    %p119 = scmp.ne.s32.totalorder %s110, %s111
    %p120 = scmp.eq.s32.totalorder %s16, 0
    %p121 = por %p119, %p120
    %p122 = scmp.ne.s32.totalorder %s110, %s111
    %p123 = scmp.eq.s32.totalorder %s17, 1
    %p124 = por %p122, %p123
    %p126 = scmp.ne.s32.totalorder %s111, %s125
    %p127 = scmp.eq.s32.totalorder %s17, 0
    %p128 = por %p126, %p127
    %s129 = ssub.s32 %s11, %s18
    %p130 = scmp.eq.s32.totalorder %s129, 0
    %s132 = sadd.s32 %s131, 1
    %s133 = scalar_select %p130, %s131, %s132
    %p136 = pneg %p130
    %p137 = scmp.eq.s32.totalorder %s11, 1
    %p138 = por %p136, %p137
    %p139 = scmp.ne.s32.totalorder %s131, %s134
    %p140 = scmp.eq.s32.totalorder %s11, 0
    %p141 = por %p139, %p140
    %p142 = scmp.ne.s32.totalorder %s131, %s134
    %p143 = scmp.eq.s32.totalorder %s16, 1
    %p144 = por %p142, %p143
    %p145 = scmp.ne.s32.totalorder %s134, %s135
    %p146 = scmp.eq.s32.totalorder %s16, 0
    %p147 = por %p145, %p146
    %p148 = scmp.ne.s32.totalorder %s134, %s135
    %p149 = scmp.eq.s32.totalorder %s17, 1
    %p150 = por %p148, %p149
    %p152 = scmp.ne.s32.totalorder %s135, %s151
    %p153 = scmp.eq.s32.totalorder %s17, 0
    %p154 = por %p152, %p153
    %p155 = scmp.le.s32.totalorder 1, %s11
    %p156 = scmp.lt.s32.totalorder %s11, 3
    %p157 = pnand %p155, %p156
    %p158 = pneg %p157
    // Predicated region
    $region9: #{inception_c_forward.5} parent=5 // pred_check
      _
    $region10: #{inception_c_forward.5} parent=5 // pred_check_branch
      %160 = sbr.rel (%p157) target = $region12
    $region11: #{inception_c_forward.5} parent=5 // pred_region
      %s161 = ssub.s32 %s11, 1
      // Predicated region
      $region13: #{inception_c_forward.5} parent=11 // pred_check
        %p162 = pneg %p58
      $region14: #{inception_c_forward.5} parent=11 // pred_check_branch
        %164 = sbr.rel (%p162) target = $region16
      $region15: #{inception_c_forward.5} parent=11 // pred_region
        _
      $region16: #{inception_c_forward.5} parent=11 // pred_fallthru
        _
      // Predicated region
      $region17: #{inception_c_forward.5} parent=11 // pred_check
        %p165 = pneg %p79
      $region18: #{inception_c_forward.5} parent=11 // pred_check_branch
        %167 = sbr.rel (%p165) target = $region20
      $region19: #{inception_c_forward.5} parent=11 // pred_region
        _
      $region20: #{inception_c_forward.5} parent=11 // pred_fallthru
        _
      // Predicated region
      $region21: #{inception_c_forward.5} parent=11 // pred_check
        %p168 = pneg %p100
      $region22: #{inception_c_forward.5} parent=11 // pred_check_branch
        %170 = sbr.rel (%p168) target = $region24
      $region23: #{inception_c_forward.5} parent=11 // pred_region
        _
      $region24: #{inception_c_forward.5} parent=11 // pred_fallthru
        _
      // Predicated region
      $region25: #{inception_c_forward.5} parent=11 // pred_check
        %p171 = pneg %p121
      $region26: #{inception_c_forward.5} parent=11 // pred_check_branch
        %173 = sbr.rel (%p171) target = $region28
      $region27: #{inception_c_forward.5} parent=11 // pred_region
        _
      $region28: #{inception_c_forward.5} parent=11 // pred_fallthru
        _
    $region12: #{inception_c_forward.5} parent=5 // pred_fallthru
      _
    %p174 = scmp.lt.s32.totalorder %s11, 2
    // Predicated region
    $region29: #{inception_c_forward.5} parent=5 // pred_check
      %p175 = pneg %p174
    $region30: #{inception_c_forward.5} parent=5 // pred_check_branch
      %177 = sbr.rel (%p175) target = $region32
    $region31: #{inception_c_forward.5} parent=5 // pred_region
      // Predicated region
      $region33: #{inception_c_forward.5} parent=31 // pred_check
        %p178 = pneg %p31
      $region34: #{inception_c_forward.5} parent=31 // pred_check_branch
        %180 = sbr.rel (%p178) target = $region36
      $region35: #{inception_c_forward.5} parent=31 // pred_region
        %p181 = scmp.lt.s32.totalorder %s11, 1
        %s182 = scalar_select %p181, %s11, 1
        %s183 = smul.addr %s182, 41
        %s184 = smul.addr %s183, 4
        %s185 = scalar_lea.vmem %s0, %s184
      $region36: #{inception_c_forward.5} parent=31 // pred_fallthru
        _
    $region32: #{inception_c_forward.5} parent=5 // pred_fallthru
      _
    %p186 = scmp.le.s32.totalorder 1, %s11
    %p187 = scmp.lt.s32.totalorder %s11, 3
    %p188 = pnand %p186, %p187
    %p189 = pneg %p188
    // Predicated region
    $region37: #{inception_c_forward.5} parent=5 // pred_check
      _
    $region38: #{inception_c_forward.5} parent=5 // pred_check_branch
      %191 = sbr.rel (%p188) target = $region40
    $region39: #{inception_c_forward.5} parent=5 // pred_region
      %s192 = ssub.s32 %s11, 1
      %p193 = scmp.lt.s32.totalorder %s16, 1
      %s194 = scalar_select %p193, %s16, 1
      %s195 = smul.addr %s194, 41
      %s196 = smul.addr %s195, 4
      %s197 = scalar_lea.vmem %s0, %s196
      %p198 = pneg %p37
      %p199 = pneg %p34
      %p200 = pneg %p58
      %p201 = pneg %p55
      %p202 = pneg %p79
      %p203 = pneg %p76
      %p204 = pneg %p100
      %p205 = pneg %p97
      %p206 = pneg %p121
      %p207 = pneg %p118
      %p208 = pneg %p147
      %p209 = pneg %p144
      %p210 = scmp.lt.s32.totalorder %s16, 1
      %s211 = scalar_select %p210, %s16, 1
      %s212 = smul.addr %s211, 36
      %s213 = smul.addr %s212, 8
      %s214 = scalar_lea.vmem %s5, %s213
      %p215 = scmp.lt.s32.totalorder %s16, 1
      %s216 = scalar_select %p215, %s16, 1
      %s217 = smul.addr %s216, 41
      %s218 = smul.addr %s217, 4
      %s219 = scalar_lea.vmem %s0, %s218
      %p220 = scmp.lt.s32.totalorder %s16, 1
      %s221 = scalar_select %p220, %s16, 1
      %s222 = smul.addr %s221, 36
      %s223 = smul.addr %s222, 8
      %s224 = scalar_lea.vmem %s5, %s223
      %v226 = vld [vmem:[%s219 + $0x8] sm:$0xe]
      %v227 = vld [vmem:[%s219 + $0xc] sm:$0xf]
      %v228 = vld [vmem:[%s219 + $0x10] sm:$0xf]
      %v229 = vld [vmem:[%s219 + $0x14] sm:$0xf]
      %v230 = vld [vmem:[%s219 + $0x18] sm:$0xf]
      %v231 = vld [vmem:[%s219 + $0x1c] sm:$0xf]
      %v232 = vld [vmem:[%s219 + $0x20] sm:$0xf]
      %v233 = vld [vmem:[%s219 + $0x24] sm:$0xf]
      %v234 = vld [vmem:[%s219 + $0x28] sm:$0xf]
      %v235 = vld [vmem:[%s219 + $0x2c] sm:$0xf]
      %v236 = vld [vmem:[%s219 + $0x30] sm:$0xf]
      %v237 = vld [vmem:[%s219 + $0x34] sm:$0xf]
      %v238 = vld [vmem:[%s219 + $0x38] sm:$0xf]
      %v239 = vld [vmem:[%s219 + $0x3c] sm:$0xf]
      %v240 = vld [vmem:[%s219 + $0x40] sm:$0xf]
      %v241 = vld [vmem:[%s219 + $0x44] sm:$0xf]
      %v242 = vld [vmem:[%s219 + $0x48] sm:$0xf]
      %v243 = vld [vmem:[%s219 + $0x4c] sm:$0xf]
      %v244 = vld [vmem:[%s219 + $0x50] sm:$0xf]
      %v245 = vld [vmem:[%s219 + $0x54] sm:$0xf]
      %v246 = vld [vmem:[%s219 + $0x58] sm:$0xf]
      %v247 = vld [vmem:[%s219 + $0x5c] sm:$0xf]
      %v248 = vld [vmem:[%s219 + $0x60] sm:$0xf]
      %v249 = vld [vmem:[%s219 + $0x64] sm:$0xf]
      %v250 = vld [vmem:[%s219 + $0x68] sm:$0xf]
      %v251 = vld [vmem:[%s219 + $0x6c] sm:$0xf]
      %v252 = vld [vmem:[%s219 + $0x70] sm:$0xf]
      %v253 = vld [vmem:[%s219 + $0x74] sm:$0xf]
      %v254 = vld [vmem:[%s219 + $0x78] sm:$0xf]
      %v255 = vld [vmem:[%s219 + $0x7c] sm:$0xf]
      %v256 = vld [vmem:[%s219 + $0x80] sm:$0xf]
      %v257 = vld [vmem:[%s219 + $0x84] sm:$0xf]
      %v258 = vld [vmem:[%s219 + $0x88] sm:$0xf]
      %v259 = vld [vmem:[%s219 + $0x8c] sm:$0xf]
      %v260 = vld [vmem:[%s219 + $0x90] sm:$0xf]
      %v261 = vld [vmem:[%s219 + $0x94] sm:$0xf]
      %v262 = vld [vmem:[%s219 + $0x98] sm:$0x1]
      %v263 = vld [vmem:[%s1] sm:$0x3]
      %v264 = vld [vmem:[%s219 + $0x98] sm:$0x3]
      %s265 = scalar_lea.vmem %s1, 2
      %v266 = vld [vmem:[%s265] sm:$0x3]
      %v304 = vunpack.c.l.b16 %v226
      %v305 = vunpack.c.l.b16 %v227
      %v306 = vunpack.c.l.b16 %v228
      %v307 = vunpack.c.l.b16 %v229
      %v308 = vunpack.c.l.b16 %v230
      %v309 = vunpack.c.l.b16 %v231
      %v310 = vunpack.c.l.b16 %v232
      %v311 = vunpack.c.l.b16 %v233
      %v312 = vunpack.c.l.b16 %v234
      %v313 = vunpack.c.l.b16 %v235
      %v314 = vunpack.c.l.b16 %v236
      %v315 = vunpack.c.l.b16 %v237
      %v316 = vunpack.c.l.b16 %v238
      %v317 = vunpack.c.l.b16 %v239
      %v318 = vunpack.c.l.b16 %v240
      %v319 = vunpack.c.l.b16 %v241
      %v320 = vunpack.c.l.b16 %v242
      %v321 = vunpack.c.l.b16 %v243
      %v322 = vunpack.c.l.b16 %v244
      %v323 = vunpack.c.l.b16 %v245
      %v324 = vunpack.c.l.b16 %v246
      %v325 = vunpack.c.l.b16 %v247
      %v326 = vunpack.c.l.b16 %v248
      %v327 = vunpack.c.l.b16 %v249
      %v328 = vunpack.c.l.b16 %v250
      %v329 = vunpack.c.l.b16 %v251
      %v330 = vunpack.c.l.b16 %v252
      %v331 = vunpack.c.l.b16 %v253
      %v332 = vunpack.c.l.b16 %v254
      %v333 = vunpack.c.l.b16 %v255
      %v334 = vunpack.c.l.b16 %v256
      %v335 = vunpack.c.l.b16 %v257
      %v336 = vunpack.c.l.b16 %v258
      %v337 = vunpack.c.l.b16 %v259
      %v338 = vunpack.c.l.b16 %v260
      %v339 = vunpack.c.l.b16 %v261
      %v340 = vunpack.c.l.b16 %v264
      %v341 = vpack.c.b16 %v305, %v304
      %v342 = vpack.c.b16 %v307, %v306
      %v343 = vpack.c.b16 %v309, %v308
      %v344 = vpack.c.b16 %v311, %v310
      %v345 = vpack.c.b16 %v313, %v312
      %v346 = vpack.c.b16 %v315, %v314
      %v347 = vpack.c.b16 %v317, %v316
      %v348 = vpack.c.b16 %v319, %v318
      %v349 = vpack.c.b16 %v321, %v320
      %v350 = vpack.c.b16 %v323, %v322
      %v351 = vpack.c.b16 %v325, %v324
      %v352 = vpack.c.b16 %v327, %v326
      %v353 = vpack.c.b16 %v329, %v328
      %v354 = vpack.c.b16 %v331, %v330
      %v355 = vpack.c.b16 %v333, %v332
      %v356 = vpack.c.b16 %v335, %v334
      %v357 = vpack.c.b16 %v337, %v336
      %v358 = vpack.c.b16 %v339, %v338
      %v359 = vpack.c.b16 %v340, %v340
      %vm360 = vsmask.f32 6400
      %v362 = vshrl.u32 %v341, 16
      %v364 = vrot.slane %v362, 1
      %v365 = vshll.u32 %v341, 16
      %v367 = vrot.slane %v365, 2
      %v368 = vor.u32 %v364, %v367
      %v370 = vshrl.u32 %v342, 16
      %v372 = vrot.slane %v370, 1
      %v373 = vshll.u32 %v342, 16
      %v375 = vrot.slane %v373, 2
      %v376 = vor.u32 %v372, %v375
      %v377 = vsel %vm360, %v368, %v376
      %v379 = vshrl.u32 %v343, 16
      %v381 = vrot.slane %v379, 1
      %v382 = vshll.u32 %v343, 16
      %v384 = vrot.slane %v382, 2
      %v385 = vor.u32 %v381, %v384
      %v386 = vsel %vm360, %v376, %v385
      %v388 = vshrl.u32 %v344, 16
      %v390 = vrot.slane %v388, 1
      %v391 = vshll.u32 %v344, 16
      %v393 = vrot.slane %v391, 2
      %v394 = vor.u32 %v390, %v393
      %v395 = vsel %vm360, %v385, %v394
      %v397 = vshrl.u32 %v345, 16
      %v399 = vrot.slane %v397, 1
      %v400 = vshll.u32 %v345, 16
      %v402 = vrot.slane %v400, 2
      %v403 = vor.u32 %v399, %v402
      %v404 = vsel %vm360, %v394, %v403
      %v406 = vshrl.u32 %v346, 16
      %v408 = vrot.slane %v406, 1
      %v409 = vshll.u32 %v346, 16
      %v411 = vrot.slane %v409, 2
      %v412 = vor.u32 %v408, %v411
      %v413 = vsel %vm360, %v403, %v412
      %v415 = vshrl.u32 %v347, 16
      %v417 = vrot.slane %v415, 1
      %v418 = vshll.u32 %v347, 16
      %v420 = vrot.slane %v418, 2
      %v421 = vor.u32 %v417, %v420
      %v422 = vsel %vm360, %v412, %v421
      %v424 = vshrl.u32 %v348, 16
      %v426 = vrot.slane %v424, 1
      %v427 = vshll.u32 %v348, 16
      %v429 = vrot.slane %v427, 2
      %v430 = vor.u32 %v426, %v429
      %v431 = vsel %vm360, %v421, %v430
      %v433 = vshrl.u32 %v349, 16
      %v435 = vrot.slane %v433, 1
      %v436 = vshll.u32 %v349, 16
      %v438 = vrot.slane %v436, 2
      %v439 = vor.u32 %v435, %v438
      %v440 = vsel %vm360, %v430, %v439
      %v442 = vshrl.u32 %v350, 16
      %v444 = vrot.slane %v442, 1
      %v445 = vshll.u32 %v350, 16
      %v447 = vrot.slane %v445, 2
      %v448 = vor.u32 %v444, %v447
      %v449 = vsel %vm360, %v439, %v448
      %v451 = vshrl.u32 %v351, 16
      %v453 = vrot.slane %v451, 1
      %v454 = vshll.u32 %v351, 16
      %v456 = vrot.slane %v454, 2
      %v457 = vor.u32 %v453, %v456
      %v458 = vsel %vm360, %v448, %v457
      %v460 = vshrl.u32 %v352, 16
      %v462 = vrot.slane %v460, 1
      %v463 = vshll.u32 %v352, 16
      %v465 = vrot.slane %v463, 2
      %v466 = vor.u32 %v462, %v465
      %v467 = vsel %vm360, %v457, %v466
      %v469 = vshrl.u32 %v353, 16
      %v471 = vrot.slane %v469, 1
      %v472 = vshll.u32 %v353, 16
      %v474 = vrot.slane %v472, 2
      %v475 = vor.u32 %v471, %v474
      %v476 = vsel %vm360, %v466, %v475
      %v478 = vshrl.u32 %v354, 16
      %v480 = vrot.slane %v478, 1
      %v481 = vshll.u32 %v354, 16
      %v483 = vrot.slane %v481, 2
      %v484 = vor.u32 %v480, %v483
      %v485 = vsel %vm360, %v475, %v484
      %v487 = vshrl.u32 %v355, 16
      %v489 = vrot.slane %v487, 1
      %v490 = vshll.u32 %v355, 16
      %v492 = vrot.slane %v490, 2
      %v493 = vor.u32 %v489, %v492
      %v494 = vsel %vm360, %v484, %v493
      %v496 = vshrl.u32 %v356, 16
      %v498 = vrot.slane %v496, 1
      %v499 = vshll.u32 %v356, 16
      %v501 = vrot.slane %v499, 2
      %v502 = vor.u32 %v498, %v501
      %v503 = vsel %vm360, %v493, %v502
      %v505 = vshrl.u32 %v357, 16
      %v507 = vrot.slane %v505, 1
      %v508 = vshll.u32 %v357, 16
      %v510 = vrot.slane %v508, 2
      %v511 = vor.u32 %v507, %v510
      %v512 = vsel %vm360, %v502, %v511
      %v514 = vshrl.u32 %v358, 16
      %v516 = vrot.slane %v514, 1
      %v517 = vshll.u32 %v358, 16
      %v519 = vrot.slane %v517, 2
      %v520 = vor.u32 %v516, %v519
      %v521 = vsel %vm360, %v511, %v520
      %v523 = vshrl.u32 %v359, 16
      %v525 = vrot.slane %v523, 1
      %v526 = vshll.u32 %v359, 16
      %v528 = vrot.slane %v526, 2
      %v529 = vor.u32 %v525, %v528
      %v530 = vsel %vm360, %v520, %v529
      %vm531 = vcmask 31744
      %v533 = vsel %vm531, %v377, 0
      %v536 = vsel %vm531, %v386, 0
      %v539 = vsel %vm531, %v395, 0
      %v542 = vsel %vm531, %v404, 0
      %v545 = vsel %vm531, %v413, 0
      %v548 = vsel %vm531, %v422, 0
      %v551 = vsel %vm531, %v431, 0
      %v554 = vsel %vm531, %v440, 0
      %v557 = vsel %vm531, %v449, 0
      %v560 = vsel %vm531, %v458, 0
      %v563 = vsel %vm531, %v467, 0
      %v566 = vsel %vm531, %v476, 0
      %v569 = vsel %vm531, %v485, 0
      %v572 = vsel %vm531, %v494, 0
      %v575 = vsel %vm531, %v503, 0
      %v578 = vsel %vm531, %v512, 0
      %v581 = vsel %vm531, %v521, 0
      %v584 = vsel %vm531, %v530, 0
      %vm586 = vcmask 1041408
      %v588 = vsel %vm586, %v266, 0
      %590 = vmatprep.subr.bf16.mxu0 0
      %591 = vmatpush1.bf16.msra.mxu0 0
      %592 = vmatprep.subr.bf16.mxu0 0
      %593 = vmatpush1.bf16.msra.mxu0 0
      %594 = vmatprep.subr.bf16.mxu0 0
      %595 = vmatpush1.bf16.msra.mxu0 0
      %596 = vmatprep.subr.bf16.mxu0 0
      %597 = vmatpush1.bf16.msra.mxu0 0
      %598 = vmatprep.subr.bf16.mxu0 0
      %599 = vmatpush1.bf16.msra.mxu0 0
      %600 = vmatprep.subr.bf16.mxu0 0
      %601 = vmatpush1.bf16.msra.mxu0 0
      %602 = vmatprep.subr.bf16.mxu0 0
      %603 = vmatpush1.bf16.msra.mxu0 0
      %604 = vmatprep.subr.bf16.mxu0 0
      %605 = vmatpush1.bf16.msra.mxu0 %v588
      %606 = vmatprep.subr.bf16.mxu0 0
      %607 = vmatpush2.bf16.msra.mxu0 0
      %608 = vmatprep.subr.bf16.mxu0 0
      %609 = vmatpush2.bf16.msra.mxu0 0
      %610 = vmatprep.subr.bf16.mxu0 0
      %611 = vmatpush2.bf16.msra.mxu0 0
      %612 = vmatprep.subr.bf16.mxu0 0
      %613 = vmatpush2.bf16.msra.mxu0 0
      %614 = vmatprep.subr.bf16.mxu0 0
      %615 = vmatpush2.bf16.msra.mxu0 0
      %616 = vmatprep.subr.bf16.mxu0 0
      %617 = vmatpush2.bf16.msra.mxu0 0
      %618 = vmatprep.subr.bf16.mxu0 0
      %619 = vmatpush2.bf16.msra.mxu0 0
      %620 = vmatprep.subr.bf16.mxu0 0
      %621 = vmatpush2.bf16.msra.mxu0 0
      %622 = vmatprep.mubr.bf16.mxu0 0
      %623 = vmatmul.mubr.bf16.gmra.mxu0 %v533
      %v624 = vpop.f32.mrf.mxu0
      %v625 = vadd.f32 0.0, %v624
      %v626 = vpop.f32.mrf.mxu0
      %v627 = vpop.f32.mrf.mxu0
      %v628 = vadd.f32 0.0, %v627
      %v629 = vpop.f32.mrf.mxu0
      %630 = vmatprep.mubr.bf16.mxu0 0
      %631 = vmatmul.mubr.bf16.gmra.mxu0 %v536
      %v632 = vpop.f32.mrf.mxu0
      %v633 = vadd.f32 0.0, %v632
      %v634 = vpop.f32.mrf.mxu0
      %v635 = vpop.f32.mrf.mxu0
      %v636 = vadd.f32 0.0, %v635
      %v637 = vpop.f32.mrf.mxu0
      %638 = vmatprep.mubr.bf16.mxu0 0
      %639 = vmatmul.mubr.bf16.gmra.mxu0 %v539
      %v640 = vpop.f32.mrf.mxu0
      %v641 = vadd.f32 0.0, %v640
      %v642 = vpop.f32.mrf.mxu0
      %v643 = vpop.f32.mrf.mxu0
      %v644 = vadd.f32 0.0, %v643
      %v645 = vpop.f32.mrf.mxu0
      %646 = vmatprep.mubr.bf16.mxu0 0
      %647 = vmatmul.mubr.bf16.gmra.mxu0 %v542
      %v648 = vpop.f32.mrf.mxu0
      %v649 = vadd.f32 0.0, %v648
      %v650 = vpop.f32.mrf.mxu0
      %v651 = vpop.f32.mrf.mxu0
      %v652 = vadd.f32 0.0, %v651
      %v653 = vpop.f32.mrf.mxu0
      %654 = vmatprep.mubr.bf16.mxu0 0
      %655 = vmatmul.mubr.bf16.gmra.mxu0 %v545
      %v656 = vpop.f32.mrf.mxu0
      %v657 = vadd.f32 0.0, %v656
      %v658 = vpop.f32.mrf.mxu0
      %v659 = vpop.f32.mrf.mxu0
      %v660 = vadd.f32 0.0, %v659
      %v661 = vpop.f32.mrf.mxu0
      %662 = vmatprep.mubr.bf16.mxu0 0
      %663 = vmatmul.mubr.bf16.gmra.mxu0 %v548
      %v664 = vpop.f32.mrf.mxu0
      %v665 = vadd.f32 0.0, %v664
      %v666 = vpop.f32.mrf.mxu0
      %v667 = vpop.f32.mrf.mxu0
      %v668 = vadd.f32 0.0, %v667
      %v669 = vpop.f32.mrf.mxu0
      %670 = vmatprep.mubr.bf16.mxu0 0
      %671 = vmatmul.mubr.bf16.gmra.mxu0 %v551
      %v672 = vpop.f32.mrf.mxu0
      %v673 = vadd.f32 0.0, %v672
      %v674 = vpop.f32.mrf.mxu0
      %v675 = vpop.f32.mrf.mxu0
      %v676 = vadd.f32 0.0, %v675
      %v677 = vpop.f32.mrf.mxu0
      %678 = vmatprep.mubr.bf16.mxu0 0
      %679 = vmatmul.mubr.bf16.gmra.mxu0 %v554
      %v680 = vpop.f32.mrf.mxu0
      %v681 = vadd.f32 0.0, %v680
      %v682 = vpop.f32.mrf.mxu0
      %v683 = vpop.f32.mrf.mxu0
      %v684 = vadd.f32 0.0, %v683
      %v685 = vpop.f32.mrf.mxu0
      %686 = vmatprep.mubr.bf16.mxu0 0
      %687 = vmatmul.mubr.bf16.gmra.mxu0 %v557
      %v688 = vpop.f32.mrf.mxu0
      %v689 = vadd.f32 0.0, %v688
      %v690 = vpop.f32.mrf.mxu0
      %v691 = vpop.f32.mrf.mxu0
      %v692 = vadd.f32 0.0, %v691
      %v693 = vpop.f32.mrf.mxu0
      %694 = vmatprep.mubr.bf16.mxu0 0
      %695 = vmatmul.mubr.bf16.gmra.mxu0 %v560
      %v696 = vpop.f32.mrf.mxu0
      %v697 = vadd.f32 0.0, %v696
      %v698 = vpop.f32.mrf.mxu0
      %v699 = vpop.f32.mrf.mxu0
      %v700 = vadd.f32 0.0, %v699
      %v701 = vpop.f32.mrf.mxu0
      %702 = vmatprep.mubr.bf16.mxu0 0
      %703 = vmatmul.mubr.bf16.gmra.mxu0 %v563
      %v704 = vpop.f32.mrf.mxu0
      %v705 = vadd.f32 0.0, %v704
      %v706 = vpop.f32.mrf.mxu0
      %v707 = vpop.f32.mrf.mxu0
      %v708 = vadd.f32 0.0, %v707
      %v709 = vpop.f32.mrf.mxu0
      %710 = vmatprep.mubr.bf16.mxu0 0
      %711 = vmatmul.mubr.bf16.gmra.mxu0 %v566
      %v712 = vpop.f32.mrf.mxu0
      %v713 = vadd.f32 0.0, %v712
      %v714 = vpop.f32.mrf.mxu0
      %v715 = vpop.f32.mrf.mxu0
      %v716 = vadd.f32 0.0, %v715
      %v717 = vpop.f32.mrf.mxu0
      %718 = vmatprep.mubr.bf16.mxu0 0
      %719 = vmatmul.mubr.bf16.gmra.mxu0 %v569
      %v720 = vpop.f32.mrf.mxu0
      %v721 = vadd.f32 0.0, %v720
      %v722 = vpop.f32.mrf.mxu0
      %v723 = vpop.f32.mrf.mxu0
      %v724 = vadd.f32 0.0, %v723
      %v725 = vpop.f32.mrf.mxu0
      %726 = vmatprep.mubr.bf16.mxu0 0
      %727 = vmatmul.mubr.bf16.gmra.mxu0 %v572
      %v728 = vpop.f32.mrf.mxu0
      %v729 = vadd.f32 0.0, %v728
      %v730 = vpop.f32.mrf.mxu0
      %v731 = vpop.f32.mrf.mxu0
      %v732 = vadd.f32 0.0, %v731
      %v733 = vpop.f32.mrf.mxu0
      %734 = vmatprep.mubr.bf16.mxu0 0
      %735 = vmatmul.mubr.bf16.gmra.mxu0 %v575
      %v736 = vpop.f32.mrf.mxu0
      %v737 = vadd.f32 0.0, %v736
      %v738 = vpop.f32.mrf.mxu0
      %v739 = vpop.f32.mrf.mxu0
      %v740 = vadd.f32 0.0, %v739
      %v741 = vpop.f32.mrf.mxu0
      %742 = vmatprep.mubr.bf16.mxu0 0
      %743 = vmatmul.mubr.bf16.gmra.mxu0 %v578
      %v744 = vpop.f32.mrf.mxu0
      %v745 = vadd.f32 0.0, %v744
      %v746 = vpop.f32.mrf.mxu0
      %v747 = vpop.f32.mrf.mxu0
      %v748 = vadd.f32 0.0, %v747
      %v749 = vpop.f32.mrf.mxu0
      %750 = vmatprep.mubr.bf16.mxu0 0
      %751 = vmatmul.mubr.bf16.gmra.mxu0 %v581
      %v752 = vpop.f32.mrf.mxu0
      %v753 = vadd.f32 0.0, %v752
      %v754 = vpop.f32.mrf.mxu0
      %v755 = vpop.f32.mrf.mxu0
      %v756 = vadd.f32 0.0, %v755
      %v757 = vpop.f32.mrf.mxu0
      %758 = vmatprep.mubr.bf16.mxu0 0
      %759 = vmatmul.mubr.bf16.gmra.mxu0 %v584
      %v760 = vpop.f32.mrf.mxu0
      %v761 = vadd.f32 0.0, %v760
      %v762 = vpop.f32.mrf.mxu0
      %v763 = vpop.f32.mrf.mxu0
      %v764 = vadd.f32 0.0, %v763
      %v765 = vpop.f32.mrf.mxu0
      %766 = vdwg.mxu0
      %v768 = vunpack.c.l.b16 %v262
      %v769 = vpack.c.b16 %v768, %v768
      %vm770 = vcmask 1046528
      %v771 = vrot.slane %v341, 1
      %v772 = vrot.slane %v342, 1
      %v773 = vsel %vm770, %v771, %v772
      %v774 = vrot.slane %v343, 1
      %v775 = vsel %vm770, %v772, %v774
      %v776 = vrot.slane %v344, 1
      %v777 = vsel %vm770, %v774, %v776
      %v778 = vrot.slane %v345, 1
      %v779 = vsel %vm770, %v776, %v778
      %v780 = vrot.slane %v346, 1
      %v781 = vsel %vm770, %v778, %v780
      %v782 = vrot.slane %v347, 1
      %v783 = vsel %vm770, %v780, %v782
      %v784 = vrot.slane %v348, 1
      %v785 = vsel %vm770, %v782, %v784
      %v786 = vrot.slane %v349, 1
      %v787 = vsel %vm770, %v784, %v786
      %v788 = vrot.slane %v350, 1
      %v789 = vsel %vm770, %v786, %v788
      %v790 = vrot.slane %v351, 1
      %v791 = vsel %vm770, %v788, %v790
      %v792 = vrot.slane %v352, 1
      %v793 = vsel %vm770, %v790, %v792
      %v794 = vrot.slane %v353, 1
      %v795 = vsel %vm770, %v792, %v794
      %v796 = vrot.slane %v354, 1
      %v797 = vsel %vm770, %v794, %v796
      %v798 = vrot.slane %v355, 1
      %v799 = vsel %vm770, %v796, %v798
      %v800 = vrot.slane %v356, 1
      %v801 = vsel %vm770, %v798, %v800
      %v802 = vrot.slane %v357, 1
      %v803 = vsel %vm770, %v800, %v802
      %v804 = vrot.slane %v358, 1
      %v805 = vsel %vm770, %v802, %v804
      %v806 = vrot.slane %v769, 1
      %v807 = vsel %vm770, %v804, %v806
      %v809 = vsel %vm531, %v773, 0
      %v812 = vsel %vm531, %v775, 0
      %v815 = vsel %vm531, %v777, 0
      %v818 = vsel %vm531, %v779, 0
      %v821 = vsel %vm531, %v781, 0
      %v824 = vsel %vm531, %v783, 0
      %v827 = vsel %vm531, %v785, 0
      %v830 = vsel %vm531, %v787, 0
      %v833 = vsel %vm531, %v789, 0
      %v836 = vsel %vm531, %v791, 0
      %v839 = vsel %vm531, %v793, 0
      %v842 = vsel %vm531, %v795, 0
      %v845 = vsel %vm531, %v797, 0
      %v848 = vsel %vm531, %v799, 0
      %v851 = vsel %vm531, %v801, 0
      %v854 = vsel %vm531, %v803, 0
      %v857 = vsel %vm531, %v805, 0
      %v860 = vsel %vm531, %v807, 0
      %v863 = vsel %vm586, %v263, 0
      %865 = vmatprep.subr.bf16.mxu0 0
      %866 = vmatpush1.bf16.msra.mxu0 0
      %867 = vmatprep.subr.bf16.mxu0 0
      %868 = vmatpush1.bf16.msra.mxu0 0
      %869 = vmatprep.subr.bf16.mxu0 0
      %870 = vmatpush1.bf16.msra.mxu0 0
      %871 = vmatprep.subr.bf16.mxu0 0
      %872 = vmatpush1.bf16.msra.mxu0 0
      %873 = vmatprep.subr.bf16.mxu0 0
      %874 = vmatpush1.bf16.msra.mxu0 0
      %875 = vmatprep.subr.bf16.mxu0 0
      %876 = vmatpush1.bf16.msra.mxu0 0
      %877 = vmatprep.subr.bf16.mxu0 0
      %878 = vmatpush1.bf16.msra.mxu0 0
      %879 = vmatprep.subr.bf16.mxu0 0
      %880 = vmatpush1.bf16.msra.mxu0 %v863
      %881 = vmatprep.subr.bf16.mxu0 0
      %882 = vmatpush2.bf16.msra.mxu0 0
      %883 = vmatprep.subr.bf16.mxu0 0
      %884 = vmatpush2.bf16.msra.mxu0 0
      %885 = vmatprep.subr.bf16.mxu0 0
      %886 = vmatpush2.bf16.msra.mxu0 0
      %887 = vmatprep.subr.bf16.mxu0 0
      %888 = vmatpush2.bf16.msra.mxu0 0
      %889 = vmatprep.subr.bf16.mxu0 0
      %890 = vmatpush2.bf16.msra.mxu0 0
      %891 = vmatprep.subr.bf16.mxu0 0
      %892 = vmatpush2.bf16.msra.mxu0 0
      %893 = vmatprep.subr.bf16.mxu0 0
      %894 = vmatpush2.bf16.msra.mxu0 0
      %895 = vmatprep.subr.bf16.mxu0 0
      %896 = vmatpush2.bf16.msra.mxu0 0
      %897 = vmatprep.mubr.bf16.mxu0 0
      %898 = vmatmul.mubr.bf16.gmra.mxu0 %v809
      %v899 = vpop.f32.mrf.mxu0
      %v900 = vadd.f32 %v625, %v899
      %v901 = vpop.f32.mrf.mxu0
      %v902 = vpop.f32.mrf.mxu0
      %v903 = vadd.f32 %v628, %v902
      %v904 = vpop.f32.mrf.mxu0
      %905 = vmatprep.mubr.bf16.mxu0 0
      %906 = vmatmul.mubr.bf16.gmra.mxu0 %v812
      %v907 = vpop.f32.mrf.mxu0
      %v908 = vadd.f32 %v633, %v907
      %v909 = vpop.f32.mrf.mxu0
      %v910 = vpop.f32.mrf.mxu0
      %v911 = vadd.f32 %v636, %v910
      %v912 = vpop.f32.mrf.mxu0
      %913 = vmatprep.mubr.bf16.mxu0 0
      %914 = vmatmul.mubr.bf16.gmra.mxu0 %v815
      %v915 = vpop.f32.mrf.mxu0
      %v916 = vadd.f32 %v641, %v915
      %v917 = vpop.f32.mrf.mxu0
      %v918 = vpop.f32.mrf.mxu0
      %v919 = vadd.f32 %v644, %v918
      %v920 = vpop.f32.mrf.mxu0
      %921 = vmatprep.mubr.bf16.mxu0 0
      %922 = vmatmul.mubr.bf16.gmra.mxu0 %v818
      %v923 = vpop.f32.mrf.mxu0
      %v924 = vadd.f32 %v649, %v923
      %v925 = vpop.f32.mrf.mxu0
      %v926 = vpop.f32.mrf.mxu0
      %v927 = vadd.f32 %v652, %v926
      %v928 = vpop.f32.mrf.mxu0
      %929 = vmatprep.mubr.bf16.mxu0 0
      %930 = vmatmul.mubr.bf16.gmra.mxu0 %v821
      %v931 = vpop.f32.mrf.mxu0
      %v932 = vadd.f32 %v657, %v931
      %v933 = vpop.f32.mrf.mxu0
      %v934 = vpop.f32.mrf.mxu0
      %v935 = vadd.f32 %v660, %v934
      %v936 = vpop.f32.mrf.mxu0
      %937 = vmatprep.mubr.bf16.mxu0 0
      %938 = vmatmul.mubr.bf16.gmra.mxu0 %v824
      %v939 = vpop.f32.mrf.mxu0
      %v940 = vadd.f32 %v665, %v939
      %v941 = vpop.f32.mrf.mxu0
      %v942 = vpop.f32.mrf.mxu0
      %v943 = vadd.f32 %v668, %v942
      %v944 = vpop.f32.mrf.mxu0
      %945 = vmatprep.mubr.bf16.mxu0 0
      %946 = vmatmul.mubr.bf16.gmra.mxu0 %v827
      %v947 = vpop.f32.mrf.mxu0
      %v948 = vadd.f32 %v673, %v947
      %v949 = vpop.f32.mrf.mxu0
      %v950 = vpop.f32.mrf.mxu0
      %v951 = vadd.f32 %v676, %v950
      %v952 = vpop.f32.mrf.mxu0
      %953 = vmatprep.mubr.bf16.mxu0 0
      %954 = vmatmul.mubr.bf16.gmra.mxu0 %v830
      %v955 = vpop.f32.mrf.mxu0
      %v956 = vadd.f32 %v681, %v955
      %v957 = vpop.f32.mrf.mxu0
      %v958 = vpop.f32.mrf.mxu0
      %v959 = vadd.f32 %v684, %v958
      %v960 = vpop.f32.mrf.mxu0
      %961 = vmatprep.mubr.bf16.mxu0 0
      %962 = vmatmul.mubr.bf16.gmra.mxu0 %v833
      %v963 = vpop.f32.mrf.mxu0
      %v964 = vadd.f32 %v689, %v963
      %v965 = vpop.f32.mrf.mxu0
      %v966 = vpop.f32.mrf.mxu0
      %v967 = vadd.f32 %v692, %v966
      %v968 = vpop.f32.mrf.mxu0
      %969 = vmatprep.mubr.bf16.mxu0 0
      %970 = vmatmul.mubr.bf16.gmra.mxu0 %v836
      %v971 = vpop.f32.mrf.mxu0
      %v972 = vadd.f32 %v697, %v971
      %v973 = vpop.f32.mrf.mxu0
      %v974 = vpop.f32.mrf.mxu0
      %v975 = vadd.f32 %v700, %v974
      %v976 = vpop.f32.mrf.mxu0
      %977 = vmatprep.mubr.bf16.mxu0 0
      %978 = vmatmul.mubr.bf16.gmra.mxu0 %v839
      %v979 = vpop.f32.mrf.mxu0
      %v980 = vadd.f32 %v705, %v979
      %v981 = vpop.f32.mrf.mxu0
      %v982 = vpop.f32.mrf.mxu0
      %v983 = vadd.f32 %v708, %v982
      %v984 = vpop.f32.mrf.mxu0
      %985 = vmatprep.mubr.bf16.mxu0 0
      %986 = vmatmul.mubr.bf16.gmra.mxu0 %v842
      %v987 = vpop.f32.mrf.mxu0
      %v988 = vadd.f32 %v713, %v987
      %v989 = vpop.f32.mrf.mxu0
      %v990 = vpop.f32.mrf.mxu0
      %v991 = vadd.f32 %v716, %v990
      %v992 = vpop.f32.mrf.mxu0
      %993 = vmatprep.mubr.bf16.mxu0 0
      %994 = vmatmul.mubr.bf16.gmra.mxu0 %v845
      %v995 = vpop.f32.mrf.mxu0
      %v996 = vadd.f32 %v721, %v995
      %v997 = vpop.f32.mrf.mxu0
      %v998 = vpop.f32.mrf.mxu0
      %v999 = vadd.f32 %v724, %v998
      %v1000 = vpop.f32.mrf.mxu0
      %1001 = vmatprep.mubr.bf16.mxu0 0
      %1002 = vmatmul.mubr.bf16.gmra.mxu0 %v848
      %v1003 = vpop.f32.mrf.mxu0
      %v1004 = vadd.f32 %v729, %v1003
      %v1005 = vpop.f32.mrf.mxu0
      %v1006 = vpop.f32.mrf.mxu0
      %v1007 = vadd.f32 %v732, %v1006
      %v1008 = vpop.f32.mrf.mxu0
      %1009 = vmatprep.mubr.bf16.mxu0 0
      %1010 = vmatmul.mubr.bf16.gmra.mxu0 %v851
      %v1011 = vpop.f32.mrf.mxu0
      %v1012 = vadd.f32 %v737, %v1011
      %v1013 = vpop.f32.mrf.mxu0
      %v1014 = vpop.f32.mrf.mxu0
      %v1015 = vadd.f32 %v740, %v1014
      %v1016 = vpop.f32.mrf.mxu0
      %1017 = vmatprep.mubr.bf16.mxu0 0
      %1018 = vmatmul.mubr.bf16.gmra.mxu0 %v854
      %v1019 = vpop.f32.mrf.mxu0
      %v1020 = vadd.f32 %v745, %v1019
      %v1021 = vpop.f32.mrf.mxu0
      %v1022 = vpop.f32.mrf.mxu0
      %v1023 = vadd.f32 %v748, %v1022
      %v1024 = vpop.f32.mrf.mxu0
      %1025 = vmatprep.mubr.bf16.mxu0 0
      %1026 = vmatmul.mubr.bf16.gmra.mxu0 %v857
      %v1027 = vpop.f32.mrf.mxu0
      %v1028 = vadd.f32 %v753, %v1027
      %v1029 = vpop.f32.mrf.mxu0
      %v1030 = vpop.f32.mrf.mxu0
      %v1031 = vadd.f32 %v756, %v1030
      %v1032 = vpop.f32.mrf.mxu0
      %1033 = vmatprep.mubr.bf16.mxu0 0
      %1034 = vmatmul.mubr.bf16.gmra.mxu0 %v860
      %v1035 = vpop.f32.mrf.mxu0
      %v1036 = vadd.f32 %v761, %v1035
      %v1037 = vpop.f32.mrf.mxu0
      %v1038 = vpop.f32.mrf.mxu0
      %v1039 = vadd.f32 %v764, %v1038
      %v1040 = vpop.f32.mrf.mxu0
      %1041 = vdwg.mxu0
      %v1042 = vld [vmem:[%s219 + $0x8] sm:$0xc]
      %s1043 = scalar_lea.vmem %s1, 4
      %v1044 = vld [vmem:[%s1043] sm:$0x3]
      %v1046 = vunpack.c.l.b16 %v1042
      %v1047 = vpack.c.b16 %v305, %v1046
      %vm1048 = vcmask 1045504
      %v1049 = vrot.slane %v1047, 2
      %v1050 = vrot.slane %v342, 2
      %v1051 = vsel %vm1048, %v1049, %v1050
      %v1052 = vrot.slane %v343, 2
      %v1053 = vsel %vm1048, %v1050, %v1052
      %v1054 = vrot.slane %v344, 2
      %v1055 = vsel %vm1048, %v1052, %v1054
      %v1056 = vrot.slane %v345, 2
      %v1057 = vsel %vm1048, %v1054, %v1056
      %v1058 = vrot.slane %v346, 2
      %v1059 = vsel %vm1048, %v1056, %v1058
      %v1060 = vrot.slane %v347, 2
      %v1061 = vsel %vm1048, %v1058, %v1060
      %v1062 = vrot.slane %v348, 2
      %v1063 = vsel %vm1048, %v1060, %v1062
      %v1064 = vrot.slane %v349, 2
      %v1065 = vsel %vm1048, %v1062, %v1064
      %v1066 = vrot.slane %v350, 2
      %v1067 = vsel %vm1048, %v1064, %v1066
      %v1068 = vrot.slane %v351, 2
      %v1069 = vsel %vm1048, %v1066, %v1068
      %v1070 = vrot.slane %v352, 2
      %v1071 = vsel %vm1048, %v1068, %v1070
      %v1072 = vrot.slane %v353, 2
      %v1073 = vsel %vm1048, %v1070, %v1072
      %v1074 = vrot.slane %v354, 2
      %v1075 = vsel %vm1048, %v1072, %v1074
      %v1076 = vrot.slane %v355, 2
      %v1077 = vsel %vm1048, %v1074, %v1076
      %v1078 = vrot.slane %v356, 2
      %v1079 = vsel %vm1048, %v1076, %v1078
      %v1080 = vrot.slane %v357, 2
      %v1081 = vsel %vm1048, %v1078, %v1080
      %v1082 = vrot.slane %v358, 2
      %v1083 = vsel %vm1048, %v1080, %v1082
      %v1084 = vrot.slane %v359, 2
      %v1085 = vsel %vm1048, %v1082, %v1084
      %v1087 = vsel %vm531, %v1051, 0
      %v1090 = vsel %vm531, %v1053, 0
      %v1093 = vsel %vm531, %v1055, 0
      %v1096 = vsel %vm531, %v1057, 0
      %v1099 = vsel %vm531, %v1059, 0
      %v1102 = vsel %vm531, %v1061, 0
      %v1105 = vsel %vm531, %v1063, 0
      %v1108 = vsel %vm531, %v1065, 0
      %v1111 = vsel %vm531, %v1067, 0
      %v1114 = vsel %vm531, %v1069, 0
      %v1117 = vsel %vm531, %v1071, 0
      %v1120 = vsel %vm531, %v1073, 0
      %v1123 = vsel %vm531, %v1075, 0
      %v1126 = vsel %vm531, %v1077, 0
      %v1129 = vsel %vm531, %v1079, 0
      %v1132 = vsel %vm531, %v1081, 0
      %v1135 = vsel %vm531, %v1083, 0
      %v1138 = vsel %vm531, %v1085, 0
      %v1141 = vsel %vm586, %v1044, 0
      %1143 = vmatprep.subr.bf16.mxu0 0
      %1144 = vmatpush1.bf16.msra.mxu0 0
      %1145 = vmatprep.subr.bf16.mxu0 0
      %1146 = vmatpush1.bf16.msra.mxu0 0
      %1147 = vmatprep.subr.bf16.mxu0 0
      %1148 = vmatpush1.bf16.msra.mxu0 0
      %1149 = vmatprep.subr.bf16.mxu0 0
      %1150 = vmatpush1.bf16.msra.mxu0 0
      %1151 = vmatprep.subr.bf16.mxu0 0
      %1152 = vmatpush1.bf16.msra.mxu0 0
      %1153 = vmatprep.subr.bf16.mxu0 0
      %1154 = vmatpush1.bf16.msra.mxu0 0
      %1155 = vmatprep.subr.bf16.mxu0 0
      %1156 = vmatpush1.bf16.msra.mxu0 0
      %1157 = vmatprep.subr.bf16.mxu0 0
      %1158 = vmatpush1.bf16.msra.mxu0 %v1141
      %1159 = vmatprep.subr.bf16.mxu0 0
      %1160 = vmatpush2.bf16.msra.mxu0 0
      %1161 = vmatprep.subr.bf16.mxu0 0
      %1162 = vmatpush2.bf16.msra.mxu0 0
      %1163 = vmatprep.subr.bf16.mxu0 0
      %1164 = vmatpush2.bf16.msra.mxu0 0
      %1165 = vmatprep.subr.bf16.mxu0 0
      %1166 = vmatpush2.bf16.msra.mxu0 0
      %1167 = vmatprep.subr.bf16.mxu0 0
      %1168 = vmatpush2.bf16.msra.mxu0 0
      %1169 = vmatprep.subr.bf16.mxu0 0
      %1170 = vmatpush2.bf16.msra.mxu0 0
      %1171 = vmatprep.subr.bf16.mxu0 0
      %1172 = vmatpush2.bf16.msra.mxu0 0
      %1173 = vmatprep.subr.bf16.mxu0 0
      %1174 = vmatpush2.bf16.msra.mxu0 0
      %1175 = vmatprep.mubr.bf16.mxu0 0
      %1176 = vmatmul.mubr.bf16.gmra.mxu0 %v1087
      %v1177 = vpop.f32.mrf.mxu0
      %v1178 = vadd.f32 0.0, %v1177
      %v1179 = vpop.f32.mrf.mxu0
      %v1180 = vpop.f32.mrf.mxu0
      %v1181 = vadd.f32 0.0, %v1180
      %v1182 = vpop.f32.mrf.mxu0
      %1183 = vmatprep.mubr.bf16.mxu0 0
      %1184 = vmatmul.mubr.bf16.gmra.mxu0 %v1090
      %v1185 = vpop.f32.mrf.mxu0
      %v1186 = vadd.f32 0.0, %v1185
      %v1187 = vpop.f32.mrf.mxu0
      %v1188 = vpop.f32.mrf.mxu0
      %v1189 = vadd.f32 0.0, %v1188
      %v1190 = vpop.f32.mrf.mxu0
      %1191 = vmatprep.mubr.bf16.mxu0 0
      %1192 = vmatmul.mubr.bf16.gmra.mxu0 %v1093
      %v1193 = vpop.f32.mrf.mxu0
      %v1194 = vadd.f32 0.0, %v1193
      %v1195 = vpop.f32.mrf.mxu0
      %v1196 = vpop.f32.mrf.mxu0
      %v1197 = vadd.f32 0.0, %v1196
      %v1198 = vpop.f32.mrf.mxu0
      %1199 = vmatprep.mubr.bf16.mxu0 0
      %1200 = vmatmul.mubr.bf16.gmra.mxu0 %v1096
      %v1201 = vpop.f32.mrf.mxu0
      %v1202 = vadd.f32 0.0, %v1201
      %v1203 = vpop.f32.mrf.mxu0
      %v1204 = vpop.f32.mrf.mxu0
      %v1205 = vadd.f32 0.0, %v1204
      %v1206 = vpop.f32.mrf.mxu0
      %1207 = vmatprep.mubr.bf16.mxu0 0
      %1208 = vmatmul.mubr.bf16.gmra.mxu0 %v1099
      %v1209 = vpop.f32.mrf.mxu0
      %v1210 = vadd.f32 0.0, %v1209
      %v1211 = vpop.f32.mrf.mxu0
      %v1212 = vpop.f32.mrf.mxu0
      %v1213 = vadd.f32 0.0, %v1212
      %v1214 = vpop.f32.mrf.mxu0
      %1215 = vmatprep.mubr.bf16.mxu0 0
      %1216 = vmatmul.mubr.bf16.gmra.mxu0 %v1102
      %v1217 = vpop.f32.mrf.mxu0
      %v1218 = vadd.f32 0.0, %v1217
      %v1219 = vpop.f32.mrf.mxu0
      %v1220 = vpop.f32.mrf.mxu0
      %v1221 = vadd.f32 0.0, %v1220
      %v1222 = vpop.f32.mrf.mxu0
      %1223 = vmatprep.mubr.bf16.mxu0 0
      %1224 = vmatmul.mubr.bf16.gmra.mxu0 %v1105
      %v1225 = vpop.f32.mrf.mxu0
      %v1226 = vadd.f32 0.0, %v1225
      %v1227 = vpop.f32.mrf.mxu0
      %v1228 = vpop.f32.mrf.mxu0
      %v1229 = vadd.f32 0.0, %v1228
      %v1230 = vpop.f32.mrf.mxu0
      %1231 = vmatprep.mubr.bf16.mxu0 0
      %1232 = vmatmul.mubr.bf16.gmra.mxu0 %v1108
      %v1233 = vpop.f32.mrf.mxu0
      %v1234 = vadd.f32 0.0, %v1233
      %v1235 = vpop.f32.mrf.mxu0
      %v1236 = vpop.f32.mrf.mxu0
      %v1237 = vadd.f32 0.0, %v1236
      %v1238 = vpop.f32.mrf.mxu0
      %1239 = vmatprep.mubr.bf16.mxu0 0
      %1240 = vmatmul.mubr.bf16.gmra.mxu0 %v1111
      %v1241 = vpop.f32.mrf.mxu0
      %v1242 = vadd.f32 0.0, %v1241
      %v1243 = vpop.f32.mrf.mxu0
      %v1244 = vpop.f32.mrf.mxu0
      %v1245 = vadd.f32 0.0, %v1244
      %v1246 = vpop.f32.mrf.mxu0
      %1247 = vmatprep.mubr.bf16.mxu0 0
      %1248 = vmatmul.mubr.bf16.gmra.mxu0 %v1114
      %v1249 = vpop.f32.mrf.mxu0
      %v1250 = vadd.f32 0.0, %v1249
      %v1251 = vpop.f32.mrf.mxu0
      %v1252 = vpop.f32.mrf.mxu0
      %v1253 = vadd.f32 0.0, %v1252
      %v1254 = vpop.f32.mrf.mxu0
      %1255 = vmatprep.mubr.bf16.mxu0 0
      %1256 = vmatmul.mubr.bf16.gmra.mxu0 %v1117
      %v1257 = vpop.f32.mrf.mxu0
      %v1258 = vadd.f32 0.0, %v1257
      %v1259 = vpop.f32.mrf.mxu0
      %v1260 = vpop.f32.mrf.mxu0
      %v1261 = vadd.f32 0.0, %v1260
      %v1262 = vpop.f32.mrf.mxu0
      %1263 = vmatprep.mubr.bf16.mxu0 0
      %1264 = vmatmul.mubr.bf16.gmra.mxu0 %v1120
      %v1265 = vpop.f32.mrf.mxu0
      %v1266 = vadd.f32 0.0, %v1265
      %v1267 = vpop.f32.mrf.mxu0
      %v1268 = vpop.f32.mrf.mxu0
      %v1269 = vadd.f32 0.0, %v1268
      %v1270 = vpop.f32.mrf.mxu0
      %1271 = vmatprep.mubr.bf16.mxu0 0
      %1272 = vmatmul.mubr.bf16.gmra.mxu0 %v1123
      %v1273 = vpop.f32.mrf.mxu0
      %v1274 = vadd.f32 0.0, %v1273
      %v1275 = vpop.f32.mrf.mxu0
      %v1276 = vpop.f32.mrf.mxu0
      %v1277 = vadd.f32 0.0, %v1276
      %v1278 = vpop.f32.mrf.mxu0
      %1279 = vmatprep.mubr.bf16.mxu0 0
      %1280 = vmatmul.mubr.bf16.gmra.mxu0 %v1126
      %v1281 = vpop.f32.mrf.mxu0
      %v1282 = vadd.f32 0.0, %v1281
      %v1283 = vpop.f32.mrf.mxu0
      %v1284 = vpop.f32.mrf.mxu0
      %v1285 = vadd.f32 0.0, %v1284
      %v1286 = vpop.f32.mrf.mxu0
      %1287 = vmatprep.mubr.bf16.mxu0 0
      %1288 = vmatmul.mubr.bf16.gmra.mxu0 %v1129
      %v1289 = vpop.f32.mrf.mxu0
      %v1290 = vadd.f32 0.0, %v1289
      %v1291 = vpop.f32.mrf.mxu0
      %v1292 = vpop.f32.mrf.mxu0
      %v1293 = vadd.f32 0.0, %v1292
      %v1294 = vpop.f32.mrf.mxu0
      %1295 = vmatprep.mubr.bf16.mxu0 0
      %1296 = vmatmul.mubr.bf16.gmra.mxu0 %v1132
      %v1297 = vpop.f32.mrf.mxu0
      %v1298 = vadd.f32 0.0, %v1297
      %v1299 = vpop.f32.mrf.mxu0
      %v1300 = vpop.f32.mrf.mxu0
      %v1301 = vadd.f32 0.0, %v1300
      %v1302 = vpop.f32.mrf.mxu0
      %1303 = vmatprep.mubr.bf16.mxu0 0
      %1304 = vmatmul.mubr.bf16.gmra.mxu0 %v1135
      %v1305 = vpop.f32.mrf.mxu0
      %v1306 = vadd.f32 0.0, %v1305
      %v1307 = vpop.f32.mrf.mxu0
      %v1308 = vpop.f32.mrf.mxu0
      %v1309 = vadd.f32 0.0, %v1308
      %v1310 = vpop.f32.mrf.mxu0
      %1311 = vmatprep.mubr.bf16.mxu0 0
      %1312 = vmatmul.mubr.bf16.gmra.mxu0 %v1138
      %v1313 = vpop.f32.mrf.mxu0
      %v1314 = vadd.f32 0.0, %v1313
      %v1315 = vpop.f32.mrf.mxu0
      %v1316 = vpop.f32.mrf.mxu0
      %v1317 = vadd.f32 0.0, %v1316
      %v1318 = vpop.f32.mrf.mxu0
      %1319 = vdwg.mxu0
      %v1320 = vadd.f32 %v900, %v1178
      %v1321 = vadd.f32 %v903, %v1181
      %v1322 = vadd.f32 %v908, %v1186
      %v1323 = vadd.f32 %v911, %v1189
      %v1324 = vadd.f32 %v916, %v1194
      %v1325 = vadd.f32 %v919, %v1197
      %v1326 = vadd.f32 %v924, %v1202
      %v1327 = vadd.f32 %v927, %v1205
      %v1328 = vadd.f32 %v932, %v1210
      %v1329 = vadd.f32 %v935, %v1213
      %v1330 = vadd.f32 %v940, %v1218
      %v1331 = vadd.f32 %v943, %v1221
      %v1332 = vadd.f32 %v948, %v1226
      %v1333 = vadd.f32 %v951, %v1229
      %v1334 = vadd.f32 %v956, %v1234
      %v1335 = vadd.f32 %v959, %v1237
      %v1336 = vadd.f32 %v964, %v1242
      %v1337 = vadd.f32 %v967, %v1245
      %v1338 = vadd.f32 %v972, %v1250
      %v1339 = vadd.f32 %v975, %v1253
      %v1340 = vadd.f32 %v980, %v1258
      %v1341 = vadd.f32 %v983, %v1261
      %v1342 = vadd.f32 %v988, %v1266
      %v1343 = vadd.f32 %v991, %v1269
      %v1344 = vadd.f32 %v996, %v1274
      %v1345 = vadd.f32 %v999, %v1277
      %v1346 = vadd.f32 %v1004, %v1282
      %v1347 = vadd.f32 %v1007, %v1285
      %v1348 = vadd.f32 %v1012, %v1290
      %v1349 = vadd.f32 %v1015, %v1293
      %v1350 = vadd.f32 %v1020, %v1298
      %v1351 = vadd.f32 %v1023, %v1301
      %v1352 = vadd.f32 %v1028, %v1306
      %v1353 = vadd.f32 %v1031, %v1309
      %v1354 = vadd.f32 %v1036, %v1314
      %v1355 = vadd.f32 %v1039, %v1317
      %v1356 = vld [vmem:[%s3] sm:$0x1]
      %v1358 = vlaneseq
      %v1359 = vshrl.u32 %v1358, 7
      %v1360 = vsub.s32 0, %v1359
      %v1361 = vrot.slane %v1356, %v1360
      %v1363 = vadd.f32 %v1320, %v1361
      %v1364 = vadd.f32 %v1321, %v1361
      %v1365 = vadd.f32 %v1322, %v1361
      %v1366 = vadd.f32 %v1323, %v1361
      %v1367 = vadd.f32 %v1324, %v1361
      %v1368 = vadd.f32 %v1325, %v1361
      %v1369 = vadd.f32 %v1326, %v1361
      %v1370 = vadd.f32 %v1327, %v1361
      %v1371 = vadd.f32 %v1328, %v1361
      %v1372 = vadd.f32 %v1329, %v1361
      %v1373 = vadd.f32 %v1330, %v1361
      %v1374 = vadd.f32 %v1331, %v1361
      %v1375 = vadd.f32 %v1332, %v1361
      %v1376 = vadd.f32 %v1333, %v1361
      %v1377 = vadd.f32 %v1334, %v1361
      %v1378 = vadd.f32 %v1335, %v1361
      %v1379 = vadd.f32 %v1336, %v1361
      %v1380 = vadd.f32 %v1337, %v1361
      %v1381 = vadd.f32 %v1338, %v1361
      %v1382 = vadd.f32 %v1339, %v1361
      %v1383 = vadd.f32 %v1340, %v1361
      %v1384 = vadd.f32 %v1341, %v1361
      %v1385 = vadd.f32 %v1342, %v1361
      %v1386 = vadd.f32 %v1343, %v1361
      %v1387 = vadd.f32 %v1344, %v1361
      %v1388 = vadd.f32 %v1345, %v1361
      %v1389 = vadd.f32 %v1346, %v1361
      %v1390 = vadd.f32 %v1347, %v1361
      %v1391 = vadd.f32 %v1348, %v1361
      %v1392 = vadd.f32 %v1349, %v1361
      %v1393 = vadd.f32 %v1350, %v1361
      %v1394 = vadd.f32 %v1351, %v1361
      %v1395 = vadd.f32 %v1352, %v1361
      %v1396 = vadd.f32 %v1353, %v1361
      %v1397 = vadd.f32 %v1354, %v1361
      %v1398 = vadd.f32 %v1355, %v1361
      %v1399 = vmax.f32 %v1363, 0.0
      %v1400 = vmax.f32 %v1364, 0.0
      %v1401 = vmax.f32 %v1365, 0.0
      %v1402 = vmax.f32 %v1366, 0.0
      %v1403 = vmax.f32 %v1367, 0.0
      %v1404 = vmax.f32 %v1368, 0.0
      %v1405 = vmax.f32 %v1369, 0.0
      %v1406 = vmax.f32 %v1370, 0.0
      %v1407 = vmax.f32 %v1371, 0.0
      %v1408 = vmax.f32 %v1372, 0.0
      %v1409 = vmax.f32 %v1373, 0.0
      %v1410 = vmax.f32 %v1374, 0.0
      %v1411 = vmax.f32 %v1375, 0.0
      %v1412 = vmax.f32 %v1376, 0.0
      %v1413 = vmax.f32 %v1377, 0.0
      %v1414 = vmax.f32 %v1378, 0.0
      %v1415 = vmax.f32 %v1379, 0.0
      %v1416 = vmax.f32 %v1380, 0.0
      %v1417 = vmax.f32 %v1381, 0.0
      %v1418 = vmax.f32 %v1382, 0.0
      %v1419 = vmax.f32 %v1383, 0.0
      %v1420 = vmax.f32 %v1384, 0.0
      %v1421 = vmax.f32 %v1385, 0.0
      %v1422 = vmax.f32 %v1386, 0.0
      %v1423 = vmax.f32 %v1387, 0.0
      %v1424 = vmax.f32 %v1388, 0.0
      %v1425 = vmax.f32 %v1389, 0.0
      %v1426 = vmax.f32 %v1390, 0.0
      %v1427 = vmax.f32 %v1391, 0.0
      %v1428 = vmax.f32 %v1392, 0.0
      %v1429 = vmax.f32 %v1393, 0.0
      %v1430 = vmax.f32 %v1394, 0.0
      %v1431 = vmax.f32 %v1395, 0.0
      %v1432 = vmax.f32 %v1396, 0.0
      %v1433 = vmax.f32 %v1397, 0.0
      %v1434 = vmax.f32 %v1398, 0.0
      %vm1435 = vcmask 64512
      %1436 = vst.msk [vmem:[%s224] sm:$0xff] %vm1435, %v1399
      %1437 = vst.msk [vmem:[%s224 + $0x8] sm:$0xff] %vm1435, %v1400
      %1438 = vst.msk [vmem:[%s224 + $0x10] sm:$0xff] %vm1435, %v1401
      %1439 = vst.msk [vmem:[%s224 + $0x18] sm:$0xff] %vm1435, %v1402
      %1440 = vst.msk [vmem:[%s224 + $0x20] sm:$0xff] %vm1435, %v1403
      %1441 = vst.msk [vmem:[%s224 + $0x28] sm:$0xff] %vm1435, %v1404
      %1442 = vst.msk [vmem:[%s224 + $0x30] sm:$0xff] %vm1435, %v1405
      %1443 = vst.msk [vmem:[%s224 + $0x38] sm:$0xff] %vm1435, %v1406
      %1444 = vst.msk [vmem:[%s224 + $0x40] sm:$0xff] %vm1435, %v1407
      %1445 = vst.msk [vmem:[%s224 + $0x48] sm:$0xff] %vm1435, %v1408
      %1446 = vst.msk [vmem:[%s224 + $0x50] sm:$0xff] %vm1435, %v1409
      %1447 = vst.msk [vmem:[%s224 + $0x58] sm:$0xff] %vm1435, %v1410
      %1448 = vst.msk [vmem:[%s224 + $0x60] sm:$0xff] %vm1435, %v1411
      %1449 = vst.msk [vmem:[%s224 + $0x68] sm:$0xff] %vm1435, %v1412
      %1450 = vst.msk [vmem:[%s224 + $0x70] sm:$0xff] %vm1435, %v1413
      %1451 = vst.msk [vmem:[%s224 + $0x78] sm:$0xff] %vm1435, %v1414
      %1452 = vst.msk [vmem:[%s224 + $0x80] sm:$0xff] %vm1435, %v1415
      %1453 = vst.msk [vmem:[%s224 + $0x88] sm:$0xff] %vm1435, %v1416
      %1454 = vst.msk [vmem:[%s224 + $0x90] sm:$0xff] %vm1435, %v1417
      %1455 = vst.msk [vmem:[%s224 + $0x98] sm:$0xff] %vm1435, %v1418
      %1456 = vst.msk [vmem:[%s224 + $0xa0] sm:$0xff] %vm1435, %v1419
      %1457 = vst.msk [vmem:[%s224 + $0xa8] sm:$0xff] %vm1435, %v1420
      %1458 = vst.msk [vmem:[%s224 + $0xb0] sm:$0xff] %vm1435, %v1421
      %1459 = vst.msk [vmem:[%s224 + $0xb8] sm:$0xff] %vm1435, %v1422
      %1460 = vst.msk [vmem:[%s224 + $0xc0] sm:$0xff] %vm1435, %v1423
      %1461 = vst.msk [vmem:[%s224 + $0xc8] sm:$0xff] %vm1435, %v1424
      %1462 = vst.msk [vmem:[%s224 + $0xd0] sm:$0xff] %vm1435, %v1425
      %1463 = vst.msk [vmem:[%s224 + $0xd8] sm:$0xff] %vm1435, %v1426
      %1464 = vst.msk [vmem:[%s224 + $0xe0] sm:$0xff] %vm1435, %v1427
      %1465 = vst.msk [vmem:[%s224 + $0xe8] sm:$0xff] %vm1435, %v1428
      %1466 = vst.msk [vmem:[%s224 + $0xf0] sm:$0xff] %vm1435, %v1429
      %1467 = vst.msk [vmem:[%s224 + $0xf8] sm:$0xff] %vm1435, %v1430
      %1468 = vst.msk [vmem:[%s224 + $0x100] sm:$0xff] %vm1435, %v1431
      %1469 = vst.msk [vmem:[%s224 + $0x108] sm:$0xff] %vm1435, %v1432
      %1470 = vst.msk [vmem:[%s224 + $0x110] sm:$0xff] %vm1435, %v1433
      %1471 = vst.msk [vmem:[%s224 + $0x118] sm:$0xff] %vm1435, %v1434
      %v1472 = vld [vmem:[%s219] sm:$0xf]
      %v1473 = vld [vmem:[%s219 + $0x4] sm:$0xf]
      %v1474 = vld [vmem:[%s219 + $0x8] sm:$0xf]
      %v1475 = vld [vmem:[%s219 + $0xc] sm:$0xf]
      %v1476 = vld [vmem:[%s219 + $0x10] sm:$0xf]
      %v1477 = vld [vmem:[%s219 + $0x14] sm:$0xf]
      %v1478 = vld [vmem:[%s219 + $0x18] sm:$0xf]
      %v1479 = vld [vmem:[%s219 + $0x1c] sm:$0xf]
      %v1480 = vld [vmem:[%s219 + $0x20] sm:$0xf]
      %v1481 = vld [vmem:[%s219 + $0x24] sm:$0xf]
      %v1482 = vld [vmem:[%s219 + $0x28] sm:$0xf]
      %v1483 = vld [vmem:[%s219 + $0x2c] sm:$0xf]
      %v1484 = vld [vmem:[%s219 + $0x30] sm:$0xf]
      %v1485 = vld [vmem:[%s219 + $0x34] sm:$0xf]
      %v1486 = vld [vmem:[%s219 + $0x38] sm:$0xf]
      %v1487 = vld [vmem:[%s219 + $0x3c] sm:$0xf]
      %v1488 = vld [vmem:[%s219 + $0x40] sm:$0xf]
      %v1489 = vld [vmem:[%s219 + $0x44] sm:$0xf]
      %v1490 = vld [vmem:[%s219 + $0x48] sm:$0xf]
      %v1491 = vld [vmem:[%s219 + $0x4c] sm:$0xf]
      %v1492 = vld [vmem:[%s219 + $0x50] sm:$0xf]
      %v1493 = vld [vmem:[%s219 + $0x54] sm:$0xf]
      %v1494 = vld [vmem:[%s219 + $0x58] sm:$0xf]
      %v1495 = vld [vmem:[%s219 + $0x5c] sm:$0xf]
      %v1496 = vld [vmem:[%s219 + $0x60] sm:$0xf]
      %v1497 = vld [vmem:[%s219 + $0x64] sm:$0xf]
      %v1498 = vld [vmem:[%s219 + $0x68] sm:$0xf]
      %v1499 = vld [vmem:[%s219 + $0x6c] sm:$0xf]
      %v1500 = vld [vmem:[%s219 + $0x70] sm:$0xf]
      %v1501 = vld [vmem:[%s219 + $0x74] sm:$0xf]
      %v1502 = vld [vmem:[%s219 + $0x78] sm:$0xf]
      %v1503 = vld [vmem:[%s219 + $0x7c] sm:$0xf]
      %v1504 = vld [vmem:[%s219 + $0x80] sm:$0xf]
      %v1505 = vld [vmem:[%s219 + $0x84] sm:$0xf]
      %v1506 = vld [vmem:[%s219 + $0x88] sm:$0xf]
      %v1507 = vld [vmem:[%s219 + $0x8c] sm:$0xf]
      %v1508 = vld [vmem:[%s219 + $0x90] sm:$0x1]
      %v1509 = vld [vmem:[%s2] sm:$0x3]
      %v1510 = vld [vmem:[%s219 + $0x8] sm:$0xe]
      %v1511 = vld [vmem:[%s219 + $0x90] sm:$0xf]
      %v1512 = vld [vmem:[%s219 + $0x94] sm:$0xf]
      %v1513 = vld [vmem:[%s219 + $0x98] sm:$0x3]
      %s1514 = scalar_lea.vmem %s2, 2
      %v1515 = vld [vmem:[%s1514] sm:$0x3]
      %v1553 = vunpack.c.l.b16 %v1510
      %v1554 = vunpack.c.l.b16 %v1475
      %v1555 = vunpack.c.l.b16 %v1476
      %v1556 = vunpack.c.l.b16 %v1477
      %v1557 = vunpack.c.l.b16 %v1478
      %v1558 = vunpack.c.l.b16 %v1479
      %v1559 = vunpack.c.l.b16 %v1480
      %v1560 = vunpack.c.l.b16 %v1481
      %v1561 = vunpack.c.l.b16 %v1482
      %v1562 = vunpack.c.l.b16 %v1483
      %v1563 = vunpack.c.l.b16 %v1484
      %v1564 = vunpack.c.l.b16 %v1485
      %v1565 = vunpack.c.l.b16 %v1486
      %v1566 = vunpack.c.l.b16 %v1487
      %v1567 = vunpack.c.l.b16 %v1488
      %v1568 = vunpack.c.l.b16 %v1489
      %v1569 = vunpack.c.l.b16 %v1490
      %v1570 = vunpack.c.l.b16 %v1491
      %v1571 = vunpack.c.l.b16 %v1492
      %v1572 = vunpack.c.l.b16 %v1493
      %v1573 = vunpack.c.l.b16 %v1494
      %v1574 = vunpack.c.l.b16 %v1495
      %v1575 = vunpack.c.l.b16 %v1496
      %v1576 = vunpack.c.l.b16 %v1497
      %v1577 = vunpack.c.l.b16 %v1498
      %v1578 = vunpack.c.l.b16 %v1499
      %v1579 = vunpack.c.l.b16 %v1500
      %v1580 = vunpack.c.l.b16 %v1501
      %v1581 = vunpack.c.l.b16 %v1502
      %v1582 = vunpack.c.l.b16 %v1503
      %v1583 = vunpack.c.l.b16 %v1504
      %v1584 = vunpack.c.l.b16 %v1505
      %v1585 = vunpack.c.l.b16 %v1506
      %v1586 = vunpack.c.l.b16 %v1507
      %v1587 = vunpack.c.l.b16 %v1511
      %v1588 = vunpack.c.l.b16 %v1512
      %v1589 = vunpack.c.l.b16 %v1513
      %v1590 = vpack.c.b16 %v1554, %v1553
      %v1591 = vpack.c.b16 %v1556, %v1555
      %v1592 = vpack.c.b16 %v1558, %v1557
      %v1593 = vpack.c.b16 %v1560, %v1559
      %v1594 = vpack.c.b16 %v1562, %v1561
      %v1595 = vpack.c.b16 %v1564, %v1563
      %v1596 = vpack.c.b16 %v1566, %v1565
      %v1597 = vpack.c.b16 %v1568, %v1567
      %v1598 = vpack.c.b16 %v1570, %v1569
      %v1599 = vpack.c.b16 %v1572, %v1571
      %v1600 = vpack.c.b16 %v1574, %v1573
      %v1601 = vpack.c.b16 %v1576, %v1575
      %v1602 = vpack.c.b16 %v1578, %v1577
      %v1603 = vpack.c.b16 %v1580, %v1579
      %v1604 = vpack.c.b16 %v1582, %v1581
      %v1605 = vpack.c.b16 %v1584, %v1583
      %v1606 = vpack.c.b16 %v1586, %v1585
      %v1607 = vpack.c.b16 %v1588, %v1587
      %v1608 = vpack.c.b16 %v1589, %v1589
      %v1610 = vshrl.u32 %v1590, 16
      %v1612 = vrot.slane %v1610, 1
      %v1613 = vshll.u32 %v1590, 16
      %v1615 = vrot.slane %v1613, 2
      %v1616 = vor.u32 %v1612, %v1615
      %v1618 = vshrl.u32 %v1591, 16
      %v1620 = vrot.slane %v1618, 1
      %v1621 = vshll.u32 %v1591, 16
      %v1623 = vrot.slane %v1621, 2
      %v1624 = vor.u32 %v1620, %v1623
      %v1625 = vsel %vm360, %v1616, %v1624
      %v1627 = vshrl.u32 %v1592, 16
      %v1629 = vrot.slane %v1627, 1
      %v1630 = vshll.u32 %v1592, 16
      %v1632 = vrot.slane %v1630, 2
      %v1633 = vor.u32 %v1629, %v1632
      %v1634 = vsel %vm360, %v1624, %v1633
      %v1636 = vshrl.u32 %v1593, 16
      %v1638 = vrot.slane %v1636, 1
      %v1639 = vshll.u32 %v1593, 16
      %v1641 = vrot.slane %v1639, 2
      %v1642 = vor.u32 %v1638, %v1641
      %v1643 = vsel %vm360, %v1633, %v1642
      %v1645 = vshrl.u32 %v1594, 16
      %v1647 = vrot.slane %v1645, 1
      %v1648 = vshll.u32 %v1594, 16
      %v1650 = vrot.slane %v1648, 2
      %v1651 = vor.u32 %v1647, %v1650
      %v1652 = vsel %vm360, %v1642, %v1651
      %v1654 = vshrl.u32 %v1595, 16
      %v1656 = vrot.slane %v1654, 1
      %v1657 = vshll.u32 %v1595, 16
      %v1659 = vrot.slane %v1657, 2
      %v1660 = vor.u32 %v1656, %v1659
      %v1661 = vsel %vm360, %v1651, %v1660
      %v1663 = vshrl.u32 %v1596, 16
      %v1665 = vrot.slane %v1663, 1
      %v1666 = vshll.u32 %v1596, 16
      %v1668 = vrot.slane %v1666, 2
      %v1669 = vor.u32 %v1665, %v1668
      %v1670 = vsel %vm360, %v1660, %v1669
      %v1672 = vshrl.u32 %v1597, 16
      %v1674 = vrot.slane %v1672, 1
      %v1675 = vshll.u32 %v1597, 16
      %v1677 = vrot.slane %v1675, 2
      %v1678 = vor.u32 %v1674, %v1677
      %v1679 = vsel %vm360, %v1669, %v1678
      %v1681 = vshrl.u32 %v1598, 16
      %v1683 = vrot.slane %v1681, 1
      %v1684 = vshll.u32 %v1598, 16
      %v1686 = vrot.slane %v1684, 2
      %v1687 = vor.u32 %v1683, %v1686
      %v1688 = vsel %vm360, %v1678, %v1687
      %v1690 = vshrl.u32 %v1599, 16
      %v1692 = vrot.slane %v1690, 1
      %v1693 = vshll.u32 %v1599, 16
      %v1695 = vrot.slane %v1693, 2
      %v1696 = vor.u32 %v1692, %v1695
      %v1697 = vsel %vm360, %v1687, %v1696
      %v1699 = vshrl.u32 %v1600, 16
      %v1701 = vrot.slane %v1699, 1
      %v1702 = vshll.u32 %v1600, 16
      %v1704 = vrot.slane %v1702, 2
      %v1705 = vor.u32 %v1701, %v1704
      %v1706 = vsel %vm360, %v1696, %v1705
      %v1708 = vshrl.u32 %v1601, 16
      %v1710 = vrot.slane %v1708, 1
      %v1711 = vshll.u32 %v1601, 16
      %v1713 = vrot.slane %v1711, 2
      %v1714 = vor.u32 %v1710, %v1713
      %v1715 = vsel %vm360, %v1705, %v1714
      %v1717 = vshrl.u32 %v1602, 16
      %v1719 = vrot.slane %v1717, 1
      %v1720 = vshll.u32 %v1602, 16
      %v1722 = vrot.slane %v1720, 2
      %v1723 = vor.u32 %v1719, %v1722
      %v1724 = vsel %vm360, %v1714, %v1723
      %v1726 = vshrl.u32 %v1603, 16
      %v1728 = vrot.slane %v1726, 1
      %v1729 = vshll.u32 %v1603, 16
      %v1731 = vrot.slane %v1729, 2
      %v1732 = vor.u32 %v1728, %v1731
      %v1733 = vsel %vm360, %v1723, %v1732
      %v1735 = vshrl.u32 %v1604, 16
      %v1737 = vrot.slane %v1735, 1
      %v1738 = vshll.u32 %v1604, 16
      %v1740 = vrot.slane %v1738, 2
      %v1741 = vor.u32 %v1737, %v1740
      %v1742 = vsel %vm360, %v1732, %v1741
      %v1744 = vshrl.u32 %v1605, 16
      %v1746 = vrot.slane %v1744, 1
      %v1747 = vshll.u32 %v1605, 16
      %v1749 = vrot.slane %v1747, 2
      %v1750 = vor.u32 %v1746, %v1749
      %v1751 = vsel %vm360, %v1741, %v1750
      %v1753 = vshrl.u32 %v1606, 16
      %v1755 = vrot.slane %v1753, 1
      %v1756 = vshll.u32 %v1606, 16
      %v1758 = vrot.slane %v1756, 2
      %v1759 = vor.u32 %v1755, %v1758
      %v1760 = vsel %vm360, %v1750, %v1759
      %v1762 = vshrl.u32 %v1607, 16
      %v1764 = vrot.slane %v1762, 1
      %v1765 = vshll.u32 %v1607, 16
      %v1767 = vrot.slane %v1765, 2
      %v1768 = vor.u32 %v1764, %v1767
      %v1769 = vsel %vm360, %v1759, %v1768
      %v1771 = vshrl.u32 %v1608, 16
      %v1773 = vrot.slane %v1771, 1
      %v1774 = vshll.u32 %v1608, 16
      %v1776 = vrot.slane %v1774, 2
      %v1777 = vor.u32 %v1773, %v1776
      %v1778 = vsel %vm360, %v1768, %v1777
      %v1780 = vsel %vm531, %v1625, 0
      %v1783 = vsel %vm531, %v1634, 0
      %v1786 = vsel %vm531, %v1643, 0
      %v1789 = vsel %vm531, %v1652, 0
      %v1792 = vsel %vm531, %v1661, 0
      %v1795 = vsel %vm531, %v1670, 0
      %v1798 = vsel %vm531, %v1679, 0
      %v1801 = vsel %vm531, %v1688, 0
      %v1804 = vsel %vm531, %v1697, 0
      %v1807 = vsel %vm531, %v1706, 0
      %v1810 = vsel %vm531, %v1715, 0
      %v1813 = vsel %vm531, %v1724, 0
      %v1816 = vsel %vm531, %v1733, 0
      %v1819 = vsel %vm531, %v1742, 0
      %v1822 = vsel %vm531, %v1751, 0
      %v1825 = vsel %vm531, %v1760, 0
      %v1828 = vsel %vm531, %v1769, 0
      %v1831 = vsel %vm531, %v1778, 0
      %v1834 = vsel %vm586, %v1515, 0
      %1836 = vmatprep.subr.bf16.mxu0 0
      %1837 = vmatpush1.bf16.msra.mxu0 0
      %1838 = vmatprep.subr.bf16.mxu0 0
      %1839 = vmatpush1.bf16.msra.mxu0 0
      %1840 = vmatprep.subr.bf16.mxu0 0
      %1841 = vmatpush1.bf16.msra.mxu0 0
      %1842 = vmatprep.subr.bf16.mxu0 0
      %1843 = vmatpush1.bf16.msra.mxu0 0
      %1844 = vmatprep.subr.bf16.mxu0 0
      %1845 = vmatpush1.bf16.msra.mxu0 0
      %1846 = vmatprep.subr.bf16.mxu0 0
      %1847 = vmatpush1.bf16.msra.mxu0 0
      %1848 = vmatprep.subr.bf16.mxu0 0
      %1849 = vmatpush1.bf16.msra.mxu0 0
      %1850 = vmatprep.subr.bf16.mxu0 0
      %1851 = vmatpush1.bf16.msra.mxu0 %v1834
      %1852 = vmatprep.subr.bf16.mxu0 0
      %1853 = vmatpush2.bf16.msra.mxu0 0
      %1854 = vmatprep.subr.bf16.mxu0 0
      %1855 = vmatpush2.bf16.msra.mxu0 0
      %1856 = vmatprep.subr.bf16.mxu0 0
      %1857 = vmatpush2.bf16.msra.mxu0 0
      %1858 = vmatprep.subr.bf16.mxu0 0
      %1859 = vmatpush2.bf16.msra.mxu0 0
      %1860 = vmatprep.subr.bf16.mxu0 0
      %1861 = vmatpush2.bf16.msra.mxu0 0
      %1862 = vmatprep.subr.bf16.mxu0 0
      %1863 = vmatpush2.bf16.msra.mxu0 0
      %1864 = vmatprep.subr.bf16.mxu0 0
      %1865 = vmatpush2.bf16.msra.mxu0 0
      %1866 = vmatprep.subr.bf16.mxu0 0
      %1867 = vmatpush2.bf16.msra.mxu0 0
      %1868 = vmatprep.mubr.bf16.mxu0 0
      %1869 = vmatmul.mubr.bf16.gmra.mxu0 %v1780
      %v1870 = vpop.f32.mrf.mxu0
      %v1871 = vadd.f32 0.0, %v1870
      %v1872 = vpop.f32.mrf.mxu0
      %v1873 = vpop.f32.mrf.mxu0
      %v1874 = vadd.f32 0.0, %v1873
      %v1875 = vpop.f32.mrf.mxu0
      %1876 = vmatprep.mubr.bf16.mxu0 0
      %1877 = vmatmul.mubr.bf16.gmra.mxu0 %v1783
      %v1878 = vpop.f32.mrf.mxu0
      %v1879 = vadd.f32 0.0, %v1878
      %v1880 = vpop.f32.mrf.mxu0
      %v1881 = vpop.f32.mrf.mxu0
      %v1882 = vadd.f32 0.0, %v1881
      %v1883 = vpop.f32.mrf.mxu0
      %1884 = vmatprep.mubr.bf16.mxu0 0
      %1885 = vmatmul.mubr.bf16.gmra.mxu0 %v1786
      %v1886 = vpop.f32.mrf.mxu0
      %v1887 = vadd.f32 0.0, %v1886
      %v1888 = vpop.f32.mrf.mxu0
      %v1889 = vpop.f32.mrf.mxu0
      %v1890 = vadd.f32 0.0, %v1889
      %v1891 = vpop.f32.mrf.mxu0
      %1892 = vmatprep.mubr.bf16.mxu0 0
      %1893 = vmatmul.mubr.bf16.gmra.mxu0 %v1789
      %v1894 = vpop.f32.mrf.mxu0
      %v1895 = vadd.f32 0.0, %v1894
      %v1896 = vpop.f32.mrf.mxu0
      %v1897 = vpop.f32.mrf.mxu0
      %v1898 = vadd.f32 0.0, %v1897
      %v1899 = vpop.f32.mrf.mxu0
      %1900 = vmatprep.mubr.bf16.mxu0 0
      %1901 = vmatmul.mubr.bf16.gmra.mxu0 %v1792
      %v1902 = vpop.f32.mrf.mxu0
      %v1903 = vadd.f32 0.0, %v1902
      %v1904 = vpop.f32.mrf.mxu0
      %v1905 = vpop.f32.mrf.mxu0
      %v1906 = vadd.f32 0.0, %v1905
      %v1907 = vpop.f32.mrf.mxu0
      %1908 = vmatprep.mubr.bf16.mxu0 0
      %1909 = vmatmul.mubr.bf16.gmra.mxu0 %v1795
      %v1910 = vpop.f32.mrf.mxu0
      %v1911 = vadd.f32 0.0, %v1910
      %v1912 = vpop.f32.mrf.mxu0
      %v1913 = vpop.f32.mrf.mxu0
      %v1914 = vadd.f32 0.0, %v1913
      %v1915 = vpop.f32.mrf.mxu0
      %1916 = vmatprep.mubr.bf16.mxu0 0
      %1917 = vmatmul.mubr.bf16.gmra.mxu0 %v1798
      %v1918 = vpop.f32.mrf.mxu0
      %v1919 = vadd.f32 0.0, %v1918
      %v1920 = vpop.f32.mrf.mxu0
      %v1921 = vpop.f32.mrf.mxu0
      %v1922 = vadd.f32 0.0, %v1921
      %v1923 = vpop.f32.mrf.mxu0
      %1924 = vmatprep.mubr.bf16.mxu0 0
      %1925 = vmatmul.mubr.bf16.gmra.mxu0 %v1801
      %v1926 = vpop.f32.mrf.mxu0
      %v1927 = vadd.f32 0.0, %v1926
      %v1928 = vpop.f32.mrf.mxu0
      %v1929 = vpop.f32.mrf.mxu0
      %v1930 = vadd.f32 0.0, %v1929
      %v1931 = vpop.f32.mrf.mxu0
      %1932 = vmatprep.mubr.bf16.mxu0 0
      %1933 = vmatmul.mubr.bf16.gmra.mxu0 %v1804
      %v1934 = vpop.f32.mrf.mxu0
      %v1935 = vadd.f32 0.0, %v1934
      %v1936 = vpop.f32.mrf.mxu0
      %v1937 = vpop.f32.mrf.mxu0
      %v1938 = vadd.f32 0.0, %v1937
      %v1939 = vpop.f32.mrf.mxu0
      %1940 = vmatprep.mubr.bf16.mxu0 0
      %1941 = vmatmul.mubr.bf16.gmra.mxu0 %v1807
      %v1942 = vpop.f32.mrf.mxu0
      %v1943 = vadd.f32 0.0, %v1942
      %v1944 = vpop.f32.mrf.mxu0
      %v1945 = vpop.f32.mrf.mxu0
      %v1946 = vadd.f32 0.0, %v1945
      %v1947 = vpop.f32.mrf.mxu0
      %1948 = vmatprep.mubr.bf16.mxu0 0
      %1949 = vmatmul.mubr.bf16.gmra.mxu0 %v1810
      %v1950 = vpop.f32.mrf.mxu0
      %v1951 = vadd.f32 0.0, %v1950
      %v1952 = vpop.f32.mrf.mxu0
      %v1953 = vpop.f32.mrf.mxu0
      %v1954 = vadd.f32 0.0, %v1953
      %v1955 = vpop.f32.mrf.mxu0
      %1956 = vmatprep.mubr.bf16.mxu0 0
      %1957 = vmatmul.mubr.bf16.gmra.mxu0 %v1813
      %v1958 = vpop.f32.mrf.mxu0
      %v1959 = vadd.f32 0.0, %v1958
      %v1960 = vpop.f32.mrf.mxu0
      %v1961 = vpop.f32.mrf.mxu0
      %v1962 = vadd.f32 0.0, %v1961
      %v1963 = vpop.f32.mrf.mxu0
      %1964 = vmatprep.mubr.bf16.mxu0 0
      %1965 = vmatmul.mubr.bf16.gmra.mxu0 %v1816
      %v1966 = vpop.f32.mrf.mxu0
      %v1967 = vadd.f32 0.0, %v1966
      %v1968 = vpop.f32.mrf.mxu0
      %v1969 = vpop.f32.mrf.mxu0
      %v1970 = vadd.f32 0.0, %v1969
      %v1971 = vpop.f32.mrf.mxu0
      %1972 = vmatprep.mubr.bf16.mxu0 0
      %1973 = vmatmul.mubr.bf16.gmra.mxu0 %v1819
      %v1974 = vpop.f32.mrf.mxu0
      %v1975 = vadd.f32 0.0, %v1974
      %v1976 = vpop.f32.mrf.mxu0
      %v1977 = vpop.f32.mrf.mxu0
      %v1978 = vadd.f32 0.0, %v1977
      %v1979 = vpop.f32.mrf.mxu0
      %1980 = vmatprep.mubr.bf16.mxu0 0
      %1981 = vmatmul.mubr.bf16.gmra.mxu0 %v1822
      %v1982 = vpop.f32.mrf.mxu0
      %v1983 = vadd.f32 0.0, %v1982
      %v1984 = vpop.f32.mrf.mxu0
      %v1985 = vpop.f32.mrf.mxu0
      %v1986 = vadd.f32 0.0, %v1985
      %v1987 = vpop.f32.mrf.mxu0
      %1988 = vmatprep.mubr.bf16.mxu0 0
      %1989 = vmatmul.mubr.bf16.gmra.mxu0 %v1825
      %v1990 = vpop.f32.mrf.mxu0
      %v1991 = vadd.f32 0.0, %v1990
      %v1992 = vpop.f32.mrf.mxu0
      %v1993 = vpop.f32.mrf.mxu0
      %v1994 = vadd.f32 0.0, %v1993
      %v1995 = vpop.f32.mrf.mxu0
      %1996 = vmatprep.mubr.bf16.mxu0 0
      %1997 = vmatmul.mubr.bf16.gmra.mxu0 %v1828
      %v1998 = vpop.f32.mrf.mxu0
      %v1999 = vadd.f32 0.0, %v1998
      %v2000 = vpop.f32.mrf.mxu0
      %v2001 = vpop.f32.mrf.mxu0
      %v2002 = vadd.f32 0.0, %v2001
      %v2003 = vpop.f32.mrf.mxu0
      %2004 = vmatprep.mubr.bf16.mxu0 0
      %2005 = vmatmul.mubr.bf16.gmra.mxu0 %v1831
      %v2006 = vpop.f32.mrf.mxu0
      %v2007 = vadd.f32 0.0, %v2006
      %v2008 = vpop.f32.mrf.mxu0
      %v2009 = vpop.f32.mrf.mxu0
      %v2010 = vadd.f32 0.0, %v2009
      %v2011 = vpop.f32.mrf.mxu0
      %2012 = vdwg.mxu0
      %v2017 = vunpack.c.l.b16 %v1472
      %v2018 = vunpack.c.l.b16 %v1473
      %v2019 = vunpack.c.l.b16 %v1474
      %v2020 = vunpack.c.l.b16 %v1508
      %v2021 = vpack.c.b16 %v2018, %v2017
      %v2022 = vpack.c.b16 %v1554, %v2019
      %v2023 = vpack.c.b16 %v2020, %v2020
      %vm2024 = vsmask.f32 7424
      %v2026 = vshrl.u32 %v2021, 16
      %v2028 = vshll.u32 %v2021, 16
      %v2030 = vrot.slane %v2028, 1
      %v2031 = vor.u32 %v2026, %v2030
      %v2033 = vshll.u32 %v2022, 16
      %v2035 = vrot.slane %v2033, 1
      %v2036 = vsel %vm2024, %v2031, %v2035
      %v2037 = vshrl.u32 %v2022, 16
      %v2039 = vor.u32 %v2037, %v2035
      %v2040 = vrot.slane %v1621, 1
      %v2041 = vsel %vm2024, %v2039, %v2040
      %v2042 = vor.u32 %v1618, %v2040
      %v2043 = vrot.slane %v1630, 1
      %v2044 = vsel %vm2024, %v2042, %v2043
      %v2045 = vor.u32 %v1627, %v2043
      %v2046 = vrot.slane %v1639, 1
      %v2047 = vsel %vm2024, %v2045, %v2046
      %v2048 = vor.u32 %v1636, %v2046
      %v2049 = vrot.slane %v1648, 1
      %v2050 = vsel %vm2024, %v2048, %v2049
      %v2051 = vor.u32 %v1645, %v2049
      %v2052 = vrot.slane %v1657, 1
      %v2053 = vsel %vm2024, %v2051, %v2052
      %v2054 = vor.u32 %v1654, %v2052
      %v2055 = vrot.slane %v1666, 1
      %v2056 = vsel %vm2024, %v2054, %v2055
      %v2057 = vor.u32 %v1663, %v2055
      %v2058 = vrot.slane %v1675, 1
      %v2059 = vsel %vm2024, %v2057, %v2058
      %v2060 = vor.u32 %v1672, %v2058
      %v2061 = vrot.slane %v1684, 1
      %v2062 = vsel %vm2024, %v2060, %v2061
      %v2063 = vor.u32 %v1681, %v2061
      %v2064 = vrot.slane %v1693, 1
      %v2065 = vsel %vm2024, %v2063, %v2064
      %v2066 = vor.u32 %v1690, %v2064
      %v2067 = vrot.slane %v1702, 1
      %v2068 = vsel %vm2024, %v2066, %v2067
      %v2069 = vor.u32 %v1699, %v2067
      %v2070 = vrot.slane %v1711, 1
      %v2071 = vsel %vm2024, %v2069, %v2070
      %v2072 = vor.u32 %v1708, %v2070
      %v2073 = vrot.slane %v1720, 1
      %v2074 = vsel %vm2024, %v2072, %v2073
      %v2075 = vor.u32 %v1717, %v2073
      %v2076 = vrot.slane %v1729, 1
      %v2077 = vsel %vm2024, %v2075, %v2076
      %v2078 = vor.u32 %v1726, %v2076
      %v2079 = vrot.slane %v1738, 1
      %v2080 = vsel %vm2024, %v2078, %v2079
      %v2081 = vor.u32 %v1735, %v2079
      %v2082 = vrot.slane %v1747, 1
      %v2083 = vsel %vm2024, %v2081, %v2082
      %v2084 = vor.u32 %v1744, %v2082
      %v2085 = vrot.slane %v1756, 1
      %v2086 = vsel %vm2024, %v2084, %v2085
      %v2087 = vor.u32 %v1753, %v2085
      %v2089 = vshll.u32 %v2023, 16
      %v2091 = vrot.slane %v2089, 1
      %v2092 = vsel %vm2024, %v2087, %v2091
      %v2094 = vsel %vm531, %v2036, 0
      %v2097 = vsel %vm531, %v2041, 0
      %v2100 = vsel %vm531, %v2044, 0
      %v2103 = vsel %vm531, %v2047, 0
      %v2106 = vsel %vm531, %v2050, 0
      %v2109 = vsel %vm531, %v2053, 0
      %v2112 = vsel %vm531, %v2056, 0
      %v2115 = vsel %vm531, %v2059, 0
      %v2118 = vsel %vm531, %v2062, 0
      %v2121 = vsel %vm531, %v2065, 0
      %v2124 = vsel %vm531, %v2068, 0
      %v2127 = vsel %vm531, %v2071, 0
      %v2130 = vsel %vm531, %v2074, 0
      %v2133 = vsel %vm531, %v2077, 0
      %v2136 = vsel %vm531, %v2080, 0
      %v2139 = vsel %vm531, %v2083, 0
      %v2142 = vsel %vm531, %v2086, 0
      %v2145 = vsel %vm531, %v2092, 0
      %v2148 = vsel %vm586, %v1509, 0
      %2150 = vmatprep.subr.bf16.mxu0 0
      %2151 = vmatpush1.bf16.msra.mxu0 0
      %2152 = vmatprep.subr.bf16.mxu0 0
      %2153 = vmatpush1.bf16.msra.mxu0 0
      %2154 = vmatprep.subr.bf16.mxu0 0
      %2155 = vmatpush1.bf16.msra.mxu0 0
      %2156 = vmatprep.subr.bf16.mxu0 0
      %2157 = vmatpush1.bf16.msra.mxu0 0
      %2158 = vmatprep.subr.bf16.mxu0 0
      %2159 = vmatpush1.bf16.msra.mxu0 0
      %2160 = vmatprep.subr.bf16.mxu0 0
      %2161 = vmatpush1.bf16.msra.mxu0 0
      %2162 = vmatprep.subr.bf16.mxu0 0
      %2163 = vmatpush1.bf16.msra.mxu0 0
      %2164 = vmatprep.subr.bf16.mxu0 0
      %2165 = vmatpush1.bf16.msra.mxu0 %v2148
      %2166 = vmatprep.subr.bf16.mxu0 0
      %2167 = vmatpush2.bf16.msra.mxu0 0
      %2168 = vmatprep.subr.bf16.mxu0 0
      %2169 = vmatpush2.bf16.msra.mxu0 0
      %2170 = vmatprep.subr.bf16.mxu0 0
      %2171 = vmatpush2.bf16.msra.mxu0 0
      %2172 = vmatprep.subr.bf16.mxu0 0
      %2173 = vmatpush2.bf16.msra.mxu0 0
      %2174 = vmatprep.subr.bf16.mxu0 0
      %2175 = vmatpush2.bf16.msra.mxu0 0
      %2176 = vmatprep.subr.bf16.mxu0 0
      %2177 = vmatpush2.bf16.msra.mxu0 0
      %2178 = vmatprep.subr.bf16.mxu0 0
      %2179 = vmatpush2.bf16.msra.mxu0 0
      %2180 = vmatprep.subr.bf16.mxu0 0
      %2181 = vmatpush2.bf16.msra.mxu0 0
      %2182 = vmatprep.mubr.bf16.mxu0 0
      %2183 = vmatmul.mubr.bf16.gmra.mxu0 %v2094
      %v2184 = vpop.f32.mrf.mxu0
      %v2185 = vadd.f32 %v1871, %v2184
      %v2186 = vpop.f32.mrf.mxu0
      %v2187 = vpop.f32.mrf.mxu0
      %v2188 = vadd.f32 %v1874, %v2187
      %v2189 = vpop.f32.mrf.mxu0
      %2190 = vmatprep.mubr.bf16.mxu0 0
      %2191 = vmatmul.mubr.bf16.gmra.mxu0 %v2097
      %v2192 = vpop.f32.mrf.mxu0
      %v2193 = vadd.f32 %v1879, %v2192
      %v2194 = vpop.f32.mrf.mxu0
      %v2195 = vpop.f32.mrf.mxu0
      %v2196 = vadd.f32 %v1882, %v2195
      %v2197 = vpop.f32.mrf.mxu0
      %2198 = vmatprep.mubr.bf16.mxu0 0
      %2199 = vmatmul.mubr.bf16.gmra.mxu0 %v2100
      %v2200 = vpop.f32.mrf.mxu0
      %v2201 = vadd.f32 %v1887, %v2200
      %v2202 = vpop.f32.mrf.mxu0
      %v2203 = vpop.f32.mrf.mxu0
      %v2204 = vadd.f32 %v1890, %v2203
      %v2205 = vpop.f32.mrf.mxu0
      %2206 = vmatprep.mubr.bf16.mxu0 0
      %2207 = vmatmul.mubr.bf16.gmra.mxu0 %v2103
      %v2208 = vpop.f32.mrf.mxu0
      %v2209 = vadd.f32 %v1895, %v2208
      %v2210 = vpop.f32.mrf.mxu0
      %v2211 = vpop.f32.mrf.mxu0
      %v2212 = vadd.f32 %v1898, %v2211
      %v2213 = vpop.f32.mrf.mxu0
      %2214 = vmatprep.mubr.bf16.mxu0 0
      %2215 = vmatmul.mubr.bf16.gmra.mxu0 %v2106
      %v2216 = vpop.f32.mrf.mxu0
      %v2217 = vadd.f32 %v1903, %v2216
      %v2218 = vpop.f32.mrf.mxu0
      %v2219 = vpop.f32.mrf.mxu0
      %v2220 = vadd.f32 %v1906, %v2219
      %v2221 = vpop.f32.mrf.mxu0
      %2222 = vmatprep.mubr.bf16.mxu0 0
      %2223 = vmatmul.mubr.bf16.gmra.mxu0 %v2109
      %v2224 = vpop.f32.mrf.mxu0
      %v2225 = vadd.f32 %v1911, %v2224
      %v2226 = vpop.f32.mrf.mxu0
      %v2227 = vpop.f32.mrf.mxu0
      %v2228 = vadd.f32 %v1914, %v2227
      %v2229 = vpop.f32.mrf.mxu0
      %2230 = vmatprep.mubr.bf16.mxu0 0
      %2231 = vmatmul.mubr.bf16.gmra.mxu0 %v2112
      %v2232 = vpop.f32.mrf.mxu0
      %v2233 = vadd.f32 %v1919, %v2232
      %v2234 = vpop.f32.mrf.mxu0
      %v2235 = vpop.f32.mrf.mxu0
      %v2236 = vadd.f32 %v1922, %v2235
      %v2237 = vpop.f32.mrf.mxu0
      %2238 = vmatprep.mubr.bf16.mxu0 0
      %2239 = vmatmul.mubr.bf16.gmra.mxu0 %v2115
      %v2240 = vpop.f32.mrf.mxu0
      %v2241 = vadd.f32 %v1927, %v2240
      %v2242 = vpop.f32.mrf.mxu0
      %v2243 = vpop.f32.mrf.mxu0
      %v2244 = vadd.f32 %v1930, %v2243
      %v2245 = vpop.f32.mrf.mxu0
      %2246 = vmatprep.mubr.bf16.mxu0 0
      %2247 = vmatmul.mubr.bf16.gmra.mxu0 %v2118
      %v2248 = vpop.f32.mrf.mxu0
      %v2249 = vadd.f32 %v1935, %v2248
      %v2250 = vpop.f32.mrf.mxu0
      %v2251 = vpop.f32.mrf.mxu0
      %v2252 = vadd.f32 %v1938, %v2251
      %v2253 = vpop.f32.mrf.mxu0
      %2254 = vmatprep.mubr.bf16.mxu0 0
      %2255 = vmatmul.mubr.bf16.gmra.mxu0 %v2121
      %v2256 = vpop.f32.mrf.mxu0
      %v2257 = vadd.f32 %v1943, %v2256
      %v2258 = vpop.f32.mrf.mxu0
      %v2259 = vpop.f32.mrf.mxu0
      %v2260 = vadd.f32 %v1946, %v2259
      %v2261 = vpop.f32.mrf.mxu0
      %2262 = vmatprep.mubr.bf16.mxu0 0
      %2263 = vmatmul.mubr.bf16.gmra.mxu0 %v2124
      %v2264 = vpop.f32.mrf.mxu0
      %v2265 = vadd.f32 %v1951, %v2264
      %v2266 = vpop.f32.mrf.mxu0
      %v2267 = vpop.f32.mrf.mxu0
      %v2268 = vadd.f32 %v1954, %v2267
      %v2269 = vpop.f32.mrf.mxu0
      %2270 = vmatprep.mubr.bf16.mxu0 0
      %2271 = vmatmul.mubr.bf16.gmra.mxu0 %v2127
      %v2272 = vpop.f32.mrf.mxu0
      %v2273 = vadd.f32 %v1959, %v2272
      %v2274 = vpop.f32.mrf.mxu0
      %v2275 = vpop.f32.mrf.mxu0
      %v2276 = vadd.f32 %v1962, %v2275
      %v2277 = vpop.f32.mrf.mxu0
      %2278 = vmatprep.mubr.bf16.mxu0 0
      %2279 = vmatmul.mubr.bf16.gmra.mxu0 %v2130
      %v2280 = vpop.f32.mrf.mxu0
      %v2281 = vadd.f32 %v1967, %v2280
      %v2282 = vpop.f32.mrf.mxu0
      %v2283 = vpop.f32.mrf.mxu0
      %v2284 = vadd.f32 %v1970, %v2283
      %v2285 = vpop.f32.mrf.mxu0
      %2286 = vmatprep.mubr.bf16.mxu0 0
      %2287 = vmatmul.mubr.bf16.gmra.mxu0 %v2133
      %v2288 = vpop.f32.mrf.mxu0
      %v2289 = vadd.f32 %v1975, %v2288
      %v2290 = vpop.f32.mrf.mxu0
      %v2291 = vpop.f32.mrf.mxu0
      %v2292 = vadd.f32 %v1978, %v2291
      %v2293 = vpop.f32.mrf.mxu0
      %2294 = vmatprep.mubr.bf16.mxu0 0
      %2295 = vmatmul.mubr.bf16.gmra.mxu0 %v2136
      %v2296 = vpop.f32.mrf.mxu0
      %v2297 = vadd.f32 %v1983, %v2296
      %v2298 = vpop.f32.mrf.mxu0
      %v2299 = vpop.f32.mrf.mxu0
      %v2300 = vadd.f32 %v1986, %v2299
      %v2301 = vpop.f32.mrf.mxu0
      %2302 = vmatprep.mubr.bf16.mxu0 0
      %2303 = vmatmul.mubr.bf16.gmra.mxu0 %v2139
      %v2304 = vpop.f32.mrf.mxu0
      %v2305 = vadd.f32 %v1991, %v2304
      %v2306 = vpop.f32.mrf.mxu0
      %v2307 = vpop.f32.mrf.mxu0
      %v2308 = vadd.f32 %v1994, %v2307
      %v2309 = vpop.f32.mrf.mxu0
      %2310 = vmatprep.mubr.bf16.mxu0 0
      %2311 = vmatmul.mubr.bf16.gmra.mxu0 %v2142
      %v2312 = vpop.f32.mrf.mxu0
      %v2313 = vadd.f32 %v1999, %v2312
      %v2314 = vpop.f32.mrf.mxu0
      %v2315 = vpop.f32.mrf.mxu0
      %v2316 = vadd.f32 %v2002, %v2315
      %v2317 = vpop.f32.mrf.mxu0
      %2318 = vmatprep.mubr.bf16.mxu0 0
      %2319 = vmatmul.mubr.bf16.gmra.mxu0 %v2145
      %v2320 = vpop.f32.mrf.mxu0
      %v2321 = vadd.f32 %v2007, %v2320
      %v2322 = vpop.f32.mrf.mxu0
      %v2323 = vpop.f32.mrf.mxu0
      %v2324 = vadd.f32 %v2010, %v2323
      %v2325 = vpop.f32.mrf.mxu0
      %2326 = vdwg.mxu0
      %v2327 = vld [vmem:[%s219 + $0x10] sm:$0xc]
      %v2328 = vld [vmem:[%s219 + $0x14] sm:$0xf]
      %v2329 = vld [vmem:[%s219 + $0x18] sm:$0xf]
      %v2330 = vld [vmem:[%s219 + $0x1c] sm:$0xf]
      %v2331 = vld [vmem:[%s219 + $0x20] sm:$0xf]
      %v2332 = vld [vmem:[%s219 + $0x24] sm:$0xf]
      %v2333 = vld [vmem:[%s219 + $0x28] sm:$0xf]
      %v2334 = vld [vmem:[%s219 + $0x2c] sm:$0xf]
      %v2335 = vld [vmem:[%s219 + $0x30] sm:$0xf]
      %v2336 = vld [vmem:[%s219 + $0x34] sm:$0xf]
      %v2337 = vld [vmem:[%s219 + $0x38] sm:$0xf]
      %v2338 = vld [vmem:[%s219 + $0x3c] sm:$0xf]
      %v2339 = vld [vmem:[%s219 + $0x40] sm:$0xf]
      %v2340 = vld [vmem:[%s219 + $0x44] sm:$0xf]
      %v2341 = vld [vmem:[%s219 + $0x48] sm:$0xf]
      %v2342 = vld [vmem:[%s219 + $0x4c] sm:$0xf]
      %v2343 = vld [vmem:[%s219 + $0x50] sm:$0xf]
      %v2344 = vld [vmem:[%s219 + $0x54] sm:$0xf]
      %v2345 = vld [vmem:[%s219 + $0x58] sm:$0xf]
      %v2346 = vld [vmem:[%s219 + $0x5c] sm:$0xf]
      %v2347 = vld [vmem:[%s219 + $0x60] sm:$0xf]
      %v2348 = vld [vmem:[%s219 + $0x64] sm:$0xf]
      %v2349 = vld [vmem:[%s219 + $0x68] sm:$0xf]
      %v2350 = vld [vmem:[%s219 + $0x6c] sm:$0xf]
      %v2351 = vld [vmem:[%s219 + $0x70] sm:$0xf]
      %v2352 = vld [vmem:[%s219 + $0x74] sm:$0xf]
      %v2353 = vld [vmem:[%s219 + $0x78] sm:$0xf]
      %v2354 = vld [vmem:[%s219 + $0x7c] sm:$0xf]
      %v2355 = vld [vmem:[%s219 + $0x80] sm:$0xf]
      %v2356 = vld [vmem:[%s219 + $0x84] sm:$0xf]
      %v2357 = vld [vmem:[%s219 + $0x88] sm:$0xf]
      %v2358 = vld [vmem:[%s219 + $0x8c] sm:$0xf]
      %v2359 = vld [vmem:[%s219 + $0x90] sm:$0xf]
      %v2360 = vld [vmem:[%s219 + $0x94] sm:$0xf]
      %v2361 = vld [vmem:[%s219 + $0x98] sm:$0xf]
      %v2362 = vld [vmem:[%s219 + $0x9c] sm:$0xf]
      %v2363 = vld [vmem:[%s219 + $0xa0] sm:$0x7]
      %s2364 = scalar_lea.vmem %s2, 4
      %v2365 = vld [vmem:[%s2364] sm:$0x3]
      %v2403 = vunpack.c.l.b16 %v2327
      %v2404 = vunpack.c.l.b16 %v2328
      %v2405 = vunpack.c.l.b16 %v2329
      %v2406 = vunpack.c.l.b16 %v2330
      %v2407 = vunpack.c.l.b16 %v2331
      %v2408 = vunpack.c.l.b16 %v2332
      %v2409 = vunpack.c.l.b16 %v2333
      %v2410 = vunpack.c.l.b16 %v2334
      %v2411 = vunpack.c.l.b16 %v2335
      %v2412 = vunpack.c.l.b16 %v2336
      %v2413 = vunpack.c.l.b16 %v2337
      %v2414 = vunpack.c.l.b16 %v2338
      %v2415 = vunpack.c.l.b16 %v2339
      %v2416 = vunpack.c.l.b16 %v2340
      %v2417 = vunpack.c.l.b16 %v2341
      %v2418 = vunpack.c.l.b16 %v2342
      %v2419 = vunpack.c.l.b16 %v2343
      %v2420 = vunpack.c.l.b16 %v2344
      %v2421 = vunpack.c.l.b16 %v2345
      %v2422 = vunpack.c.l.b16 %v2346
      %v2423 = vunpack.c.l.b16 %v2347
      %v2424 = vunpack.c.l.b16 %v2348
      %v2425 = vunpack.c.l.b16 %v2349
      %v2426 = vunpack.c.l.b16 %v2350
      %v2427 = vunpack.c.l.b16 %v2351
      %v2428 = vunpack.c.l.b16 %v2352
      %v2429 = vunpack.c.l.b16 %v2353
      %v2430 = vunpack.c.l.b16 %v2354
      %v2431 = vunpack.c.l.b16 %v2355
      %v2432 = vunpack.c.l.b16 %v2356
      %v2433 = vunpack.c.l.b16 %v2357
      %v2434 = vunpack.c.l.b16 %v2358
      %v2435 = vunpack.c.l.b16 %v2359
      %v2436 = vunpack.c.l.b16 %v2360
      %v2437 = vunpack.c.l.b16 %v2361
      %v2438 = vunpack.c.l.b16 %v2362
      %v2439 = vunpack.c.l.b16 %v2363
      %v2440 = vpack.c.b16 %v2404, %v2403
      %v2441 = vpack.c.b16 %v2406, %v2405
      %v2442 = vpack.c.b16 %v2408, %v2407
      %v2443 = vpack.c.b16 %v2410, %v2409
      %v2444 = vpack.c.b16 %v2412, %v2411
      %v2445 = vpack.c.b16 %v2414, %v2413
      %v2446 = vpack.c.b16 %v2416, %v2415
      %v2447 = vpack.c.b16 %v2418, %v2417
      %v2448 = vpack.c.b16 %v2420, %v2419
      %v2449 = vpack.c.b16 %v2422, %v2421
      %v2450 = vpack.c.b16 %v2424, %v2423
      %v2451 = vpack.c.b16 %v2426, %v2425
      %v2452 = vpack.c.b16 %v2428, %v2427
      %v2453 = vpack.c.b16 %v2430, %v2429
      %v2454 = vpack.c.b16 %v2432, %v2431
      %v2455 = vpack.c.b16 %v2434, %v2433
      %v2456 = vpack.c.b16 %v2436, %v2435
      %v2457 = vpack.c.b16 %v2438, %v2437
      %v2458 = vpack.c.b16 %v2439, %v2439
      %vm2459 = vsmask.f32 5376
      %v2461 = vshrl.u32 %v2440, 16
      %v2463 = vrot.slane %v2461, 2
      %v2464 = vshll.u32 %v2440, 16
      %v2466 = vrot.slane %v2464, 3
      %v2467 = vor.u32 %v2463, %v2466
      %v2469 = vshrl.u32 %v2441, 16
      %v2471 = vrot.slane %v2469, 2
      %v2472 = vshll.u32 %v2441, 16
      %v2474 = vrot.slane %v2472, 3
      %v2475 = vor.u32 %v2471, %v2474
      %v2476 = vsel %vm2459, %v2467, %v2475
      %v2478 = vshrl.u32 %v2442, 16
      %v2480 = vrot.slane %v2478, 2
      %v2481 = vshll.u32 %v2442, 16
      %v2483 = vrot.slane %v2481, 3
      %v2484 = vor.u32 %v2480, %v2483
      %v2485 = vsel %vm2459, %v2475, %v2484
      %v2487 = vshrl.u32 %v2443, 16
      %v2489 = vrot.slane %v2487, 2
      %v2490 = vshll.u32 %v2443, 16
      %v2492 = vrot.slane %v2490, 3
      %v2493 = vor.u32 %v2489, %v2492
      %v2494 = vsel %vm2459, %v2484, %v2493
      %v2496 = vshrl.u32 %v2444, 16
      %v2498 = vrot.slane %v2496, 2
      %v2499 = vshll.u32 %v2444, 16
      %v2501 = vrot.slane %v2499, 3
      %v2502 = vor.u32 %v2498, %v2501
      %v2503 = vsel %vm2459, %v2493, %v2502
      %v2505 = vshrl.u32 %v2445, 16
      %v2507 = vrot.slane %v2505, 2
      %v2508 = vshll.u32 %v2445, 16
      %v2510 = vrot.slane %v2508, 3
      %v2511 = vor.u32 %v2507, %v2510
      %v2512 = vsel %vm2459, %v2502, %v2511
      %v2514 = vshrl.u32 %v2446, 16
      %v2516 = vrot.slane %v2514, 2
      %v2517 = vshll.u32 %v2446, 16
      %v2519 = vrot.slane %v2517, 3
      %v2520 = vor.u32 %v2516, %v2519
      %v2521 = vsel %vm2459, %v2511, %v2520
      %v2523 = vshrl.u32 %v2447, 16
      %v2525 = vrot.slane %v2523, 2
      %v2526 = vshll.u32 %v2447, 16
      %v2528 = vrot.slane %v2526, 3
      %v2529 = vor.u32 %v2525, %v2528
      %v2530 = vsel %vm2459, %v2520, %v2529
      %v2532 = vshrl.u32 %v2448, 16
      %v2534 = vrot.slane %v2532, 2
      %v2535 = vshll.u32 %v2448, 16
      %v2537 = vrot.slane %v2535, 3
      %v2538 = vor.u32 %v2534, %v2537
      %v2539 = vsel %vm2459, %v2529, %v2538
      %v2541 = vshrl.u32 %v2449, 16
      %v2543 = vrot.slane %v2541, 2
      %v2544 = vshll.u32 %v2449, 16
      %v2546 = vrot.slane %v2544, 3
      %v2547 = vor.u32 %v2543, %v2546
      %v2548 = vsel %vm2459, %v2538, %v2547
      %v2550 = vshrl.u32 %v2450, 16
      %v2552 = vrot.slane %v2550, 2
      %v2553 = vshll.u32 %v2450, 16
      %v2555 = vrot.slane %v2553, 3
      %v2556 = vor.u32 %v2552, %v2555
      %v2557 = vsel %vm2459, %v2547, %v2556
      %v2559 = vshrl.u32 %v2451, 16
      %v2561 = vrot.slane %v2559, 2
      %v2562 = vshll.u32 %v2451, 16
      %v2564 = vrot.slane %v2562, 3
      %v2565 = vor.u32 %v2561, %v2564
      %v2566 = vsel %vm2459, %v2556, %v2565
      %v2568 = vshrl.u32 %v2452, 16
      %v2570 = vrot.slane %v2568, 2
      %v2571 = vshll.u32 %v2452, 16
      %v2573 = vrot.slane %v2571, 3
      %v2574 = vor.u32 %v2570, %v2573
      %v2575 = vsel %vm2459, %v2565, %v2574
      %v2577 = vshrl.u32 %v2453, 16
      %v2579 = vrot.slane %v2577, 2
      %v2580 = vshll.u32 %v2453, 16
      %v2582 = vrot.slane %v2580, 3
      %v2583 = vor.u32 %v2579, %v2582
      %v2584 = vsel %vm2459, %v2574, %v2583
      %v2586 = vshrl.u32 %v2454, 16
      %v2588 = vrot.slane %v2586, 2
      %v2589 = vshll.u32 %v2454, 16
      %v2591 = vrot.slane %v2589, 3
      %v2592 = vor.u32 %v2588, %v2591
      %v2593 = vsel %vm2459, %v2583, %v2592
      %v2595 = vshrl.u32 %v2455, 16
      %v2597 = vrot.slane %v2595, 2
      %v2598 = vshll.u32 %v2455, 16
      %v2600 = vrot.slane %v2598, 3
      %v2601 = vor.u32 %v2597, %v2600
      %v2602 = vsel %vm2459, %v2592, %v2601
      %v2604 = vshrl.u32 %v2456, 16
      %v2606 = vrot.slane %v2604, 2
      %v2607 = vshll.u32 %v2456, 16
      %v2609 = vrot.slane %v2607, 3
      %v2610 = vor.u32 %v2606, %v2609
      %v2611 = vsel %vm2459, %v2601, %v2610
      %v2613 = vshrl.u32 %v2457, 16
      %v2615 = vrot.slane %v2613, 2
      %v2616 = vshll.u32 %v2457, 16
      %v2618 = vrot.slane %v2616, 3
      %v2619 = vor.u32 %v2615, %v2618
      %v2620 = vsel %vm2459, %v2610, %v2619
      %v2622 = vshrl.u32 %v2458, 16
      %v2624 = vrot.slane %v2622, 2
      %v2625 = vshll.u32 %v2458, 16
      %v2627 = vrot.slane %v2625, 3
      %v2628 = vor.u32 %v2624, %v2627
      %v2629 = vsel %vm2459, %v2619, %v2628
      %v2631 = vsel %vm531, %v2476, 0
      %v2634 = vsel %vm531, %v2485, 0
      %v2637 = vsel %vm531, %v2494, 0
      %v2640 = vsel %vm531, %v2503, 0
      %v2643 = vsel %vm531, %v2512, 0
      %v2646 = vsel %vm531, %v2521, 0
      %v2649 = vsel %vm531, %v2530, 0
      %v2652 = vsel %vm531, %v2539, 0
      %v2655 = vsel %vm531, %v2548, 0
      %v2658 = vsel %vm531, %v2557, 0
      %v2661 = vsel %vm531, %v2566, 0
      %v2664 = vsel %vm531, %v2575, 0
      %v2667 = vsel %vm531, %v2584, 0
      %v2670 = vsel %vm531, %v2593, 0
      %v2673 = vsel %vm531, %v2602, 0
      %v2676 = vsel %vm531, %v2611, 0
      %v2679 = vsel %vm531, %v2620, 0
      %v2682 = vsel %vm531, %v2629, 0
      %v2685 = vsel %vm586, %v2365, 0
      %2687 = vmatprep.subr.bf16.mxu0 0
      %2688 = vmatpush1.bf16.msra.mxu0 0
      %2689 = vmatprep.subr.bf16.mxu0 0
      %2690 = vmatpush1.bf16.msra.mxu0 0
      %2691 = vmatprep.subr.bf16.mxu0 0
      %2692 = vmatpush1.bf16.msra.mxu0 0
      %2693 = vmatprep.subr.bf16.mxu0 0
      %2694 = vmatpush1.bf16.msra.mxu0 0
      %2695 = vmatprep.subr.bf16.mxu0 0
      %2696 = vmatpush1.bf16.msra.mxu0 0
      %2697 = vmatprep.subr.bf16.mxu0 0
      %2698 = vmatpush1.bf16.msra.mxu0 0
      %2699 = vmatprep.subr.bf16.mxu0 0
      %2700 = vmatpush1.bf16.msra.mxu0 0
      %2701 = vmatprep.subr.bf16.mxu0 0
      %2702 = vmatpush1.bf16.msra.mxu0 %v2685
      %2703 = vmatprep.subr.bf16.mxu0 0
      %2704 = vmatpush2.bf16.msra.mxu0 0
      %2705 = vmatprep.subr.bf16.mxu0 0
      %2706 = vmatpush2.bf16.msra.mxu0 0
      %2707 = vmatprep.subr.bf16.mxu0 0
      %2708 = vmatpush2.bf16.msra.mxu0 0
      %2709 = vmatprep.subr.bf16.mxu0 0
      %2710 = vmatpush2.bf16.msra.mxu0 0
      %2711 = vmatprep.subr.bf16.mxu0 0
      %2712 = vmatpush2.bf16.msra.mxu0 0
      %2713 = vmatprep.subr.bf16.mxu0 0
      %2714 = vmatpush2.bf16.msra.mxu0 0
      %2715 = vmatprep.subr.bf16.mxu0 0
      %2716 = vmatpush2.bf16.msra.mxu0 0
      %2717 = vmatprep.subr.bf16.mxu0 0
      %2718 = vmatpush2.bf16.msra.mxu0 0
      %2719 = vmatprep.mubr.bf16.mxu0 0
      %2720 = vmatmul.mubr.bf16.gmra.mxu0 %v2631
      %v2721 = vpop.f32.mrf.mxu0
      %v2722 = vadd.f32 0.0, %v2721
      %v2723 = vpop.f32.mrf.mxu0
      %v2724 = vpop.f32.mrf.mxu0
      %v2725 = vadd.f32 0.0, %v2724
      %v2726 = vpop.f32.mrf.mxu0
      %2727 = vmatprep.mubr.bf16.mxu0 0
      %2728 = vmatmul.mubr.bf16.gmra.mxu0 %v2634
      %v2729 = vpop.f32.mrf.mxu0
      %v2730 = vadd.f32 0.0, %v2729
      %v2731 = vpop.f32.mrf.mxu0
      %v2732 = vpop.f32.mrf.mxu0
      %v2733 = vadd.f32 0.0, %v2732
      %v2734 = vpop.f32.mrf.mxu0
      %2735 = vmatprep.mubr.bf16.mxu0 0
      %2736 = vmatmul.mubr.bf16.gmra.mxu0 %v2637
      %v2737 = vpop.f32.mrf.mxu0
      %v2738 = vadd.f32 0.0, %v2737
      %v2739 = vpop.f32.mrf.mxu0
      %v2740 = vpop.f32.mrf.mxu0
      %v2741 = vadd.f32 0.0, %v2740
      %v2742 = vpop.f32.mrf.mxu0
      %2743 = vmatprep.mubr.bf16.mxu0 0
      %2744 = vmatmul.mubr.bf16.gmra.mxu0 %v2640
      %v2745 = vpop.f32.mrf.mxu0
      %v2746 = vadd.f32 0.0, %v2745
      %v2747 = vpop.f32.mrf.mxu0
      %v2748 = vpop.f32.mrf.mxu0
      %v2749 = vadd.f32 0.0, %v2748
      %v2750 = vpop.f32.mrf.mxu0
      %2751 = vmatprep.mubr.bf16.mxu0 0
      %2752 = vmatmul.mubr.bf16.gmra.mxu0 %v2643
      %v2753 = vpop.f32.mrf.mxu0
      %v2754 = vadd.f32 0.0, %v2753
      %v2755 = vpop.f32.mrf.mxu0
      %v2756 = vpop.f32.mrf.mxu0
      %v2757 = vadd.f32 0.0, %v2756
      %v2758 = vpop.f32.mrf.mxu0
      %2759 = vmatprep.mubr.bf16.mxu0 0
      %2760 = vmatmul.mubr.bf16.gmra.mxu0 %v2646
      %v2761 = vpop.f32.mrf.mxu0
      %v2762 = vadd.f32 0.0, %v2761
      %v2763 = vpop.f32.mrf.mxu0
      %v2764 = vpop.f32.mrf.mxu0
      %v2765 = vadd.f32 0.0, %v2764
      %v2766 = vpop.f32.mrf.mxu0
      %2767 = vmatprep.mubr.bf16.mxu0 0
      %2768 = vmatmul.mubr.bf16.gmra.mxu0 %v2649
      %v2769 = vpop.f32.mrf.mxu0
      %v2770 = vadd.f32 0.0, %v2769
      %v2771 = vpop.f32.mrf.mxu0
      %v2772 = vpop.f32.mrf.mxu0
      %v2773 = vadd.f32 0.0, %v2772
      %v2774 = vpop.f32.mrf.mxu0
      %2775 = vmatprep.mubr.bf16.mxu0 0
      %2776 = vmatmul.mubr.bf16.gmra.mxu0 %v2652
      %v2777 = vpop.f32.mrf.mxu0
      %v2778 = vadd.f32 0.0, %v2777
      %v2779 = vpop.f32.mrf.mxu0
      %v2780 = vpop.f32.mrf.mxu0
      %v2781 = vadd.f32 0.0, %v2780
      %v2782 = vpop.f32.mrf.mxu0
      %2783 = vmatprep.mubr.bf16.mxu0 0
      %2784 = vmatmul.mubr.bf16.gmra.mxu0 %v2655
      %v2785 = vpop.f32.mrf.mxu0
      %v2786 = vadd.f32 0.0, %v2785
      %v2787 = vpop.f32.mrf.mxu0
      %v2788 = vpop.f32.mrf.mxu0
      %v2789 = vadd.f32 0.0, %v2788
      %v2790 = vpop.f32.mrf.mxu0
      %2791 = vmatprep.mubr.bf16.mxu0 0
      %2792 = vmatmul.mubr.bf16.gmra.mxu0 %v2658
      %v2793 = vpop.f32.mrf.mxu0
      %v2794 = vadd.f32 0.0, %v2793
      %v2795 = vpop.f32.mrf.mxu0
      %v2796 = vpop.f32.mrf.mxu0
      %v2797 = vadd.f32 0.0, %v2796
      %v2798 = vpop.f32.mrf.mxu0
      %2799 = vmatprep.mubr.bf16.mxu0 0
      %2800 = vmatmul.mubr.bf16.gmra.mxu0 %v2661
      %v2801 = vpop.f32.mrf.mxu0
      %v2802 = vadd.f32 0.0, %v2801
      %v2803 = vpop.f32.mrf.mxu0
      %v2804 = vpop.f32.mrf.mxu0
      %v2805 = vadd.f32 0.0, %v2804
      %v2806 = vpop.f32.mrf.mxu0
      %2807 = vmatprep.mubr.bf16.mxu0 0
      %2808 = vmatmul.mubr.bf16.gmra.mxu0 %v2664
      %v2809 = vpop.f32.mrf.mxu0
      %v2810 = vadd.f32 0.0, %v2809
      %v2811 = vpop.f32.mrf.mxu0
      %v2812 = vpop.f32.mrf.mxu0
      %v2813 = vadd.f32 0.0, %v2812
      %v2814 = vpop.f32.mrf.mxu0
      %2815 = vmatprep.mubr.bf16.mxu0 0
      %2816 = vmatmul.mubr.bf16.gmra.mxu0 %v2667
      %v2817 = vpop.f32.mrf.mxu0
      %v2818 = vadd.f32 0.0, %v2817
      %v2819 = vpop.f32.mrf.mxu0
      %v2820 = vpop.f32.mrf.mxu0
      %v2821 = vadd.f32 0.0, %v2820
      %v2822 = vpop.f32.mrf.mxu0
      %2823 = vmatprep.mubr.bf16.mxu0 0
      %2824 = vmatmul.mubr.bf16.gmra.mxu0 %v2670
      %v2825 = vpop.f32.mrf.mxu0
      %v2826 = vadd.f32 0.0, %v2825
      %v2827 = vpop.f32.mrf.mxu0
      %v2828 = vpop.f32.mrf.mxu0
      %v2829 = vadd.f32 0.0, %v2828
      %v2830 = vpop.f32.mrf.mxu0
      %2831 = vmatprep.mubr.bf16.mxu0 0
      %2832 = vmatmul.mubr.bf16.gmra.mxu0 %v2673
      %v2833 = vpop.f32.mrf.mxu0
      %v2834 = vadd.f32 0.0, %v2833
      %v2835 = vpop.f32.mrf.mxu0
      %v2836 = vpop.f32.mrf.mxu0
      %v2837 = vadd.f32 0.0, %v2836
      %v2838 = vpop.f32.mrf.mxu0
      %2839 = vmatprep.mubr.bf16.mxu0 0
      %2840 = vmatmul.mubr.bf16.gmra.mxu0 %v2676
      %v2841 = vpop.f32.mrf.mxu0
      %v2842 = vadd.f32 0.0, %v2841
      %v2843 = vpop.f32.mrf.mxu0
      %v2844 = vpop.f32.mrf.mxu0
      %v2845 = vadd.f32 0.0, %v2844
      %v2846 = vpop.f32.mrf.mxu0
      %2847 = vmatprep.mubr.bf16.mxu0 0
      %2848 = vmatmul.mubr.bf16.gmra.mxu0 %v2679
      %v2849 = vpop.f32.mrf.mxu0
      %v2850 = vadd.f32 0.0, %v2849
      %v2851 = vpop.f32.mrf.mxu0
      %v2852 = vpop.f32.mrf.mxu0
      %v2853 = vadd.f32 0.0, %v2852
      %v2854 = vpop.f32.mrf.mxu0
      %2855 = vmatprep.mubr.bf16.mxu0 0
      %2856 = vmatmul.mubr.bf16.gmra.mxu0 %v2682
      %v2857 = vpop.f32.mrf.mxu0
      %v2858 = vadd.f32 0.0, %v2857
      %v2859 = vpop.f32.mrf.mxu0
      %v2860 = vpop.f32.mrf.mxu0
      %v2861 = vadd.f32 0.0, %v2860
      %v2862 = vpop.f32.mrf.mxu0
      %2863 = vdwg.mxu0
      %v2864 = vadd.f32 %v2185, %v2722
      %v2865 = vadd.f32 %v2188, %v2725
      %v2866 = vadd.f32 %v2193, %v2730
      %v2867 = vadd.f32 %v2196, %v2733
      %v2868 = vadd.f32 %v2201, %v2738
      %v2869 = vadd.f32 %v2204, %v2741
      %v2870 = vadd.f32 %v2209, %v2746
      %v2871 = vadd.f32 %v2212, %v2749
      %v2872 = vadd.f32 %v2217, %v2754
      %v2873 = vadd.f32 %v2220, %v2757
      %v2874 = vadd.f32 %v2225, %v2762
      %v2875 = vadd.f32 %v2228, %v2765
      %v2876 = vadd.f32 %v2233, %v2770
      %v2877 = vadd.f32 %v2236, %v2773
      %v2878 = vadd.f32 %v2241, %v2778
      %v2879 = vadd.f32 %v2244, %v2781
      %v2880 = vadd.f32 %v2249, %v2786
      %v2881 = vadd.f32 %v2252, %v2789
      %v2882 = vadd.f32 %v2257, %v2794
      %v2883 = vadd.f32 %v2260, %v2797
      %v2884 = vadd.f32 %v2265, %v2802
      %v2885 = vadd.f32 %v2268, %v2805
      %v2886 = vadd.f32 %v2273, %v2810
      %v2887 = vadd.f32 %v2276, %v2813
      %v2888 = vadd.f32 %v2281, %v2818
      %v2889 = vadd.f32 %v2284, %v2821
      %v2890 = vadd.f32 %v2289, %v2826
      %v2891 = vadd.f32 %v2292, %v2829
      %v2892 = vadd.f32 %v2297, %v2834
      %v2893 = vadd.f32 %v2300, %v2837
      %v2894 = vadd.f32 %v2305, %v2842
      %v2895 = vadd.f32 %v2308, %v2845
      %v2896 = vadd.f32 %v2313, %v2850
      %v2897 = vadd.f32 %v2316, %v2853
      %v2898 = vadd.f32 %v2321, %v2858
      %v2899 = vadd.f32 %v2324, %v2861
      %v2900 = vld [vmem:[%s4] sm:$0x1]
      %v2902 = vlaneseq
      %v2903 = vshrl.u32 %v2902, 7
      %v2904 = vsub.s32 0, %v2903
      %v2905 = vrot.slane %v2900, %v2904
      %v2907 = vadd.f32 %v2864, %v2905
      %v2908 = vadd.f32 %v2865, %v2905
      %v2909 = vadd.f32 %v2866, %v2905
      %v2910 = vadd.f32 %v2867, %v2905
      %v2911 = vadd.f32 %v2868, %v2905
      %v2912 = vadd.f32 %v2869, %v2905
      %v2913 = vadd.f32 %v2870, %v2905
      %v2914 = vadd.f32 %v2871, %v2905
      %v2915 = vadd.f32 %v2872, %v2905
      %v2916 = vadd.f32 %v2873, %v2905
      %v2917 = vadd.f32 %v2874, %v2905
      %v2918 = vadd.f32 %v2875, %v2905
      %v2919 = vadd.f32 %v2876, %v2905
      %v2920 = vadd.f32 %v2877, %v2905
      %v2921 = vadd.f32 %v2878, %v2905
      %v2922 = vadd.f32 %v2879, %v2905
      %v2923 = vadd.f32 %v2880, %v2905
      %v2924 = vadd.f32 %v2881, %v2905
      %v2925 = vadd.f32 %v2882, %v2905
      %v2926 = vadd.f32 %v2883, %v2905
      %v2927 = vadd.f32 %v2884, %v2905
      %v2928 = vadd.f32 %v2885, %v2905
      %v2929 = vadd.f32 %v2886, %v2905
      %v2930 = vadd.f32 %v2887, %v2905
      %v2931 = vadd.f32 %v2888, %v2905
      %v2932 = vadd.f32 %v2889, %v2905
      %v2933 = vadd.f32 %v2890, %v2905
      %v2934 = vadd.f32 %v2891, %v2905
      %v2935 = vadd.f32 %v2892, %v2905
      %v2936 = vadd.f32 %v2893, %v2905
      %v2937 = vadd.f32 %v2894, %v2905
      %v2938 = vadd.f32 %v2895, %v2905
      %v2939 = vadd.f32 %v2896, %v2905
      %v2940 = vadd.f32 %v2897, %v2905
      %v2941 = vadd.f32 %v2898, %v2905
      %v2942 = vadd.f32 %v2899, %v2905
      %v2943 = vmax.f32 %v2907, 0.0
      %v2944 = vmax.f32 %v2908, 0.0
      %v2945 = vmax.f32 %v2909, 0.0
      %v2946 = vmax.f32 %v2910, 0.0
      %v2947 = vmax.f32 %v2911, 0.0
      %v2948 = vmax.f32 %v2912, 0.0
      %v2949 = vmax.f32 %v2913, 0.0
      %v2950 = vmax.f32 %v2914, 0.0
      %v2951 = vmax.f32 %v2915, 0.0
      %v2952 = vmax.f32 %v2916, 0.0
      %v2953 = vmax.f32 %v2917, 0.0
      %v2954 = vmax.f32 %v2918, 0.0
      %v2955 = vmax.f32 %v2919, 0.0
      %v2956 = vmax.f32 %v2920, 0.0
      %v2957 = vmax.f32 %v2921, 0.0
      %v2958 = vmax.f32 %v2922, 0.0
      %v2959 = vmax.f32 %v2923, 0.0
      %v2960 = vmax.f32 %v2924, 0.0
      %v2961 = vmax.f32 %v2925, 0.0
      %v2962 = vmax.f32 %v2926, 0.0
      %v2963 = vmax.f32 %v2927, 0.0
      %v2964 = vmax.f32 %v2928, 0.0
      %v2965 = vmax.f32 %v2929, 0.0
      %v2966 = vmax.f32 %v2930, 0.0
      %v2967 = vmax.f32 %v2931, 0.0
      %v2968 = vmax.f32 %v2932, 0.0
      %v2969 = vmax.f32 %v2933, 0.0
      %v2970 = vmax.f32 %v2934, 0.0
      %v2971 = vmax.f32 %v2935, 0.0
      %v2972 = vmax.f32 %v2936, 0.0
      %v2973 = vmax.f32 %v2937, 0.0
      %v2974 = vmax.f32 %v2938, 0.0
      %v2975 = vmax.f32 %v2939, 0.0
      %v2976 = vmax.f32 %v2940, 0.0
      %v2977 = vmax.f32 %v2941, 0.0
      %v2978 = vmax.f32 %v2942, 0.0
      %3015 = vrot.lane.b32.xlu0 %v2943, 8
      %v3016 = vpop.permute.xlu0 %3015
      %3017 = vrot.lane.b32.xlu0 %v2944, 8
      %v3018 = vpop.permute.xlu0 %3017
      %3019 = vrot.lane.b32.xlu0 %v2945, 8
      %v3020 = vpop.permute.xlu0 %3019
      %3021 = vrot.lane.b32.xlu0 %v2946, 8
      %v3022 = vpop.permute.xlu0 %3021
      %3023 = vrot.lane.b32.xlu0 %v2947, 8
      %v3024 = vpop.permute.xlu0 %3023
      %3025 = vrot.lane.b32.xlu0 %v2948, 8
      %v3026 = vpop.permute.xlu0 %3025
      %3027 = vrot.lane.b32.xlu0 %v2949, 8
      %v3028 = vpop.permute.xlu0 %3027
      %3029 = vrot.lane.b32.xlu0 %v2950, 8
      %v3030 = vpop.permute.xlu0 %3029
      %3031 = vrot.lane.b32.xlu0 %v2951, 8
      %v3032 = vpop.permute.xlu0 %3031
      %3033 = vrot.lane.b32.xlu0 %v2952, 8
      %v3034 = vpop.permute.xlu0 %3033
      %3035 = vrot.lane.b32.xlu0 %v2953, 8
      %v3036 = vpop.permute.xlu0 %3035
      %3037 = vrot.lane.b32.xlu0 %v2954, 8
      %v3038 = vpop.permute.xlu0 %3037
      %3039 = vrot.lane.b32.xlu0 %v2955, 8
      %v3040 = vpop.permute.xlu0 %3039
      %3041 = vrot.lane.b32.xlu0 %v2956, 8
      %v3042 = vpop.permute.xlu0 %3041
      %3043 = vrot.lane.b32.xlu0 %v2957, 8
      %v3044 = vpop.permute.xlu0 %3043
      %3045 = vrot.lane.b32.xlu0 %v2958, 8
      %v3046 = vpop.permute.xlu0 %3045
      %3047 = vrot.lane.b32.xlu0 %v2959, 8
      %v3048 = vpop.permute.xlu0 %3047
      %3049 = vrot.lane.b32.xlu0 %v2960, 8
      %v3050 = vpop.permute.xlu0 %3049
      %3051 = vrot.lane.b32.xlu0 %v2961, 8
      %v3052 = vpop.permute.xlu0 %3051
      %3053 = vrot.lane.b32.xlu0 %v2962, 8
      %v3054 = vpop.permute.xlu0 %3053
      %3055 = vrot.lane.b32.xlu0 %v2963, 8
      %v3056 = vpop.permute.xlu0 %3055
      %3057 = vrot.lane.b32.xlu0 %v2964, 8
      %v3058 = vpop.permute.xlu0 %3057
      %3059 = vrot.lane.b32.xlu0 %v2965, 8
      %v3060 = vpop.permute.xlu0 %3059
      %3061 = vrot.lane.b32.xlu0 %v2966, 8
      %v3062 = vpop.permute.xlu0 %3061
      %3063 = vrot.lane.b32.xlu0 %v2967, 8
      %v3064 = vpop.permute.xlu0 %3063
      %3065 = vrot.lane.b32.xlu0 %v2968, 8
      %v3066 = vpop.permute.xlu0 %3065
      %3067 = vrot.lane.b32.xlu0 %v2969, 8
      %v3068 = vpop.permute.xlu0 %3067
      %3069 = vrot.lane.b32.xlu0 %v2970, 8
      %v3070 = vpop.permute.xlu0 %3069
      %3071 = vrot.lane.b32.xlu0 %v2971, 8
      %v3072 = vpop.permute.xlu0 %3071
      %3073 = vrot.lane.b32.xlu0 %v2972, 8
      %v3074 = vpop.permute.xlu0 %3073
      %3075 = vrot.lane.b32.xlu0 %v2973, 8
      %v3076 = vpop.permute.xlu0 %3075
      %3077 = vrot.lane.b32.xlu0 %v2974, 8
      %v3078 = vpop.permute.xlu0 %3077
      %3079 = vrot.lane.b32.xlu0 %v2975, 8
      %v3080 = vpop.permute.xlu0 %3079
      %3081 = vrot.lane.b32.xlu0 %v2976, 8
      %v3082 = vpop.permute.xlu0 %3081
      %3083 = vrot.lane.b32.xlu0 %v2977, 8
      %v3084 = vpop.permute.xlu0 %3083
      %3085 = vrot.lane.b32.xlu0 %v2978, 8
      %v3086 = vpop.permute.xlu0 %3085
      %vm3123 = vcmask 130112
      %3124 = vst.msk [vmem:[%s224] sm:$0xff] %vm3123, %v3016
      %3125 = vst.msk [vmem:[%s224 + $0x8] sm:$0xff] %vm3123, %v3018
      %3126 = vst.msk [vmem:[%s224 + $0x10] sm:$0xff] %vm3123, %v3020
      %3127 = vst.msk [vmem:[%s224 + $0x18] sm:$0xff] %vm3123, %v3022
      %3128 = vst.msk [vmem:[%s224 + $0x20] sm:$0xff] %vm3123, %v3024
      %3129 = vst.msk [vmem:[%s224 + $0x28] sm:$0xff] %vm3123, %v3026
      %3130 = vst.msk [vmem:[%s224 + $0x30] sm:$0xff] %vm3123, %v3028
      %3131 = vst.msk [vmem:[%s224 + $0x38] sm:$0xff] %vm3123, %v3030
      %3132 = vst.msk [vmem:[%s224 + $0x40] sm:$0xff] %vm3123, %v3032
      %3133 = vst.msk [vmem:[%s224 + $0x48] sm:$0xff] %vm3123, %v3034
      %3134 = vst.msk [vmem:[%s224 + $0x50] sm:$0xff] %vm3123, %v3036
      %3135 = vst.msk [vmem:[%s224 + $0x58] sm:$0xff] %vm3123, %v3038
      %3136 = vst.msk [vmem:[%s224 + $0x60] sm:$0xff] %vm3123, %v3040
      %3137 = vst.msk [vmem:[%s224 + $0x68] sm:$0xff] %vm3123, %v3042
      %3138 = vst.msk [vmem:[%s224 + $0x70] sm:$0xff] %vm3123, %v3044
      %3139 = vst.msk [vmem:[%s224 + $0x78] sm:$0xff] %vm3123, %v3046
      %3140 = vst.msk [vmem:[%s224 + $0x80] sm:$0xff] %vm3123, %v3048
      %3141 = vst.msk [vmem:[%s224 + $0x88] sm:$0xff] %vm3123, %v3050
      %3142 = vst.msk [vmem:[%s224 + $0x90] sm:$0xff] %vm3123, %v3052
      %3143 = vst.msk [vmem:[%s224 + $0x98] sm:$0xff] %vm3123, %v3054
      %3144 = vst.msk [vmem:[%s224 + $0xa0] sm:$0xff] %vm3123, %v3056
      %3145 = vst.msk [vmem:[%s224 + $0xa8] sm:$0xff] %vm3123, %v3058
      %3146 = vst.msk [vmem:[%s224 + $0xb0] sm:$0xff] %vm3123, %v3060
      %3147 = vst.msk [vmem:[%s224 + $0xb8] sm:$0xff] %vm3123, %v3062
      %3148 = vst.msk [vmem:[%s224 + $0xc0] sm:$0xff] %vm3123, %v3064
      %3149 = vst.msk [vmem:[%s224 + $0xc8] sm:$0xff] %vm3123, %v3066
      %3150 = vst.msk [vmem:[%s224 + $0xd0] sm:$0xff] %vm3123, %v3068
      %3151 = vst.msk [vmem:[%s224 + $0xd8] sm:$0xff] %vm3123, %v3070
      %3152 = vst.msk [vmem:[%s224 + $0xe0] sm:$0xff] %vm3123, %v3072
      %3153 = vst.msk [vmem:[%s224 + $0xe8] sm:$0xff] %vm3123, %v3074
      %3154 = vst.msk [vmem:[%s224 + $0xf0] sm:$0xff] %vm3123, %v3076
      %3155 = vst.msk [vmem:[%s224 + $0xf8] sm:$0xff] %vm3123, %v3078
      %3156 = vst.msk [vmem:[%s224 + $0x100] sm:$0xff] %vm3123, %v3080
      %3157 = vst.msk [vmem:[%s224 + $0x108] sm:$0xff] %vm3123, %v3082
      %3158 = vst.msk [vmem:[%s224 + $0x110] sm:$0xff] %vm3123, %v3084
      %3159 = vst.msk [vmem:[%s224 + $0x118] sm:$0xff] %vm3123, %v3086
      %p3160 = scmp.lt.s32.totalorder %s16, 1
      %s3161 = scalar_select %p3160, %s16, 1
      %s3162 = smul.addr %s3161, 36
      %s3163 = smul.addr %s3162, 8
      %s3164 = scalar_lea.vmem %s5, %s3163
      // Predicated region
      $region41: #{inception_c_forward.5} parent=39 // pred_check
        %p3165 = pneg %p144
      $region42: #{inception_c_forward.5} parent=39 // pred_check_branch
        %3167 = sbr.rel (%p3165) target = $region44
      $region43: #{inception_c_forward.5} parent=39 // pred_region
        _
      $region44: #{inception_c_forward.5} parent=39 // pred_fallthru
        _
    $region40: #{inception_c_forward.5} parent=5 // pred_fallthru
      _
    %p3168 = scmp.le.s32.totalorder 2, %s11
    // Predicated region
    $region45: #{inception_c_forward.5} parent=5 // pred_check
      %p3169 = pneg %p3168
    $region46: #{inception_c_forward.5} parent=5 // pred_check_branch
      %3171 = sbr.rel (%p3169) target = $region48
    $region47: #{inception_c_forward.5} parent=5 // pred_region
      %s3172 = ssub.s32 %s11, 2
      // Predicated region
      $region49: #{inception_c_forward.5} parent=47 // pred_check
        %p3173 = pneg %p150
      $region50: #{inception_c_forward.5} parent=47 // pred_check_branch
        %3175 = sbr.rel (%p3173) target = $region52
      $region51: #{inception_c_forward.5} parent=47 // pred_region
        %p3176 = scmp.lt.s32.totalorder %s17, 1
        %s3177 = scalar_select %p3176, %s17, 1
        %s3178 = smul.addr %s3177, 36
        %s3179 = smul.addr %s3178, 8
        %s3180 = scalar_lea.vmem %s5, %s3179
      $region52: #{inception_c_forward.5} parent=47 // pred_fallthru
        _
    $region48: #{inception_c_forward.5} parent=5 // pred_fallthru
      _
  $region6: #{inception_c_forward.5} parent=0 // loop_footer
    %s15 = sadd.s32 1, %s11
  $region7: #{inception_c_forward.5} parent=0 // loop_footer_branch
    %10 = sbr.rel target = $region3
  $region8: #{inception_c_forward.5} parent=0 // loop_exit
    _

// kernel: inception_c_forward.6
$region0: #{inception_c_forward.6}
  #allocation0 [shape = 'u32[]', space=smem, size = 0x4, offset = 0x4, fixed_abs, tag = 'smem constant byte address 0x4 - core index']
  #allocation1 [shape = 'u32[144,128]{1,0:T(1,128)}', space=vmem, size = 0x12000, scoped, tag = 'internal scratch']
  %s0 = inlined_call_operand.vmem [shape: bf16[2,328,4], index: 0, kind: input, shape index: {}]
  %s1 = inlined_call_operand.vmem [shape: bf16[9,4,8], index: 1, kind: input, shape index: {}]
  %s2 = inlined_call_operand.vmem [shape: f32[1,8], index: 2, kind: input, shape index: {}]
  %s3 = inlined_call_operand.vmem [shape: bf16[2,288,8], index: 3, kind: output, shape index: {}]
  %s4 = sld [smem:[#allocation0]]
  $region45: #{inception_c_forward.6} parent=0
    _
  %s6 = ssub.s32 1, %s4
  %s7 = scalar_select 0, %s6, %s4
  loop: start=0, step=1, limit=4
  $region2: #{inception_c_forward.6} parent=0 // loop_pre_header
    _
  $region3: #{inception_c_forward.6} parent=0 // loop_header
    %s9 = sphi 0, %s13
    %p10 = scmp.ge.s32.totalorder %s9, 4
    %s19 = sphi 0, %s21
    %s22 = sphi 0, %s19
    %s23 = sphi 0, %s22
    %s39 = sphi 0, %s23
    %s43 = sphi 0, %s43
    %s45 = sphi 0, %s43
    %s46 = sphi 0, %s45
    %s60 = sphi 0, %s46
    %s64 = sphi 0, %s64
    %s66 = sphi 0, %s64
    %s67 = sphi 0, %s66
    %s81 = sphi 0, %s67
    %s87 = sphi 0, %s89
    %s90 = sphi 0, %s87
    %s91 = sphi 0, %s90
    %s107 = sphi 0, %s91
  $region4: #{inception_c_forward.6} parent=0 // loop_header_branch
    %12 = sbr.rel (%p10) target = $region8
  $region5: #{inception_c_forward.6} parent=0 // loop_body
    %s14 = ssub.s32 %s9, 1
    %s15 = ssub.s32 %s9, 2
    %s16 = sadd.s32 %s9, 1
    %s17 = ssub.s32 %s9, %s16
    %p18 = scmp.eq.s32.totalorder %s17, 0
    %s20 = sadd.s32 %s19, 1
    %s21 = scalar_select %p18, %s19, %s20
    %p24 = pneg %p18
    %p25 = scmp.eq.s32.totalorder %s9, 1
    %p26 = por %p24, %p25
    %p27 = scmp.ne.s32.totalorder %s19, %s22
    %p28 = scmp.eq.s32.totalorder %s9, 0
    %p29 = por %p27, %p28
    %p30 = scmp.ne.s32.totalorder %s19, %s22
    %p31 = scmp.eq.s32.totalorder %s14, 1
    %p32 = por %p30, %p31
    %p33 = scmp.ne.s32.totalorder %s22, %s23
    %p34 = scmp.eq.s32.totalorder %s14, 0
    %p35 = por %p33, %p34
    %p36 = scmp.ne.s32.totalorder %s22, %s23
    %p37 = scmp.eq.s32.totalorder %s15, 1
    %p38 = por %p36, %p37
    %p40 = scmp.ne.s32.totalorder %s23, %s39
    %p41 = scmp.eq.s32.totalorder %s15, 0
    %p42 = por %p40, %p41
    %s44 = sadd.s32 %s43, 1
    %p47 = scmp.eq.s32.totalorder %s9, 1
    %p48 = scmp.ne.s32.totalorder %s43, %s45
    %p49 = scmp.eq.s32.totalorder %s9, 0
    %p50 = por %p48, %p49
    %p51 = scmp.ne.s32.totalorder %s43, %s45
    %p52 = scmp.eq.s32.totalorder %s14, 1
    %p53 = por %p51, %p52
    %p54 = scmp.ne.s32.totalorder %s45, %s46
    %p55 = scmp.eq.s32.totalorder %s14, 0
    %p56 = por %p54, %p55
    %p57 = scmp.ne.s32.totalorder %s45, %s46
    %p58 = scmp.eq.s32.totalorder %s15, 1
    %p59 = por %p57, %p58
    %p61 = scmp.ne.s32.totalorder %s46, %s60
    %p62 = scmp.eq.s32.totalorder %s15, 0
    %p63 = por %p61, %p62
    %s65 = sadd.s32 %s64, 1
    %p68 = scmp.eq.s32.totalorder %s9, 1
    %p69 = scmp.ne.s32.totalorder %s64, %s66
    %p70 = scmp.eq.s32.totalorder %s9, 0
    %p71 = por %p69, %p70
    %p72 = scmp.ne.s32.totalorder %s64, %s66
    %p73 = scmp.eq.s32.totalorder %s14, 1
    %p74 = por %p72, %p73
    %p75 = scmp.ne.s32.totalorder %s66, %s67
    %p76 = scmp.eq.s32.totalorder %s14, 0
    %p77 = por %p75, %p76
    %p78 = scmp.ne.s32.totalorder %s66, %s67
    %p79 = scmp.eq.s32.totalorder %s15, 1
    %p80 = por %p78, %p79
    %p82 = scmp.ne.s32.totalorder %s67, %s81
    %p83 = scmp.eq.s32.totalorder %s15, 0
    %p84 = por %p82, %p83
    %s85 = ssub.s32 %s9, %s16
    %p86 = scmp.eq.s32.totalorder %s85, 0
    %s88 = sadd.s32 %s87, 1
    %s89 = scalar_select %p86, %s87, %s88
    %p92 = pneg %p86
    %p93 = scmp.eq.s32.totalorder %s9, 1
    %p94 = por %p92, %p93
    %p95 = scmp.ne.s32.totalorder %s87, %s90
    %p96 = scmp.eq.s32.totalorder %s9, 0
    %p97 = por %p95, %p96
    %p98 = scmp.ne.s32.totalorder %s87, %s90
    %p99 = scmp.eq.s32.totalorder %s14, 1
    %p100 = por %p98, %p99
    %p101 = scmp.ne.s32.totalorder %s90, %s91
    %p102 = scmp.eq.s32.totalorder %s14, 0
    %p103 = por %p101, %p102
    %p104 = scmp.ne.s32.totalorder %s90, %s91
    %p105 = scmp.eq.s32.totalorder %s15, 1
    %p106 = por %p104, %p105
    %p108 = scmp.ne.s32.totalorder %s91, %s107
    %p109 = scmp.eq.s32.totalorder %s15, 0
    %p110 = por %p108, %p109
    %p111 = scmp.le.s32.totalorder 1, %s9
    %p112 = scmp.lt.s32.totalorder %s9, 3
    %p113 = pnand %p111, %p112
    %p114 = pneg %p113
    // Predicated region
    $region9: #{inception_c_forward.6} parent=5 // pred_check
      _
    $region10: #{inception_c_forward.6} parent=5 // pred_check_branch
      %116 = sbr.rel (%p113) target = $region12
    $region11: #{inception_c_forward.6} parent=5 // pred_region
      %s117 = ssub.s32 %s9, 1
      // Predicated region
      $region13: #{inception_c_forward.6} parent=11 // pred_check
        %p118 = pneg %p56
      $region14: #{inception_c_forward.6} parent=11 // pred_check_branch
        %120 = sbr.rel (%p118) target = $region16
      $region15: #{inception_c_forward.6} parent=11 // pred_region
        _
      $region16: #{inception_c_forward.6} parent=11 // pred_fallthru
        _
      // Predicated region
      $region17: #{inception_c_forward.6} parent=11 // pred_check
        %p121 = pneg %p77
      $region18: #{inception_c_forward.6} parent=11 // pred_check_branch
        %123 = sbr.rel (%p121) target = $region20
      $region19: #{inception_c_forward.6} parent=11 // pred_region
        _
      $region20: #{inception_c_forward.6} parent=11 // pred_fallthru
        _
    $region12: #{inception_c_forward.6} parent=5 // pred_fallthru
      _
    %p124 = scmp.lt.s32.totalorder %s9, 2
    // Predicated region
    $region21: #{inception_c_forward.6} parent=5 // pred_check
      %p125 = pneg %p124
    $region22: #{inception_c_forward.6} parent=5 // pred_check_branch
      %127 = sbr.rel (%p125) target = $region24
    $region23: #{inception_c_forward.6} parent=5 // pred_region
      // Predicated region
      $region25: #{inception_c_forward.6} parent=23 // pred_check
        %p128 = pneg %p29
      $region26: #{inception_c_forward.6} parent=23 // pred_check_branch
        %130 = sbr.rel (%p128) target = $region28
      $region27: #{inception_c_forward.6} parent=23 // pred_region
        %p131 = scmp.lt.s32.totalorder %s9, 1
        %s132 = scalar_select %p131, %s9, 1
        %s133 = smul.addr %s132, 41
        %s134 = smul.addr %s133, 4
        %s135 = scalar_lea.vmem %s0, %s134
      $region28: #{inception_c_forward.6} parent=23 // pred_fallthru
        _
    $region24: #{inception_c_forward.6} parent=5 // pred_fallthru
      _
    %p136 = scmp.le.s32.totalorder 1, %s9
    %p137 = scmp.lt.s32.totalorder %s9, 3
    %p138 = pnand %p136, %p137
    %p139 = pneg %p138
    // Predicated region
    $region29: #{inception_c_forward.6} parent=5 // pred_check
      _
    $region30: #{inception_c_forward.6} parent=5 // pred_check_branch
      %141 = sbr.rel (%p138) target = $region32
    $region31: #{inception_c_forward.6} parent=5 // pred_region
      %s142 = ssub.s32 %s9, 1
      %p143 = scmp.lt.s32.totalorder %s14, 1
      %s144 = scalar_select %p143, %s14, 1
      %s145 = smul.addr %s144, 41
      %s146 = smul.addr %s145, 4
      %s147 = scalar_lea.vmem %s0, %s146
      %p148 = pneg %p35
      %p149 = pneg %p32
      %p150 = pneg %p56
      %p151 = pneg %p53
      %p152 = pneg %p77
      %p153 = pneg %p74
      %p154 = pneg %p103
      %p155 = pneg %p100
      %p156 = scmp.lt.s32.totalorder %s14, 1
      %s157 = scalar_select %p156, %s14, 1
      %s158 = smul.addr %s157, 36
      %s159 = smul.addr %s158, 4
      %s160 = scalar_lea.vmem %s3, %s159
      %p161 = scmp.lt.s32.totalorder %s14, 1
      %s162 = scalar_select %p161, %s14, 1
      %s163 = smul.addr %s162, 41
      %s164 = smul.addr %s163, 4
      %s165 = scalar_lea.vmem %s0, %s164
      %p166 = scmp.lt.s32.totalorder %s14, 1
      %s167 = scalar_select %p166, %s14, 1
      %s168 = smul.addr %s167, 36
      %s169 = smul.addr %s168, 4
      %s170 = scalar_lea.vmem %s3, %s169
      %v172 = vld [vmem:[%s165] sm:$0xf]
      %v173 = vld [vmem:[%s165 + $0x4] sm:$0xf]
      %v174 = vld [vmem:[%s165 + $0x8] sm:$0xf]
      %v175 = vld [vmem:[%s165 + $0xc] sm:$0xf]
      %v176 = vld [vmem:[%s165 + $0x10] sm:$0xf]
      %v177 = vld [vmem:[%s165 + $0x14] sm:$0xf]
      %v178 = vld [vmem:[%s165 + $0x18] sm:$0xf]
      %v179 = vld [vmem:[%s165 + $0x1c] sm:$0xf]
      %v180 = vld [vmem:[%s165 + $0x20] sm:$0xf]
      %v181 = vld [vmem:[%s165 + $0x24] sm:$0xf]
      %v182 = vld [vmem:[%s165 + $0x28] sm:$0xf]
      %v183 = vld [vmem:[%s165 + $0x2c] sm:$0xf]
      %v184 = vld [vmem:[%s165 + $0x30] sm:$0xf]
      %v185 = vld [vmem:[%s165 + $0x34] sm:$0xf]
      %v186 = vld [vmem:[%s165 + $0x38] sm:$0xf]
      %v187 = vld [vmem:[%s165 + $0x3c] sm:$0xf]
      %v188 = vld [vmem:[%s165 + $0x40] sm:$0xf]
      %v189 = vld [vmem:[%s165 + $0x44] sm:$0xf]
      %v190 = vld [vmem:[%s165 + $0x48] sm:$0xf]
      %v191 = vld [vmem:[%s165 + $0x4c] sm:$0xf]
      %v192 = vld [vmem:[%s165 + $0x50] sm:$0xf]
      %v193 = vld [vmem:[%s165 + $0x54] sm:$0xf]
      %v194 = vld [vmem:[%s165 + $0x58] sm:$0xf]
      %v195 = vld [vmem:[%s165 + $0x5c] sm:$0xf]
      %v196 = vld [vmem:[%s165 + $0x60] sm:$0xf]
      %v197 = vld [vmem:[%s165 + $0x64] sm:$0xf]
      %v198 = vld [vmem:[%s165 + $0x68] sm:$0xf]
      %v199 = vld [vmem:[%s165 + $0x6c] sm:$0xf]
      %v200 = vld [vmem:[%s165 + $0x70] sm:$0xf]
      %v201 = vld [vmem:[%s165 + $0x74] sm:$0xf]
      %v202 = vld [vmem:[%s165 + $0x78] sm:$0xf]
      %v203 = vld [vmem:[%s165 + $0x7c] sm:$0xf]
      %v204 = vld [vmem:[%s165 + $0x80] sm:$0xf]
      %v205 = vld [vmem:[%s165 + $0x84] sm:$0xf]
      %v206 = vld [vmem:[%s165 + $0x88] sm:$0xf]
      %v207 = vld [vmem:[%s165 + $0x8c] sm:$0xf]
      %v208 = vld [vmem:[%s1] sm:$0x3]
      %v209 = vld [vmem:[%s165 + $0x90] sm:$0x1]
      %s210 = scalar_lea.vmem %s1, 2
      %v211 = vld [vmem:[%s210] sm:$0x3]
      %v249 = vunpack.c.l.b16 %v172
      %v250 = vunpack.c.l.b16 %v173
      %v251 = vunpack.c.l.b16 %v174
      %v252 = vunpack.c.l.b16 %v175
      %v253 = vunpack.c.l.b16 %v176
      %v254 = vunpack.c.l.b16 %v177
      %v255 = vunpack.c.l.b16 %v178
      %v256 = vunpack.c.l.b16 %v179
      %v257 = vunpack.c.l.b16 %v180
      %v258 = vunpack.c.l.b16 %v181
      %v259 = vunpack.c.l.b16 %v182
      %v260 = vunpack.c.l.b16 %v183
      %v261 = vunpack.c.l.b16 %v184
      %v262 = vunpack.c.l.b16 %v185
      %v263 = vunpack.c.l.b16 %v186
      %v264 = vunpack.c.l.b16 %v187
      %v265 = vunpack.c.l.b16 %v188
      %v266 = vunpack.c.l.b16 %v189
      %v267 = vunpack.c.l.b16 %v190
      %v268 = vunpack.c.l.b16 %v191
      %v269 = vunpack.c.l.b16 %v192
      %v270 = vunpack.c.l.b16 %v193
      %v271 = vunpack.c.l.b16 %v194
      %v272 = vunpack.c.l.b16 %v195
      %v273 = vunpack.c.l.b16 %v196
      %v274 = vunpack.c.l.b16 %v197
      %v275 = vunpack.c.l.b16 %v198
      %v276 = vunpack.c.l.b16 %v199
      %v277 = vunpack.c.l.b16 %v200
      %v278 = vunpack.c.l.b16 %v201
      %v279 = vunpack.c.l.b16 %v202
      %v280 = vunpack.c.l.b16 %v203
      %v281 = vunpack.c.l.b16 %v204
      %v282 = vunpack.c.l.b16 %v205
      %v283 = vunpack.c.l.b16 %v206
      %v284 = vunpack.c.l.b16 %v207
      %v285 = vunpack.c.l.b16 %v209
      %v286 = vpack.c.b16 %v250, %v249
      %v287 = vpack.c.b16 %v252, %v251
      %v288 = vpack.c.b16 %v254, %v253
      %v289 = vpack.c.b16 %v256, %v255
      %v290 = vpack.c.b16 %v258, %v257
      %v291 = vpack.c.b16 %v260, %v259
      %v292 = vpack.c.b16 %v262, %v261
      %v293 = vpack.c.b16 %v264, %v263
      %v294 = vpack.c.b16 %v266, %v265
      %v295 = vpack.c.b16 %v268, %v267
      %v296 = vpack.c.b16 %v270, %v269
      %v297 = vpack.c.b16 %v272, %v271
      %v298 = vpack.c.b16 %v274, %v273
      %v299 = vpack.c.b16 %v276, %v275
      %v300 = vpack.c.b16 %v278, %v277
      %v301 = vpack.c.b16 %v280, %v279
      %v302 = vpack.c.b16 %v282, %v281
      %v303 = vpack.c.b16 %v284, %v283
      %v304 = vpack.c.b16 %v285, %v285
      %vm305 = vsmask.f32 7424
      %v307 = vshrl.u32 %v286, 16
      %v309 = vshll.u32 %v286, 16
      %v311 = vrot.slane %v309, 1
      %v312 = vor.u32 %v307, %v311
      %v314 = vshll.u32 %v287, 16
      %v316 = vrot.slane %v314, 1
      %v317 = vsel %vm305, %v312, %v316
      %v318 = vshrl.u32 %v287, 16
      %v320 = vor.u32 %v318, %v316
      %v322 = vshll.u32 %v288, 16
      %v324 = vrot.slane %v322, 1
      %v325 = vsel %vm305, %v320, %v324
      %v326 = vshrl.u32 %v288, 16
      %v328 = vor.u32 %v326, %v324
      %v330 = vshll.u32 %v289, 16
      %v332 = vrot.slane %v330, 1
      %v333 = vsel %vm305, %v328, %v332
      %v334 = vshrl.u32 %v289, 16
      %v336 = vor.u32 %v334, %v332
      %v338 = vshll.u32 %v290, 16
      %v340 = vrot.slane %v338, 1
      %v341 = vsel %vm305, %v336, %v340
      %v342 = vshrl.u32 %v290, 16
      %v344 = vor.u32 %v342, %v340
      %v346 = vshll.u32 %v291, 16
      %v348 = vrot.slane %v346, 1
      %v349 = vsel %vm305, %v344, %v348
      %v350 = vshrl.u32 %v291, 16
      %v352 = vor.u32 %v350, %v348
      %v354 = vshll.u32 %v292, 16
      %v356 = vrot.slane %v354, 1
      %v357 = vsel %vm305, %v352, %v356
      %v358 = vshrl.u32 %v292, 16
      %v360 = vor.u32 %v358, %v356
      %v362 = vshll.u32 %v293, 16
      %v364 = vrot.slane %v362, 1
      %v365 = vsel %vm305, %v360, %v364
      %v366 = vshrl.u32 %v293, 16
      %v368 = vor.u32 %v366, %v364
      %v370 = vshll.u32 %v294, 16
      %v372 = vrot.slane %v370, 1
      %v373 = vsel %vm305, %v368, %v372
      %v374 = vshrl.u32 %v294, 16
      %v376 = vor.u32 %v374, %v372
      %v378 = vshll.u32 %v295, 16
      %v380 = vrot.slane %v378, 1
      %v381 = vsel %vm305, %v376, %v380
      %v382 = vshrl.u32 %v295, 16
      %v384 = vor.u32 %v382, %v380
      %v386 = vshll.u32 %v296, 16
      %v388 = vrot.slane %v386, 1
      %v389 = vsel %vm305, %v384, %v388
      %v390 = vshrl.u32 %v296, 16
      %v392 = vor.u32 %v390, %v388
      %v394 = vshll.u32 %v297, 16
      %v396 = vrot.slane %v394, 1
      %v397 = vsel %vm305, %v392, %v396
      %v398 = vshrl.u32 %v297, 16
      %v400 = vor.u32 %v398, %v396
      %v402 = vshll.u32 %v298, 16
      %v404 = vrot.slane %v402, 1
      %v405 = vsel %vm305, %v400, %v404
      %v406 = vshrl.u32 %v298, 16
      %v408 = vor.u32 %v406, %v404
      %v410 = vshll.u32 %v299, 16
      %v412 = vrot.slane %v410, 1
      %v413 = vsel %vm305, %v408, %v412
      %v414 = vshrl.u32 %v299, 16
      %v416 = vor.u32 %v414, %v412
      %v418 = vshll.u32 %v300, 16
      %v420 = vrot.slane %v418, 1
      %v421 = vsel %vm305, %v416, %v420
      %v422 = vshrl.u32 %v300, 16
      %v424 = vor.u32 %v422, %v420
      %v426 = vshll.u32 %v301, 16
      %v428 = vrot.slane %v426, 1
      %v429 = vsel %vm305, %v424, %v428
      %v430 = vshrl.u32 %v301, 16
      %v432 = vor.u32 %v430, %v428
      %v434 = vshll.u32 %v302, 16
      %v436 = vrot.slane %v434, 1
      %v437 = vsel %vm305, %v432, %v436
      %v438 = vshrl.u32 %v302, 16
      %v440 = vor.u32 %v438, %v436
      %v442 = vshll.u32 %v303, 16
      %v444 = vrot.slane %v442, 1
      %v445 = vsel %vm305, %v440, %v444
      %v446 = vshrl.u32 %v303, 16
      %v448 = vor.u32 %v446, %v444
      %v450 = vshll.u32 %v304, 16
      %v452 = vrot.slane %v450, 1
      %v453 = vsel %vm305, %v448, %v452
      %vm454 = vcmask 31744
      %v456 = vsel %vm454, %v317, 0
      %v459 = vsel %vm454, %v325, 0
      %v462 = vsel %vm454, %v333, 0
      %v465 = vsel %vm454, %v341, 0
      %v468 = vsel %vm454, %v349, 0
      %v471 = vsel %vm454, %v357, 0
      %v474 = vsel %vm454, %v365, 0
      %v477 = vsel %vm454, %v373, 0
      %v480 = vsel %vm454, %v381, 0
      %v483 = vsel %vm454, %v389, 0
      %v486 = vsel %vm454, %v397, 0
      %v489 = vsel %vm454, %v405, 0
      %v492 = vsel %vm454, %v413, 0
      %v495 = vsel %vm454, %v421, 0
      %v498 = vsel %vm454, %v429, 0
      %v501 = vsel %vm454, %v437, 0
      %v504 = vsel %vm454, %v445, 0
      %v507 = vsel %vm454, %v453, 0
      %vm509 = vcmask 1041408
      %v511 = vsel %vm509, %v211, 0
      %513 = vmatprep.subr.bf16.mxu0 0
      %514 = vmatpush1.bf16.msra.mxu0 0
      %515 = vmatprep.subr.bf16.mxu0 0
      %516 = vmatpush1.bf16.msra.mxu0 0
      %517 = vmatprep.subr.bf16.mxu0 0
      %518 = vmatpush1.bf16.msra.mxu0 0
      %519 = vmatprep.subr.bf16.mxu0 0
      %520 = vmatpush1.bf16.msra.mxu0 0
      %521 = vmatprep.subr.bf16.mxu0 0
      %522 = vmatpush1.bf16.msra.mxu0 0
      %523 = vmatprep.subr.bf16.mxu0 0
      %524 = vmatpush1.bf16.msra.mxu0 0
      %525 = vmatprep.subr.bf16.mxu0 0
      %526 = vmatpush1.bf16.msra.mxu0 0
      %527 = vmatprep.subr.bf16.mxu0 0
      %528 = vmatpush1.bf16.msra.mxu0 %v511
      %529 = vmatprep.subr.bf16.mxu0 0
      %530 = vmatpush2.bf16.msra.mxu0 0
      %531 = vmatprep.subr.bf16.mxu0 0
      %532 = vmatpush2.bf16.msra.mxu0 0
      %533 = vmatprep.subr.bf16.mxu0 0
      %534 = vmatpush2.bf16.msra.mxu0 0
      %535 = vmatprep.subr.bf16.mxu0 0
      %536 = vmatpush2.bf16.msra.mxu0 0
      %537 = vmatprep.subr.bf16.mxu0 0
      %538 = vmatpush2.bf16.msra.mxu0 0
      %539 = vmatprep.subr.bf16.mxu0 0
      %540 = vmatpush2.bf16.msra.mxu0 0
      %541 = vmatprep.subr.bf16.mxu0 0
      %542 = vmatpush2.bf16.msra.mxu0 0
      %543 = vmatprep.subr.bf16.mxu0 0
      %544 = vmatpush2.bf16.msra.mxu0 0
      %545 = vmatprep.mubr.bf16.mxu0 0
      %546 = vmatmul.mubr.bf16.gmra.mxu0 %v456
      %v547 = vpop.f32.mrf.mxu0
      %v548 = vadd.f32 0.0, %v547
      %v549 = vpop.f32.mrf.mxu0
      %v550 = vpop.f32.mrf.mxu0
      %v551 = vadd.f32 0.0, %v550
      %v552 = vpop.f32.mrf.mxu0
      %553 = vmatprep.mubr.bf16.mxu0 0
      %554 = vmatmul.mubr.bf16.gmra.mxu0 %v459
      %v555 = vpop.f32.mrf.mxu0
      %v556 = vadd.f32 0.0, %v555
      %v557 = vpop.f32.mrf.mxu0
      %v558 = vpop.f32.mrf.mxu0
      %v559 = vadd.f32 0.0, %v558
      %v560 = vpop.f32.mrf.mxu0
      %561 = vmatprep.mubr.bf16.mxu0 0
      %562 = vmatmul.mubr.bf16.gmra.mxu0 %v462
      %v563 = vpop.f32.mrf.mxu0
      %v564 = vadd.f32 0.0, %v563
      %v565 = vpop.f32.mrf.mxu0
      %v566 = vpop.f32.mrf.mxu0
      %v567 = vadd.f32 0.0, %v566
      %v568 = vpop.f32.mrf.mxu0
      %569 = vmatprep.mubr.bf16.mxu0 0
      %570 = vmatmul.mubr.bf16.gmra.mxu0 %v465
      %v571 = vpop.f32.mrf.mxu0
      %v572 = vadd.f32 0.0, %v571
      %v573 = vpop.f32.mrf.mxu0
      %v574 = vpop.f32.mrf.mxu0
      %v575 = vadd.f32 0.0, %v574
      %v576 = vpop.f32.mrf.mxu0
      %577 = vmatprep.mubr.bf16.mxu0 0
      %578 = vmatmul.mubr.bf16.gmra.mxu0 %v468
      %v579 = vpop.f32.mrf.mxu0
      %v580 = vadd.f32 0.0, %v579
      %v581 = vpop.f32.mrf.mxu0
      %v582 = vpop.f32.mrf.mxu0
      %v583 = vadd.f32 0.0, %v582
      %v584 = vpop.f32.mrf.mxu0
      %585 = vmatprep.mubr.bf16.mxu0 0
      %586 = vmatmul.mubr.bf16.gmra.mxu0 %v471
      %v587 = vpop.f32.mrf.mxu0
      %v588 = vadd.f32 0.0, %v587
      %v589 = vpop.f32.mrf.mxu0
      %v590 = vpop.f32.mrf.mxu0
      %v591 = vadd.f32 0.0, %v590
      %v592 = vpop.f32.mrf.mxu0
      %593 = vmatprep.mubr.bf16.mxu0 0
      %594 = vmatmul.mubr.bf16.gmra.mxu0 %v474
      %v595 = vpop.f32.mrf.mxu0
      %v596 = vadd.f32 0.0, %v595
      %v597 = vpop.f32.mrf.mxu0
      %v598 = vpop.f32.mrf.mxu0
      %v599 = vadd.f32 0.0, %v598
      %v600 = vpop.f32.mrf.mxu0
      %601 = vmatprep.mubr.bf16.mxu0 0
      %602 = vmatmul.mubr.bf16.gmra.mxu0 %v477
      %v603 = vpop.f32.mrf.mxu0
      %v604 = vadd.f32 0.0, %v603
      %v605 = vpop.f32.mrf.mxu0
      %v606 = vpop.f32.mrf.mxu0
      %v607 = vadd.f32 0.0, %v606
      %v608 = vpop.f32.mrf.mxu0
      %609 = vmatprep.mubr.bf16.mxu0 0
      %610 = vmatmul.mubr.bf16.gmra.mxu0 %v480
      %v611 = vpop.f32.mrf.mxu0
      %v612 = vadd.f32 0.0, %v611
      %v613 = vpop.f32.mrf.mxu0
      %v614 = vpop.f32.mrf.mxu0
      %v615 = vadd.f32 0.0, %v614
      %v616 = vpop.f32.mrf.mxu0
      %617 = vmatprep.mubr.bf16.mxu0 0
      %618 = vmatmul.mubr.bf16.gmra.mxu0 %v483
      %v619 = vpop.f32.mrf.mxu0
      %v620 = vadd.f32 0.0, %v619
      %v621 = vpop.f32.mrf.mxu0
      %v622 = vpop.f32.mrf.mxu0
      %v623 = vadd.f32 0.0, %v622
      %v624 = vpop.f32.mrf.mxu0
      %625 = vmatprep.mubr.bf16.mxu0 0
      %626 = vmatmul.mubr.bf16.gmra.mxu0 %v486
      %v627 = vpop.f32.mrf.mxu0
      %v628 = vadd.f32 0.0, %v627
      %v629 = vpop.f32.mrf.mxu0
      %v630 = vpop.f32.mrf.mxu0
      %v631 = vadd.f32 0.0, %v630
      %v632 = vpop.f32.mrf.mxu0
      %633 = vmatprep.mubr.bf16.mxu0 0
      %634 = vmatmul.mubr.bf16.gmra.mxu0 %v489
      %v635 = vpop.f32.mrf.mxu0
      %v636 = vadd.f32 0.0, %v635
      %v637 = vpop.f32.mrf.mxu0
      %v638 = vpop.f32.mrf.mxu0
      %v639 = vadd.f32 0.0, %v638
      %v640 = vpop.f32.mrf.mxu0
      %641 = vmatprep.mubr.bf16.mxu0 0
      %642 = vmatmul.mubr.bf16.gmra.mxu0 %v492
      %v643 = vpop.f32.mrf.mxu0
      %v644 = vadd.f32 0.0, %v643
      %v645 = vpop.f32.mrf.mxu0
      %v646 = vpop.f32.mrf.mxu0
      %v647 = vadd.f32 0.0, %v646
      %v648 = vpop.f32.mrf.mxu0
      %649 = vmatprep.mubr.bf16.mxu0 0
      %650 = vmatmul.mubr.bf16.gmra.mxu0 %v495
      %v651 = vpop.f32.mrf.mxu0
      %v652 = vadd.f32 0.0, %v651
      %v653 = vpop.f32.mrf.mxu0
      %v654 = vpop.f32.mrf.mxu0
      %v655 = vadd.f32 0.0, %v654
      %v656 = vpop.f32.mrf.mxu0
      %657 = vmatprep.mubr.bf16.mxu0 0
      %658 = vmatmul.mubr.bf16.gmra.mxu0 %v498
      %v659 = vpop.f32.mrf.mxu0
      %v660 = vadd.f32 0.0, %v659
      %v661 = vpop.f32.mrf.mxu0
      %v662 = vpop.f32.mrf.mxu0
      %v663 = vadd.f32 0.0, %v662
      %v664 = vpop.f32.mrf.mxu0
      %665 = vmatprep.mubr.bf16.mxu0 0
      %666 = vmatmul.mubr.bf16.gmra.mxu0 %v501
      %v667 = vpop.f32.mrf.mxu0
      %v668 = vadd.f32 0.0, %v667
      %v669 = vpop.f32.mrf.mxu0
      %v670 = vpop.f32.mrf.mxu0
      %v671 = vadd.f32 0.0, %v670
      %v672 = vpop.f32.mrf.mxu0
      %673 = vmatprep.mubr.bf16.mxu0 0
      %674 = vmatmul.mubr.bf16.gmra.mxu0 %v504
      %v675 = vpop.f32.mrf.mxu0
      %v676 = vadd.f32 0.0, %v675
      %v677 = vpop.f32.mrf.mxu0
      %v678 = vpop.f32.mrf.mxu0
      %v679 = vadd.f32 0.0, %v678
      %v680 = vpop.f32.mrf.mxu0
      %681 = vmatprep.mubr.bf16.mxu0 0
      %682 = vmatmul.mubr.bf16.gmra.mxu0 %v507
      %v683 = vpop.f32.mrf.mxu0
      %v684 = vadd.f32 0.0, %v683
      %v685 = vpop.f32.mrf.mxu0
      %v686 = vpop.f32.mrf.mxu0
      %v687 = vadd.f32 0.0, %v686
      %v688 = vpop.f32.mrf.mxu0
      %689 = vdwg.mxu0
      %v690 = vsel %vm454, %v286, 0
      %v692 = vsel %vm454, %v287, 0
      %v694 = vsel %vm454, %v288, 0
      %v696 = vsel %vm454, %v289, 0
      %v698 = vsel %vm454, %v290, 0
      %v700 = vsel %vm454, %v291, 0
      %v702 = vsel %vm454, %v292, 0
      %v704 = vsel %vm454, %v293, 0
      %v706 = vsel %vm454, %v294, 0
      %v708 = vsel %vm454, %v295, 0
      %v710 = vsel %vm454, %v296, 0
      %v712 = vsel %vm454, %v297, 0
      %v714 = vsel %vm454, %v298, 0
      %v716 = vsel %vm454, %v299, 0
      %v718 = vsel %vm454, %v300, 0
      %v720 = vsel %vm454, %v301, 0
      %v722 = vsel %vm454, %v302, 0
      %v724 = vsel %vm454, %v303, 0
      %v727 = vsel %vm509, %v208, 0
      %729 = vmatprep.subr.bf16.mxu0 0
      %730 = vmatpush1.bf16.msra.mxu0 0
      %731 = vmatprep.subr.bf16.mxu0 0
      %732 = vmatpush1.bf16.msra.mxu0 0
      %733 = vmatprep.subr.bf16.mxu0 0
      %734 = vmatpush1.bf16.msra.mxu0 0
      %735 = vmatprep.subr.bf16.mxu0 0
      %736 = vmatpush1.bf16.msra.mxu0 0
      %737 = vmatprep.subr.bf16.mxu0 0
      %738 = vmatpush1.bf16.msra.mxu0 0
      %739 = vmatprep.subr.bf16.mxu0 0
      %740 = vmatpush1.bf16.msra.mxu0 0
      %741 = vmatprep.subr.bf16.mxu0 0
      %742 = vmatpush1.bf16.msra.mxu0 0
      %743 = vmatprep.subr.bf16.mxu0 0
      %744 = vmatpush1.bf16.msra.mxu0 %v727
      %745 = vmatprep.subr.bf16.mxu0 0
      %746 = vmatpush2.bf16.msra.mxu0 0
      %747 = vmatprep.subr.bf16.mxu0 0
      %748 = vmatpush2.bf16.msra.mxu0 0
      %749 = vmatprep.subr.bf16.mxu0 0
      %750 = vmatpush2.bf16.msra.mxu0 0
      %751 = vmatprep.subr.bf16.mxu0 0
      %752 = vmatpush2.bf16.msra.mxu0 0
      %753 = vmatprep.subr.bf16.mxu0 0
      %754 = vmatpush2.bf16.msra.mxu0 0
      %755 = vmatprep.subr.bf16.mxu0 0
      %756 = vmatpush2.bf16.msra.mxu0 0
      %757 = vmatprep.subr.bf16.mxu0 0
      %758 = vmatpush2.bf16.msra.mxu0 0
      %759 = vmatprep.subr.bf16.mxu0 0
      %760 = vmatpush2.bf16.msra.mxu0 0
      %761 = vmatprep.mubr.bf16.mxu0 0
      %762 = vmatmul.mubr.bf16.gmra.mxu0 %v690
      %v763 = vpop.f32.mrf.mxu0
      %v764 = vadd.f32 %v548, %v763
      %v765 = vpop.f32.mrf.mxu0
      %v766 = vpop.f32.mrf.mxu0
      %v767 = vadd.f32 %v551, %v766
      %v768 = vpop.f32.mrf.mxu0
      %769 = vmatprep.mubr.bf16.mxu0 0
      %770 = vmatmul.mubr.bf16.gmra.mxu0 %v692
      %v771 = vpop.f32.mrf.mxu0
      %v772 = vadd.f32 %v556, %v771
      %v773 = vpop.f32.mrf.mxu0
      %v774 = vpop.f32.mrf.mxu0
      %v775 = vadd.f32 %v559, %v774
      %v776 = vpop.f32.mrf.mxu0
      %777 = vmatprep.mubr.bf16.mxu0 0
      %778 = vmatmul.mubr.bf16.gmra.mxu0 %v694
      %v779 = vpop.f32.mrf.mxu0
      %v780 = vadd.f32 %v564, %v779
      %v781 = vpop.f32.mrf.mxu0
      %v782 = vpop.f32.mrf.mxu0
      %v783 = vadd.f32 %v567, %v782
      %v784 = vpop.f32.mrf.mxu0
      %785 = vmatprep.mubr.bf16.mxu0 0
      %786 = vmatmul.mubr.bf16.gmra.mxu0 %v696
      %v787 = vpop.f32.mrf.mxu0
      %v788 = vadd.f32 %v572, %v787
      %v789 = vpop.f32.mrf.mxu0
      %v790 = vpop.f32.mrf.mxu0
      %v791 = vadd.f32 %v575, %v790
      %v792 = vpop.f32.mrf.mxu0
      %793 = vmatprep.mubr.bf16.mxu0 0
      %794 = vmatmul.mubr.bf16.gmra.mxu0 %v698
      %v795 = vpop.f32.mrf.mxu0
      %v796 = vadd.f32 %v580, %v795
      %v797 = vpop.f32.mrf.mxu0
      %v798 = vpop.f32.mrf.mxu0
      %v799 = vadd.f32 %v583, %v798
      %v800 = vpop.f32.mrf.mxu0
      %801 = vmatprep.mubr.bf16.mxu0 0
      %802 = vmatmul.mubr.bf16.gmra.mxu0 %v700
      %v803 = vpop.f32.mrf.mxu0
      %v804 = vadd.f32 %v588, %v803
      %v805 = vpop.f32.mrf.mxu0
      %v806 = vpop.f32.mrf.mxu0
      %v807 = vadd.f32 %v591, %v806
      %v808 = vpop.f32.mrf.mxu0
      %809 = vmatprep.mubr.bf16.mxu0 0
      %810 = vmatmul.mubr.bf16.gmra.mxu0 %v702
      %v811 = vpop.f32.mrf.mxu0
      %v812 = vadd.f32 %v596, %v811
      %v813 = vpop.f32.mrf.mxu0
      %v814 = vpop.f32.mrf.mxu0
      %v815 = vadd.f32 %v599, %v814
      %v816 = vpop.f32.mrf.mxu0
      %817 = vmatprep.mubr.bf16.mxu0 0
      %818 = vmatmul.mubr.bf16.gmra.mxu0 %v704
      %v819 = vpop.f32.mrf.mxu0
      %v820 = vadd.f32 %v604, %v819
      %v821 = vpop.f32.mrf.mxu0
      %v822 = vpop.f32.mrf.mxu0
      %v823 = vadd.f32 %v607, %v822
      %v824 = vpop.f32.mrf.mxu0
      %825 = vmatprep.mubr.bf16.mxu0 0
      %826 = vmatmul.mubr.bf16.gmra.mxu0 %v706
      %v827 = vpop.f32.mrf.mxu0
      %v828 = vadd.f32 %v612, %v827
      %v829 = vpop.f32.mrf.mxu0
      %v830 = vpop.f32.mrf.mxu0
      %v831 = vadd.f32 %v615, %v830
      %v832 = vpop.f32.mrf.mxu0
      %833 = vmatprep.mubr.bf16.mxu0 0
      %834 = vmatmul.mubr.bf16.gmra.mxu0 %v708
      %v835 = vpop.f32.mrf.mxu0
      %v836 = vadd.f32 %v620, %v835
      %v837 = vpop.f32.mrf.mxu0
      %v838 = vpop.f32.mrf.mxu0
      %v839 = vadd.f32 %v623, %v838
      %v840 = vpop.f32.mrf.mxu0
      %841 = vmatprep.mubr.bf16.mxu0 0
      %842 = vmatmul.mubr.bf16.gmra.mxu0 %v710
      %v843 = vpop.f32.mrf.mxu0
      %v844 = vadd.f32 %v628, %v843
      %v845 = vpop.f32.mrf.mxu0
      %v846 = vpop.f32.mrf.mxu0
      %v847 = vadd.f32 %v631, %v846
      %v848 = vpop.f32.mrf.mxu0
      %849 = vmatprep.mubr.bf16.mxu0 0
      %850 = vmatmul.mubr.bf16.gmra.mxu0 %v712
      %v851 = vpop.f32.mrf.mxu0
      %v852 = vadd.f32 %v636, %v851
      %v853 = vpop.f32.mrf.mxu0
      %v854 = vpop.f32.mrf.mxu0
      %v855 = vadd.f32 %v639, %v854
      %v856 = vpop.f32.mrf.mxu0
      %857 = vmatprep.mubr.bf16.mxu0 0
      %858 = vmatmul.mubr.bf16.gmra.mxu0 %v714
      %v859 = vpop.f32.mrf.mxu0
      %v860 = vadd.f32 %v644, %v859
      %v861 = vpop.f32.mrf.mxu0
      %v862 = vpop.f32.mrf.mxu0
      %v863 = vadd.f32 %v647, %v862
      %v864 = vpop.f32.mrf.mxu0
      %865 = vmatprep.mubr.bf16.mxu0 0
      %866 = vmatmul.mubr.bf16.gmra.mxu0 %v716
      %v867 = vpop.f32.mrf.mxu0
      %v868 = vadd.f32 %v652, %v867
      %v869 = vpop.f32.mrf.mxu0
      %v870 = vpop.f32.mrf.mxu0
      %v871 = vadd.f32 %v655, %v870
      %v872 = vpop.f32.mrf.mxu0
      %873 = vmatprep.mubr.bf16.mxu0 0
      %874 = vmatmul.mubr.bf16.gmra.mxu0 %v718
      %v875 = vpop.f32.mrf.mxu0
      %v876 = vadd.f32 %v660, %v875
      %v877 = vpop.f32.mrf.mxu0
      %v878 = vpop.f32.mrf.mxu0
      %v879 = vadd.f32 %v663, %v878
      %v880 = vpop.f32.mrf.mxu0
      %881 = vmatprep.mubr.bf16.mxu0 0
      %882 = vmatmul.mubr.bf16.gmra.mxu0 %v720
      %v883 = vpop.f32.mrf.mxu0
      %v884 = vadd.f32 %v668, %v883
      %v885 = vpop.f32.mrf.mxu0
      %v886 = vpop.f32.mrf.mxu0
      %v887 = vadd.f32 %v671, %v886
      %v888 = vpop.f32.mrf.mxu0
      %889 = vmatprep.mubr.bf16.mxu0 0
      %890 = vmatmul.mubr.bf16.gmra.mxu0 %v722
      %v891 = vpop.f32.mrf.mxu0
      %v892 = vadd.f32 %v676, %v891
      %v893 = vpop.f32.mrf.mxu0
      %v894 = vpop.f32.mrf.mxu0
      %v895 = vadd.f32 %v679, %v894
      %v896 = vpop.f32.mrf.mxu0
      %897 = vmatprep.mubr.bf16.mxu0 0
      %898 = vmatmul.mubr.bf16.gmra.mxu0 %v724
      %v899 = vpop.f32.mrf.mxu0
      %v900 = vadd.f32 %v684, %v899
      %v901 = vpop.f32.mrf.mxu0
      %v902 = vpop.f32.mrf.mxu0
      %v903 = vadd.f32 %v687, %v902
      %v904 = vpop.f32.mrf.mxu0
      %905 = vdwg.mxu0
      %v906 = vld [vmem:[%s165] sm:$0xe]
      %s907 = scalar_lea.vmem %s1, 4
      %v908 = vld [vmem:[%s907] sm:$0x3]
      %v910 = vunpack.c.l.b16 %v906
      %v911 = vpack.c.b16 %v250, %v910
      %vm912 = vcmask 1046528
      %v913 = vrot.slane %v911, 1
      %v914 = vrot.slane %v287, 1
      %v915 = vsel %vm912, %v913, %v914
      %v916 = vrot.slane %v288, 1
      %v917 = vsel %vm912, %v914, %v916
      %v918 = vrot.slane %v289, 1
      %v919 = vsel %vm912, %v916, %v918
      %v920 = vrot.slane %v290, 1
      %v921 = vsel %vm912, %v918, %v920
      %v922 = vrot.slane %v291, 1
      %v923 = vsel %vm912, %v920, %v922
      %v924 = vrot.slane %v292, 1
      %v925 = vsel %vm912, %v922, %v924
      %v926 = vrot.slane %v293, 1
      %v927 = vsel %vm912, %v924, %v926
      %v928 = vrot.slane %v294, 1
      %v929 = vsel %vm912, %v926, %v928
      %v930 = vrot.slane %v295, 1
      %v931 = vsel %vm912, %v928, %v930
      %v932 = vrot.slane %v296, 1
      %v933 = vsel %vm912, %v930, %v932
      %v934 = vrot.slane %v297, 1
      %v935 = vsel %vm912, %v932, %v934
      %v936 = vrot.slane %v298, 1
      %v937 = vsel %vm912, %v934, %v936
      %v938 = vrot.slane %v299, 1
      %v939 = vsel %vm912, %v936, %v938
      %v940 = vrot.slane %v300, 1
      %v941 = vsel %vm912, %v938, %v940
      %v942 = vrot.slane %v301, 1
      %v943 = vsel %vm912, %v940, %v942
      %v944 = vrot.slane %v302, 1
      %v945 = vsel %vm912, %v942, %v944
      %v946 = vrot.slane %v303, 1
      %v947 = vsel %vm912, %v944, %v946
      %v948 = vrot.slane %v304, 1
      %v949 = vsel %vm912, %v946, %v948
      %v951 = vsel %vm454, %v915, 0
      %v954 = vsel %vm454, %v917, 0
      %v957 = vsel %vm454, %v919, 0
      %v960 = vsel %vm454, %v921, 0
      %v963 = vsel %vm454, %v923, 0
      %v966 = vsel %vm454, %v925, 0
      %v969 = vsel %vm454, %v927, 0
      %v972 = vsel %vm454, %v929, 0
      %v975 = vsel %vm454, %v931, 0
      %v978 = vsel %vm454, %v933, 0
      %v981 = vsel %vm454, %v935, 0
      %v984 = vsel %vm454, %v937, 0
      %v987 = vsel %vm454, %v939, 0
      %v990 = vsel %vm454, %v941, 0
      %v993 = vsel %vm454, %v943, 0
      %v996 = vsel %vm454, %v945, 0
      %v999 = vsel %vm454, %v947, 0
      %v1002 = vsel %vm454, %v949, 0
      %v1005 = vsel %vm509, %v908, 0
      %1007 = vmatprep.subr.bf16.mxu0 0
      %1008 = vmatpush1.bf16.msra.mxu0 0
      %1009 = vmatprep.subr.bf16.mxu0 0
      %1010 = vmatpush1.bf16.msra.mxu0 0
      %1011 = vmatprep.subr.bf16.mxu0 0
      %1012 = vmatpush1.bf16.msra.mxu0 0
      %1013 = vmatprep.subr.bf16.mxu0 0
      %1014 = vmatpush1.bf16.msra.mxu0 0
      %1015 = vmatprep.subr.bf16.mxu0 0
      %1016 = vmatpush1.bf16.msra.mxu0 0
      %1017 = vmatprep.subr.bf16.mxu0 0
      %1018 = vmatpush1.bf16.msra.mxu0 0
      %1019 = vmatprep.subr.bf16.mxu0 0
      %1020 = vmatpush1.bf16.msra.mxu0 0
      %1021 = vmatprep.subr.bf16.mxu0 0
      %1022 = vmatpush1.bf16.msra.mxu0 %v1005
      %1023 = vmatprep.subr.bf16.mxu0 0
      %1024 = vmatpush2.bf16.msra.mxu0 0
      %1025 = vmatprep.subr.bf16.mxu0 0
      %1026 = vmatpush2.bf16.msra.mxu0 0
      %1027 = vmatprep.subr.bf16.mxu0 0
      %1028 = vmatpush2.bf16.msra.mxu0 0
      %1029 = vmatprep.subr.bf16.mxu0 0
      %1030 = vmatpush2.bf16.msra.mxu0 0
      %1031 = vmatprep.subr.bf16.mxu0 0
      %1032 = vmatpush2.bf16.msra.mxu0 0
      %1033 = vmatprep.subr.bf16.mxu0 0
      %1034 = vmatpush2.bf16.msra.mxu0 0
      %1035 = vmatprep.subr.bf16.mxu0 0
      %1036 = vmatpush2.bf16.msra.mxu0 0
      %1037 = vmatprep.subr.bf16.mxu0 0
      %1038 = vmatpush2.bf16.msra.mxu0 0
      %1039 = vmatprep.mubr.bf16.mxu0 0
      %1040 = vmatmul.mubr.bf16.gmra.mxu0 %v951
      %v1041 = vpop.f32.mrf.mxu0
      %v1042 = vadd.f32 0.0, %v1041
      %v1043 = vpop.f32.mrf.mxu0
      %v1044 = vpop.f32.mrf.mxu0
      %v1045 = vadd.f32 0.0, %v1044
      %v1046 = vpop.f32.mrf.mxu0
      %1047 = vmatprep.mubr.bf16.mxu0 0
      %1048 = vmatmul.mubr.bf16.gmra.mxu0 %v954
      %v1049 = vpop.f32.mrf.mxu0
      %v1050 = vadd.f32 0.0, %v1049
      %v1051 = vpop.f32.mrf.mxu0
      %v1052 = vpop.f32.mrf.mxu0
      %v1053 = vadd.f32 0.0, %v1052
      %v1054 = vpop.f32.mrf.mxu0
      %1055 = vmatprep.mubr.bf16.mxu0 0
      %1056 = vmatmul.mubr.bf16.gmra.mxu0 %v957
      %v1057 = vpop.f32.mrf.mxu0
      %v1058 = vadd.f32 0.0, %v1057
      %v1059 = vpop.f32.mrf.mxu0
      %v1060 = vpop.f32.mrf.mxu0
      %v1061 = vadd.f32 0.0, %v1060
      %v1062 = vpop.f32.mrf.mxu0
      %1063 = vmatprep.mubr.bf16.mxu0 0
      %1064 = vmatmul.mubr.bf16.gmra.mxu0 %v960
      %v1065 = vpop.f32.mrf.mxu0
      %v1066 = vadd.f32 0.0, %v1065
      %v1067 = vpop.f32.mrf.mxu0
      %v1068 = vpop.f32.mrf.mxu0
      %v1069 = vadd.f32 0.0, %v1068
      %v1070 = vpop.f32.mrf.mxu0
      %1071 = vmatprep.mubr.bf16.mxu0 0
      %1072 = vmatmul.mubr.bf16.gmra.mxu0 %v963
      %v1073 = vpop.f32.mrf.mxu0
      %v1074 = vadd.f32 0.0, %v1073
      %v1075 = vpop.f32.mrf.mxu0
      %v1076 = vpop.f32.mrf.mxu0
      %v1077 = vadd.f32 0.0, %v1076
      %v1078 = vpop.f32.mrf.mxu0
      %1079 = vmatprep.mubr.bf16.mxu0 0
      %1080 = vmatmul.mubr.bf16.gmra.mxu0 %v966
      %v1081 = vpop.f32.mrf.mxu0
      %v1082 = vadd.f32 0.0, %v1081
      %v1083 = vpop.f32.mrf.mxu0
      %v1084 = vpop.f32.mrf.mxu0
      %v1085 = vadd.f32 0.0, %v1084
      %v1086 = vpop.f32.mrf.mxu0
      %1087 = vmatprep.mubr.bf16.mxu0 0
      %1088 = vmatmul.mubr.bf16.gmra.mxu0 %v969
      %v1089 = vpop.f32.mrf.mxu0
      %v1090 = vadd.f32 0.0, %v1089
      %v1091 = vpop.f32.mrf.mxu0
      %v1092 = vpop.f32.mrf.mxu0
      %v1093 = vadd.f32 0.0, %v1092
      %v1094 = vpop.f32.mrf.mxu0
      %1095 = vmatprep.mubr.bf16.mxu0 0
      %1096 = vmatmul.mubr.bf16.gmra.mxu0 %v972
      %v1097 = vpop.f32.mrf.mxu0
      %v1098 = vadd.f32 0.0, %v1097
      %v1099 = vpop.f32.mrf.mxu0
      %v1100 = vpop.f32.mrf.mxu0
      %v1101 = vadd.f32 0.0, %v1100
      %v1102 = vpop.f32.mrf.mxu0
      %1103 = vmatprep.mubr.bf16.mxu0 0
      %1104 = vmatmul.mubr.bf16.gmra.mxu0 %v975
      %v1105 = vpop.f32.mrf.mxu0
      %v1106 = vadd.f32 0.0, %v1105
      %v1107 = vpop.f32.mrf.mxu0
      %v1108 = vpop.f32.mrf.mxu0
      %v1109 = vadd.f32 0.0, %v1108
      %v1110 = vpop.f32.mrf.mxu0
      %1111 = vmatprep.mubr.bf16.mxu0 0
      %1112 = vmatmul.mubr.bf16.gmra.mxu0 %v978
      %v1113 = vpop.f32.mrf.mxu0
      %v1114 = vadd.f32 0.0, %v1113
      %v1115 = vpop.f32.mrf.mxu0
      %v1116 = vpop.f32.mrf.mxu0
      %v1117 = vadd.f32 0.0, %v1116
      %v1118 = vpop.f32.mrf.mxu0
      %1119 = vmatprep.mubr.bf16.mxu0 0
      %1120 = vmatmul.mubr.bf16.gmra.mxu0 %v981
      %v1121 = vpop.f32.mrf.mxu0
      %v1122 = vadd.f32 0.0, %v1121
      %v1123 = vpop.f32.mrf.mxu0
      %v1124 = vpop.f32.mrf.mxu0
      %v1125 = vadd.f32 0.0, %v1124
      %v1126 = vpop.f32.mrf.mxu0
      %1127 = vmatprep.mubr.bf16.mxu0 0
      %1128 = vmatmul.mubr.bf16.gmra.mxu0 %v984
      %v1129 = vpop.f32.mrf.mxu0
      %v1130 = vadd.f32 0.0, %v1129
      %v1131 = vpop.f32.mrf.mxu0
      %v1132 = vpop.f32.mrf.mxu0
      %v1133 = vadd.f32 0.0, %v1132
      %v1134 = vpop.f32.mrf.mxu0
      %1135 = vmatprep.mubr.bf16.mxu0 0
      %1136 = vmatmul.mubr.bf16.gmra.mxu0 %v987
      %v1137 = vpop.f32.mrf.mxu0
      %v1138 = vadd.f32 0.0, %v1137
      %v1139 = vpop.f32.mrf.mxu0
      %v1140 = vpop.f32.mrf.mxu0
      %v1141 = vadd.f32 0.0, %v1140
      %v1142 = vpop.f32.mrf.mxu0
      %1143 = vmatprep.mubr.bf16.mxu0 0
      %1144 = vmatmul.mubr.bf16.gmra.mxu0 %v990
      %v1145 = vpop.f32.mrf.mxu0
      %v1146 = vadd.f32 0.0, %v1145
      %v1147 = vpop.f32.mrf.mxu0
      %v1148 = vpop.f32.mrf.mxu0
      %v1149 = vadd.f32 0.0, %v1148
      %v1150 = vpop.f32.mrf.mxu0
      %1151 = vmatprep.mubr.bf16.mxu0 0
      %1152 = vmatmul.mubr.bf16.gmra.mxu0 %v993
      %v1153 = vpop.f32.mrf.mxu0
      %v1154 = vadd.f32 0.0, %v1153
      %v1155 = vpop.f32.mrf.mxu0
      %v1156 = vpop.f32.mrf.mxu0
      %v1157 = vadd.f32 0.0, %v1156
      %v1158 = vpop.f32.mrf.mxu0
      %1159 = vmatprep.mubr.bf16.mxu0 0
      %1160 = vmatmul.mubr.bf16.gmra.mxu0 %v996
      %v1161 = vpop.f32.mrf.mxu0
      %v1162 = vadd.f32 0.0, %v1161
      %v1163 = vpop.f32.mrf.mxu0
      %v1164 = vpop.f32.mrf.mxu0
      %v1165 = vadd.f32 0.0, %v1164
      %v1166 = vpop.f32.mrf.mxu0
      %1167 = vmatprep.mubr.bf16.mxu0 0
      %1168 = vmatmul.mubr.bf16.gmra.mxu0 %v999
      %v1169 = vpop.f32.mrf.mxu0
      %v1170 = vadd.f32 0.0, %v1169
      %v1171 = vpop.f32.mrf.mxu0
      %v1172 = vpop.f32.mrf.mxu0
      %v1173 = vadd.f32 0.0, %v1172
      %v1174 = vpop.f32.mrf.mxu0
      %1175 = vmatprep.mubr.bf16.mxu0 0
      %1176 = vmatmul.mubr.bf16.gmra.mxu0 %v1002
      %v1177 = vpop.f32.mrf.mxu0
      %v1178 = vadd.f32 0.0, %v1177
      %v1179 = vpop.f32.mrf.mxu0
      %v1180 = vpop.f32.mrf.mxu0
      %v1181 = vadd.f32 0.0, %v1180
      %v1182 = vpop.f32.mrf.mxu0
      %1183 = vdwg.mxu0
      %v1184 = vadd.f32 %v764, %v1042
      %v1185 = vadd.f32 %v767, %v1045
      %v1186 = vadd.f32 %v772, %v1050
      %v1187 = vadd.f32 %v775, %v1053
      %v1188 = vadd.f32 %v780, %v1058
      %v1189 = vadd.f32 %v783, %v1061
      %v1190 = vadd.f32 %v788, %v1066
      %v1191 = vadd.f32 %v791, %v1069
      %v1192 = vadd.f32 %v796, %v1074
      %v1193 = vadd.f32 %v799, %v1077
      %v1194 = vadd.f32 %v804, %v1082
      %v1195 = vadd.f32 %v807, %v1085
      %v1196 = vadd.f32 %v812, %v1090
      %v1197 = vadd.f32 %v815, %v1093
      %v1198 = vadd.f32 %v820, %v1098
      %v1199 = vadd.f32 %v823, %v1101
      %v1200 = vadd.f32 %v828, %v1106
      %v1201 = vadd.f32 %v831, %v1109
      %v1202 = vadd.f32 %v836, %v1114
      %v1203 = vadd.f32 %v839, %v1117
      %v1204 = vadd.f32 %v844, %v1122
      %v1205 = vadd.f32 %v847, %v1125
      %v1206 = vadd.f32 %v852, %v1130
      %v1207 = vadd.f32 %v855, %v1133
      %v1208 = vadd.f32 %v860, %v1138
      %v1209 = vadd.f32 %v863, %v1141
      %v1210 = vadd.f32 %v868, %v1146
      %v1211 = vadd.f32 %v871, %v1149
      %v1212 = vadd.f32 %v876, %v1154
      %v1213 = vadd.f32 %v879, %v1157
      %v1214 = vadd.f32 %v884, %v1162
      %v1215 = vadd.f32 %v887, %v1165
      %v1216 = vadd.f32 %v892, %v1170
      %v1217 = vadd.f32 %v895, %v1173
      %v1218 = vadd.f32 %v900, %v1178
      %v1219 = vadd.f32 %v903, %v1181
      %v1220 = vld [vmem:[%s165 + $0x8] sm:$0xe]
      %v1221 = vld [vmem:[%s165 + $0xc] sm:$0xf]
      %v1222 = vld [vmem:[%s165 + $0x10] sm:$0xf]
      %v1223 = vld [vmem:[%s165 + $0x14] sm:$0xf]
      %v1224 = vld [vmem:[%s165 + $0x18] sm:$0xf]
      %v1225 = vld [vmem:[%s165 + $0x1c] sm:$0xf]
      %v1226 = vld [vmem:[%s165 + $0x20] sm:$0xf]
      %v1227 = vld [vmem:[%s165 + $0x24] sm:$0xf]
      %v1228 = vld [vmem:[%s165 + $0x28] sm:$0xf]
      %v1229 = vld [vmem:[%s165 + $0x2c] sm:$0xf]
      %v1230 = vld [vmem:[%s165 + $0x30] sm:$0xf]
      %v1231 = vld [vmem:[%s165 + $0x34] sm:$0xf]
      %v1232 = vld [vmem:[%s165 + $0x38] sm:$0xf]
      %v1233 = vld [vmem:[%s165 + $0x3c] sm:$0xf]
      %v1234 = vld [vmem:[%s165 + $0x40] sm:$0xf]
      %v1235 = vld [vmem:[%s165 + $0x44] sm:$0xf]
      %v1236 = vld [vmem:[%s165 + $0x48] sm:$0xf]
      %v1237 = vld [vmem:[%s165 + $0x4c] sm:$0xf]
      %v1238 = vld [vmem:[%s165 + $0x50] sm:$0xf]
      %v1239 = vld [vmem:[%s165 + $0x54] sm:$0xf]
      %v1240 = vld [vmem:[%s165 + $0x58] sm:$0xf]
      %v1241 = vld [vmem:[%s165 + $0x5c] sm:$0xf]
      %v1242 = vld [vmem:[%s165 + $0x60] sm:$0xf]
      %v1243 = vld [vmem:[%s165 + $0x64] sm:$0xf]
      %v1244 = vld [vmem:[%s165 + $0x68] sm:$0xf]
      %v1245 = vld [vmem:[%s165 + $0x6c] sm:$0xf]
      %v1246 = vld [vmem:[%s165 + $0x70] sm:$0xf]
      %v1247 = vld [vmem:[%s165 + $0x74] sm:$0xf]
      %v1248 = vld [vmem:[%s165 + $0x78] sm:$0xf]
      %v1249 = vld [vmem:[%s165 + $0x7c] sm:$0xf]
      %v1250 = vld [vmem:[%s165 + $0x80] sm:$0xf]
      %v1251 = vld [vmem:[%s165 + $0x84] sm:$0xf]
      %v1252 = vld [vmem:[%s165 + $0x88] sm:$0xf]
      %v1253 = vld [vmem:[%s165 + $0x8c] sm:$0xf]
      %v1254 = vld [vmem:[%s165 + $0x90] sm:$0xf]
      %v1255 = vld [vmem:[%s165 + $0x94] sm:$0xf]
      %v1256 = vld [vmem:[%s165 + $0x98] sm:$0x1]
      %s1257 = scalar_lea.vmem %s1, 6
      %v1258 = vld [vmem:[%s1257] sm:$0x3]
      %v1296 = vunpack.c.l.b16 %v1220
      %v1297 = vunpack.c.l.b16 %v1221
      %v1298 = vunpack.c.l.b16 %v1222
      %v1299 = vunpack.c.l.b16 %v1223
      %v1300 = vunpack.c.l.b16 %v1224
      %v1301 = vunpack.c.l.b16 %v1225
      %v1302 = vunpack.c.l.b16 %v1226
      %v1303 = vunpack.c.l.b16 %v1227
      %v1304 = vunpack.c.l.b16 %v1228
      %v1305 = vunpack.c.l.b16 %v1229
      %v1306 = vunpack.c.l.b16 %v1230
      %v1307 = vunpack.c.l.b16 %v1231
      %v1308 = vunpack.c.l.b16 %v1232
      %v1309 = vunpack.c.l.b16 %v1233
      %v1310 = vunpack.c.l.b16 %v1234
      %v1311 = vunpack.c.l.b16 %v1235
      %v1312 = vunpack.c.l.b16 %v1236
      %v1313 = vunpack.c.l.b16 %v1237
      %v1314 = vunpack.c.l.b16 %v1238
      %v1315 = vunpack.c.l.b16 %v1239
      %v1316 = vunpack.c.l.b16 %v1240
      %v1317 = vunpack.c.l.b16 %v1241
      %v1318 = vunpack.c.l.b16 %v1242
      %v1319 = vunpack.c.l.b16 %v1243
      %v1320 = vunpack.c.l.b16 %v1244
      %v1321 = vunpack.c.l.b16 %v1245
      %v1322 = vunpack.c.l.b16 %v1246
      %v1323 = vunpack.c.l.b16 %v1247
      %v1324 = vunpack.c.l.b16 %v1248
      %v1325 = vunpack.c.l.b16 %v1249
      %v1326 = vunpack.c.l.b16 %v1250
      %v1327 = vunpack.c.l.b16 %v1251
      %v1328 = vunpack.c.l.b16 %v1252
      %v1329 = vunpack.c.l.b16 %v1253
      %v1330 = vunpack.c.l.b16 %v1254
      %v1331 = vunpack.c.l.b16 %v1255
      %v1332 = vunpack.c.l.b16 %v1256
      %v1333 = vpack.c.b16 %v1297, %v1296
      %v1334 = vpack.c.b16 %v1299, %v1298
      %v1335 = vpack.c.b16 %v1301, %v1300
      %v1336 = vpack.c.b16 %v1303, %v1302
      %v1337 = vpack.c.b16 %v1305, %v1304
      %v1338 = vpack.c.b16 %v1307, %v1306
      %v1339 = vpack.c.b16 %v1309, %v1308
      %v1340 = vpack.c.b16 %v1311, %v1310
      %v1341 = vpack.c.b16 %v1313, %v1312
      %v1342 = vpack.c.b16 %v1315, %v1314
      %v1343 = vpack.c.b16 %v1317, %v1316
      %v1344 = vpack.c.b16 %v1319, %v1318
      %v1345 = vpack.c.b16 %v1321, %v1320
      %v1346 = vpack.c.b16 %v1323, %v1322
      %v1347 = vpack.c.b16 %v1325, %v1324
      %v1348 = vpack.c.b16 %v1327, %v1326
      %v1349 = vpack.c.b16 %v1329, %v1328
      %v1350 = vpack.c.b16 %v1331, %v1330
      %v1351 = vpack.c.b16 %v1332, %v1332
      %v1352 = vrot.slane %v1333, 1
      %v1353 = vrot.slane %v1334, 1
      %v1354 = vsel %vm912, %v1352, %v1353
      %v1355 = vrot.slane %v1335, 1
      %v1356 = vsel %vm912, %v1353, %v1355
      %v1357 = vrot.slane %v1336, 1
      %v1358 = vsel %vm912, %v1355, %v1357
      %v1359 = vrot.slane %v1337, 1
      %v1360 = vsel %vm912, %v1357, %v1359
      %v1361 = vrot.slane %v1338, 1
      %v1362 = vsel %vm912, %v1359, %v1361
      %v1363 = vrot.slane %v1339, 1
      %v1364 = vsel %vm912, %v1361, %v1363
      %v1365 = vrot.slane %v1340, 1
      %v1366 = vsel %vm912, %v1363, %v1365
      %v1367 = vrot.slane %v1341, 1
      %v1368 = vsel %vm912, %v1365, %v1367
      %v1369 = vrot.slane %v1342, 1
      %v1370 = vsel %vm912, %v1367, %v1369
      %v1371 = vrot.slane %v1343, 1
      %v1372 = vsel %vm912, %v1369, %v1371
      %v1373 = vrot.slane %v1344, 1
      %v1374 = vsel %vm912, %v1371, %v1373
      %v1375 = vrot.slane %v1345, 1
      %v1376 = vsel %vm912, %v1373, %v1375
      %v1377 = vrot.slane %v1346, 1
      %v1378 = vsel %vm912, %v1375, %v1377
      %v1379 = vrot.slane %v1347, 1
      %v1380 = vsel %vm912, %v1377, %v1379
      %v1381 = vrot.slane %v1348, 1
      %v1382 = vsel %vm912, %v1379, %v1381
      %v1383 = vrot.slane %v1349, 1
      %v1384 = vsel %vm912, %v1381, %v1383
      %v1385 = vrot.slane %v1350, 1
      %v1386 = vsel %vm912, %v1383, %v1385
      %v1387 = vrot.slane %v1351, 1
      %v1388 = vsel %vm912, %v1385, %v1387
      %v1390 = vsel %vm454, %v1354, 0
      %v1393 = vsel %vm454, %v1356, 0
      %v1396 = vsel %vm454, %v1358, 0
      %v1399 = vsel %vm454, %v1360, 0
      %v1402 = vsel %vm454, %v1362, 0
      %v1405 = vsel %vm454, %v1364, 0
      %v1408 = vsel %vm454, %v1366, 0
      %v1411 = vsel %vm454, %v1368, 0
      %v1414 = vsel %vm454, %v1370, 0
      %v1417 = vsel %vm454, %v1372, 0
      %v1420 = vsel %vm454, %v1374, 0
      %v1423 = vsel %vm454, %v1376, 0
      %v1426 = vsel %vm454, %v1378, 0
      %v1429 = vsel %vm454, %v1380, 0
      %v1432 = vsel %vm454, %v1382, 0
      %v1435 = vsel %vm454, %v1384, 0
      %v1438 = vsel %vm454, %v1386, 0
      %v1441 = vsel %vm454, %v1388, 0
      %v1444 = vsel %vm509, %v1258, 0
      %1446 = vmatprep.subr.bf16.mxu0 0
      %1447 = vmatpush1.bf16.msra.mxu0 0
      %1448 = vmatprep.subr.bf16.mxu0 0
      %1449 = vmatpush1.bf16.msra.mxu0 0
      %1450 = vmatprep.subr.bf16.mxu0 0
      %1451 = vmatpush1.bf16.msra.mxu0 0
      %1452 = vmatprep.subr.bf16.mxu0 0
      %1453 = vmatpush1.bf16.msra.mxu0 0
      %1454 = vmatprep.subr.bf16.mxu0 0
      %1455 = vmatpush1.bf16.msra.mxu0 0
      %1456 = vmatprep.subr.bf16.mxu0 0
      %1457 = vmatpush1.bf16.msra.mxu0 0
      %1458 = vmatprep.subr.bf16.mxu0 0
      %1459 = vmatpush1.bf16.msra.mxu0 0
      %1460 = vmatprep.subr.bf16.mxu0 0
      %1461 = vmatpush1.bf16.msra.mxu0 %v1444
      %1462 = vmatprep.subr.bf16.mxu0 0
      %1463 = vmatpush2.bf16.msra.mxu0 0
      %1464 = vmatprep.subr.bf16.mxu0 0
      %1465 = vmatpush2.bf16.msra.mxu0 0
      %1466 = vmatprep.subr.bf16.mxu0 0
      %1467 = vmatpush2.bf16.msra.mxu0 0
      %1468 = vmatprep.subr.bf16.mxu0 0
      %1469 = vmatpush2.bf16.msra.mxu0 0
      %1470 = vmatprep.subr.bf16.mxu0 0
      %1471 = vmatpush2.bf16.msra.mxu0 0
      %1472 = vmatprep.subr.bf16.mxu0 0
      %1473 = vmatpush2.bf16.msra.mxu0 0
      %1474 = vmatprep.subr.bf16.mxu0 0
      %1475 = vmatpush2.bf16.msra.mxu0 0
      %1476 = vmatprep.subr.bf16.mxu0 0
      %1477 = vmatpush2.bf16.msra.mxu0 0
      %1478 = vmatprep.mubr.bf16.mxu0 0
      %1479 = vmatmul.mubr.bf16.gmra.mxu0 %v1390
      %v1480 = vpop.f32.mrf.mxu0
      %v1481 = vadd.f32 0.0, %v1480
      %v1482 = vpop.f32.mrf.mxu0
      %v1483 = vpop.f32.mrf.mxu0
      %v1484 = vadd.f32 0.0, %v1483
      %v1485 = vpop.f32.mrf.mxu0
      %1486 = vmatprep.mubr.bf16.mxu0 0
      %1487 = vmatmul.mubr.bf16.gmra.mxu0 %v1393
      %v1488 = vpop.f32.mrf.mxu0
      %v1489 = vadd.f32 0.0, %v1488
      %v1490 = vpop.f32.mrf.mxu0
      %v1491 = vpop.f32.mrf.mxu0
      %v1492 = vadd.f32 0.0, %v1491
      %v1493 = vpop.f32.mrf.mxu0
      %1494 = vmatprep.mubr.bf16.mxu0 0
      %1495 = vmatmul.mubr.bf16.gmra.mxu0 %v1396
      %v1496 = vpop.f32.mrf.mxu0
      %v1497 = vadd.f32 0.0, %v1496
      %v1498 = vpop.f32.mrf.mxu0
      %v1499 = vpop.f32.mrf.mxu0
      %v1500 = vadd.f32 0.0, %v1499
      %v1501 = vpop.f32.mrf.mxu0
      %1502 = vmatprep.mubr.bf16.mxu0 0
      %1503 = vmatmul.mubr.bf16.gmra.mxu0 %v1399
      %v1504 = vpop.f32.mrf.mxu0
      %v1505 = vadd.f32 0.0, %v1504
      %v1506 = vpop.f32.mrf.mxu0
      %v1507 = vpop.f32.mrf.mxu0
      %v1508 = vadd.f32 0.0, %v1507
      %v1509 = vpop.f32.mrf.mxu0
      %1510 = vmatprep.mubr.bf16.mxu0 0
      %1511 = vmatmul.mubr.bf16.gmra.mxu0 %v1402
      %v1512 = vpop.f32.mrf.mxu0
      %v1513 = vadd.f32 0.0, %v1512
      %v1514 = vpop.f32.mrf.mxu0
      %v1515 = vpop.f32.mrf.mxu0
      %v1516 = vadd.f32 0.0, %v1515
      %v1517 = vpop.f32.mrf.mxu0
      %1518 = vmatprep.mubr.bf16.mxu0 0
      %1519 = vmatmul.mubr.bf16.gmra.mxu0 %v1405
      %v1520 = vpop.f32.mrf.mxu0
      %v1521 = vadd.f32 0.0, %v1520
      %v1522 = vpop.f32.mrf.mxu0
      %v1523 = vpop.f32.mrf.mxu0
      %v1524 = vadd.f32 0.0, %v1523
      %v1525 = vpop.f32.mrf.mxu0
      %1526 = vmatprep.mubr.bf16.mxu0 0
      %1527 = vmatmul.mubr.bf16.gmra.mxu0 %v1408
      %v1528 = vpop.f32.mrf.mxu0
      %v1529 = vadd.f32 0.0, %v1528
      %v1530 = vpop.f32.mrf.mxu0
      %v1531 = vpop.f32.mrf.mxu0
      %v1532 = vadd.f32 0.0, %v1531
      %v1533 = vpop.f32.mrf.mxu0
      %1534 = vmatprep.mubr.bf16.mxu0 0
      %1535 = vmatmul.mubr.bf16.gmra.mxu0 %v1411
      %v1536 = vpop.f32.mrf.mxu0
      %v1537 = vadd.f32 0.0, %v1536
      %v1538 = vpop.f32.mrf.mxu0
      %v1539 = vpop.f32.mrf.mxu0
      %v1540 = vadd.f32 0.0, %v1539
      %v1541 = vpop.f32.mrf.mxu0
      %1542 = vmatprep.mubr.bf16.mxu0 0
      %1543 = vmatmul.mubr.bf16.gmra.mxu0 %v1414
      %v1544 = vpop.f32.mrf.mxu0
      %v1545 = vadd.f32 0.0, %v1544
      %v1546 = vpop.f32.mrf.mxu0
      %v1547 = vpop.f32.mrf.mxu0
      %v1548 = vadd.f32 0.0, %v1547
      %v1549 = vpop.f32.mrf.mxu0
      %1550 = vmatprep.mubr.bf16.mxu0 0
      %1551 = vmatmul.mubr.bf16.gmra.mxu0 %v1417
      %v1552 = vpop.f32.mrf.mxu0
      %v1553 = vadd.f32 0.0, %v1552
      %v1554 = vpop.f32.mrf.mxu0
      %v1555 = vpop.f32.mrf.mxu0
      %v1556 = vadd.f32 0.0, %v1555
      %v1557 = vpop.f32.mrf.mxu0
      %1558 = vmatprep.mubr.bf16.mxu0 0
      %1559 = vmatmul.mubr.bf16.gmra.mxu0 %v1420
      %v1560 = vpop.f32.mrf.mxu0
      %v1561 = vadd.f32 0.0, %v1560
      %v1562 = vpop.f32.mrf.mxu0
      %v1563 = vpop.f32.mrf.mxu0
      %v1564 = vadd.f32 0.0, %v1563
      %v1565 = vpop.f32.mrf.mxu0
      %1566 = vmatprep.mubr.bf16.mxu0 0
      %1567 = vmatmul.mubr.bf16.gmra.mxu0 %v1423
      %v1568 = vpop.f32.mrf.mxu0
      %v1569 = vadd.f32 0.0, %v1568
      %v1570 = vpop.f32.mrf.mxu0
      %v1571 = vpop.f32.mrf.mxu0
      %v1572 = vadd.f32 0.0, %v1571
      %v1573 = vpop.f32.mrf.mxu0
      %1574 = vmatprep.mubr.bf16.mxu0 0
      %1575 = vmatmul.mubr.bf16.gmra.mxu0 %v1426
      %v1576 = vpop.f32.mrf.mxu0
      %v1577 = vadd.f32 0.0, %v1576
      %v1578 = vpop.f32.mrf.mxu0
      %v1579 = vpop.f32.mrf.mxu0
      %v1580 = vadd.f32 0.0, %v1579
      %v1581 = vpop.f32.mrf.mxu0
      %1582 = vmatprep.mubr.bf16.mxu0 0
      %1583 = vmatmul.mubr.bf16.gmra.mxu0 %v1429
      %v1584 = vpop.f32.mrf.mxu0
      %v1585 = vadd.f32 0.0, %v1584
      %v1586 = vpop.f32.mrf.mxu0
      %v1587 = vpop.f32.mrf.mxu0
      %v1588 = vadd.f32 0.0, %v1587
      %v1589 = vpop.f32.mrf.mxu0
      %1590 = vmatprep.mubr.bf16.mxu0 0
      %1591 = vmatmul.mubr.bf16.gmra.mxu0 %v1432
      %v1592 = vpop.f32.mrf.mxu0
      %v1593 = vadd.f32 0.0, %v1592
      %v1594 = vpop.f32.mrf.mxu0
      %v1595 = vpop.f32.mrf.mxu0
      %v1596 = vadd.f32 0.0, %v1595
      %v1597 = vpop.f32.mrf.mxu0
      %1598 = vmatprep.mubr.bf16.mxu0 0
      %1599 = vmatmul.mubr.bf16.gmra.mxu0 %v1435
      %v1600 = vpop.f32.mrf.mxu0
      %v1601 = vadd.f32 0.0, %v1600
      %v1602 = vpop.f32.mrf.mxu0
      %v1603 = vpop.f32.mrf.mxu0
      %v1604 = vadd.f32 0.0, %v1603
      %v1605 = vpop.f32.mrf.mxu0
      %1606 = vmatprep.mubr.bf16.mxu0 0
      %1607 = vmatmul.mubr.bf16.gmra.mxu0 %v1438
      %v1608 = vpop.f32.mrf.mxu0
      %v1609 = vadd.f32 0.0, %v1608
      %v1610 = vpop.f32.mrf.mxu0
      %v1611 = vpop.f32.mrf.mxu0
      %v1612 = vadd.f32 0.0, %v1611
      %v1613 = vpop.f32.mrf.mxu0
      %1614 = vmatprep.mubr.bf16.mxu0 0
      %1615 = vmatmul.mubr.bf16.gmra.mxu0 %v1441
      %v1616 = vpop.f32.mrf.mxu0
      %v1617 = vadd.f32 0.0, %v1616
      %v1618 = vpop.f32.mrf.mxu0
      %v1619 = vpop.f32.mrf.mxu0
      %v1620 = vadd.f32 0.0, %v1619
      %v1621 = vpop.f32.mrf.mxu0
      %1622 = vdwg.mxu0
      %v1623 = vadd.f32 %v1184, %v1481
      %v1624 = vadd.f32 %v1185, %v1484
      %v1625 = vadd.f32 %v1186, %v1489
      %v1626 = vadd.f32 %v1187, %v1492
      %v1627 = vadd.f32 %v1188, %v1497
      %v1628 = vadd.f32 %v1189, %v1500
      %v1629 = vadd.f32 %v1190, %v1505
      %v1630 = vadd.f32 %v1191, %v1508
      %v1631 = vadd.f32 %v1192, %v1513
      %v1632 = vadd.f32 %v1193, %v1516
      %v1633 = vadd.f32 %v1194, %v1521
      %v1634 = vadd.f32 %v1195, %v1524
      %v1635 = vadd.f32 %v1196, %v1529
      %v1636 = vadd.f32 %v1197, %v1532
      %v1637 = vadd.f32 %v1198, %v1537
      %v1638 = vadd.f32 %v1199, %v1540
      %v1639 = vadd.f32 %v1200, %v1545
      %v1640 = vadd.f32 %v1201, %v1548
      %v1641 = vadd.f32 %v1202, %v1553
      %v1642 = vadd.f32 %v1203, %v1556
      %v1643 = vadd.f32 %v1204, %v1561
      %v1644 = vadd.f32 %v1205, %v1564
      %v1645 = vadd.f32 %v1206, %v1569
      %v1646 = vadd.f32 %v1207, %v1572
      %v1647 = vadd.f32 %v1208, %v1577
      %v1648 = vadd.f32 %v1209, %v1580
      %v1649 = vadd.f32 %v1210, %v1585
      %v1650 = vadd.f32 %v1211, %v1588
      %v1651 = vadd.f32 %v1212, %v1593
      %v1652 = vadd.f32 %v1213, %v1596
      %v1653 = vadd.f32 %v1214, %v1601
      %v1654 = vadd.f32 %v1215, %v1604
      %v1655 = vadd.f32 %v1216, %v1609
      %v1656 = vadd.f32 %v1217, %v1612
      %v1657 = vadd.f32 %v1218, %v1617
      %v1658 = vadd.f32 %v1219, %v1620
      %v1659 = vld [vmem:[%s165 + $0x98] sm:$0x3]
      %s1660 = scalar_lea.vmem %s1, 8
      %v1661 = vld [vmem:[%s1660] sm:$0x3]
      %v1663 = vunpack.c.l.b16 %v1659
      %v1664 = vpack.c.b16 %v1663, %v1663
      %vm1665 = vsmask.f32 6400
      %v1667 = vshrl.u32 %v1333, 16
      %v1669 = vrot.slane %v1667, 1
      %v1670 = vshll.u32 %v1333, 16
      %v1672 = vrot.slane %v1670, 2
      %v1673 = vor.u32 %v1669, %v1672
      %v1675 = vshrl.u32 %v1334, 16
      %v1677 = vrot.slane %v1675, 1
      %v1678 = vshll.u32 %v1334, 16
      %v1680 = vrot.slane %v1678, 2
      %v1681 = vor.u32 %v1677, %v1680
      %v1682 = vsel %vm1665, %v1673, %v1681
      %v1684 = vshrl.u32 %v1335, 16
      %v1686 = vrot.slane %v1684, 1
      %v1687 = vshll.u32 %v1335, 16
      %v1689 = vrot.slane %v1687, 2
      %v1690 = vor.u32 %v1686, %v1689
      %v1691 = vsel %vm1665, %v1681, %v1690
      %v1693 = vshrl.u32 %v1336, 16
      %v1695 = vrot.slane %v1693, 1
      %v1696 = vshll.u32 %v1336, 16
      %v1698 = vrot.slane %v1696, 2
      %v1699 = vor.u32 %v1695, %v1698
      %v1700 = vsel %vm1665, %v1690, %v1699
      %v1702 = vshrl.u32 %v1337, 16
      %v1704 = vrot.slane %v1702, 1
      %v1705 = vshll.u32 %v1337, 16
      %v1707 = vrot.slane %v1705, 2
      %v1708 = vor.u32 %v1704, %v1707
      %v1709 = vsel %vm1665, %v1699, %v1708
      %v1711 = vshrl.u32 %v1338, 16
      %v1713 = vrot.slane %v1711, 1
      %v1714 = vshll.u32 %v1338, 16
      %v1716 = vrot.slane %v1714, 2
      %v1717 = vor.u32 %v1713, %v1716
      %v1718 = vsel %vm1665, %v1708, %v1717
      %v1720 = vshrl.u32 %v1339, 16
      %v1722 = vrot.slane %v1720, 1
      %v1723 = vshll.u32 %v1339, 16
      %v1725 = vrot.slane %v1723, 2
      %v1726 = vor.u32 %v1722, %v1725
      %v1727 = vsel %vm1665, %v1717, %v1726
      %v1729 = vshrl.u32 %v1340, 16
      %v1731 = vrot.slane %v1729, 1
      %v1732 = vshll.u32 %v1340, 16
      %v1734 = vrot.slane %v1732, 2
      %v1735 = vor.u32 %v1731, %v1734
      %v1736 = vsel %vm1665, %v1726, %v1735
      %v1738 = vshrl.u32 %v1341, 16
      %v1740 = vrot.slane %v1738, 1
      %v1741 = vshll.u32 %v1341, 16
      %v1743 = vrot.slane %v1741, 2
      %v1744 = vor.u32 %v1740, %v1743
      %v1745 = vsel %vm1665, %v1735, %v1744
      %v1747 = vshrl.u32 %v1342, 16
      %v1749 = vrot.slane %v1747, 1
      %v1750 = vshll.u32 %v1342, 16
      %v1752 = vrot.slane %v1750, 2
      %v1753 = vor.u32 %v1749, %v1752
      %v1754 = vsel %vm1665, %v1744, %v1753
      %v1756 = vshrl.u32 %v1343, 16
      %v1758 = vrot.slane %v1756, 1
      %v1759 = vshll.u32 %v1343, 16
      %v1761 = vrot.slane %v1759, 2
      %v1762 = vor.u32 %v1758, %v1761
      %v1763 = vsel %vm1665, %v1753, %v1762
      %v1765 = vshrl.u32 %v1344, 16
      %v1767 = vrot.slane %v1765, 1
      %v1768 = vshll.u32 %v1344, 16
      %v1770 = vrot.slane %v1768, 2
      %v1771 = vor.u32 %v1767, %v1770
      %v1772 = vsel %vm1665, %v1762, %v1771
      %v1774 = vshrl.u32 %v1345, 16
      %v1776 = vrot.slane %v1774, 1
      %v1777 = vshll.u32 %v1345, 16
      %v1779 = vrot.slane %v1777, 2
      %v1780 = vor.u32 %v1776, %v1779
      %v1781 = vsel %vm1665, %v1771, %v1780
      %v1783 = vshrl.u32 %v1346, 16
      %v1785 = vrot.slane %v1783, 1
      %v1786 = vshll.u32 %v1346, 16
      %v1788 = vrot.slane %v1786, 2
      %v1789 = vor.u32 %v1785, %v1788
      %v1790 = vsel %vm1665, %v1780, %v1789
      %v1792 = vshrl.u32 %v1347, 16
      %v1794 = vrot.slane %v1792, 1
      %v1795 = vshll.u32 %v1347, 16
      %v1797 = vrot.slane %v1795, 2
      %v1798 = vor.u32 %v1794, %v1797
      %v1799 = vsel %vm1665, %v1789, %v1798
      %v1801 = vshrl.u32 %v1348, 16
      %v1803 = vrot.slane %v1801, 1
      %v1804 = vshll.u32 %v1348, 16
      %v1806 = vrot.slane %v1804, 2
      %v1807 = vor.u32 %v1803, %v1806
      %v1808 = vsel %vm1665, %v1798, %v1807
      %v1810 = vshrl.u32 %v1349, 16
      %v1812 = vrot.slane %v1810, 1
      %v1813 = vshll.u32 %v1349, 16
      %v1815 = vrot.slane %v1813, 2
      %v1816 = vor.u32 %v1812, %v1815
      %v1817 = vsel %vm1665, %v1807, %v1816
      %v1819 = vshrl.u32 %v1350, 16
      %v1821 = vrot.slane %v1819, 1
      %v1822 = vshll.u32 %v1350, 16
      %v1824 = vrot.slane %v1822, 2
      %v1825 = vor.u32 %v1821, %v1824
      %v1826 = vsel %vm1665, %v1816, %v1825
      %v1828 = vshrl.u32 %v1664, 16
      %v1830 = vrot.slane %v1828, 1
      %v1831 = vshll.u32 %v1664, 16
      %v1833 = vrot.slane %v1831, 2
      %v1834 = vor.u32 %v1830, %v1833
      %v1835 = vsel %vm1665, %v1825, %v1834
      %v1837 = vsel %vm454, %v1682, 0
      %v1840 = vsel %vm454, %v1691, 0
      %v1843 = vsel %vm454, %v1700, 0
      %v1846 = vsel %vm454, %v1709, 0
      %v1849 = vsel %vm454, %v1718, 0
      %v1852 = vsel %vm454, %v1727, 0
      %v1855 = vsel %vm454, %v1736, 0
      %v1858 = vsel %vm454, %v1745, 0
      %v1861 = vsel %vm454, %v1754, 0
      %v1864 = vsel %vm454, %v1763, 0
      %v1867 = vsel %vm454, %v1772, 0
      %v1870 = vsel %vm454, %v1781, 0
      %v1873 = vsel %vm454, %v1790, 0
      %v1876 = vsel %vm454, %v1799, 0
      %v1879 = vsel %vm454, %v1808, 0
      %v1882 = vsel %vm454, %v1817, 0
      %v1885 = vsel %vm454, %v1826, 0
      %v1888 = vsel %vm454, %v1835, 0
      %v1891 = vsel %vm509, %v1661, 0
      %1893 = vmatprep.subr.bf16.mxu0 0
      %1894 = vmatpush1.bf16.msra.mxu0 0
      %1895 = vmatprep.subr.bf16.mxu0 0
      %1896 = vmatpush1.bf16.msra.mxu0 0
      %1897 = vmatprep.subr.bf16.mxu0 0
      %1898 = vmatpush1.bf16.msra.mxu0 0
      %1899 = vmatprep.subr.bf16.mxu0 0
      %1900 = vmatpush1.bf16.msra.mxu0 0
      %1901 = vmatprep.subr.bf16.mxu0 0
      %1902 = vmatpush1.bf16.msra.mxu0 0
      %1903 = vmatprep.subr.bf16.mxu0 0
      %1904 = vmatpush1.bf16.msra.mxu0 0
      %1905 = vmatprep.subr.bf16.mxu0 0
      %1906 = vmatpush1.bf16.msra.mxu0 0
      %1907 = vmatprep.subr.bf16.mxu0 0
      %1908 = vmatpush1.bf16.msra.mxu0 %v1891
      %1909 = vmatprep.subr.bf16.mxu0 0
      %1910 = vmatpush2.bf16.msra.mxu0 0
      %1911 = vmatprep.subr.bf16.mxu0 0
      %1912 = vmatpush2.bf16.msra.mxu0 0
      %1913 = vmatprep.subr.bf16.mxu0 0
      %1914 = vmatpush2.bf16.msra.mxu0 0
      %1915 = vmatprep.subr.bf16.mxu0 0
      %1916 = vmatpush2.bf16.msra.mxu0 0
      %1917 = vmatprep.subr.bf16.mxu0 0
      %1918 = vmatpush2.bf16.msra.mxu0 0
      %1919 = vmatprep.subr.bf16.mxu0 0
      %1920 = vmatpush2.bf16.msra.mxu0 0
      %1921 = vmatprep.subr.bf16.mxu0 0
      %1922 = vmatpush2.bf16.msra.mxu0 0
      %1923 = vmatprep.subr.bf16.mxu0 0
      %1924 = vmatpush2.bf16.msra.mxu0 0
      %1925 = vmatprep.mubr.bf16.mxu0 0
      %1926 = vmatmul.mubr.bf16.gmra.mxu0 %v1837
      %v1927 = vpop.f32.mrf.mxu0
      %v1928 = vadd.f32 0.0, %v1927
      %v1929 = vpop.f32.mrf.mxu0
      %v1930 = vpop.f32.mrf.mxu0
      %v1931 = vadd.f32 0.0, %v1930
      %v1932 = vpop.f32.mrf.mxu0
      %1933 = vmatprep.mubr.bf16.mxu0 0
      %1934 = vmatmul.mubr.bf16.gmra.mxu0 %v1840
      %v1935 = vpop.f32.mrf.mxu0
      %v1936 = vadd.f32 0.0, %v1935
      %v1937 = vpop.f32.mrf.mxu0
      %v1938 = vpop.f32.mrf.mxu0
      %v1939 = vadd.f32 0.0, %v1938
      %v1940 = vpop.f32.mrf.mxu0
      %1941 = vmatprep.mubr.bf16.mxu0 0
      %1942 = vmatmul.mubr.bf16.gmra.mxu0 %v1843
      %v1943 = vpop.f32.mrf.mxu0
      %v1944 = vadd.f32 0.0, %v1943
      %v1945 = vpop.f32.mrf.mxu0
      %v1946 = vpop.f32.mrf.mxu0
      %v1947 = vadd.f32 0.0, %v1946
      %v1948 = vpop.f32.mrf.mxu0
      %1949 = vmatprep.mubr.bf16.mxu0 0
      %1950 = vmatmul.mubr.bf16.gmra.mxu0 %v1846
      %v1951 = vpop.f32.mrf.mxu0
      %v1952 = vadd.f32 0.0, %v1951
      %v1953 = vpop.f32.mrf.mxu0
      %v1954 = vpop.f32.mrf.mxu0
      %v1955 = vadd.f32 0.0, %v1954
      %v1956 = vpop.f32.mrf.mxu0
      %1957 = vmatprep.mubr.bf16.mxu0 0
      %1958 = vmatmul.mubr.bf16.gmra.mxu0 %v1849
      %v1959 = vpop.f32.mrf.mxu0
      %v1960 = vadd.f32 0.0, %v1959
      %v1961 = vpop.f32.mrf.mxu0
      %v1962 = vpop.f32.mrf.mxu0
      %v1963 = vadd.f32 0.0, %v1962
      %v1964 = vpop.f32.mrf.mxu0
      %1965 = vmatprep.mubr.bf16.mxu0 0
      %1966 = vmatmul.mubr.bf16.gmra.mxu0 %v1852
      %v1967 = vpop.f32.mrf.mxu0
      %v1968 = vadd.f32 0.0, %v1967
      %v1969 = vpop.f32.mrf.mxu0
      %v1970 = vpop.f32.mrf.mxu0
      %v1971 = vadd.f32 0.0, %v1970
      %v1972 = vpop.f32.mrf.mxu0
      %1973 = vmatprep.mubr.bf16.mxu0 0
      %1974 = vmatmul.mubr.bf16.gmra.mxu0 %v1855
      %v1975 = vpop.f32.mrf.mxu0
      %v1976 = vadd.f32 0.0, %v1975
      %v1977 = vpop.f32.mrf.mxu0
      %v1978 = vpop.f32.mrf.mxu0
      %v1979 = vadd.f32 0.0, %v1978
      %v1980 = vpop.f32.mrf.mxu0
      %1981 = vmatprep.mubr.bf16.mxu0 0
      %1982 = vmatmul.mubr.bf16.gmra.mxu0 %v1858
      %v1983 = vpop.f32.mrf.mxu0
      %v1984 = vadd.f32 0.0, %v1983
      %v1985 = vpop.f32.mrf.mxu0
      %v1986 = vpop.f32.mrf.mxu0
      %v1987 = vadd.f32 0.0, %v1986
      %v1988 = vpop.f32.mrf.mxu0
      %1989 = vmatprep.mubr.bf16.mxu0 0
      %1990 = vmatmul.mubr.bf16.gmra.mxu0 %v1861
      %v1991 = vpop.f32.mrf.mxu0
      %v1992 = vadd.f32 0.0, %v1991
      %v1993 = vpop.f32.mrf.mxu0
      %v1994 = vpop.f32.mrf.mxu0
      %v1995 = vadd.f32 0.0, %v1994
      %v1996 = vpop.f32.mrf.mxu0
      %1997 = vmatprep.mubr.bf16.mxu0 0
      %1998 = vmatmul.mubr.bf16.gmra.mxu0 %v1864
      %v1999 = vpop.f32.mrf.mxu0
      %v2000 = vadd.f32 0.0, %v1999
      %v2001 = vpop.f32.mrf.mxu0
      %v2002 = vpop.f32.mrf.mxu0
      %v2003 = vadd.f32 0.0, %v2002
      %v2004 = vpop.f32.mrf.mxu0
      %2005 = vmatprep.mubr.bf16.mxu0 0
      %2006 = vmatmul.mubr.bf16.gmra.mxu0 %v1867
      %v2007 = vpop.f32.mrf.mxu0
      %v2008 = vadd.f32 0.0, %v2007
      %v2009 = vpop.f32.mrf.mxu0
      %v2010 = vpop.f32.mrf.mxu0
      %v2011 = vadd.f32 0.0, %v2010
      %v2012 = vpop.f32.mrf.mxu0
      %2013 = vmatprep.mubr.bf16.mxu0 0
      %2014 = vmatmul.mubr.bf16.gmra.mxu0 %v1870
      %v2015 = vpop.f32.mrf.mxu0
      %v2016 = vadd.f32 0.0, %v2015
      %v2017 = vpop.f32.mrf.mxu0
      %v2018 = vpop.f32.mrf.mxu0
      %v2019 = vadd.f32 0.0, %v2018
      %v2020 = vpop.f32.mrf.mxu0
      %2021 = vmatprep.mubr.bf16.mxu0 0
      %2022 = vmatmul.mubr.bf16.gmra.mxu0 %v1873
      %v2023 = vpop.f32.mrf.mxu0
      %v2024 = vadd.f32 0.0, %v2023
      %v2025 = vpop.f32.mrf.mxu0
      %v2026 = vpop.f32.mrf.mxu0
      %v2027 = vadd.f32 0.0, %v2026
      %v2028 = vpop.f32.mrf.mxu0
      %2029 = vmatprep.mubr.bf16.mxu0 0
      %2030 = vmatmul.mubr.bf16.gmra.mxu0 %v1876
      %v2031 = vpop.f32.mrf.mxu0
      %v2032 = vadd.f32 0.0, %v2031
      %v2033 = vpop.f32.mrf.mxu0
      %v2034 = vpop.f32.mrf.mxu0
      %v2035 = vadd.f32 0.0, %v2034
      %v2036 = vpop.f32.mrf.mxu0
      %2037 = vmatprep.mubr.bf16.mxu0 0
      %2038 = vmatmul.mubr.bf16.gmra.mxu0 %v1879
      %v2039 = vpop.f32.mrf.mxu0
      %v2040 = vadd.f32 0.0, %v2039
      %v2041 = vpop.f32.mrf.mxu0
      %v2042 = vpop.f32.mrf.mxu0
      %v2043 = vadd.f32 0.0, %v2042
      %v2044 = vpop.f32.mrf.mxu0
      %2045 = vmatprep.mubr.bf16.mxu0 0
      %2046 = vmatmul.mubr.bf16.gmra.mxu0 %v1882
      %v2047 = vpop.f32.mrf.mxu0
      %v2048 = vadd.f32 0.0, %v2047
      %v2049 = vpop.f32.mrf.mxu0
      %v2050 = vpop.f32.mrf.mxu0
      %v2051 = vadd.f32 0.0, %v2050
      %v2052 = vpop.f32.mrf.mxu0
      %2053 = vmatprep.mubr.bf16.mxu0 0
      %2054 = vmatmul.mubr.bf16.gmra.mxu0 %v1885
      %v2055 = vpop.f32.mrf.mxu0
      %v2056 = vadd.f32 0.0, %v2055
      %v2057 = vpop.f32.mrf.mxu0
      %v2058 = vpop.f32.mrf.mxu0
      %v2059 = vadd.f32 0.0, %v2058
      %v2060 = vpop.f32.mrf.mxu0
      %2061 = vmatprep.mubr.bf16.mxu0 0
      %2062 = vmatmul.mubr.bf16.gmra.mxu0 %v1888
      %v2063 = vpop.f32.mrf.mxu0
      %v2064 = vadd.f32 0.0, %v2063
      %v2065 = vpop.f32.mrf.mxu0
      %v2066 = vpop.f32.mrf.mxu0
      %v2067 = vadd.f32 0.0, %v2066
      %v2068 = vpop.f32.mrf.mxu0
      %2069 = vdwg.mxu0
      %v2070 = vadd.f32 %v1623, %v1928
      %v2071 = vadd.f32 %v1624, %v1931
      %v2072 = vadd.f32 %v1625, %v1936
      %v2073 = vadd.f32 %v1626, %v1939
      %v2074 = vadd.f32 %v1627, %v1944
      %v2075 = vadd.f32 %v1628, %v1947
      %v2076 = vadd.f32 %v1629, %v1952
      %v2077 = vadd.f32 %v1630, %v1955
      %v2078 = vadd.f32 %v1631, %v1960
      %v2079 = vadd.f32 %v1632, %v1963
      %v2080 = vadd.f32 %v1633, %v1968
      %v2081 = vadd.f32 %v1634, %v1971
      %v2082 = vadd.f32 %v1635, %v1976
      %v2083 = vadd.f32 %v1636, %v1979
      %v2084 = vadd.f32 %v1637, %v1984
      %v2085 = vadd.f32 %v1638, %v1987
      %v2086 = vadd.f32 %v1639, %v1992
      %v2087 = vadd.f32 %v1640, %v1995
      %v2088 = vadd.f32 %v1641, %v2000
      %v2089 = vadd.f32 %v1642, %v2003
      %v2090 = vadd.f32 %v1643, %v2008
      %v2091 = vadd.f32 %v1644, %v2011
      %v2092 = vadd.f32 %v1645, %v2016
      %v2093 = vadd.f32 %v1646, %v2019
      %v2094 = vadd.f32 %v1647, %v2024
      %v2095 = vadd.f32 %v1648, %v2027
      %v2096 = vadd.f32 %v1649, %v2032
      %v2097 = vadd.f32 %v1650, %v2035
      %v2098 = vadd.f32 %v1651, %v2040
      %v2099 = vadd.f32 %v1652, %v2043
      %v2100 = vadd.f32 %v1653, %v2048
      %v2101 = vadd.f32 %v1654, %v2051
      %v2102 = vadd.f32 %v1655, %v2056
      %v2103 = vadd.f32 %v1656, %v2059
      %v2104 = vadd.f32 %v1657, %v2064
      %v2105 = vadd.f32 %v1658, %v2067
      %v2106 = vld [vmem:[%s165 + $0x8] sm:$0xc]
      %s2107 = scalar_lea.vmem %s1, 10
      %v2108 = vld [vmem:[%s2107] sm:$0x3]
      %v2110 = vunpack.c.l.b16 %v2106
      %v2111 = vpack.c.b16 %v1297, %v2110
      %vm2112 = vcmask 1045504
      %v2113 = vrot.slane %v2111, 2
      %v2114 = vrot.slane %v1334, 2
      %v2115 = vsel %vm2112, %v2113, %v2114
      %v2116 = vrot.slane %v1335, 2
      %v2117 = vsel %vm2112, %v2114, %v2116
      %v2118 = vrot.slane %v1336, 2
      %v2119 = vsel %vm2112, %v2116, %v2118
      %v2120 = vrot.slane %v1337, 2
      %v2121 = vsel %vm2112, %v2118, %v2120
      %v2122 = vrot.slane %v1338, 2
      %v2123 = vsel %vm2112, %v2120, %v2122
      %v2124 = vrot.slane %v1339, 2
      %v2125 = vsel %vm2112, %v2122, %v2124
      %v2126 = vrot.slane %v1340, 2
      %v2127 = vsel %vm2112, %v2124, %v2126
      %v2128 = vrot.slane %v1341, 2
      %v2129 = vsel %vm2112, %v2126, %v2128
      %v2130 = vrot.slane %v1342, 2
      %v2131 = vsel %vm2112, %v2128, %v2130
      %v2132 = vrot.slane %v1343, 2
      %v2133 = vsel %vm2112, %v2130, %v2132
      %v2134 = vrot.slane %v1344, 2
      %v2135 = vsel %vm2112, %v2132, %v2134
      %v2136 = vrot.slane %v1345, 2
      %v2137 = vsel %vm2112, %v2134, %v2136
      %v2138 = vrot.slane %v1346, 2
      %v2139 = vsel %vm2112, %v2136, %v2138
      %v2140 = vrot.slane %v1347, 2
      %v2141 = vsel %vm2112, %v2138, %v2140
      %v2142 = vrot.slane %v1348, 2
      %v2143 = vsel %vm2112, %v2140, %v2142
      %v2144 = vrot.slane %v1349, 2
      %v2145 = vsel %vm2112, %v2142, %v2144
      %v2146 = vrot.slane %v1350, 2
      %v2147 = vsel %vm2112, %v2144, %v2146
      %v2148 = vrot.slane %v1664, 2
      %v2149 = vsel %vm2112, %v2146, %v2148
      %v2151 = vsel %vm454, %v2115, 0
      %v2154 = vsel %vm454, %v2117, 0
      %v2157 = vsel %vm454, %v2119, 0
      %v2160 = vsel %vm454, %v2121, 0
      %v2163 = vsel %vm454, %v2123, 0
      %v2166 = vsel %vm454, %v2125, 0
      %v2169 = vsel %vm454, %v2127, 0
      %v2172 = vsel %vm454, %v2129, 0
      %v2175 = vsel %vm454, %v2131, 0
      %v2178 = vsel %vm454, %v2133, 0
      %v2181 = vsel %vm454, %v2135, 0
      %v2184 = vsel %vm454, %v2137, 0
      %v2187 = vsel %vm454, %v2139, 0
      %v2190 = vsel %vm454, %v2141, 0
      %v2193 = vsel %vm454, %v2143, 0
      %v2196 = vsel %vm454, %v2145, 0
      %v2199 = vsel %vm454, %v2147, 0
      %v2202 = vsel %vm454, %v2149, 0
      %v2205 = vsel %vm509, %v2108, 0
      %2207 = vmatprep.subr.bf16.mxu0 0
      %2208 = vmatpush1.bf16.msra.mxu0 0
      %2209 = vmatprep.subr.bf16.mxu0 0
      %2210 = vmatpush1.bf16.msra.mxu0 0
      %2211 = vmatprep.subr.bf16.mxu0 0
      %2212 = vmatpush1.bf16.msra.mxu0 0
      %2213 = vmatprep.subr.bf16.mxu0 0
      %2214 = vmatpush1.bf16.msra.mxu0 0
      %2215 = vmatprep.subr.bf16.mxu0 0
      %2216 = vmatpush1.bf16.msra.mxu0 0
      %2217 = vmatprep.subr.bf16.mxu0 0
      %2218 = vmatpush1.bf16.msra.mxu0 0
      %2219 = vmatprep.subr.bf16.mxu0 0
      %2220 = vmatpush1.bf16.msra.mxu0 0
      %2221 = vmatprep.subr.bf16.mxu0 0
      %2222 = vmatpush1.bf16.msra.mxu0 %v2205
      %2223 = vmatprep.subr.bf16.mxu0 0
      %2224 = vmatpush2.bf16.msra.mxu0 0
      %2225 = vmatprep.subr.bf16.mxu0 0
      %2226 = vmatpush2.bf16.msra.mxu0 0
      %2227 = vmatprep.subr.bf16.mxu0 0
      %2228 = vmatpush2.bf16.msra.mxu0 0
      %2229 = vmatprep.subr.bf16.mxu0 0
      %2230 = vmatpush2.bf16.msra.mxu0 0
      %2231 = vmatprep.subr.bf16.mxu0 0
      %2232 = vmatpush2.bf16.msra.mxu0 0
      %2233 = vmatprep.subr.bf16.mxu0 0
      %2234 = vmatpush2.bf16.msra.mxu0 0
      %2235 = vmatprep.subr.bf16.mxu0 0
      %2236 = vmatpush2.bf16.msra.mxu0 0
      %2237 = vmatprep.subr.bf16.mxu0 0
      %2238 = vmatpush2.bf16.msra.mxu0 0
      %2239 = vmatprep.mubr.bf16.mxu0 0
      %2240 = vmatmul.mubr.bf16.gmra.mxu0 %v2151
      %v2241 = vpop.f32.mrf.mxu0
      %v2242 = vadd.f32 0.0, %v2241
      %v2243 = vpop.f32.mrf.mxu0
      %v2244 = vpop.f32.mrf.mxu0
      %v2245 = vadd.f32 0.0, %v2244
      %v2246 = vpop.f32.mrf.mxu0
      %2247 = vmatprep.mubr.bf16.mxu0 0
      %2248 = vmatmul.mubr.bf16.gmra.mxu0 %v2154
      %v2249 = vpop.f32.mrf.mxu0
      %v2250 = vadd.f32 0.0, %v2249
      %v2251 = vpop.f32.mrf.mxu0
      %v2252 = vpop.f32.mrf.mxu0
      %v2253 = vadd.f32 0.0, %v2252
      %v2254 = vpop.f32.mrf.mxu0
      %2255 = vmatprep.mubr.bf16.mxu0 0
      %2256 = vmatmul.mubr.bf16.gmra.mxu0 %v2157
      %v2257 = vpop.f32.mrf.mxu0
      %v2258 = vadd.f32 0.0, %v2257
      %v2259 = vpop.f32.mrf.mxu0
      %v2260 = vpop.f32.mrf.mxu0
      %v2261 = vadd.f32 0.0, %v2260
      %v2262 = vpop.f32.mrf.mxu0
      %2263 = vmatprep.mubr.bf16.mxu0 0
      %2264 = vmatmul.mubr.bf16.gmra.mxu0 %v2160
      %v2265 = vpop.f32.mrf.mxu0
      %v2266 = vadd.f32 0.0, %v2265
      %v2267 = vpop.f32.mrf.mxu0
      %v2268 = vpop.f32.mrf.mxu0
      %v2269 = vadd.f32 0.0, %v2268
      %v2270 = vpop.f32.mrf.mxu0
      %2271 = vmatprep.mubr.bf16.mxu0 0
      %2272 = vmatmul.mubr.bf16.gmra.mxu0 %v2163
      %v2273 = vpop.f32.mrf.mxu0
      %v2274 = vadd.f32 0.0, %v2273
      %v2275 = vpop.f32.mrf.mxu0
      %v2276 = vpop.f32.mrf.mxu0
      %v2277 = vadd.f32 0.0, %v2276
      %v2278 = vpop.f32.mrf.mxu0
      %2279 = vmatprep.mubr.bf16.mxu0 0
      %2280 = vmatmul.mubr.bf16.gmra.mxu0 %v2166
      %v2281 = vpop.f32.mrf.mxu0
      %v2282 = vadd.f32 0.0, %v2281
      %v2283 = vpop.f32.mrf.mxu0
      %v2284 = vpop.f32.mrf.mxu0
      %v2285 = vadd.f32 0.0, %v2284
      %v2286 = vpop.f32.mrf.mxu0
      %2287 = vmatprep.mubr.bf16.mxu0 0
      %2288 = vmatmul.mubr.bf16.gmra.mxu0 %v2169
      %v2289 = vpop.f32.mrf.mxu0
      %v2290 = vadd.f32 0.0, %v2289
      %v2291 = vpop.f32.mrf.mxu0
      %v2292 = vpop.f32.mrf.mxu0
      %v2293 = vadd.f32 0.0, %v2292
      %v2294 = vpop.f32.mrf.mxu0
      %2295 = vmatprep.mubr.bf16.mxu0 0
      %2296 = vmatmul.mubr.bf16.gmra.mxu0 %v2172
      %v2297 = vpop.f32.mrf.mxu0
      %v2298 = vadd.f32 0.0, %v2297
      %v2299 = vpop.f32.mrf.mxu0
      %v2300 = vpop.f32.mrf.mxu0
      %v2301 = vadd.f32 0.0, %v2300
      %v2302 = vpop.f32.mrf.mxu0
      %2303 = vmatprep.mubr.bf16.mxu0 0
      %2304 = vmatmul.mubr.bf16.gmra.mxu0 %v2175
      %v2305 = vpop.f32.mrf.mxu0
      %v2306 = vadd.f32 0.0, %v2305
      %v2307 = vpop.f32.mrf.mxu0
      %v2308 = vpop.f32.mrf.mxu0
      %v2309 = vadd.f32 0.0, %v2308
      %v2310 = vpop.f32.mrf.mxu0
      %2311 = vmatprep.mubr.bf16.mxu0 0
      %2312 = vmatmul.mubr.bf16.gmra.mxu0 %v2178
      %v2313 = vpop.f32.mrf.mxu0
      %v2314 = vadd.f32 0.0, %v2313
      %v2315 = vpop.f32.mrf.mxu0
      %v2316 = vpop.f32.mrf.mxu0
      %v2317 = vadd.f32 0.0, %v2316
      %v2318 = vpop.f32.mrf.mxu0
      %2319 = vmatprep.mubr.bf16.mxu0 0
      %2320 = vmatmul.mubr.bf16.gmra.mxu0 %v2181
      %v2321 = vpop.f32.mrf.mxu0
      %v2322 = vadd.f32 0.0, %v2321
      %v2323 = vpop.f32.mrf.mxu0
      %v2324 = vpop.f32.mrf.mxu0
      %v2325 = vadd.f32 0.0, %v2324
      %v2326 = vpop.f32.mrf.mxu0
      %2327 = vmatprep.mubr.bf16.mxu0 0
      %2328 = vmatmul.mubr.bf16.gmra.mxu0 %v2184
      %v2329 = vpop.f32.mrf.mxu0
      %v2330 = vadd.f32 0.0, %v2329
      %v2331 = vpop.f32.mrf.mxu0
      %v2332 = vpop.f32.mrf.mxu0
      %v2333 = vadd.f32 0.0, %v2332
      %v2334 = vpop.f32.mrf.mxu0
      %2335 = vmatprep.mubr.bf16.mxu0 0
      %2336 = vmatmul.mubr.bf16.gmra.mxu0 %v2187
      %v2337 = vpop.f32.mrf.mxu0
      %v2338 = vadd.f32 0.0, %v2337
      %v2339 = vpop.f32.mrf.mxu0
      %v2340 = vpop.f32.mrf.mxu0
      %v2341 = vadd.f32 0.0, %v2340
      %v2342 = vpop.f32.mrf.mxu0
      %2343 = vmatprep.mubr.bf16.mxu0 0
      %2344 = vmatmul.mubr.bf16.gmra.mxu0 %v2190
      %v2345 = vpop.f32.mrf.mxu0
      %v2346 = vadd.f32 0.0, %v2345
      %v2347 = vpop.f32.mrf.mxu0
      %v2348 = vpop.f32.mrf.mxu0
      %v2349 = vadd.f32 0.0, %v2348
      %v2350 = vpop.f32.mrf.mxu0
      %2351 = vmatprep.mubr.bf16.mxu0 0
      %2352 = vmatmul.mubr.bf16.gmra.mxu0 %v2193
      %v2353 = vpop.f32.mrf.mxu0
      %v2354 = vadd.f32 0.0, %v2353
      %v2355 = vpop.f32.mrf.mxu0
      %v2356 = vpop.f32.mrf.mxu0
      %v2357 = vadd.f32 0.0, %v2356
      %v2358 = vpop.f32.mrf.mxu0
      %2359 = vmatprep.mubr.bf16.mxu0 0
      %2360 = vmatmul.mubr.bf16.gmra.mxu0 %v2196
      %v2361 = vpop.f32.mrf.mxu0
      %v2362 = vadd.f32 0.0, %v2361
      %v2363 = vpop.f32.mrf.mxu0
      %v2364 = vpop.f32.mrf.mxu0
      %v2365 = vadd.f32 0.0, %v2364
      %v2366 = vpop.f32.mrf.mxu0
      %2367 = vmatprep.mubr.bf16.mxu0 0
      %2368 = vmatmul.mubr.bf16.gmra.mxu0 %v2199
      %v2369 = vpop.f32.mrf.mxu0
      %v2370 = vadd.f32 0.0, %v2369
      %v2371 = vpop.f32.mrf.mxu0
      %v2372 = vpop.f32.mrf.mxu0
      %v2373 = vadd.f32 0.0, %v2372
      %v2374 = vpop.f32.mrf.mxu0
      %2375 = vmatprep.mubr.bf16.mxu0 0
      %2376 = vmatmul.mubr.bf16.gmra.mxu0 %v2202
      %v2377 = vpop.f32.mrf.mxu0
      %v2378 = vadd.f32 0.0, %v2377
      %v2379 = vpop.f32.mrf.mxu0
      %v2380 = vpop.f32.mrf.mxu0
      %v2381 = vadd.f32 0.0, %v2380
      %v2382 = vpop.f32.mrf.mxu0
      %2383 = vdwg.mxu0
      %v2384 = vadd.f32 %v2070, %v2242
      %v2385 = vadd.f32 %v2071, %v2245
      %v2386 = vadd.f32 %v2072, %v2250
      %v2387 = vadd.f32 %v2073, %v2253
      %v2388 = vadd.f32 %v2074, %v2258
      %v2389 = vadd.f32 %v2075, %v2261
      %v2390 = vadd.f32 %v2076, %v2266
      %v2391 = vadd.f32 %v2077, %v2269
      %v2392 = vadd.f32 %v2078, %v2274
      %v2393 = vadd.f32 %v2079, %v2277
      %v2394 = vadd.f32 %v2080, %v2282
      %v2395 = vadd.f32 %v2081, %v2285
      %v2396 = vadd.f32 %v2082, %v2290
      %v2397 = vadd.f32 %v2083, %v2293
      %v2398 = vadd.f32 %v2084, %v2298
      %v2399 = vadd.f32 %v2085, %v2301
      %v2400 = vadd.f32 %v2086, %v2306
      %v2401 = vadd.f32 %v2087, %v2309
      %v2402 = vadd.f32 %v2088, %v2314
      %v2403 = vadd.f32 %v2089, %v2317
      %v2404 = vadd.f32 %v2090, %v2322
      %v2405 = vadd.f32 %v2091, %v2325
      %v2406 = vadd.f32 %v2092, %v2330
      %v2407 = vadd.f32 %v2093, %v2333
      %v2408 = vadd.f32 %v2094, %v2338
      %v2409 = vadd.f32 %v2095, %v2341
      %v2410 = vadd.f32 %v2096, %v2346
      %v2411 = vadd.f32 %v2097, %v2349
      %v2412 = vadd.f32 %v2098, %v2354
      %v2413 = vadd.f32 %v2099, %v2357
      %v2414 = vadd.f32 %v2100, %v2362
      %v2415 = vadd.f32 %v2101, %v2365
      %v2416 = vadd.f32 %v2102, %v2370
      %v2417 = vadd.f32 %v2103, %v2373
      %v2418 = vadd.f32 %v2104, %v2378
      %v2419 = vadd.f32 %v2105, %v2381
      %v2420 = vld [vmem:[%s165 + $0x10] sm:$0xc]
      %v2421 = vld [vmem:[%s165 + $0x14] sm:$0xf]
      %v2422 = vld [vmem:[%s165 + $0x18] sm:$0xf]
      %v2423 = vld [vmem:[%s165 + $0x1c] sm:$0xf]
      %v2424 = vld [vmem:[%s165 + $0x20] sm:$0xf]
      %v2425 = vld [vmem:[%s165 + $0x24] sm:$0xf]
      %v2426 = vld [vmem:[%s165 + $0x28] sm:$0xf]
      %v2427 = vld [vmem:[%s165 + $0x2c] sm:$0xf]
      %v2428 = vld [vmem:[%s165 + $0x30] sm:$0xf]
      %v2429 = vld [vmem:[%s165 + $0x34] sm:$0xf]
      %v2430 = vld [vmem:[%s165 + $0x38] sm:$0xf]
      %v2431 = vld [vmem:[%s165 + $0x3c] sm:$0xf]
      %v2432 = vld [vmem:[%s165 + $0x40] sm:$0xf]
      %v2433 = vld [vmem:[%s165 + $0x44] sm:$0xf]
      %v2434 = vld [vmem:[%s165 + $0x48] sm:$0xf]
      %v2435 = vld [vmem:[%s165 + $0x4c] sm:$0xf]
      %v2436 = vld [vmem:[%s165 + $0x50] sm:$0xf]
      %v2437 = vld [vmem:[%s165 + $0x54] sm:$0xf]
      %v2438 = vld [vmem:[%s165 + $0x58] sm:$0xf]
      %v2439 = vld [vmem:[%s165 + $0x5c] sm:$0xf]
      %v2440 = vld [vmem:[%s165 + $0x60] sm:$0xf]
      %v2441 = vld [vmem:[%s165 + $0x64] sm:$0xf]
      %v2442 = vld [vmem:[%s165 + $0x68] sm:$0xf]
      %v2443 = vld [vmem:[%s165 + $0x6c] sm:$0xf]
      %v2444 = vld [vmem:[%s165 + $0x70] sm:$0xf]
      %v2445 = vld [vmem:[%s165 + $0x74] sm:$0xf]
      %v2446 = vld [vmem:[%s165 + $0x78] sm:$0xf]
      %v2447 = vld [vmem:[%s165 + $0x7c] sm:$0xf]
      %v2448 = vld [vmem:[%s165 + $0x80] sm:$0xf]
      %v2449 = vld [vmem:[%s165 + $0x84] sm:$0xf]
      %v2450 = vld [vmem:[%s165 + $0x88] sm:$0xf]
      %v2451 = vld [vmem:[%s165 + $0x8c] sm:$0xf]
      %v2452 = vld [vmem:[%s165 + $0x90] sm:$0xf]
      %v2453 = vld [vmem:[%s165 + $0x94] sm:$0xf]
      %v2454 = vld [vmem:[%s165 + $0x98] sm:$0xf]
      %v2455 = vld [vmem:[%s165 + $0x9c] sm:$0xf]
      %v2456 = vld [vmem:[%s165 + $0xa0] sm:$0x3]
      %s2457 = scalar_lea.vmem %s1, 12
      %v2458 = vld [vmem:[%s2457] sm:$0x3]
      %v2496 = vunpack.c.l.b16 %v2420
      %v2497 = vunpack.c.l.b16 %v2421
      %v2498 = vunpack.c.l.b16 %v2422
      %v2499 = vunpack.c.l.b16 %v2423
      %v2500 = vunpack.c.l.b16 %v2424
      %v2501 = vunpack.c.l.b16 %v2425
      %v2502 = vunpack.c.l.b16 %v2426
      %v2503 = vunpack.c.l.b16 %v2427
      %v2504 = vunpack.c.l.b16 %v2428
      %v2505 = vunpack.c.l.b16 %v2429
      %v2506 = vunpack.c.l.b16 %v2430
      %v2507 = vunpack.c.l.b16 %v2431
      %v2508 = vunpack.c.l.b16 %v2432
      %v2509 = vunpack.c.l.b16 %v2433
      %v2510 = vunpack.c.l.b16 %v2434
      %v2511 = vunpack.c.l.b16 %v2435
      %v2512 = vunpack.c.l.b16 %v2436
      %v2513 = vunpack.c.l.b16 %v2437
      %v2514 = vunpack.c.l.b16 %v2438
      %v2515 = vunpack.c.l.b16 %v2439
      %v2516 = vunpack.c.l.b16 %v2440
      %v2517 = vunpack.c.l.b16 %v2441
      %v2518 = vunpack.c.l.b16 %v2442
      %v2519 = vunpack.c.l.b16 %v2443
      %v2520 = vunpack.c.l.b16 %v2444
      %v2521 = vunpack.c.l.b16 %v2445
      %v2522 = vunpack.c.l.b16 %v2446
      %v2523 = vunpack.c.l.b16 %v2447
      %v2524 = vunpack.c.l.b16 %v2448
      %v2525 = vunpack.c.l.b16 %v2449
      %v2526 = vunpack.c.l.b16 %v2450
      %v2527 = vunpack.c.l.b16 %v2451
      %v2528 = vunpack.c.l.b16 %v2452
      %v2529 = vunpack.c.l.b16 %v2453
      %v2530 = vunpack.c.l.b16 %v2454
      %v2531 = vunpack.c.l.b16 %v2455
      %v2532 = vunpack.c.l.b16 %v2456
      %v2533 = vpack.c.b16 %v2497, %v2496
      %v2534 = vpack.c.b16 %v2499, %v2498
      %v2535 = vpack.c.b16 %v2501, %v2500
      %v2536 = vpack.c.b16 %v2503, %v2502
      %v2537 = vpack.c.b16 %v2505, %v2504
      %v2538 = vpack.c.b16 %v2507, %v2506
      %v2539 = vpack.c.b16 %v2509, %v2508
      %v2540 = vpack.c.b16 %v2511, %v2510
      %v2541 = vpack.c.b16 %v2513, %v2512
      %v2542 = vpack.c.b16 %v2515, %v2514
      %v2543 = vpack.c.b16 %v2517, %v2516
      %v2544 = vpack.c.b16 %v2519, %v2518
      %v2545 = vpack.c.b16 %v2521, %v2520
      %v2546 = vpack.c.b16 %v2523, %v2522
      %v2547 = vpack.c.b16 %v2525, %v2524
      %v2548 = vpack.c.b16 %v2527, %v2526
      %v2549 = vpack.c.b16 %v2529, %v2528
      %v2550 = vpack.c.b16 %v2531, %v2530
      %v2551 = vpack.c.b16 %v2532, %v2532
      %v2552 = vrot.slane %v2533, 2
      %v2553 = vrot.slane %v2534, 2
      %v2554 = vsel %vm2112, %v2552, %v2553
      %v2555 = vrot.slane %v2535, 2
      %v2556 = vsel %vm2112, %v2553, %v2555
      %v2557 = vrot.slane %v2536, 2
      %v2558 = vsel %vm2112, %v2555, %v2557
      %v2559 = vrot.slane %v2537, 2
      %v2560 = vsel %vm2112, %v2557, %v2559
      %v2561 = vrot.slane %v2538, 2
      %v2562 = vsel %vm2112, %v2559, %v2561
      %v2563 = vrot.slane %v2539, 2
      %v2564 = vsel %vm2112, %v2561, %v2563
      %v2565 = vrot.slane %v2540, 2
      %v2566 = vsel %vm2112, %v2563, %v2565
      %v2567 = vrot.slane %v2541, 2
      %v2568 = vsel %vm2112, %v2565, %v2567
      %v2569 = vrot.slane %v2542, 2
      %v2570 = vsel %vm2112, %v2567, %v2569
      %v2571 = vrot.slane %v2543, 2
      %v2572 = vsel %vm2112, %v2569, %v2571
      %v2573 = vrot.slane %v2544, 2
      %v2574 = vsel %vm2112, %v2571, %v2573
      %v2575 = vrot.slane %v2545, 2
      %v2576 = vsel %vm2112, %v2573, %v2575
      %v2577 = vrot.slane %v2546, 2
      %v2578 = vsel %vm2112, %v2575, %v2577
      %v2579 = vrot.slane %v2547, 2
      %v2580 = vsel %vm2112, %v2577, %v2579
      %v2581 = vrot.slane %v2548, 2
      %v2582 = vsel %vm2112, %v2579, %v2581
      %v2583 = vrot.slane %v2549, 2
      %v2584 = vsel %vm2112, %v2581, %v2583
      %v2585 = vrot.slane %v2550, 2
      %v2586 = vsel %vm2112, %v2583, %v2585
      %v2587 = vrot.slane %v2551, 2
      %v2588 = vsel %vm2112, %v2585, %v2587
      %v2590 = vsel %vm454, %v2554, 0
      %v2593 = vsel %vm454, %v2556, 0
      %v2596 = vsel %vm454, %v2558, 0
      %v2599 = vsel %vm454, %v2560, 0
      %v2602 = vsel %vm454, %v2562, 0
      %v2605 = vsel %vm454, %v2564, 0
      %v2608 = vsel %vm454, %v2566, 0
      %v2611 = vsel %vm454, %v2568, 0
      %v2614 = vsel %vm454, %v2570, 0
      %v2617 = vsel %vm454, %v2572, 0
      %v2620 = vsel %vm454, %v2574, 0
      %v2623 = vsel %vm454, %v2576, 0
      %v2626 = vsel %vm454, %v2578, 0
      %v2629 = vsel %vm454, %v2580, 0
      %v2632 = vsel %vm454, %v2582, 0
      %v2635 = vsel %vm454, %v2584, 0
      %v2638 = vsel %vm454, %v2586, 0
      %v2641 = vsel %vm454, %v2588, 0
      %v2644 = vsel %vm509, %v2458, 0
      %2646 = vmatprep.subr.bf16.mxu0 0
      %2647 = vmatpush1.bf16.msra.mxu0 0
      %2648 = vmatprep.subr.bf16.mxu0 0
      %2649 = vmatpush1.bf16.msra.mxu0 0
      %2650 = vmatprep.subr.bf16.mxu0 0
      %2651 = vmatpush1.bf16.msra.mxu0 0
      %2652 = vmatprep.subr.bf16.mxu0 0
      %2653 = vmatpush1.bf16.msra.mxu0 0
      %2654 = vmatprep.subr.bf16.mxu0 0
      %2655 = vmatpush1.bf16.msra.mxu0 0
      %2656 = vmatprep.subr.bf16.mxu0 0
      %2657 = vmatpush1.bf16.msra.mxu0 0
      %2658 = vmatprep.subr.bf16.mxu0 0
      %2659 = vmatpush1.bf16.msra.mxu0 0
      %2660 = vmatprep.subr.bf16.mxu0 0
      %2661 = vmatpush1.bf16.msra.mxu0 %v2644
      %2662 = vmatprep.subr.bf16.mxu0 0
      %2663 = vmatpush2.bf16.msra.mxu0 0
      %2664 = vmatprep.subr.bf16.mxu0 0
      %2665 = vmatpush2.bf16.msra.mxu0 0
      %2666 = vmatprep.subr.bf16.mxu0 0
      %2667 = vmatpush2.bf16.msra.mxu0 0
      %2668 = vmatprep.subr.bf16.mxu0 0
      %2669 = vmatpush2.bf16.msra.mxu0 0
      %2670 = vmatprep.subr.bf16.mxu0 0
      %2671 = vmatpush2.bf16.msra.mxu0 0
      %2672 = vmatprep.subr.bf16.mxu0 0
      %2673 = vmatpush2.bf16.msra.mxu0 0
      %2674 = vmatprep.subr.bf16.mxu0 0
      %2675 = vmatpush2.bf16.msra.mxu0 0
      %2676 = vmatprep.subr.bf16.mxu0 0
      %2677 = vmatpush2.bf16.msra.mxu0 0
      %2678 = vmatprep.mubr.bf16.mxu0 0
      %2679 = vmatmul.mubr.bf16.gmra.mxu0 %v2590
      %v2680 = vpop.f32.mrf.mxu0
      %v2681 = vadd.f32 0.0, %v2680
      %v2682 = vpop.f32.mrf.mxu0
      %v2683 = vpop.f32.mrf.mxu0
      %v2684 = vadd.f32 0.0, %v2683
      %v2685 = vpop.f32.mrf.mxu0
      %2686 = vmatprep.mubr.bf16.mxu0 0
      %2687 = vmatmul.mubr.bf16.gmra.mxu0 %v2593
      %v2688 = vpop.f32.mrf.mxu0
      %v2689 = vadd.f32 0.0, %v2688
      %v2690 = vpop.f32.mrf.mxu0
      %v2691 = vpop.f32.mrf.mxu0
      %v2692 = vadd.f32 0.0, %v2691
      %v2693 = vpop.f32.mrf.mxu0
      %2694 = vmatprep.mubr.bf16.mxu0 0
      %2695 = vmatmul.mubr.bf16.gmra.mxu0 %v2596
      %v2696 = vpop.f32.mrf.mxu0
      %v2697 = vadd.f32 0.0, %v2696
      %v2698 = vpop.f32.mrf.mxu0
      %v2699 = vpop.f32.mrf.mxu0
      %v2700 = vadd.f32 0.0, %v2699
      %v2701 = vpop.f32.mrf.mxu0
      %2702 = vmatprep.mubr.bf16.mxu0 0
      %2703 = vmatmul.mubr.bf16.gmra.mxu0 %v2599
      %v2704 = vpop.f32.mrf.mxu0
      %v2705 = vadd.f32 0.0, %v2704
      %v2706 = vpop.f32.mrf.mxu0
      %v2707 = vpop.f32.mrf.mxu0
      %v2708 = vadd.f32 0.0, %v2707
      %v2709 = vpop.f32.mrf.mxu0
      %2710 = vmatprep.mubr.bf16.mxu0 0
      %2711 = vmatmul.mubr.bf16.gmra.mxu0 %v2602
      %v2712 = vpop.f32.mrf.mxu0
      %v2713 = vadd.f32 0.0, %v2712
      %v2714 = vpop.f32.mrf.mxu0
      %v2715 = vpop.f32.mrf.mxu0
      %v2716 = vadd.f32 0.0, %v2715
      %v2717 = vpop.f32.mrf.mxu0
      %2718 = vmatprep.mubr.bf16.mxu0 0
      %2719 = vmatmul.mubr.bf16.gmra.mxu0 %v2605
      %v2720 = vpop.f32.mrf.mxu0
      %v2721 = vadd.f32 0.0, %v2720
      %v2722 = vpop.f32.mrf.mxu0
      %v2723 = vpop.f32.mrf.mxu0
      %v2724 = vadd.f32 0.0, %v2723
      %v2725 = vpop.f32.mrf.mxu0
      %2726 = vmatprep.mubr.bf16.mxu0 0
      %2727 = vmatmul.mubr.bf16.gmra.mxu0 %v2608
      %v2728 = vpop.f32.mrf.mxu0
      %v2729 = vadd.f32 0.0, %v2728
      %v2730 = vpop.f32.mrf.mxu0
      %v2731 = vpop.f32.mrf.mxu0
      %v2732 = vadd.f32 0.0, %v2731
      %v2733 = vpop.f32.mrf.mxu0
      %2734 = vmatprep.mubr.bf16.mxu0 0
      %2735 = vmatmul.mubr.bf16.gmra.mxu0 %v2611
      %v2736 = vpop.f32.mrf.mxu0
      %v2737 = vadd.f32 0.0, %v2736
      %v2738 = vpop.f32.mrf.mxu0
      %v2739 = vpop.f32.mrf.mxu0
      %v2740 = vadd.f32 0.0, %v2739
      %v2741 = vpop.f32.mrf.mxu0
      %2742 = vmatprep.mubr.bf16.mxu0 0
      %2743 = vmatmul.mubr.bf16.gmra.mxu0 %v2614
      %v2744 = vpop.f32.mrf.mxu0
      %v2745 = vadd.f32 0.0, %v2744
      %v2746 = vpop.f32.mrf.mxu0
      %v2747 = vpop.f32.mrf.mxu0
      %v2748 = vadd.f32 0.0, %v2747
      %v2749 = vpop.f32.mrf.mxu0
      %2750 = vmatprep.mubr.bf16.mxu0 0
      %2751 = vmatmul.mubr.bf16.gmra.mxu0 %v2617
      %v2752 = vpop.f32.mrf.mxu0
      %v2753 = vadd.f32 0.0, %v2752
      %v2754 = vpop.f32.mrf.mxu0
      %v2755 = vpop.f32.mrf.mxu0
      %v2756 = vadd.f32 0.0, %v2755
      %v2757 = vpop.f32.mrf.mxu0
      %2758 = vmatprep.mubr.bf16.mxu0 0
      %2759 = vmatmul.mubr.bf16.gmra.mxu0 %v2620
      %v2760 = vpop.f32.mrf.mxu0
      %v2761 = vadd.f32 0.0, %v2760
      %v2762 = vpop.f32.mrf.mxu0
      %v2763 = vpop.f32.mrf.mxu0
      %v2764 = vadd.f32 0.0, %v2763
      %v2765 = vpop.f32.mrf.mxu0
      %2766 = vmatprep.mubr.bf16.mxu0 0
      %2767 = vmatmul.mubr.bf16.gmra.mxu0 %v2623
      %v2768 = vpop.f32.mrf.mxu0
      %v2769 = vadd.f32 0.0, %v2768
      %v2770 = vpop.f32.mrf.mxu0
      %v2771 = vpop.f32.mrf.mxu0
      %v2772 = vadd.f32 0.0, %v2771
      %v2773 = vpop.f32.mrf.mxu0
      %2774 = vmatprep.mubr.bf16.mxu0 0
      %2775 = vmatmul.mubr.bf16.gmra.mxu0 %v2626
      %v2776 = vpop.f32.mrf.mxu0
      %v2777 = vadd.f32 0.0, %v2776
      %v2778 = vpop.f32.mrf.mxu0
      %v2779 = vpop.f32.mrf.mxu0
      %v2780 = vadd.f32 0.0, %v2779
      %v2781 = vpop.f32.mrf.mxu0
      %2782 = vmatprep.mubr.bf16.mxu0 0
      %2783 = vmatmul.mubr.bf16.gmra.mxu0 %v2629
      %v2784 = vpop.f32.mrf.mxu0
      %v2785 = vadd.f32 0.0, %v2784
      %v2786 = vpop.f32.mrf.mxu0
      %v2787 = vpop.f32.mrf.mxu0
      %v2788 = vadd.f32 0.0, %v2787
      %v2789 = vpop.f32.mrf.mxu0
      %2790 = vmatprep.mubr.bf16.mxu0 0
      %2791 = vmatmul.mubr.bf16.gmra.mxu0 %v2632
      %v2792 = vpop.f32.mrf.mxu0
      %v2793 = vadd.f32 0.0, %v2792
      %v2794 = vpop.f32.mrf.mxu0
      %v2795 = vpop.f32.mrf.mxu0
      %v2796 = vadd.f32 0.0, %v2795
      %v2797 = vpop.f32.mrf.mxu0
      %2798 = vmatprep.mubr.bf16.mxu0 0
      %2799 = vmatmul.mubr.bf16.gmra.mxu0 %v2635
      %v2800 = vpop.f32.mrf.mxu0
      %v2801 = vadd.f32 0.0, %v2800
      %v2802 = vpop.f32.mrf.mxu0
      %v2803 = vpop.f32.mrf.mxu0
      %v2804 = vadd.f32 0.0, %v2803
      %v2805 = vpop.f32.mrf.mxu0
      %2806 = vmatprep.mubr.bf16.mxu0 0
      %2807 = vmatmul.mubr.bf16.gmra.mxu0 %v2638
      %v2808 = vpop.f32.mrf.mxu0
      %v2809 = vadd.f32 0.0, %v2808
      %v2810 = vpop.f32.mrf.mxu0
      %v2811 = vpop.f32.mrf.mxu0
      %v2812 = vadd.f32 0.0, %v2811
      %v2813 = vpop.f32.mrf.mxu0
      %2814 = vmatprep.mubr.bf16.mxu0 0
      %2815 = vmatmul.mubr.bf16.gmra.mxu0 %v2641
      %v2816 = vpop.f32.mrf.mxu0
      %v2817 = vadd.f32 0.0, %v2816
      %v2818 = vpop.f32.mrf.mxu0
      %v2819 = vpop.f32.mrf.mxu0
      %v2820 = vadd.f32 0.0, %v2819
      %v2821 = vpop.f32.mrf.mxu0
      %2822 = vdwg.mxu0
      %v2823 = vadd.f32 %v2384, %v2681
      %v2824 = vadd.f32 %v2385, %v2684
      %v2825 = vadd.f32 %v2386, %v2689
      %v2826 = vadd.f32 %v2387, %v2692
      %v2827 = vadd.f32 %v2388, %v2697
      %v2828 = vadd.f32 %v2389, %v2700
      %v2829 = vadd.f32 %v2390, %v2705
      %v2830 = vadd.f32 %v2391, %v2708
      %v2831 = vadd.f32 %v2392, %v2713
      %v2832 = vadd.f32 %v2393, %v2716
      %v2833 = vadd.f32 %v2394, %v2721
      %v2834 = vadd.f32 %v2395, %v2724
      %v2835 = vadd.f32 %v2396, %v2729
      %v2836 = vadd.f32 %v2397, %v2732
      %v2837 = vadd.f32 %v2398, %v2737
      %v2838 = vadd.f32 %v2399, %v2740
      %v2839 = vadd.f32 %v2400, %v2745
      %v2840 = vadd.f32 %v2401, %v2748
      %v2841 = vadd.f32 %v2402, %v2753
      %v2842 = vadd.f32 %v2403, %v2756
      %v2843 = vadd.f32 %v2404, %v2761
      %v2844 = vadd.f32 %v2405, %v2764
      %v2845 = vadd.f32 %v2406, %v2769
      %v2846 = vadd.f32 %v2407, %v2772
      %v2847 = vadd.f32 %v2408, %v2777
      %v2848 = vadd.f32 %v2409, %v2780
      %v2849 = vadd.f32 %v2410, %v2785
      %v2850 = vadd.f32 %v2411, %v2788
      %v2851 = vadd.f32 %v2412, %v2793
      %v2852 = vadd.f32 %v2413, %v2796
      %v2853 = vadd.f32 %v2414, %v2801
      %v2854 = vadd.f32 %v2415, %v2804
      %v2855 = vadd.f32 %v2416, %v2809
      %v2856 = vadd.f32 %v2417, %v2812
      %v2857 = vadd.f32 %v2418, %v2817
      %v2858 = vadd.f32 %v2419, %v2820
      %v2859 = vld [vmem:[%s165 + $0xa0] sm:$0x7]
      %s2860 = scalar_lea.vmem %s1, 14
      %v2861 = vld [vmem:[%s2860] sm:$0x3]
      %v2863 = vunpack.c.l.b16 %v2859
      %v2864 = vpack.c.b16 %v2863, %v2863
      %vm2865 = vsmask.f32 5376
      %v2867 = vshrl.u32 %v2533, 16
      %v2869 = vrot.slane %v2867, 2
      %v2870 = vshll.u32 %v2533, 16
      %v2872 = vrot.slane %v2870, 3
      %v2873 = vor.u32 %v2869, %v2872
      %v2875 = vshrl.u32 %v2534, 16
      %v2877 = vrot.slane %v2875, 2
      %v2878 = vshll.u32 %v2534, 16
      %v2880 = vrot.slane %v2878, 3
      %v2881 = vor.u32 %v2877, %v2880
      %v2882 = vsel %vm2865, %v2873, %v2881
      %v2884 = vshrl.u32 %v2535, 16
      %v2886 = vrot.slane %v2884, 2
      %v2887 = vshll.u32 %v2535, 16
      %v2889 = vrot.slane %v2887, 3
      %v2890 = vor.u32 %v2886, %v2889
      %v2891 = vsel %vm2865, %v2881, %v2890
      %v2893 = vshrl.u32 %v2536, 16
      %v2895 = vrot.slane %v2893, 2
      %v2896 = vshll.u32 %v2536, 16
      %v2898 = vrot.slane %v2896, 3
      %v2899 = vor.u32 %v2895, %v2898
      %v2900 = vsel %vm2865, %v2890, %v2899
      %v2902 = vshrl.u32 %v2537, 16
      %v2904 = vrot.slane %v2902, 2
      %v2905 = vshll.u32 %v2537, 16
      %v2907 = vrot.slane %v2905, 3
      %v2908 = vor.u32 %v2904, %v2907
      %v2909 = vsel %vm2865, %v2899, %v2908
      %v2911 = vshrl.u32 %v2538, 16
      %v2913 = vrot.slane %v2911, 2
      %v2914 = vshll.u32 %v2538, 16
      %v2916 = vrot.slane %v2914, 3
      %v2917 = vor.u32 %v2913, %v2916
      %v2918 = vsel %vm2865, %v2908, %v2917
      %v2920 = vshrl.u32 %v2539, 16
      %v2922 = vrot.slane %v2920, 2
      %v2923 = vshll.u32 %v2539, 16
      %v2925 = vrot.slane %v2923, 3
      %v2926 = vor.u32 %v2922, %v2925
      %v2927 = vsel %vm2865, %v2917, %v2926
      %v2929 = vshrl.u32 %v2540, 16
      %v2931 = vrot.slane %v2929, 2
      %v2932 = vshll.u32 %v2540, 16
      %v2934 = vrot.slane %v2932, 3
      %v2935 = vor.u32 %v2931, %v2934
      %v2936 = vsel %vm2865, %v2926, %v2935
      %v2938 = vshrl.u32 %v2541, 16
      %v2940 = vrot.slane %v2938, 2
      %v2941 = vshll.u32 %v2541, 16
      %v2943 = vrot.slane %v2941, 3
      %v2944 = vor.u32 %v2940, %v2943
      %v2945 = vsel %vm2865, %v2935, %v2944
      %v2947 = vshrl.u32 %v2542, 16
      %v2949 = vrot.slane %v2947, 2
      %v2950 = vshll.u32 %v2542, 16
      %v2952 = vrot.slane %v2950, 3
      %v2953 = vor.u32 %v2949, %v2952
      %v2954 = vsel %vm2865, %v2944, %v2953
      %v2956 = vshrl.u32 %v2543, 16
      %v2958 = vrot.slane %v2956, 2
      %v2959 = vshll.u32 %v2543, 16
      %v2961 = vrot.slane %v2959, 3
      %v2962 = vor.u32 %v2958, %v2961
      %v2963 = vsel %vm2865, %v2953, %v2962
      %v2965 = vshrl.u32 %v2544, 16
      %v2967 = vrot.slane %v2965, 2
      %v2968 = vshll.u32 %v2544, 16
      %v2970 = vrot.slane %v2968, 3
      %v2971 = vor.u32 %v2967, %v2970
      %v2972 = vsel %vm2865, %v2962, %v2971
      %v2974 = vshrl.u32 %v2545, 16
      %v2976 = vrot.slane %v2974, 2
      %v2977 = vshll.u32 %v2545, 16
      %v2979 = vrot.slane %v2977, 3
      %v2980 = vor.u32 %v2976, %v2979
      %v2981 = vsel %vm2865, %v2971, %v2980
      %v2983 = vshrl.u32 %v2546, 16
      %v2985 = vrot.slane %v2983, 2
      %v2986 = vshll.u32 %v2546, 16
      %v2988 = vrot.slane %v2986, 3
      %v2989 = vor.u32 %v2985, %v2988
      %v2990 = vsel %vm2865, %v2980, %v2989
      %v2992 = vshrl.u32 %v2547, 16
      %v2994 = vrot.slane %v2992, 2
      %v2995 = vshll.u32 %v2547, 16
      %v2997 = vrot.slane %v2995, 3
      %v2998 = vor.u32 %v2994, %v2997
      %v2999 = vsel %vm2865, %v2989, %v2998
      %v3001 = vshrl.u32 %v2548, 16
      %v3003 = vrot.slane %v3001, 2
      %v3004 = vshll.u32 %v2548, 16
      %v3006 = vrot.slane %v3004, 3
      %v3007 = vor.u32 %v3003, %v3006
      %v3008 = vsel %vm2865, %v2998, %v3007
      %v3010 = vshrl.u32 %v2549, 16
      %v3012 = vrot.slane %v3010, 2
      %v3013 = vshll.u32 %v2549, 16
      %v3015 = vrot.slane %v3013, 3
      %v3016 = vor.u32 %v3012, %v3015
      %v3017 = vsel %vm2865, %v3007, %v3016
      %v3019 = vshrl.u32 %v2550, 16
      %v3021 = vrot.slane %v3019, 2
      %v3022 = vshll.u32 %v2550, 16
      %v3024 = vrot.slane %v3022, 3
      %v3025 = vor.u32 %v3021, %v3024
      %v3026 = vsel %vm2865, %v3016, %v3025
      %v3028 = vshrl.u32 %v2864, 16
      %v3030 = vrot.slane %v3028, 2
      %v3031 = vshll.u32 %v2864, 16
      %v3033 = vrot.slane %v3031, 3
      %v3034 = vor.u32 %v3030, %v3033
      %v3035 = vsel %vm2865, %v3025, %v3034
      %v3037 = vsel %vm454, %v2882, 0
      %v3040 = vsel %vm454, %v2891, 0
      %v3043 = vsel %vm454, %v2900, 0
      %v3046 = vsel %vm454, %v2909, 0
      %v3049 = vsel %vm454, %v2918, 0
      %v3052 = vsel %vm454, %v2927, 0
      %v3055 = vsel %vm454, %v2936, 0
      %v3058 = vsel %vm454, %v2945, 0
      %v3061 = vsel %vm454, %v2954, 0
      %v3064 = vsel %vm454, %v2963, 0
      %v3067 = vsel %vm454, %v2972, 0
      %v3070 = vsel %vm454, %v2981, 0
      %v3073 = vsel %vm454, %v2990, 0
      %v3076 = vsel %vm454, %v2999, 0
      %v3079 = vsel %vm454, %v3008, 0
      %v3082 = vsel %vm454, %v3017, 0
      %v3085 = vsel %vm454, %v3026, 0
      %v3088 = vsel %vm454, %v3035, 0
      %v3091 = vsel %vm509, %v2861, 0
      %3093 = vmatprep.subr.bf16.mxu0 0
      %3094 = vmatpush1.bf16.msra.mxu0 0
      %3095 = vmatprep.subr.bf16.mxu0 0
      %3096 = vmatpush1.bf16.msra.mxu0 0
      %3097 = vmatprep.subr.bf16.mxu0 0
      %3098 = vmatpush1.bf16.msra.mxu0 0
      %3099 = vmatprep.subr.bf16.mxu0 0
      %3100 = vmatpush1.bf16.msra.mxu0 0
      %3101 = vmatprep.subr.bf16.mxu0 0
      %3102 = vmatpush1.bf16.msra.mxu0 0
      %3103 = vmatprep.subr.bf16.mxu0 0
      %3104 = vmatpush1.bf16.msra.mxu0 0
      %3105 = vmatprep.subr.bf16.mxu0 0
      %3106 = vmatpush1.bf16.msra.mxu0 0
      %3107 = vmatprep.subr.bf16.mxu0 0
      %3108 = vmatpush1.bf16.msra.mxu0 %v3091
      %3109 = vmatprep.subr.bf16.mxu0 0
      %3110 = vmatpush2.bf16.msra.mxu0 0
      %3111 = vmatprep.subr.bf16.mxu0 0
      %3112 = vmatpush2.bf16.msra.mxu0 0
      %3113 = vmatprep.subr.bf16.mxu0 0
      %3114 = vmatpush2.bf16.msra.mxu0 0
      %3115 = vmatprep.subr.bf16.mxu0 0
      %3116 = vmatpush2.bf16.msra.mxu0 0
      %3117 = vmatprep.subr.bf16.mxu0 0
      %3118 = vmatpush2.bf16.msra.mxu0 0
      %3119 = vmatprep.subr.bf16.mxu0 0
      %3120 = vmatpush2.bf16.msra.mxu0 0
      %3121 = vmatprep.subr.bf16.mxu0 0
      %3122 = vmatpush2.bf16.msra.mxu0 0
      %3123 = vmatprep.subr.bf16.mxu0 0
      %3124 = vmatpush2.bf16.msra.mxu0 0
      %3125 = vmatprep.mubr.bf16.mxu0 0
      %3126 = vmatmul.mubr.bf16.gmra.mxu0 %v3037
      %v3127 = vpop.f32.mrf.mxu0
      %v3128 = vadd.f32 0.0, %v3127
      %v3129 = vpop.f32.mrf.mxu0
      %v3130 = vpop.f32.mrf.mxu0
      %v3131 = vadd.f32 0.0, %v3130
      %v3132 = vpop.f32.mrf.mxu0
      %3133 = vmatprep.mubr.bf16.mxu0 0
      %3134 = vmatmul.mubr.bf16.gmra.mxu0 %v3040
      %v3135 = vpop.f32.mrf.mxu0
      %v3136 = vadd.f32 0.0, %v3135
      %v3137 = vpop.f32.mrf.mxu0
      %v3138 = vpop.f32.mrf.mxu0
      %v3139 = vadd.f32 0.0, %v3138
      %v3140 = vpop.f32.mrf.mxu0
      %3141 = vmatprep.mubr.bf16.mxu0 0
      %3142 = vmatmul.mubr.bf16.gmra.mxu0 %v3043
      %v3143 = vpop.f32.mrf.mxu0
      %v3144 = vadd.f32 0.0, %v3143
      %v3145 = vpop.f32.mrf.mxu0
      %v3146 = vpop.f32.mrf.mxu0
      %v3147 = vadd.f32 0.0, %v3146
      %v3148 = vpop.f32.mrf.mxu0
      %3149 = vmatprep.mubr.bf16.mxu0 0
      %3150 = vmatmul.mubr.bf16.gmra.mxu0 %v3046
      %v3151 = vpop.f32.mrf.mxu0
      %v3152 = vadd.f32 0.0, %v3151
      %v3153 = vpop.f32.mrf.mxu0
      %v3154 = vpop.f32.mrf.mxu0
      %v3155 = vadd.f32 0.0, %v3154
      %v3156 = vpop.f32.mrf.mxu0
      %3157 = vmatprep.mubr.bf16.mxu0 0
      %3158 = vmatmul.mubr.bf16.gmra.mxu0 %v3049
      %v3159 = vpop.f32.mrf.mxu0
      %v3160 = vadd.f32 0.0, %v3159
      %v3161 = vpop.f32.mrf.mxu0
      %v3162 = vpop.f32.mrf.mxu0
      %v3163 = vadd.f32 0.0, %v3162
      %v3164 = vpop.f32.mrf.mxu0
      %3165 = vmatprep.mubr.bf16.mxu0 0
      %3166 = vmatmul.mubr.bf16.gmra.mxu0 %v3052
      %v3167 = vpop.f32.mrf.mxu0
      %v3168 = vadd.f32 0.0, %v3167
      %v3169 = vpop.f32.mrf.mxu0
      %v3170 = vpop.f32.mrf.mxu0
      %v3171 = vadd.f32 0.0, %v3170
      %v3172 = vpop.f32.mrf.mxu0
      %3173 = vmatprep.mubr.bf16.mxu0 0
      %3174 = vmatmul.mubr.bf16.gmra.mxu0 %v3055
      %v3175 = vpop.f32.mrf.mxu0
      %v3176 = vadd.f32 0.0, %v3175
      %v3177 = vpop.f32.mrf.mxu0
      %v3178 = vpop.f32.mrf.mxu0
      %v3179 = vadd.f32 0.0, %v3178
      %v3180 = vpop.f32.mrf.mxu0
      %3181 = vmatprep.mubr.bf16.mxu0 0
      %3182 = vmatmul.mubr.bf16.gmra.mxu0 %v3058
      %v3183 = vpop.f32.mrf.mxu0
      %v3184 = vadd.f32 0.0, %v3183
      %v3185 = vpop.f32.mrf.mxu0
      %v3186 = vpop.f32.mrf.mxu0
      %v3187 = vadd.f32 0.0, %v3186
      %v3188 = vpop.f32.mrf.mxu0
      %3189 = vmatprep.mubr.bf16.mxu0 0
      %3190 = vmatmul.mubr.bf16.gmra.mxu0 %v3061
      %v3191 = vpop.f32.mrf.mxu0
      %v3192 = vadd.f32 0.0, %v3191
      %v3193 = vpop.f32.mrf.mxu0
      %v3194 = vpop.f32.mrf.mxu0
      %v3195 = vadd.f32 0.0, %v3194
      %v3196 = vpop.f32.mrf.mxu0
      %3197 = vmatprep.mubr.bf16.mxu0 0
      %3198 = vmatmul.mubr.bf16.gmra.mxu0 %v3064
      %v3199 = vpop.f32.mrf.mxu0
      %v3200 = vadd.f32 0.0, %v3199
      %v3201 = vpop.f32.mrf.mxu0
      %v3202 = vpop.f32.mrf.mxu0
      %v3203 = vadd.f32 0.0, %v3202
      %v3204 = vpop.f32.mrf.mxu0
      %3205 = vmatprep.mubr.bf16.mxu0 0
      %3206 = vmatmul.mubr.bf16.gmra.mxu0 %v3067
      %v3207 = vpop.f32.mrf.mxu0
      %v3208 = vadd.f32 0.0, %v3207
      %v3209 = vpop.f32.mrf.mxu0
      %v3210 = vpop.f32.mrf.mxu0
      %v3211 = vadd.f32 0.0, %v3210
      %v3212 = vpop.f32.mrf.mxu0
      %3213 = vmatprep.mubr.bf16.mxu0 0
      %3214 = vmatmul.mubr.bf16.gmra.mxu0 %v3070
      %v3215 = vpop.f32.mrf.mxu0
      %v3216 = vadd.f32 0.0, %v3215
      %v3217 = vpop.f32.mrf.mxu0
      %v3218 = vpop.f32.mrf.mxu0
      %v3219 = vadd.f32 0.0, %v3218
      %v3220 = vpop.f32.mrf.mxu0
      %3221 = vmatprep.mubr.bf16.mxu0 0
      %3222 = vmatmul.mubr.bf16.gmra.mxu0 %v3073
      %v3223 = vpop.f32.mrf.mxu0
      %v3224 = vadd.f32 0.0, %v3223
      %v3225 = vpop.f32.mrf.mxu0
      %v3226 = vpop.f32.mrf.mxu0
      %v3227 = vadd.f32 0.0, %v3226
      %v3228 = vpop.f32.mrf.mxu0
      %3229 = vmatprep.mubr.bf16.mxu0 0
      %3230 = vmatmul.mubr.bf16.gmra.mxu0 %v3076
      %v3231 = vpop.f32.mrf.mxu0
      %v3232 = vadd.f32 0.0, %v3231
      %v3233 = vpop.f32.mrf.mxu0
      %v3234 = vpop.f32.mrf.mxu0
      %v3235 = vadd.f32 0.0, %v3234
      %v3236 = vpop.f32.mrf.mxu0
      %3237 = vmatprep.mubr.bf16.mxu0 0
      %3238 = vmatmul.mubr.bf16.gmra.mxu0 %v3079
      %v3239 = vpop.f32.mrf.mxu0
      %v3240 = vadd.f32 0.0, %v3239
      %v3241 = vpop.f32.mrf.mxu0
      %v3242 = vpop.f32.mrf.mxu0
      %v3243 = vadd.f32 0.0, %v3242
      %v3244 = vpop.f32.mrf.mxu0
      %3245 = vmatprep.mubr.bf16.mxu0 0
      %3246 = vmatmul.mubr.bf16.gmra.mxu0 %v3082
      %v3247 = vpop.f32.mrf.mxu0
      %v3248 = vadd.f32 0.0, %v3247
      %v3249 = vpop.f32.mrf.mxu0
      %v3250 = vpop.f32.mrf.mxu0
      %v3251 = vadd.f32 0.0, %v3250
      %v3252 = vpop.f32.mrf.mxu0
      %3253 = vmatprep.mubr.bf16.mxu0 0
      %3254 = vmatmul.mubr.bf16.gmra.mxu0 %v3085
      %v3255 = vpop.f32.mrf.mxu0
      %v3256 = vadd.f32 0.0, %v3255
      %v3257 = vpop.f32.mrf.mxu0
      %v3258 = vpop.f32.mrf.mxu0
      %v3259 = vadd.f32 0.0, %v3258
      %v3260 = vpop.f32.mrf.mxu0
      %3261 = vmatprep.mubr.bf16.mxu0 0
      %3262 = vmatmul.mubr.bf16.gmra.mxu0 %v3088
      %v3263 = vpop.f32.mrf.mxu0
      %v3264 = vadd.f32 0.0, %v3263
      %v3265 = vpop.f32.mrf.mxu0
      %v3266 = vpop.f32.mrf.mxu0
      %v3267 = vadd.f32 0.0, %v3266
      %v3268 = vpop.f32.mrf.mxu0
      %3269 = vdwg.mxu0
      %v3270 = vadd.f32 %v2823, %v3128
      %v3271 = vadd.f32 %v2824, %v3131
      %v3272 = vadd.f32 %v2825, %v3136
      %v3273 = vadd.f32 %v2826, %v3139
      %v3274 = vadd.f32 %v2827, %v3144
      %v3275 = vadd.f32 %v2828, %v3147
      %v3276 = vadd.f32 %v2829, %v3152
      %v3277 = vadd.f32 %v2830, %v3155
      %v3278 = vadd.f32 %v2831, %v3160
      %v3279 = vadd.f32 %v2832, %v3163
      %v3280 = vadd.f32 %v2833, %v3168
      %v3281 = vadd.f32 %v2834, %v3171
      %v3282 = vadd.f32 %v2835, %v3176
      %v3283 = vadd.f32 %v2836, %v3179
      %v3284 = vadd.f32 %v2837, %v3184
      %v3285 = vadd.f32 %v2838, %v3187
      %v3286 = vadd.f32 %v2839, %v3192
      %v3287 = vadd.f32 %v2840, %v3195
      %v3288 = vadd.f32 %v2841, %v3200
      %v3289 = vadd.f32 %v2842, %v3203
      %v3290 = vadd.f32 %v2843, %v3208
      %v3291 = vadd.f32 %v2844, %v3211
      %v3292 = vadd.f32 %v2845, %v3216
      %v3293 = vadd.f32 %v2846, %v3219
      %v3294 = vadd.f32 %v2847, %v3224
      %v3295 = vadd.f32 %v2848, %v3227
      %v3296 = vadd.f32 %v2849, %v3232
      %v3297 = vadd.f32 %v2850, %v3235
      %v3298 = vadd.f32 %v2851, %v3240
      %v3299 = vadd.f32 %v2852, %v3243
      %v3300 = vadd.f32 %v2853, %v3248
      %v3301 = vadd.f32 %v2854, %v3251
      %v3302 = vadd.f32 %v2855, %v3256
      %v3303 = vadd.f32 %v2856, %v3259
      %v3304 = vadd.f32 %v2857, %v3264
      %v3305 = vadd.f32 %v2858, %v3267
      %v3306 = vld [vmem:[%s165 + $0x10] sm:$0x8]
      %s3307 = scalar_lea.vmem %s1, 16
      %v3308 = vld [vmem:[%s3307] sm:$0x3]
      %v3310 = vunpack.c.l.b16 %v3306
      %v3311 = vpack.c.b16 %v2497, %v3310
      %vm3312 = vcmask 1044480
      %v3313 = vrot.slane %v3311, 3
      %v3314 = vrot.slane %v2534, 3
      %v3315 = vsel %vm3312, %v3313, %v3314
      %v3316 = vrot.slane %v2535, 3
      %v3317 = vsel %vm3312, %v3314, %v3316
      %v3318 = vrot.slane %v2536, 3
      %v3319 = vsel %vm3312, %v3316, %v3318
      %v3320 = vrot.slane %v2537, 3
      %v3321 = vsel %vm3312, %v3318, %v3320
      %v3322 = vrot.slane %v2538, 3
      %v3323 = vsel %vm3312, %v3320, %v3322
      %v3324 = vrot.slane %v2539, 3
      %v3325 = vsel %vm3312, %v3322, %v3324
      %v3326 = vrot.slane %v2540, 3
      %v3327 = vsel %vm3312, %v3324, %v3326
      %v3328 = vrot.slane %v2541, 3
      %v3329 = vsel %vm3312, %v3326, %v3328
      %v3330 = vrot.slane %v2542, 3
      %v3331 = vsel %vm3312, %v3328, %v3330
      %v3332 = vrot.slane %v2543, 3
      %v3333 = vsel %vm3312, %v3330, %v3332
      %v3334 = vrot.slane %v2544, 3
      %v3335 = vsel %vm3312, %v3332, %v3334
      %v3336 = vrot.slane %v2545, 3
      %v3337 = vsel %vm3312, %v3334, %v3336
      %v3338 = vrot.slane %v2546, 3
      %v3339 = vsel %vm3312, %v3336, %v3338
      %v3340 = vrot.slane %v2547, 3
      %v3341 = vsel %vm3312, %v3338, %v3340
      %v3342 = vrot.slane %v2548, 3
      %v3343 = vsel %vm3312, %v3340, %v3342
      %v3344 = vrot.slane %v2549, 3
      %v3345 = vsel %vm3312, %v3342, %v3344
      %v3346 = vrot.slane %v2550, 3
      %v3347 = vsel %vm3312, %v3344, %v3346
      %v3348 = vrot.slane %v2864, 3
      %v3349 = vsel %vm3312, %v3346, %v3348
      %v3351 = vsel %vm454, %v3315, 0
      %v3354 = vsel %vm454, %v3317, 0
      %v3357 = vsel %vm454, %v3319, 0
      %v3360 = vsel %vm454, %v3321, 0
      %v3363 = vsel %vm454, %v3323, 0
      %v3366 = vsel %vm454, %v3325, 0
      %v3369 = vsel %vm454, %v3327, 0
      %v3372 = vsel %vm454, %v3329, 0
      %v3375 = vsel %vm454, %v3331, 0
      %v3378 = vsel %vm454, %v3333, 0
      %v3381 = vsel %vm454, %v3335, 0
      %v3384 = vsel %vm454, %v3337, 0
      %v3387 = vsel %vm454, %v3339, 0
      %v3390 = vsel %vm454, %v3341, 0
      %v3393 = vsel %vm454, %v3343, 0
      %v3396 = vsel %vm454, %v3345, 0
      %v3399 = vsel %vm454, %v3347, 0
      %v3402 = vsel %vm454, %v3349, 0
      %v3405 = vsel %vm509, %v3308, 0
      %3407 = vmatprep.subr.bf16.mxu0 0
      %3408 = vmatpush1.bf16.msra.mxu0 0
      %3409 = vmatprep.subr.bf16.mxu0 0
      %3410 = vmatpush1.bf16.msra.mxu0 0
      %3411 = vmatprep.subr.bf16.mxu0 0
      %3412 = vmatpush1.bf16.msra.mxu0 0
      %3413 = vmatprep.subr.bf16.mxu0 0
      %3414 = vmatpush1.bf16.msra.mxu0 0
      %3415 = vmatprep.subr.bf16.mxu0 0
      %3416 = vmatpush1.bf16.msra.mxu0 0
      %3417 = vmatprep.subr.bf16.mxu0 0
      %3418 = vmatpush1.bf16.msra.mxu0 0
      %3419 = vmatprep.subr.bf16.mxu0 0
      %3420 = vmatpush1.bf16.msra.mxu0 0
      %3421 = vmatprep.subr.bf16.mxu0 0
      %3422 = vmatpush1.bf16.msra.mxu0 %v3405
      %3423 = vmatprep.subr.bf16.mxu0 0
      %3424 = vmatpush2.bf16.msra.mxu0 0
      %3425 = vmatprep.subr.bf16.mxu0 0
      %3426 = vmatpush2.bf16.msra.mxu0 0
      %3427 = vmatprep.subr.bf16.mxu0 0
      %3428 = vmatpush2.bf16.msra.mxu0 0
      %3429 = vmatprep.subr.bf16.mxu0 0
      %3430 = vmatpush2.bf16.msra.mxu0 0
      %3431 = vmatprep.subr.bf16.mxu0 0
      %3432 = vmatpush2.bf16.msra.mxu0 0
      %3433 = vmatprep.subr.bf16.mxu0 0
      %3434 = vmatpush2.bf16.msra.mxu0 0
      %3435 = vmatprep.subr.bf16.mxu0 0
      %3436 = vmatpush2.bf16.msra.mxu0 0
      %3437 = vmatprep.subr.bf16.mxu0 0
      %3438 = vmatpush2.bf16.msra.mxu0 0
      %3439 = vmatprep.mubr.bf16.mxu0 0
      %3440 = vmatmul.mubr.bf16.gmra.mxu0 %v3351
      %v3441 = vpop.f32.mrf.mxu0
      %v3442 = vadd.f32 0.0, %v3441
      %v3443 = vpop.f32.mrf.mxu0
      %v3444 = vpop.f32.mrf.mxu0
      %v3445 = vadd.f32 0.0, %v3444
      %v3446 = vpop.f32.mrf.mxu0
      %3447 = vmatprep.mubr.bf16.mxu0 0
      %3448 = vmatmul.mubr.bf16.gmra.mxu0 %v3354
      %v3449 = vpop.f32.mrf.mxu0
      %v3450 = vadd.f32 0.0, %v3449
      %v3451 = vpop.f32.mrf.mxu0
      %v3452 = vpop.f32.mrf.mxu0
      %v3453 = vadd.f32 0.0, %v3452
      %v3454 = vpop.f32.mrf.mxu0
      %3455 = vmatprep.mubr.bf16.mxu0 0
      %3456 = vmatmul.mubr.bf16.gmra.mxu0 %v3357
      %v3457 = vpop.f32.mrf.mxu0
      %v3458 = vadd.f32 0.0, %v3457
      %v3459 = vpop.f32.mrf.mxu0
      %v3460 = vpop.f32.mrf.mxu0
      %v3461 = vadd.f32 0.0, %v3460
      %v3462 = vpop.f32.mrf.mxu0
      %3463 = vmatprep.mubr.bf16.mxu0 0
      %3464 = vmatmul.mubr.bf16.gmra.mxu0 %v3360
      %v3465 = vpop.f32.mrf.mxu0
      %v3466 = vadd.f32 0.0, %v3465
      %v3467 = vpop.f32.mrf.mxu0
      %v3468 = vpop.f32.mrf.mxu0
      %v3469 = vadd.f32 0.0, %v3468
      %v3470 = vpop.f32.mrf.mxu0
      %3471 = vmatprep.mubr.bf16.mxu0 0
      %3472 = vmatmul.mubr.bf16.gmra.mxu0 %v3363
      %v3473 = vpop.f32.mrf.mxu0
      %v3474 = vadd.f32 0.0, %v3473
      %v3475 = vpop.f32.mrf.mxu0
      %v3476 = vpop.f32.mrf.mxu0
      %v3477 = vadd.f32 0.0, %v3476
      %v3478 = vpop.f32.mrf.mxu0
      %3479 = vmatprep.mubr.bf16.mxu0 0
      %3480 = vmatmul.mubr.bf16.gmra.mxu0 %v3366
      %v3481 = vpop.f32.mrf.mxu0
      %v3482 = vadd.f32 0.0, %v3481
      %v3483 = vpop.f32.mrf.mxu0
      %v3484 = vpop.f32.mrf.mxu0
      %v3485 = vadd.f32 0.0, %v3484
      %v3486 = vpop.f32.mrf.mxu0
      %3487 = vmatprep.mubr.bf16.mxu0 0
      %3488 = vmatmul.mubr.bf16.gmra.mxu0 %v3369
      %v3489 = vpop.f32.mrf.mxu0
      %v3490 = vadd.f32 0.0, %v3489
      %v3491 = vpop.f32.mrf.mxu0
      %v3492 = vpop.f32.mrf.mxu0
      %v3493 = vadd.f32 0.0, %v3492
      %v3494 = vpop.f32.mrf.mxu0
      %3495 = vmatprep.mubr.bf16.mxu0 0
      %3496 = vmatmul.mubr.bf16.gmra.mxu0 %v3372
      %v3497 = vpop.f32.mrf.mxu0
      %v3498 = vadd.f32 0.0, %v3497
      %v3499 = vpop.f32.mrf.mxu0
      %v3500 = vpop.f32.mrf.mxu0
      %v3501 = vadd.f32 0.0, %v3500
      %v3502 = vpop.f32.mrf.mxu0
      %3503 = vmatprep.mubr.bf16.mxu0 0
      %3504 = vmatmul.mubr.bf16.gmra.mxu0 %v3375
      %v3505 = vpop.f32.mrf.mxu0
      %v3506 = vadd.f32 0.0, %v3505
      %v3507 = vpop.f32.mrf.mxu0
      %v3508 = vpop.f32.mrf.mxu0
      %v3509 = vadd.f32 0.0, %v3508
      %v3510 = vpop.f32.mrf.mxu0
      %3511 = vmatprep.mubr.bf16.mxu0 0
      %3512 = vmatmul.mubr.bf16.gmra.mxu0 %v3378
      %v3513 = vpop.f32.mrf.mxu0
      %v3514 = vadd.f32 0.0, %v3513
      %v3515 = vpop.f32.mrf.mxu0
      %v3516 = vpop.f32.mrf.mxu0
      %v3517 = vadd.f32 0.0, %v3516
      %v3518 = vpop.f32.mrf.mxu0
      %3519 = vmatprep.mubr.bf16.mxu0 0
      %3520 = vmatmul.mubr.bf16.gmra.mxu0 %v3381
      %v3521 = vpop.f32.mrf.mxu0
      %v3522 = vadd.f32 0.0, %v3521
      %v3523 = vpop.f32.mrf.mxu0
      %v3524 = vpop.f32.mrf.mxu0
      %v3525 = vadd.f32 0.0, %v3524
      %v3526 = vpop.f32.mrf.mxu0
      %3527 = vmatprep.mubr.bf16.mxu0 0
      %3528 = vmatmul.mubr.bf16.gmra.mxu0 %v3384
      %v3529 = vpop.f32.mrf.mxu0
      %v3530 = vadd.f32 0.0, %v3529
      %v3531 = vpop.f32.mrf.mxu0
      %v3532 = vpop.f32.mrf.mxu0
      %v3533 = vadd.f32 0.0, %v3532
      %v3534 = vpop.f32.mrf.mxu0
      %3535 = vmatprep.mubr.bf16.mxu0 0
      %3536 = vmatmul.mubr.bf16.gmra.mxu0 %v3387
      %v3537 = vpop.f32.mrf.mxu0
      %v3538 = vadd.f32 0.0, %v3537
      %v3539 = vpop.f32.mrf.mxu0
      %v3540 = vpop.f32.mrf.mxu0
      %v3541 = vadd.f32 0.0, %v3540
      %v3542 = vpop.f32.mrf.mxu0
      %3543 = vmatprep.mubr.bf16.mxu0 0
      %3544 = vmatmul.mubr.bf16.gmra.mxu0 %v3390
      %v3545 = vpop.f32.mrf.mxu0
      %v3546 = vadd.f32 0.0, %v3545
      %v3547 = vpop.f32.mrf.mxu0
      %v3548 = vpop.f32.mrf.mxu0
      %v3549 = vadd.f32 0.0, %v3548
      %v3550 = vpop.f32.mrf.mxu0
      %3551 = vmatprep.mubr.bf16.mxu0 0
      %3552 = vmatmul.mubr.bf16.gmra.mxu0 %v3393
      %v3553 = vpop.f32.mrf.mxu0
      %v3554 = vadd.f32 0.0, %v3553
      %v3555 = vpop.f32.mrf.mxu0
      %v3556 = vpop.f32.mrf.mxu0
      %v3557 = vadd.f32 0.0, %v3556
      %v3558 = vpop.f32.mrf.mxu0
      %3559 = vmatprep.mubr.bf16.mxu0 0
      %3560 = vmatmul.mubr.bf16.gmra.mxu0 %v3396
      %v3561 = vpop.f32.mrf.mxu0
      %v3562 = vadd.f32 0.0, %v3561
      %v3563 = vpop.f32.mrf.mxu0
      %v3564 = vpop.f32.mrf.mxu0
      %v3565 = vadd.f32 0.0, %v3564
      %v3566 = vpop.f32.mrf.mxu0
      %3567 = vmatprep.mubr.bf16.mxu0 0
      %3568 = vmatmul.mubr.bf16.gmra.mxu0 %v3399
      %v3569 = vpop.f32.mrf.mxu0
      %v3570 = vadd.f32 0.0, %v3569
      %v3571 = vpop.f32.mrf.mxu0
      %v3572 = vpop.f32.mrf.mxu0
      %v3573 = vadd.f32 0.0, %v3572
      %v3574 = vpop.f32.mrf.mxu0
      %3575 = vmatprep.mubr.bf16.mxu0 0
      %3576 = vmatmul.mubr.bf16.gmra.mxu0 %v3402
      %v3577 = vpop.f32.mrf.mxu0
      %v3578 = vadd.f32 0.0, %v3577
      %v3579 = vpop.f32.mrf.mxu0
      %v3580 = vpop.f32.mrf.mxu0
      %v3581 = vadd.f32 0.0, %v3580
      %v3582 = vpop.f32.mrf.mxu0
      %3583 = vdwg.mxu0
      %v3584 = vadd.f32 %v3270, %v3442
      %v3585 = vadd.f32 %v3271, %v3445
      %v3586 = vadd.f32 %v3272, %v3450
      %v3587 = vadd.f32 %v3273, %v3453
      %v3588 = vadd.f32 %v3274, %v3458
      %v3589 = vadd.f32 %v3275, %v3461
      %v3590 = vadd.f32 %v3276, %v3466
      %v3591 = vadd.f32 %v3277, %v3469
      %v3592 = vadd.f32 %v3278, %v3474
      %v3593 = vadd.f32 %v3279, %v3477
      %v3594 = vadd.f32 %v3280, %v3482
      %v3595 = vadd.f32 %v3281, %v3485
      %v3596 = vadd.f32 %v3282, %v3490
      %v3597 = vadd.f32 %v3283, %v3493
      %v3598 = vadd.f32 %v3284, %v3498
      %v3599 = vadd.f32 %v3285, %v3501
      %v3600 = vadd.f32 %v3286, %v3506
      %v3601 = vadd.f32 %v3287, %v3509
      %v3602 = vadd.f32 %v3288, %v3514
      %v3603 = vadd.f32 %v3289, %v3517
      %v3604 = vadd.f32 %v3290, %v3522
      %v3605 = vadd.f32 %v3291, %v3525
      %v3606 = vadd.f32 %v3292, %v3530
      %v3607 = vadd.f32 %v3293, %v3533
      %v3608 = vadd.f32 %v3294, %v3538
      %v3609 = vadd.f32 %v3295, %v3541
      %v3610 = vadd.f32 %v3296, %v3546
      %v3611 = vadd.f32 %v3297, %v3549
      %v3612 = vadd.f32 %v3298, %v3554
      %v3613 = vadd.f32 %v3299, %v3557
      %v3614 = vadd.f32 %v3300, %v3562
      %v3615 = vadd.f32 %v3301, %v3565
      %v3616 = vadd.f32 %v3302, %v3570
      %v3617 = vadd.f32 %v3303, %v3573
      %v3618 = vadd.f32 %v3304, %v3578
      %v3619 = vadd.f32 %v3305, %v3581
      %v3620 = vld [vmem:[%s2] sm:$0x1]
      %v3622 = vlaneseq
      %v3623 = vshrl.u32 %v3622, 7
      %v3624 = vsub.s32 0, %v3623
      %v3625 = vrot.slane %v3620, %v3624
      %v3627 = vadd.f32 %v3584, %v3625
      %v3628 = vadd.f32 %v3585, %v3625
      %v3629 = vadd.f32 %v3586, %v3625
      %v3630 = vadd.f32 %v3587, %v3625
      %v3631 = vadd.f32 %v3588, %v3625
      %v3632 = vadd.f32 %v3589, %v3625
      %v3633 = vadd.f32 %v3590, %v3625
      %v3634 = vadd.f32 %v3591, %v3625
      %v3635 = vadd.f32 %v3592, %v3625
      %v3636 = vadd.f32 %v3593, %v3625
      %v3637 = vadd.f32 %v3594, %v3625
      %v3638 = vadd.f32 %v3595, %v3625
      %v3639 = vadd.f32 %v3596, %v3625
      %v3640 = vadd.f32 %v3597, %v3625
      %v3641 = vadd.f32 %v3598, %v3625
      %v3642 = vadd.f32 %v3599, %v3625
      %v3643 = vadd.f32 %v3600, %v3625
      %v3644 = vadd.f32 %v3601, %v3625
      %v3645 = vadd.f32 %v3602, %v3625
      %v3646 = vadd.f32 %v3603, %v3625
      %v3647 = vadd.f32 %v3604, %v3625
      %v3648 = vadd.f32 %v3605, %v3625
      %v3649 = vadd.f32 %v3606, %v3625
      %v3650 = vadd.f32 %v3607, %v3625
      %v3651 = vadd.f32 %v3608, %v3625
      %v3652 = vadd.f32 %v3609, %v3625
      %v3653 = vadd.f32 %v3610, %v3625
      %v3654 = vadd.f32 %v3611, %v3625
      %v3655 = vadd.f32 %v3612, %v3625
      %v3656 = vadd.f32 %v3613, %v3625
      %v3657 = vadd.f32 %v3614, %v3625
      %v3658 = vadd.f32 %v3615, %v3625
      %v3659 = vadd.f32 %v3616, %v3625
      %v3660 = vadd.f32 %v3617, %v3625
      %v3661 = vadd.f32 %v3618, %v3625
      %v3662 = vadd.f32 %v3619, %v3625
      %v3663 = vmax.f32 %v3627, 0.0
      %v3664 = vmax.f32 %v3628, 0.0
      %v3665 = vmax.f32 %v3629, 0.0
      %v3666 = vmax.f32 %v3630, 0.0
      %v3667 = vmax.f32 %v3631, 0.0
      %v3668 = vmax.f32 %v3632, 0.0
      %v3669 = vmax.f32 %v3633, 0.0
      %v3670 = vmax.f32 %v3634, 0.0
      %v3671 = vmax.f32 %v3635, 0.0
      %v3672 = vmax.f32 %v3636, 0.0
      %v3673 = vmax.f32 %v3637, 0.0
      %v3674 = vmax.f32 %v3638, 0.0
      %v3675 = vmax.f32 %v3639, 0.0
      %v3676 = vmax.f32 %v3640, 0.0
      %v3677 = vmax.f32 %v3641, 0.0
      %v3678 = vmax.f32 %v3642, 0.0
      %v3679 = vmax.f32 %v3643, 0.0
      %v3680 = vmax.f32 %v3644, 0.0
      %v3681 = vmax.f32 %v3645, 0.0
      %v3682 = vmax.f32 %v3646, 0.0
      %v3683 = vmax.f32 %v3647, 0.0
      %v3684 = vmax.f32 %v3648, 0.0
      %v3685 = vmax.f32 %v3649, 0.0
      %v3686 = vmax.f32 %v3650, 0.0
      %v3687 = vmax.f32 %v3651, 0.0
      %v3688 = vmax.f32 %v3652, 0.0
      %v3689 = vmax.f32 %v3653, 0.0
      %v3690 = vmax.f32 %v3654, 0.0
      %v3691 = vmax.f32 %v3655, 0.0
      %v3692 = vmax.f32 %v3656, 0.0
      %v3693 = vmax.f32 %v3657, 0.0
      %v3694 = vmax.f32 %v3658, 0.0
      %v3695 = vmax.f32 %v3659, 0.0
      %v3696 = vmax.f32 %v3660, 0.0
      %v3697 = vmax.f32 %v3661, 0.0
      %v3698 = vmax.f32 %v3662, 0.0
      %v3699 = vpack.c.bf16 %v3664, %v3663
      %v3700 = vpack.c.bf16 %v3666, %v3665
      %v3701 = vpack.c.bf16 %v3668, %v3667
      %v3702 = vpack.c.bf16 %v3670, %v3669
      %v3703 = vpack.c.bf16 %v3672, %v3671
      %v3704 = vpack.c.bf16 %v3674, %v3673
      %v3705 = vpack.c.bf16 %v3676, %v3675
      %v3706 = vpack.c.bf16 %v3678, %v3677
      %v3707 = vpack.c.bf16 %v3680, %v3679
      %v3708 = vpack.c.bf16 %v3682, %v3681
      %v3709 = vpack.c.bf16 %v3684, %v3683
      %v3710 = vpack.c.bf16 %v3686, %v3685
      %v3711 = vpack.c.bf16 %v3688, %v3687
      %v3712 = vpack.c.bf16 %v3690, %v3689
      %v3713 = vpack.c.bf16 %v3692, %v3691
      %v3714 = vpack.c.bf16 %v3694, %v3693
      %v3715 = vpack.c.bf16 %v3696, %v3695
      %v3716 = vpack.c.bf16 %v3698, %v3697
      %v3735 = vunpack.c.l.b16 %v3699
      %v3736 = vunpack.c.h.b16 %v3699
      %v3737 = vunpack.c.l.b16 %v3700
      %v3738 = vunpack.c.h.b16 %v3700
      %v3739 = vunpack.c.l.b16 %v3701
      %v3740 = vunpack.c.h.b16 %v3701
      %v3741 = vunpack.c.l.b16 %v3702
      %v3742 = vunpack.c.h.b16 %v3702
      %v3743 = vunpack.c.l.b16 %v3703
      %v3744 = vunpack.c.h.b16 %v3703
      %v3745 = vunpack.c.l.b16 %v3704
      %v3746 = vunpack.c.h.b16 %v3704
      %v3747 = vunpack.c.l.b16 %v3705
      %v3748 = vunpack.c.h.b16 %v3705
      %v3749 = vunpack.c.l.b16 %v3706
      %v3750 = vunpack.c.h.b16 %v3706
      %v3751 = vunpack.c.l.b16 %v3707
      %v3752 = vunpack.c.h.b16 %v3707
      %v3753 = vunpack.c.l.b16 %v3708
      %v3754 = vunpack.c.h.b16 %v3708
      %v3755 = vunpack.c.l.b16 %v3709
      %v3756 = vunpack.c.h.b16 %v3709
      %v3757 = vunpack.c.l.b16 %v3710
      %v3758 = vunpack.c.h.b16 %v3710
      %v3759 = vunpack.c.l.b16 %v3711
      %v3760 = vunpack.c.h.b16 %v3711
      %v3761 = vunpack.c.l.b16 %v3712
      %v3762 = vunpack.c.h.b16 %v3712
      %v3763 = vunpack.c.l.b16 %v3713
      %v3764 = vunpack.c.h.b16 %v3713
      %v3765 = vunpack.c.l.b16 %v3714
      %v3766 = vunpack.c.h.b16 %v3714
      %v3767 = vunpack.c.l.b16 %v3715
      %v3768 = vunpack.c.h.b16 %v3715
      %v3769 = vunpack.c.l.b16 %v3716
      %v3770 = vunpack.c.h.b16 %v3716
      %v3771 = vpack.c.b16 %v3735, %v3735
      %v3772 = vpack.c.b16 %v3736, %v3736
      %v3773 = vpack.c.b16 %v3737, %v3737
      %v3774 = vpack.c.b16 %v3738, %v3738
      %v3775 = vpack.c.b16 %v3739, %v3739
      %v3776 = vpack.c.b16 %v3740, %v3740
      %v3777 = vpack.c.b16 %v3741, %v3741
      %v3778 = vpack.c.b16 %v3742, %v3742
      %v3779 = vpack.c.b16 %v3743, %v3743
      %v3780 = vpack.c.b16 %v3744, %v3744
      %v3781 = vpack.c.b16 %v3745, %v3745
      %v3782 = vpack.c.b16 %v3746, %v3746
      %v3783 = vpack.c.b16 %v3747, %v3747
      %v3784 = vpack.c.b16 %v3748, %v3748
      %v3785 = vpack.c.b16 %v3749, %v3749
      %v3786 = vpack.c.b16 %v3750, %v3750
      %v3787 = vpack.c.b16 %v3751, %v3751
      %v3788 = vpack.c.b16 %v3752, %v3752
      %v3789 = vpack.c.b16 %v3753, %v3753
      %v3790 = vpack.c.b16 %v3754, %v3754
      %v3791 = vpack.c.b16 %v3755, %v3755
      %v3792 = vpack.c.b16 %v3756, %v3756
      %v3793 = vpack.c.b16 %v3757, %v3757
      %v3794 = vpack.c.b16 %v3758, %v3758
      %v3795 = vpack.c.b16 %v3759, %v3759
      %v3796 = vpack.c.b16 %v3760, %v3760
      %v3797 = vpack.c.b16 %v3761, %v3761
      %v3798 = vpack.c.b16 %v3762, %v3762
      %v3799 = vpack.c.b16 %v3763, %v3763
      %v3800 = vpack.c.b16 %v3764, %v3764
      %v3801 = vpack.c.b16 %v3765, %v3765
      %v3802 = vpack.c.b16 %v3766, %v3766
      %v3803 = vpack.c.b16 %v3767, %v3767
      %v3804 = vpack.c.b16 %v3768, %v3768
      %v3805 = vpack.c.b16 %v3769, %v3769
      %v3806 = vpack.c.b16 %v3770, %v3770
      %vm3843 = vcmask 60416
      %3844 = vst.msk [vmem:[%s170] sm:$0xf] %vm3843, %v3771
      %3845 = vst.msk [vmem:[%s170 + $0x4] sm:$0xf] %vm3843, %v3772
      %3846 = vst.msk [vmem:[%s170 + $0x8] sm:$0xf] %vm3843, %v3773
      %3847 = vst.msk [vmem:[%s170 + $0xc] sm:$0xf] %vm3843, %v3774
      %3848 = vst.msk [vmem:[%s170 + $0x10] sm:$0xf] %vm3843, %v3775
      %3849 = vst.msk [vmem:[%s170 + $0x14] sm:$0xf] %vm3843, %v3776
      %3850 = vst.msk [vmem:[%s170 + $0x18] sm:$0xf] %vm3843, %v3777
      %3851 = vst.msk [vmem:[%s170 + $0x1c] sm:$0xf] %vm3843, %v3778
      %3852 = vst.msk [vmem:[%s170 + $0x20] sm:$0xf] %vm3843, %v3779
      %3853 = vst.msk [vmem:[%s170 + $0x24] sm:$0xf] %vm3843, %v3780
      %3854 = vst.msk [vmem:[%s170 + $0x28] sm:$0xf] %vm3843, %v3781
      %3855 = vst.msk [vmem:[%s170 + $0x2c] sm:$0xf] %vm3843, %v3782
      %3856 = vst.msk [vmem:[%s170 + $0x30] sm:$0xf] %vm3843, %v3783
      %3857 = vst.msk [vmem:[%s170 + $0x34] sm:$0xf] %vm3843, %v3784
      %3858 = vst.msk [vmem:[%s170 + $0x38] sm:$0xf] %vm3843, %v3785
      %3859 = vst.msk [vmem:[%s170 + $0x3c] sm:$0xf] %vm3843, %v3786
      %3860 = vst.msk [vmem:[%s170 + $0x40] sm:$0xf] %vm3843, %v3787
      %3861 = vst.msk [vmem:[%s170 + $0x44] sm:$0xf] %vm3843, %v3788
      %3862 = vst.msk [vmem:[%s170 + $0x48] sm:$0xf] %vm3843, %v3789
      %3863 = vst.msk [vmem:[%s170 + $0x4c] sm:$0xf] %vm3843, %v3790
      %3864 = vst.msk [vmem:[%s170 + $0x50] sm:$0xf] %vm3843, %v3791
      %3865 = vst.msk [vmem:[%s170 + $0x54] sm:$0xf] %vm3843, %v3792
      %3866 = vst.msk [vmem:[%s170 + $0x58] sm:$0xf] %vm3843, %v3793
      %3867 = vst.msk [vmem:[%s170 + $0x5c] sm:$0xf] %vm3843, %v3794
      %3868 = vst.msk [vmem:[%s170 + $0x60] sm:$0xf] %vm3843, %v3795
      %3869 = vst.msk [vmem:[%s170 + $0x64] sm:$0xf] %vm3843, %v3796
      %3870 = vst.msk [vmem:[%s170 + $0x68] sm:$0xf] %vm3843, %v3797
      %3871 = vst.msk [vmem:[%s170 + $0x6c] sm:$0xf] %vm3843, %v3798
      %3872 = vst.msk [vmem:[%s170 + $0x70] sm:$0xf] %vm3843, %v3799
      %3873 = vst.msk [vmem:[%s170 + $0x74] sm:$0xf] %vm3843, %v3800
      %3874 = vst.msk [vmem:[%s170 + $0x78] sm:$0xf] %vm3843, %v3801
      %3875 = vst.msk [vmem:[%s170 + $0x7c] sm:$0xf] %vm3843, %v3802
      %3876 = vst.msk [vmem:[%s170 + $0x80] sm:$0xf] %vm3843, %v3803
      %3877 = vst.msk [vmem:[%s170 + $0x84] sm:$0xf] %vm3843, %v3804
      %3878 = vst.msk [vmem:[%s170 + $0x88] sm:$0xf] %vm3843, %v3805
      %3879 = vst.msk [vmem:[%s170 + $0x8c] sm:$0xf] %vm3843, %v3806
      %p3880 = scmp.lt.s32.totalorder %s14, 1
      %s3881 = scalar_select %p3880, %s14, 1
      %s3882 = smul.addr %s3881, 36
      %s3883 = smul.addr %s3882, 4
      %s3884 = scalar_lea.vmem %s3, %s3883
      // Predicated region
      $region33: #{inception_c_forward.6} parent=31 // pred_check
        %p3885 = pneg %p100
      $region34: #{inception_c_forward.6} parent=31 // pred_check_branch
        %3887 = sbr.rel (%p3885) target = $region36
      $region35: #{inception_c_forward.6} parent=31 // pred_region
        _
      $region36: #{inception_c_forward.6} parent=31 // pred_fallthru
        _
    $region32: #{inception_c_forward.6} parent=5 // pred_fallthru
      _
    %p3888 = scmp.le.s32.totalorder 2, %s9
    // Predicated region
    $region37: #{inception_c_forward.6} parent=5 // pred_check
      %p3889 = pneg %p3888
    $region38: #{inception_c_forward.6} parent=5 // pred_check_branch
      %3891 = sbr.rel (%p3889) target = $region40
    $region39: #{inception_c_forward.6} parent=5 // pred_region
      %s3892 = ssub.s32 %s9, 2
      // Predicated region
      $region41: #{inception_c_forward.6} parent=39 // pred_check
        %p3893 = pneg %p106
      $region42: #{inception_c_forward.6} parent=39 // pred_check_branch
        %3895 = sbr.rel (%p3893) target = $region44
      $region43: #{inception_c_forward.6} parent=39 // pred_region
        %p3896 = scmp.lt.s32.totalorder %s15, 1
        %s3897 = scalar_select %p3896, %s15, 1
        %s3898 = smul.addr %s3897, 36
        %s3899 = smul.addr %s3898, 4
        %s3900 = scalar_lea.vmem %s3, %s3899
      $region44: #{inception_c_forward.6} parent=39 // pred_fallthru
        _
    $region40: #{inception_c_forward.6} parent=5 // pred_fallthru
      _
  $region6: #{inception_c_forward.6} parent=0 // loop_footer
    %s13 = sadd.s32 1, %s9
  $region7: #{inception_c_forward.6} parent=0 // loop_footer_branch
    %8 = sbr.rel target = $region3
  $region8: #{inception_c_forward.6} parent=0 // loop_exit
    _

// kernel: inception_c_forward.7
$region0: #{inception_c_forward.7}
  #allocation0 [shape = 'u32[]', space=smem, size = 0x4, offset = 0x4, fixed_abs, tag = 'smem constant byte address 0x4 - core index']
  #allocation1 [shape = 'u32[144,128]{1,0:T(1,128)}', space=vmem, size = 0x12000, scoped, tag = 'internal scratch']
  %s0 = inlined_call_operand.vmem [shape: bf16[2,328,8], index: 0, kind: input, shape index: {}]
  %s1 = inlined_call_operand.vmem [shape: bf16[3,8,8], index: 1, kind: input, shape index: {}]
  %s2 = inlined_call_operand.vmem [shape: bf16[3,8,8], index: 2, kind: input, shape index: {}]
  %s3 = inlined_call_operand.vmem [shape: f32[1,8], index: 3, kind: input, shape index: {}]
  %s4 = inlined_call_operand.vmem [shape: f32[1,8], index: 4, kind: input, shape index: {}]
  %s5 = inlined_call_operand.vmem [shape: f32[2,288,16], index: 5, kind: output, shape index: {}]
  %s6 = sld [smem:[#allocation0]]
  $region53: #{inception_c_forward.7} parent=0
    _
  %s8 = ssub.s32 1, %s6
  %s9 = scalar_select 0, %s8, %s6
  loop: start=0, step=1, limit=4
  $region2: #{inception_c_forward.7} parent=0 // loop_pre_header
    _
  $region3: #{inception_c_forward.7} parent=0 // loop_header
    %s11 = sphi 0, %s15
    %p12 = scmp.ge.s32.totalorder %s11, 4
    %s21 = sphi 0, %s23
    %s24 = sphi 0, %s21
    %s25 = sphi 0, %s24
    %s41 = sphi 0, %s25
    %s45 = sphi 0, %s45
    %s47 = sphi 0, %s45
    %s48 = sphi 0, %s47
    %s62 = sphi 0, %s48
    %s66 = sphi 0, %s66
    %s68 = sphi 0, %s66
    %s69 = sphi 0, %s68
    %s83 = sphi 0, %s69
    %s87 = sphi 0, %s87
    %s89 = sphi 0, %s87
    %s90 = sphi 0, %s89
    %s104 = sphi 0, %s90
    %s108 = sphi 0, %s108
    %s110 = sphi 0, %s108
    %s111 = sphi 0, %s110
    %s125 = sphi 0, %s111
    %s131 = sphi 0, %s133
    %s134 = sphi 0, %s131
    %s135 = sphi 0, %s134
    %s151 = sphi 0, %s135
  $region4: #{inception_c_forward.7} parent=0 // loop_header_branch
    %14 = sbr.rel (%p12) target = $region8
  $region5: #{inception_c_forward.7} parent=0 // loop_body
    %s16 = ssub.s32 %s11, 1
    %s17 = ssub.s32 %s11, 2
    %s18 = sadd.s32 %s11, 1
    %s19 = ssub.s32 %s11, %s18
    %p20 = scmp.eq.s32.totalorder %s19, 0
    %s22 = sadd.s32 %s21, 1
    %s23 = scalar_select %p20, %s21, %s22
    %p26 = pneg %p20
    %p27 = scmp.eq.s32.totalorder %s11, 1
    %p28 = por %p26, %p27
    %p29 = scmp.ne.s32.totalorder %s21, %s24
    %p30 = scmp.eq.s32.totalorder %s11, 0
    %p31 = por %p29, %p30
    %p32 = scmp.ne.s32.totalorder %s21, %s24
    %p33 = scmp.eq.s32.totalorder %s16, 1
    %p34 = por %p32, %p33
    %p35 = scmp.ne.s32.totalorder %s24, %s25
    %p36 = scmp.eq.s32.totalorder %s16, 0
    %p37 = por %p35, %p36
    %p38 = scmp.ne.s32.totalorder %s24, %s25
    %p39 = scmp.eq.s32.totalorder %s17, 1
    %p40 = por %p38, %p39
    %p42 = scmp.ne.s32.totalorder %s25, %s41
    %p43 = scmp.eq.s32.totalorder %s17, 0
    %p44 = por %p42, %p43
    %s46 = sadd.s32 %s45, 1
    %p49 = scmp.eq.s32.totalorder %s11, 1
    %p50 = scmp.ne.s32.totalorder %s45, %s47
    %p51 = scmp.eq.s32.totalorder %s11, 0
    %p52 = por %p50, %p51
    %p53 = scmp.ne.s32.totalorder %s45, %s47
    %p54 = scmp.eq.s32.totalorder %s16, 1
    %p55 = por %p53, %p54
    %p56 = scmp.ne.s32.totalorder %s47, %s48
    %p57 = scmp.eq.s32.totalorder %s16, 0
    %p58 = por %p56, %p57
    %p59 = scmp.ne.s32.totalorder %s47, %s48
    %p60 = scmp.eq.s32.totalorder %s17, 1
    %p61 = por %p59, %p60
    %p63 = scmp.ne.s32.totalorder %s48, %s62
    %p64 = scmp.eq.s32.totalorder %s17, 0
    %p65 = por %p63, %p64
    %s67 = sadd.s32 %s66, 1
    %p70 = scmp.eq.s32.totalorder %s11, 1
    %p71 = scmp.ne.s32.totalorder %s66, %s68
    %p72 = scmp.eq.s32.totalorder %s11, 0
    %p73 = por %p71, %p72
    %p74 = scmp.ne.s32.totalorder %s66, %s68
    %p75 = scmp.eq.s32.totalorder %s16, 1
    %p76 = por %p74, %p75
    %p77 = scmp.ne.s32.totalorder %s68, %s69
    %p78 = scmp.eq.s32.totalorder %s16, 0
    %p79 = por %p77, %p78
    %p80 = scmp.ne.s32.totalorder %s68, %s69
    %p81 = scmp.eq.s32.totalorder %s17, 1
    %p82 = por %p80, %p81
    %p84 = scmp.ne.s32.totalorder %s69, %s83
    %p85 = scmp.eq.s32.totalorder %s17, 0
    %p86 = por %p84, %p85
    %s88 = sadd.s32 %s87, 1
    %p91 = scmp.eq.s32.totalorder %s11, 1
    %p92 = scmp.ne.s32.totalorder %s87, %s89
    %p93 = scmp.eq.s32.totalorder %s11, 0
    %p94 = por %p92, %p93
    %p95 = scmp.ne.s32.totalorder %s87, %s89
    %p96 = scmp.eq.s32.totalorder %s16, 1
    %p97 = por %p95, %p96
    %p98 = scmp.ne.s32.totalorder %s89, %s90
    %p99 = scmp.eq.s32.totalorder %s16, 0
    %p100 = por %p98, %p99
    %p101 = scmp.ne.s32.totalorder %s89, %s90
    %p102 = scmp.eq.s32.totalorder %s17, 1
    %p103 = por %p101, %p102
    %p105 = scmp.ne.s32.totalorder %s90, %s104
    %p106 = scmp.eq.s32.totalorder %s17, 0
    %p107 = por %p105, %p106
    %s109 = sadd.s32 %s108, 1
    %p112 = scmp.eq.s32.totalorder %s11, 1
    %p113 = scmp.ne.s32.totalorder %s108, %s110
    %p114 = scmp.eq.s32.totalorder %s11, 0
    %p115 = por %p113, %p114
    %p116 = scmp.ne.s32.totalorder %s108, %s110
    %p117 = scmp.eq.s32.totalorder %s16, 1
    %p118 = por %p116, %p117
    %p119 = scmp.ne.s32.totalorder %s110, %s111
    %p120 = scmp.eq.s32.totalorder %s16, 0
    %p121 = por %p119, %p120
    %p122 = scmp.ne.s32.totalorder %s110, %s111
    %p123 = scmp.eq.s32.totalorder %s17, 1
    %p124 = por %p122, %p123
    %p126 = scmp.ne.s32.totalorder %s111, %s125
    %p127 = scmp.eq.s32.totalorder %s17, 0
    %p128 = por %p126, %p127
    %s129 = ssub.s32 %s11, %s18
    %p130 = scmp.eq.s32.totalorder %s129, 0
    %s132 = sadd.s32 %s131, 1
    %s133 = scalar_select %p130, %s131, %s132
    %p136 = pneg %p130
    %p137 = scmp.eq.s32.totalorder %s11, 1
    %p138 = por %p136, %p137
    %p139 = scmp.ne.s32.totalorder %s131, %s134
    %p140 = scmp.eq.s32.totalorder %s11, 0
    %p141 = por %p139, %p140
    %p142 = scmp.ne.s32.totalorder %s131, %s134
    %p143 = scmp.eq.s32.totalorder %s16, 1
    %p144 = por %p142, %p143
    %p145 = scmp.ne.s32.totalorder %s134, %s135
    %p146 = scmp.eq.s32.totalorder %s16, 0
    %p147 = por %p145, %p146
    %p148 = scmp.ne.s32.totalorder %s134, %s135
    %p149 = scmp.eq.s32.totalorder %s17, 1
    %p150 = por %p148, %p149
    %p152 = scmp.ne.s32.totalorder %s135, %s151
    %p153 = scmp.eq.s32.totalorder %s17, 0
    %p154 = por %p152, %p153
    %p155 = scmp.le.s32.totalorder 1, %s11
    %p156 = scmp.lt.s32.totalorder %s11, 3
    %p157 = pnand %p155, %p156
    %p158 = pneg %p157
    // Predicated region
    $region9: #{inception_c_forward.7} parent=5 // pred_check
      _
    $region10: #{inception_c_forward.7} parent=5 // pred_check_branch
      %160 = sbr.rel (%p157) target = $region12
    $region11: #{inception_c_forward.7} parent=5 // pred_region
      %s161 = ssub.s32 %s11, 1
      // Predicated region
      $region13: #{inception_c_forward.7} parent=11 // pred_check
        %p162 = pneg %p58
      $region14: #{inception_c_forward.7} parent=11 // pred_check_branch
        %164 = sbr.rel (%p162) target = $region16
      $region15: #{inception_c_forward.7} parent=11 // pred_region
        _
      $region16: #{inception_c_forward.7} parent=11 // pred_fallthru
        _
      // Predicated region
      $region17: #{inception_c_forward.7} parent=11 // pred_check
        %p165 = pneg %p79
      $region18: #{inception_c_forward.7} parent=11 // pred_check_branch
        %167 = sbr.rel (%p165) target = $region20
      $region19: #{inception_c_forward.7} parent=11 // pred_region
        _
      $region20: #{inception_c_forward.7} parent=11 // pred_fallthru
        _
      // Predicated region
      $region21: #{inception_c_forward.7} parent=11 // pred_check
        %p168 = pneg %p100
      $region22: #{inception_c_forward.7} parent=11 // pred_check_branch
        %170 = sbr.rel (%p168) target = $region24
      $region23: #{inception_c_forward.7} parent=11 // pred_region
        _
      $region24: #{inception_c_forward.7} parent=11 // pred_fallthru
        _
      // Predicated region
      $region25: #{inception_c_forward.7} parent=11 // pred_check
        %p171 = pneg %p121
      $region26: #{inception_c_forward.7} parent=11 // pred_check_branch
        %173 = sbr.rel (%p171) target = $region28
      $region27: #{inception_c_forward.7} parent=11 // pred_region
        _
      $region28: #{inception_c_forward.7} parent=11 // pred_fallthru
        _
    $region12: #{inception_c_forward.7} parent=5 // pred_fallthru
      _
    %p174 = scmp.lt.s32.totalorder %s11, 2
    // Predicated region
    $region29: #{inception_c_forward.7} parent=5 // pred_check
      %p175 = pneg %p174
    $region30: #{inception_c_forward.7} parent=5 // pred_check_branch
      %177 = sbr.rel (%p175) target = $region32
    $region31: #{inception_c_forward.7} parent=5 // pred_region
      // Predicated region
      $region33: #{inception_c_forward.7} parent=31 // pred_check
        %p178 = pneg %p31
      $region34: #{inception_c_forward.7} parent=31 // pred_check_branch
        %180 = sbr.rel (%p178) target = $region36
      $region35: #{inception_c_forward.7} parent=31 // pred_region
        %p181 = scmp.lt.s32.totalorder %s11, 1
        %s182 = scalar_select %p181, %s11, 1
        %s183 = smul.addr %s182, 41
        %s184 = smul.addr %s183, 4
        %s185 = scalar_lea.vmem %s0, %s184
      $region36: #{inception_c_forward.7} parent=31 // pred_fallthru
        _
    $region32: #{inception_c_forward.7} parent=5 // pred_fallthru
      _
    %p186 = scmp.le.s32.totalorder 1, %s11
    %p187 = scmp.lt.s32.totalorder %s11, 3
    %p188 = pnand %p186, %p187
    %p189 = pneg %p188
    // Predicated region
    $region37: #{inception_c_forward.7} parent=5 // pred_check
      _
    $region38: #{inception_c_forward.7} parent=5 // pred_check_branch
      %191 = sbr.rel (%p188) target = $region40
    $region39: #{inception_c_forward.7} parent=5 // pred_region
      %s192 = ssub.s32 %s11, 1
      %p193 = scmp.lt.s32.totalorder %s16, 1
      %s194 = scalar_select %p193, %s16, 1
      %s195 = smul.addr %s194, 41
      %s196 = smul.addr %s195, 4
      %s197 = scalar_lea.vmem %s0, %s196
      %p198 = pneg %p37
      %p199 = pneg %p34
      %p200 = pneg %p58
      %p201 = pneg %p55
      %p202 = pneg %p79
      %p203 = pneg %p76
      %p204 = pneg %p100
      %p205 = pneg %p97
      %p206 = pneg %p121
      %p207 = pneg %p118
      %p208 = pneg %p147
      %p209 = pneg %p144
      %p210 = scmp.lt.s32.totalorder %s16, 1
      %s211 = scalar_select %p210, %s16, 1
      %s212 = smul.addr %s211, 36
      %s213 = smul.addr %s212, 8
      %s214 = scalar_lea.vmem %s5, %s213
      %p215 = scmp.lt.s32.totalorder %s16, 1
      %s216 = scalar_select %p215, %s16, 1
      %s217 = smul.addr %s216, 41
      %s218 = smul.addr %s217, 4
      %s219 = scalar_lea.vmem %s0, %s218
      %p220 = scmp.lt.s32.totalorder %s16, 1
      %s221 = scalar_select %p220, %s16, 1
      %s222 = smul.addr %s221, 36
      %s223 = smul.addr %s222, 8
      %s224 = scalar_lea.vmem %s5, %s223
      %v226 = vld [vmem:[%s219 + $0x8] sm:$0xe]
      %v227 = vld [vmem:[%s219 + $0xc] sm:$0xf]
      %v228 = vld [vmem:[%s219 + $0x10] sm:$0xf]
      %v229 = vld [vmem:[%s219 + $0x14] sm:$0xf]
      %v230 = vld [vmem:[%s219 + $0x18] sm:$0xf]
      %v231 = vld [vmem:[%s219 + $0x1c] sm:$0xf]
      %v232 = vld [vmem:[%s219 + $0x20] sm:$0xf]
      %v233 = vld [vmem:[%s219 + $0x24] sm:$0xf]
      %v234 = vld [vmem:[%s219 + $0x28] sm:$0xf]
      %v235 = vld [vmem:[%s219 + $0x2c] sm:$0xf]
      %v236 = vld [vmem:[%s219 + $0x30] sm:$0xf]
      %v237 = vld [vmem:[%s219 + $0x34] sm:$0xf]
      %v238 = vld [vmem:[%s219 + $0x38] sm:$0xf]
      %v239 = vld [vmem:[%s219 + $0x3c] sm:$0xf]
      %v240 = vld [vmem:[%s219 + $0x40] sm:$0xf]
      %v241 = vld [vmem:[%s219 + $0x44] sm:$0xf]
      %v242 = vld [vmem:[%s219 + $0x48] sm:$0xf]
      %v243 = vld [vmem:[%s219 + $0x4c] sm:$0xf]
      %v244 = vld [vmem:[%s219 + $0x50] sm:$0xf]
      %v245 = vld [vmem:[%s219 + $0x54] sm:$0xf]
      %v246 = vld [vmem:[%s219 + $0x58] sm:$0xf]
      %v247 = vld [vmem:[%s219 + $0x5c] sm:$0xf]
      %v248 = vld [vmem:[%s219 + $0x60] sm:$0xf]
      %v249 = vld [vmem:[%s219 + $0x64] sm:$0xf]
      %v250 = vld [vmem:[%s219 + $0x68] sm:$0xf]
      %v251 = vld [vmem:[%s219 + $0x6c] sm:$0xf]
      %v252 = vld [vmem:[%s219 + $0x70] sm:$0xf]
      %v253 = vld [vmem:[%s219 + $0x74] sm:$0xf]
      %v254 = vld [vmem:[%s219 + $0x78] sm:$0xf]
      %v255 = vld [vmem:[%s219 + $0x7c] sm:$0xf]
      %v256 = vld [vmem:[%s219 + $0x80] sm:$0xf]
      %v257 = vld [vmem:[%s219 + $0x84] sm:$0xf]
      %v258 = vld [vmem:[%s219 + $0x88] sm:$0xf]
      %v259 = vld [vmem:[%s219 + $0x8c] sm:$0xf]
      %v260 = vld [vmem:[%s219 + $0x90] sm:$0xf]
      %v261 = vld [vmem:[%s219 + $0x94] sm:$0xf]
      %v262 = vld [vmem:[%s219 + $0x98] sm:$0x1]
      %v263 = vld [vmem:[%s1] sm:$0xf]
      %v264 = vld [vmem:[%s219 + $0x98] sm:$0x3]
      %s265 = scalar_lea.vmem %s1, 4
      %v266 = vld [vmem:[%s265] sm:$0xf]
      %v304 = vunpack.c.l.b16 %v226
      %v305 = vunpack.c.l.b16 %v227
      %v306 = vunpack.c.l.b16 %v228
      %v307 = vunpack.c.l.b16 %v229
      %v308 = vunpack.c.l.b16 %v230
      %v309 = vunpack.c.l.b16 %v231
      %v310 = vunpack.c.l.b16 %v232
      %v311 = vunpack.c.l.b16 %v233
      %v312 = vunpack.c.l.b16 %v234
      %v313 = vunpack.c.l.b16 %v235
      %v314 = vunpack.c.l.b16 %v236
      %v315 = vunpack.c.l.b16 %v237
      %v316 = vunpack.c.l.b16 %v238
      %v317 = vunpack.c.l.b16 %v239
      %v318 = vunpack.c.l.b16 %v240
      %v319 = vunpack.c.l.b16 %v241
      %v320 = vunpack.c.l.b16 %v242
      %v321 = vunpack.c.l.b16 %v243
      %v322 = vunpack.c.l.b16 %v244
      %v323 = vunpack.c.l.b16 %v245
      %v324 = vunpack.c.l.b16 %v246
      %v325 = vunpack.c.l.b16 %v247
      %v326 = vunpack.c.l.b16 %v248
      %v327 = vunpack.c.l.b16 %v249
      %v328 = vunpack.c.l.b16 %v250
      %v329 = vunpack.c.l.b16 %v251
      %v330 = vunpack.c.l.b16 %v252
      %v331 = vunpack.c.l.b16 %v253
      %v332 = vunpack.c.l.b16 %v254
      %v333 = vunpack.c.l.b16 %v255
      %v334 = vunpack.c.l.b16 %v256
      %v335 = vunpack.c.l.b16 %v257
      %v336 = vunpack.c.l.b16 %v258
      %v337 = vunpack.c.l.b16 %v259
      %v338 = vunpack.c.l.b16 %v260
      %v339 = vunpack.c.l.b16 %v261
      %v340 = vunpack.c.l.b16 %v264
      %v341 = vpack.c.b16 %v305, %v304
      %v342 = vpack.c.b16 %v307, %v306
      %v343 = vpack.c.b16 %v309, %v308
      %v344 = vpack.c.b16 %v311, %v310
      %v345 = vpack.c.b16 %v313, %v312
      %v346 = vpack.c.b16 %v315, %v314
      %v347 = vpack.c.b16 %v317, %v316
      %v348 = vpack.c.b16 %v319, %v318
      %v349 = vpack.c.b16 %v321, %v320
      %v350 = vpack.c.b16 %v323, %v322
      %v351 = vpack.c.b16 %v325, %v324
      %v352 = vpack.c.b16 %v327, %v326
      %v353 = vpack.c.b16 %v329, %v328
      %v354 = vpack.c.b16 %v331, %v330
      %v355 = vpack.c.b16 %v333, %v332
      %v356 = vpack.c.b16 %v335, %v334
      %v357 = vpack.c.b16 %v337, %v336
      %v358 = vpack.c.b16 %v339, %v338
      %v359 = vpack.c.b16 %v340, %v340
      %vm360 = vsmask.f32 6400
      %v362 = vshrl.u32 %v341, 16
      %v364 = vrot.slane %v362, 1
      %v365 = vshll.u32 %v341, 16
      %v367 = vrot.slane %v365, 2
      %v368 = vor.u32 %v364, %v367
      %v370 = vshrl.u32 %v342, 16
      %v372 = vrot.slane %v370, 1
      %v373 = vshll.u32 %v342, 16
      %v375 = vrot.slane %v373, 2
      %v376 = vor.u32 %v372, %v375
      %v377 = vsel %vm360, %v368, %v376
      %v379 = vshrl.u32 %v343, 16
      %v381 = vrot.slane %v379, 1
      %v382 = vshll.u32 %v343, 16
      %v384 = vrot.slane %v382, 2
      %v385 = vor.u32 %v381, %v384
      %v386 = vsel %vm360, %v376, %v385
      %v388 = vshrl.u32 %v344, 16
      %v390 = vrot.slane %v388, 1
      %v391 = vshll.u32 %v344, 16
      %v393 = vrot.slane %v391, 2
      %v394 = vor.u32 %v390, %v393
      %v395 = vsel %vm360, %v385, %v394
      %v397 = vshrl.u32 %v345, 16
      %v399 = vrot.slane %v397, 1
      %v400 = vshll.u32 %v345, 16
      %v402 = vrot.slane %v400, 2
      %v403 = vor.u32 %v399, %v402
      %v404 = vsel %vm360, %v394, %v403
      %v406 = vshrl.u32 %v346, 16
      %v408 = vrot.slane %v406, 1
      %v409 = vshll.u32 %v346, 16
      %v411 = vrot.slane %v409, 2
      %v412 = vor.u32 %v408, %v411
      %v413 = vsel %vm360, %v403, %v412
      %v415 = vshrl.u32 %v347, 16
      %v417 = vrot.slane %v415, 1
      %v418 = vshll.u32 %v347, 16
      %v420 = vrot.slane %v418, 2
      %v421 = vor.u32 %v417, %v420
      %v422 = vsel %vm360, %v412, %v421
      %v424 = vshrl.u32 %v348, 16
      %v426 = vrot.slane %v424, 1
      %v427 = vshll.u32 %v348, 16
      %v429 = vrot.slane %v427, 2
      %v430 = vor.u32 %v426, %v429
      %v431 = vsel %vm360, %v421, %v430
      %v433 = vshrl.u32 %v349, 16
      %v435 = vrot.slane %v433, 1
      %v436 = vshll.u32 %v349, 16
      %v438 = vrot.slane %v436, 2
      %v439 = vor.u32 %v435, %v438
      %v440 = vsel %vm360, %v430, %v439
      %v442 = vshrl.u32 %v350, 16
      %v444 = vrot.slane %v442, 1
      %v445 = vshll.u32 %v350, 16
      %v447 = vrot.slane %v445, 2
      %v448 = vor.u32 %v444, %v447
      %v449 = vsel %vm360, %v439, %v448
      %v451 = vshrl.u32 %v351, 16
      %v453 = vrot.slane %v451, 1
      %v454 = vshll.u32 %v351, 16
      %v456 = vrot.slane %v454, 2
      %v457 = vor.u32 %v453, %v456
      %v458 = vsel %vm360, %v448, %v457
      %v460 = vshrl.u32 %v352, 16
      %v462 = vrot.slane %v460, 1
      %v463 = vshll.u32 %v352, 16
      %v465 = vrot.slane %v463, 2
      %v466 = vor.u32 %v462, %v465
      %v467 = vsel %vm360, %v457, %v466
      %v469 = vshrl.u32 %v353, 16
      %v471 = vrot.slane %v469, 1
      %v472 = vshll.u32 %v353, 16
      %v474 = vrot.slane %v472, 2
      %v475 = vor.u32 %v471, %v474
      %v476 = vsel %vm360, %v466, %v475
      %v478 = vshrl.u32 %v354, 16
      %v480 = vrot.slane %v478, 1
      %v481 = vshll.u32 %v354, 16
      %v483 = vrot.slane %v481, 2
      %v484 = vor.u32 %v480, %v483
      %v485 = vsel %vm360, %v475, %v484
      %v487 = vshrl.u32 %v355, 16
      %v489 = vrot.slane %v487, 1
      %v490 = vshll.u32 %v355, 16
      %v492 = vrot.slane %v490, 2
      %v493 = vor.u32 %v489, %v492
      %v494 = vsel %vm360, %v484, %v493
      %v496 = vshrl.u32 %v356, 16
      %v498 = vrot.slane %v496, 1
      %v499 = vshll.u32 %v356, 16
      %v501 = vrot.slane %v499, 2
      %v502 = vor.u32 %v498, %v501
      %v503 = vsel %vm360, %v493, %v502
      %v505 = vshrl.u32 %v357, 16
      %v507 = vrot.slane %v505, 1
      %v508 = vshll.u32 %v357, 16
      %v510 = vrot.slane %v508, 2
      %v511 = vor.u32 %v507, %v510
      %v512 = vsel %vm360, %v502, %v511
      %v514 = vshrl.u32 %v358, 16
      %v516 = vrot.slane %v514, 1
      %v517 = vshll.u32 %v358, 16
      %v519 = vrot.slane %v517, 2
      %v520 = vor.u32 %v516, %v519
      %v521 = vsel %vm360, %v511, %v520
      %v523 = vshrl.u32 %v359, 16
      %v525 = vrot.slane %v523, 1
      %v526 = vshll.u32 %v359, 16
      %v528 = vrot.slane %v526, 2
      %v529 = vor.u32 %v525, %v528
      %v530 = vsel %vm360, %v520, %v529
      %vm531 = vcmask 64512
      %v533 = vsel %vm531, %v377, 0
      %v536 = vsel %vm531, %v386, 0
      %v539 = vsel %vm531, %v395, 0
      %v542 = vsel %vm531, %v404, 0
      %v545 = vsel %vm531, %v413, 0
      %v548 = vsel %vm531, %v422, 0
      %v551 = vsel %vm531, %v431, 0
      %v554 = vsel %vm531, %v440, 0
      %v557 = vsel %vm531, %v449, 0
      %v560 = vsel %vm531, %v458, 0
      %v563 = vsel %vm531, %v467, 0
      %v566 = vsel %vm531, %v476, 0
      %v569 = vsel %vm531, %v485, 0
      %v572 = vsel %vm531, %v494, 0
      %v575 = vsel %vm531, %v503, 0
      %v578 = vsel %vm531, %v512, 0
      %v581 = vsel %vm531, %v521, 0
      %v584 = vsel %vm531, %v530, 0
      %vm586 = vcmask 1043456
      %v588 = vsel %vm586, %v266, 0
      %590 = vmatprep.subr.bf16.mxu0 0
      %591 = vmatpush1.bf16.msra.mxu0 0
      %592 = vmatprep.subr.bf16.mxu0 0
      %593 = vmatpush1.bf16.msra.mxu0 0
      %594 = vmatprep.subr.bf16.mxu0 0
      %595 = vmatpush1.bf16.msra.mxu0 0
      %596 = vmatprep.subr.bf16.mxu0 0
      %597 = vmatpush1.bf16.msra.mxu0 0
      %598 = vmatprep.subr.bf16.mxu0 0
      %599 = vmatpush1.bf16.msra.mxu0 0
      %600 = vmatprep.subr.bf16.mxu0 0
      %601 = vmatpush1.bf16.msra.mxu0 0
      %602 = vmatprep.subr.bf16.mxu0 0
      %603 = vmatpush1.bf16.msra.mxu0 0
      %604 = vmatprep.subr.bf16.mxu0 0
      %605 = vmatpush1.bf16.msra.mxu0 %v588
      %606 = vmatprep.subr.bf16.mxu0 0
      %607 = vmatpush2.bf16.msra.mxu0 0
      %608 = vmatprep.subr.bf16.mxu0 0
      %609 = vmatpush2.bf16.msra.mxu0 0
      %610 = vmatprep.subr.bf16.mxu0 0
      %611 = vmatpush2.bf16.msra.mxu0 0
      %612 = vmatprep.subr.bf16.mxu0 0
      %613 = vmatpush2.bf16.msra.mxu0 0
      %614 = vmatprep.subr.bf16.mxu0 0
      %615 = vmatpush2.bf16.msra.mxu0 0
      %616 = vmatprep.subr.bf16.mxu0 0
      %617 = vmatpush2.bf16.msra.mxu0 0
      %618 = vmatprep.subr.bf16.mxu0 0
      %619 = vmatpush2.bf16.msra.mxu0 0
      %620 = vmatprep.subr.bf16.mxu0 0
      %621 = vmatpush2.bf16.msra.mxu0 0
      %622 = vmatprep.mubr.bf16.mxu0 0
      %623 = vmatmul.mubr.bf16.gmra.mxu0 %v533
      %v624 = vpop.f32.mrf.mxu0
      %v625 = vadd.f32 0.0, %v624
      %v626 = vpop.f32.mrf.mxu0
      %v627 = vpop.f32.mrf.mxu0
      %v628 = vadd.f32 0.0, %v627
      %v629 = vpop.f32.mrf.mxu0
      %630 = vmatprep.mubr.bf16.mxu0 0
      %631 = vmatmul.mubr.bf16.gmra.mxu0 %v536
      %v632 = vpop.f32.mrf.mxu0
      %v633 = vadd.f32 0.0, %v632
      %v634 = vpop.f32.mrf.mxu0
      %v635 = vpop.f32.mrf.mxu0
      %v636 = vadd.f32 0.0, %v635
      %v637 = vpop.f32.mrf.mxu0
      %638 = vmatprep.mubr.bf16.mxu0 0
      %639 = vmatmul.mubr.bf16.gmra.mxu0 %v539
      %v640 = vpop.f32.mrf.mxu0
      %v641 = vadd.f32 0.0, %v640
      %v642 = vpop.f32.mrf.mxu0
      %v643 = vpop.f32.mrf.mxu0
      %v644 = vadd.f32 0.0, %v643
      %v645 = vpop.f32.mrf.mxu0
      %646 = vmatprep.mubr.bf16.mxu0 0
      %647 = vmatmul.mubr.bf16.gmra.mxu0 %v542
      %v648 = vpop.f32.mrf.mxu0
      %v649 = vadd.f32 0.0, %v648
      %v650 = vpop.f32.mrf.mxu0
      %v651 = vpop.f32.mrf.mxu0
      %v652 = vadd.f32 0.0, %v651
      %v653 = vpop.f32.mrf.mxu0
      %654 = vmatprep.mubr.bf16.mxu0 0
      %655 = vmatmul.mubr.bf16.gmra.mxu0 %v545
      %v656 = vpop.f32.mrf.mxu0
      %v657 = vadd.f32 0.0, %v656
      %v658 = vpop.f32.mrf.mxu0
      %v659 = vpop.f32.mrf.mxu0
      %v660 = vadd.f32 0.0, %v659
      %v661 = vpop.f32.mrf.mxu0
      %662 = vmatprep.mubr.bf16.mxu0 0
      %663 = vmatmul.mubr.bf16.gmra.mxu0 %v548
      %v664 = vpop.f32.mrf.mxu0
      %v665 = vadd.f32 0.0, %v664
      %v666 = vpop.f32.mrf.mxu0
      %v667 = vpop.f32.mrf.mxu0
      %v668 = vadd.f32 0.0, %v667
      %v669 = vpop.f32.mrf.mxu0
      %670 = vmatprep.mubr.bf16.mxu0 0
      %671 = vmatmul.mubr.bf16.gmra.mxu0 %v551
      %v672 = vpop.f32.mrf.mxu0
      %v673 = vadd.f32 0.0, %v672
      %v674 = vpop.f32.mrf.mxu0
      %v675 = vpop.f32.mrf.mxu0
      %v676 = vadd.f32 0.0, %v675
      %v677 = vpop.f32.mrf.mxu0
      %678 = vmatprep.mubr.bf16.mxu0 0
      %679 = vmatmul.mubr.bf16.gmra.mxu0 %v554
      %v680 = vpop.f32.mrf.mxu0
      %v681 = vadd.f32 0.0, %v680
      %v682 = vpop.f32.mrf.mxu0
      %v683 = vpop.f32.mrf.mxu0
      %v684 = vadd.f32 0.0, %v683
      %v685 = vpop.f32.mrf.mxu0
      %686 = vmatprep.mubr.bf16.mxu0 0
      %687 = vmatmul.mubr.bf16.gmra.mxu0 %v557
      %v688 = vpop.f32.mrf.mxu0
      %v689 = vadd.f32 0.0, %v688
      %v690 = vpop.f32.mrf.mxu0
      %v691 = vpop.f32.mrf.mxu0
      %v692 = vadd.f32 0.0, %v691
      %v693 = vpop.f32.mrf.mxu0
      %694 = vmatprep.mubr.bf16.mxu0 0
      %695 = vmatmul.mubr.bf16.gmra.mxu0 %v560
      %v696 = vpop.f32.mrf.mxu0
      %v697 = vadd.f32 0.0, %v696
      %v698 = vpop.f32.mrf.mxu0
      %v699 = vpop.f32.mrf.mxu0
      %v700 = vadd.f32 0.0, %v699
      %v701 = vpop.f32.mrf.mxu0
      %702 = vmatprep.mubr.bf16.mxu0 0
      %703 = vmatmul.mubr.bf16.gmra.mxu0 %v563
      %v704 = vpop.f32.mrf.mxu0
      %v705 = vadd.f32 0.0, %v704
      %v706 = vpop.f32.mrf.mxu0
      %v707 = vpop.f32.mrf.mxu0
      %v708 = vadd.f32 0.0, %v707
      %v709 = vpop.f32.mrf.mxu0
      %710 = vmatprep.mubr.bf16.mxu0 0
      %711 = vmatmul.mubr.bf16.gmra.mxu0 %v566
      %v712 = vpop.f32.mrf.mxu0
      %v713 = vadd.f32 0.0, %v712
      %v714 = vpop.f32.mrf.mxu0
      %v715 = vpop.f32.mrf.mxu0
      %v716 = vadd.f32 0.0, %v715
      %v717 = vpop.f32.mrf.mxu0
      %718 = vmatprep.mubr.bf16.mxu0 0
      %719 = vmatmul.mubr.bf16.gmra.mxu0 %v569
      %v720 = vpop.f32.mrf.mxu0
      %v721 = vadd.f32 0.0, %v720
      %v722 = vpop.f32.mrf.mxu0
      %v723 = vpop.f32.mrf.mxu0
      %v724 = vadd.f32 0.0, %v723
      %v725 = vpop.f32.mrf.mxu0
      %726 = vmatprep.mubr.bf16.mxu0 0
      %727 = vmatmul.mubr.bf16.gmra.mxu0 %v572
      %v728 = vpop.f32.mrf.mxu0
      %v729 = vadd.f32 0.0, %v728
      %v730 = vpop.f32.mrf.mxu0
      %v731 = vpop.f32.mrf.mxu0
      %v732 = vadd.f32 0.0, %v731
      %v733 = vpop.f32.mrf.mxu0
      %734 = vmatprep.mubr.bf16.mxu0 0
      %735 = vmatmul.mubr.bf16.gmra.mxu0 %v575
      %v736 = vpop.f32.mrf.mxu0
      %v737 = vadd.f32 0.0, %v736
      %v738 = vpop.f32.mrf.mxu0
      %v739 = vpop.f32.mrf.mxu0
      %v740 = vadd.f32 0.0, %v739
      %v741 = vpop.f32.mrf.mxu0
      %742 = vmatprep.mubr.bf16.mxu0 0
      %743 = vmatmul.mubr.bf16.gmra.mxu0 %v578
      %v744 = vpop.f32.mrf.mxu0
      %v745 = vadd.f32 0.0, %v744
      %v746 = vpop.f32.mrf.mxu0
      %v747 = vpop.f32.mrf.mxu0
      %v748 = vadd.f32 0.0, %v747
      %v749 = vpop.f32.mrf.mxu0
      %750 = vmatprep.mubr.bf16.mxu0 0
      %751 = vmatmul.mubr.bf16.gmra.mxu0 %v581
      %v752 = vpop.f32.mrf.mxu0
      %v753 = vadd.f32 0.0, %v752
      %v754 = vpop.f32.mrf.mxu0
      %v755 = vpop.f32.mrf.mxu0
      %v756 = vadd.f32 0.0, %v755
      %v757 = vpop.f32.mrf.mxu0
      %758 = vmatprep.mubr.bf16.mxu0 0
      %759 = vmatmul.mubr.bf16.gmra.mxu0 %v584
      %v760 = vpop.f32.mrf.mxu0
      %v761 = vadd.f32 0.0, %v760
      %v762 = vpop.f32.mrf.mxu0
      %v763 = vpop.f32.mrf.mxu0
      %v764 = vadd.f32 0.0, %v763
      %v765 = vpop.f32.mrf.mxu0
      %766 = vdwg.mxu0
      %v768 = vunpack.c.l.b16 %v262
      %v769 = vpack.c.b16 %v768, %v768
      %vm770 = vcmask 1046528
      %v771 = vrot.slane %v341, 1
      %v772 = vrot.slane %v342, 1
      %v773 = vsel %vm770, %v771, %v772
      %v774 = vrot.slane %v343, 1
      %v775 = vsel %vm770, %v772, %v774
      %v776 = vrot.slane %v344, 1
      %v777 = vsel %vm770, %v774, %v776
      %v778 = vrot.slane %v345, 1
      %v779 = vsel %vm770, %v776, %v778
      %v780 = vrot.slane %v346, 1
      %v781 = vsel %vm770, %v778, %v780
      %v782 = vrot.slane %v347, 1
      %v783 = vsel %vm770, %v780, %v782
      %v784 = vrot.slane %v348, 1
      %v785 = vsel %vm770, %v782, %v784
      %v786 = vrot.slane %v349, 1
      %v787 = vsel %vm770, %v784, %v786
      %v788 = vrot.slane %v350, 1
      %v789 = vsel %vm770, %v786, %v788
      %v790 = vrot.slane %v351, 1
      %v791 = vsel %vm770, %v788, %v790
      %v792 = vrot.slane %v352, 1
      %v793 = vsel %vm770, %v790, %v792
      %v794 = vrot.slane %v353, 1
      %v795 = vsel %vm770, %v792, %v794
      %v796 = vrot.slane %v354, 1
      %v797 = vsel %vm770, %v794, %v796
      %v798 = vrot.slane %v355, 1
      %v799 = vsel %vm770, %v796, %v798
      %v800 = vrot.slane %v356, 1
      %v801 = vsel %vm770, %v798, %v800
      %v802 = vrot.slane %v357, 1
      %v803 = vsel %vm770, %v800, %v802
      %v804 = vrot.slane %v358, 1
      %v805 = vsel %vm770, %v802, %v804
      %v806 = vrot.slane %v769, 1
      %v807 = vsel %vm770, %v804, %v806
      %v809 = vsel %vm531, %v773, 0
      %v812 = vsel %vm531, %v775, 0
      %v815 = vsel %vm531, %v777, 0
      %v818 = vsel %vm531, %v779, 0
      %v821 = vsel %vm531, %v781, 0
      %v824 = vsel %vm531, %v783, 0
      %v827 = vsel %vm531, %v785, 0
      %v830 = vsel %vm531, %v787, 0
      %v833 = vsel %vm531, %v789, 0
      %v836 = vsel %vm531, %v791, 0
      %v839 = vsel %vm531, %v793, 0
      %v842 = vsel %vm531, %v795, 0
      %v845 = vsel %vm531, %v797, 0
      %v848 = vsel %vm531, %v799, 0
      %v851 = vsel %vm531, %v801, 0
      %v854 = vsel %vm531, %v803, 0
      %v857 = vsel %vm531, %v805, 0
      %v860 = vsel %vm531, %v807, 0
      %v863 = vsel %vm586, %v263, 0
      %865 = vmatprep.subr.bf16.mxu0 0
      %866 = vmatpush1.bf16.msra.mxu0 0
      %867 = vmatprep.subr.bf16.mxu0 0
      %868 = vmatpush1.bf16.msra.mxu0 0
      %869 = vmatprep.subr.bf16.mxu0 0
      %870 = vmatpush1.bf16.msra.mxu0 0
      %871 = vmatprep.subr.bf16.mxu0 0
      %872 = vmatpush1.bf16.msra.mxu0 0
      %873 = vmatprep.subr.bf16.mxu0 0
      %874 = vmatpush1.bf16.msra.mxu0 0
      %875 = vmatprep.subr.bf16.mxu0 0
      %876 = vmatpush1.bf16.msra.mxu0 0
      %877 = vmatprep.subr.bf16.mxu0 0
      %878 = vmatpush1.bf16.msra.mxu0 0
      %879 = vmatprep.subr.bf16.mxu0 0
      %880 = vmatpush1.bf16.msra.mxu0 %v863
      %881 = vmatprep.subr.bf16.mxu0 0
      %882 = vmatpush2.bf16.msra.mxu0 0
      %883 = vmatprep.subr.bf16.mxu0 0
      %884 = vmatpush2.bf16.msra.mxu0 0
      %885 = vmatprep.subr.bf16.mxu0 0
      %886 = vmatpush2.bf16.msra.mxu0 0
      %887 = vmatprep.subr.bf16.mxu0 0
      %888 = vmatpush2.bf16.msra.mxu0 0
      %889 = vmatprep.subr.bf16.mxu0 0
      %890 = vmatpush2.bf16.msra.mxu0 0
      %891 = vmatprep.subr.bf16.mxu0 0
      %892 = vmatpush2.bf16.msra.mxu0 0
      %893 = vmatprep.subr.bf16.mxu0 0
      %894 = vmatpush2.bf16.msra.mxu0 0
      %895 = vmatprep.subr.bf16.mxu0 0
      %896 = vmatpush2.bf16.msra.mxu0 0
      %897 = vmatprep.mubr.bf16.mxu0 0
      %898 = vmatmul.mubr.bf16.gmra.mxu0 %v809
      %v899 = vpop.f32.mrf.mxu0
      %v900 = vadd.f32 %v625, %v899
      %v901 = vpop.f32.mrf.mxu0
      %v902 = vpop.f32.mrf.mxu0
      %v903 = vadd.f32 %v628, %v902
      %v904 = vpop.f32.mrf.mxu0
      %905 = vmatprep.mubr.bf16.mxu0 0
      %906 = vmatmul.mubr.bf16.gmra.mxu0 %v812
      %v907 = vpop.f32.mrf.mxu0
      %v908 = vadd.f32 %v633, %v907
      %v909 = vpop.f32.mrf.mxu0
      %v910 = vpop.f32.mrf.mxu0
      %v911 = vadd.f32 %v636, %v910
      %v912 = vpop.f32.mrf.mxu0
      %913 = vmatprep.mubr.bf16.mxu0 0
      %914 = vmatmul.mubr.bf16.gmra.mxu0 %v815
      %v915 = vpop.f32.mrf.mxu0
      %v916 = vadd.f32 %v641, %v915
      %v917 = vpop.f32.mrf.mxu0
      %v918 = vpop.f32.mrf.mxu0
      %v919 = vadd.f32 %v644, %v918
      %v920 = vpop.f32.mrf.mxu0
      %921 = vmatprep.mubr.bf16.mxu0 0
      %922 = vmatmul.mubr.bf16.gmra.mxu0 %v818
      %v923 = vpop.f32.mrf.mxu0
      %v924 = vadd.f32 %v649, %v923
      %v925 = vpop.f32.mrf.mxu0
      %v926 = vpop.f32.mrf.mxu0
      %v927 = vadd.f32 %v652, %v926
      %v928 = vpop.f32.mrf.mxu0
      %929 = vmatprep.mubr.bf16.mxu0 0
      %930 = vmatmul.mubr.bf16.gmra.mxu0 %v821
      %v931 = vpop.f32.mrf.mxu0
      %v932 = vadd.f32 %v657, %v931
      %v933 = vpop.f32.mrf.mxu0
      %v934 = vpop.f32.mrf.mxu0
      %v935 = vadd.f32 %v660, %v934
      %v936 = vpop.f32.mrf.mxu0
      %937 = vmatprep.mubr.bf16.mxu0 0
      %938 = vmatmul.mubr.bf16.gmra.mxu0 %v824
      %v939 = vpop.f32.mrf.mxu0
      %v940 = vadd.f32 %v665, %v939
      %v941 = vpop.f32.mrf.mxu0
      %v942 = vpop.f32.mrf.mxu0
      %v943 = vadd.f32 %v668, %v942
      %v944 = vpop.f32.mrf.mxu0
      %945 = vmatprep.mubr.bf16.mxu0 0
      %946 = vmatmul.mubr.bf16.gmra.mxu0 %v827
      %v947 = vpop.f32.mrf.mxu0
      %v948 = vadd.f32 %v673, %v947
      %v949 = vpop.f32.mrf.mxu0
      %v950 = vpop.f32.mrf.mxu0
      %v951 = vadd.f32 %v676, %v950
      %v952 = vpop.f32.mrf.mxu0
      %953 = vmatprep.mubr.bf16.mxu0 0
      %954 = vmatmul.mubr.bf16.gmra.mxu0 %v830
      %v955 = vpop.f32.mrf.mxu0
      %v956 = vadd.f32 %v681, %v955
      %v957 = vpop.f32.mrf.mxu0
      %v958 = vpop.f32.mrf.mxu0
      %v959 = vadd.f32 %v684, %v958
      %v960 = vpop.f32.mrf.mxu0
      %961 = vmatprep.mubr.bf16.mxu0 0
      %962 = vmatmul.mubr.bf16.gmra.mxu0 %v833
      %v963 = vpop.f32.mrf.mxu0
      %v964 = vadd.f32 %v689, %v963
      %v965 = vpop.f32.mrf.mxu0
      %v966 = vpop.f32.mrf.mxu0
      %v967 = vadd.f32 %v692, %v966
      %v968 = vpop.f32.mrf.mxu0
      %969 = vmatprep.mubr.bf16.mxu0 0
      %970 = vmatmul.mubr.bf16.gmra.mxu0 %v836
      %v971 = vpop.f32.mrf.mxu0
      %v972 = vadd.f32 %v697, %v971
      %v973 = vpop.f32.mrf.mxu0
      %v974 = vpop.f32.mrf.mxu0
      %v975 = vadd.f32 %v700, %v974
      %v976 = vpop.f32.mrf.mxu0
      %977 = vmatprep.mubr.bf16.mxu0 0
      %978 = vmatmul.mubr.bf16.gmra.mxu0 %v839
      %v979 = vpop.f32.mrf.mxu0
      %v980 = vadd.f32 %v705, %v979
      %v981 = vpop.f32.mrf.mxu0
      %v982 = vpop.f32.mrf.mxu0
      %v983 = vadd.f32 %v708, %v982
      %v984 = vpop.f32.mrf.mxu0
      %985 = vmatprep.mubr.bf16.mxu0 0
      %986 = vmatmul.mubr.bf16.gmra.mxu0 %v842
      %v987 = vpop.f32.mrf.mxu0
      %v988 = vadd.f32 %v713, %v987
      %v989 = vpop.f32.mrf.mxu0
      %v990 = vpop.f32.mrf.mxu0
      %v991 = vadd.f32 %v716, %v990
      %v992 = vpop.f32.mrf.mxu0
      %993 = vmatprep.mubr.bf16.mxu0 0
      %994 = vmatmul.mubr.bf16.gmra.mxu0 %v845
      %v995 = vpop.f32.mrf.mxu0
      %v996 = vadd.f32 %v721, %v995
      %v997 = vpop.f32.mrf.mxu0
      %v998 = vpop.f32.mrf.mxu0
      %v999 = vadd.f32 %v724, %v998
      %v1000 = vpop.f32.mrf.mxu0
      %1001 = vmatprep.mubr.bf16.mxu0 0
      %1002 = vmatmul.mubr.bf16.gmra.mxu0 %v848
      %v1003 = vpop.f32.mrf.mxu0
      %v1004 = vadd.f32 %v729, %v1003
      %v1005 = vpop.f32.mrf.mxu0
      %v1006 = vpop.f32.mrf.mxu0
      %v1007 = vadd.f32 %v732, %v1006
      %v1008 = vpop.f32.mrf.mxu0
      %1009 = vmatprep.mubr.bf16.mxu0 0
      %1010 = vmatmul.mubr.bf16.gmra.mxu0 %v851
      %v1011 = vpop.f32.mrf.mxu0
      %v1012 = vadd.f32 %v737, %v1011
      %v1013 = vpop.f32.mrf.mxu0
      %v1014 = vpop.f32.mrf.mxu0
      %v1015 = vadd.f32 %v740, %v1014
      %v1016 = vpop.f32.mrf.mxu0
      %1017 = vmatprep.mubr.bf16.mxu0 0
      %1018 = vmatmul.mubr.bf16.gmra.mxu0 %v854
      %v1019 = vpop.f32.mrf.mxu0
      %v1020 = vadd.f32 %v745, %v1019
      %v1021 = vpop.f32.mrf.mxu0
      %v1022 = vpop.f32.mrf.mxu0
      %v1023 = vadd.f32 %v748, %v1022
      %v1024 = vpop.f32.mrf.mxu0
      %1025 = vmatprep.mubr.bf16.mxu0 0
      %1026 = vmatmul.mubr.bf16.gmra.mxu0 %v857
      %v1027 = vpop.f32.mrf.mxu0
      %v1028 = vadd.f32 %v753, %v1027
      %v1029 = vpop.f32.mrf.mxu0
      %v1030 = vpop.f32.mrf.mxu0
      %v1031 = vadd.f32 %v756, %v1030
      %v1032 = vpop.f32.mrf.mxu0
      %1033 = vmatprep.mubr.bf16.mxu0 0
      %1034 = vmatmul.mubr.bf16.gmra.mxu0 %v860
      %v1035 = vpop.f32.mrf.mxu0
      %v1036 = vadd.f32 %v761, %v1035
      %v1037 = vpop.f32.mrf.mxu0
      %v1038 = vpop.f32.mrf.mxu0
      %v1039 = vadd.f32 %v764, %v1038
      %v1040 = vpop.f32.mrf.mxu0
      %1041 = vdwg.mxu0
      %v1042 = vld [vmem:[%s219 + $0x8] sm:$0xc]
      %s1043 = scalar_lea.vmem %s1, 8
      %v1044 = vld [vmem:[%s1043] sm:$0xf]
      %v1046 = vunpack.c.l.b16 %v1042
      %v1047 = vpack.c.b16 %v305, %v1046
      %vm1048 = vcmask 1045504
      %v1049 = vrot.slane %v1047, 2
      %v1050 = vrot.slane %v342, 2
      %v1051 = vsel %vm1048, %v1049, %v1050
      %v1052 = vrot.slane %v343, 2
      %v1053 = vsel %vm1048, %v1050, %v1052
      %v1054 = vrot.slane %v344, 2
      %v1055 = vsel %vm1048, %v1052, %v1054
      %v1056 = vrot.slane %v345, 2
      %v1057 = vsel %vm1048, %v1054, %v1056
      %v1058 = vrot.slane %v346, 2
      %v1059 = vsel %vm1048, %v1056, %v1058
      %v1060 = vrot.slane %v347, 2
      %v1061 = vsel %vm1048, %v1058, %v1060
      %v1062 = vrot.slane %v348, 2
      %v1063 = vsel %vm1048, %v1060, %v1062
      %v1064 = vrot.slane %v349, 2
      %v1065 = vsel %vm1048, %v1062, %v1064
      %v1066 = vrot.slane %v350, 2
      %v1067 = vsel %vm1048, %v1064, %v1066
      %v1068 = vrot.slane %v351, 2
      %v1069 = vsel %vm1048, %v1066, %v1068
      %v1070 = vrot.slane %v352, 2
      %v1071 = vsel %vm1048, %v1068, %v1070
      %v1072 = vrot.slane %v353, 2
      %v1073 = vsel %vm1048, %v1070, %v1072
      %v1074 = vrot.slane %v354, 2
      %v1075 = vsel %vm1048, %v1072, %v1074
      %v1076 = vrot.slane %v355, 2
      %v1077 = vsel %vm1048, %v1074, %v1076
      %v1078 = vrot.slane %v356, 2
      %v1079 = vsel %vm1048, %v1076, %v1078
      %v1080 = vrot.slane %v357, 2
      %v1081 = vsel %vm1048, %v1078, %v1080
      %v1082 = vrot.slane %v358, 2
      %v1083 = vsel %vm1048, %v1080, %v1082
      %v1084 = vrot.slane %v359, 2
      %v1085 = vsel %vm1048, %v1082, %v1084
      %v1087 = vsel %vm531, %v1051, 0
      %v1090 = vsel %vm531, %v1053, 0
      %v1093 = vsel %vm531, %v1055, 0
      %v1096 = vsel %vm531, %v1057, 0
      %v1099 = vsel %vm531, %v1059, 0
      %v1102 = vsel %vm531, %v1061, 0
      %v1105 = vsel %vm531, %v1063, 0
      %v1108 = vsel %vm531, %v1065, 0
      %v1111 = vsel %vm531, %v1067, 0
      %v1114 = vsel %vm531, %v1069, 0
      %v1117 = vsel %vm531, %v1071, 0
      %v1120 = vsel %vm531, %v1073, 0
      %v1123 = vsel %vm531, %v1075, 0
      %v1126 = vsel %vm531, %v1077, 0
      %v1129 = vsel %vm531, %v1079, 0
      %v1132 = vsel %vm531, %v1081, 0
      %v1135 = vsel %vm531, %v1083, 0
      %v1138 = vsel %vm531, %v1085, 0
      %v1141 = vsel %vm586, %v1044, 0
      %1143 = vmatprep.subr.bf16.mxu0 0
      %1144 = vmatpush1.bf16.msra.mxu0 0
      %1145 = vmatprep.subr.bf16.mxu0 0
      %1146 = vmatpush1.bf16.msra.mxu0 0
      %1147 = vmatprep.subr.bf16.mxu0 0
      %1148 = vmatpush1.bf16.msra.mxu0 0
      %1149 = vmatprep.subr.bf16.mxu0 0
      %1150 = vmatpush1.bf16.msra.mxu0 0
      %1151 = vmatprep.subr.bf16.mxu0 0
      %1152 = vmatpush1.bf16.msra.mxu0 0
      %1153 = vmatprep.subr.bf16.mxu0 0
      %1154 = vmatpush1.bf16.msra.mxu0 0
      %1155 = vmatprep.subr.bf16.mxu0 0
      %1156 = vmatpush1.bf16.msra.mxu0 0
      %1157 = vmatprep.subr.bf16.mxu0 0
      %1158 = vmatpush1.bf16.msra.mxu0 %v1141
      %1159 = vmatprep.subr.bf16.mxu0 0
      %1160 = vmatpush2.bf16.msra.mxu0 0
      %1161 = vmatprep.subr.bf16.mxu0 0
      %1162 = vmatpush2.bf16.msra.mxu0 0
      %1163 = vmatprep.subr.bf16.mxu0 0
      %1164 = vmatpush2.bf16.msra.mxu0 0
      %1165 = vmatprep.subr.bf16.mxu0 0
      %1166 = vmatpush2.bf16.msra.mxu0 0
      %1167 = vmatprep.subr.bf16.mxu0 0
      %1168 = vmatpush2.bf16.msra.mxu0 0
      %1169 = vmatprep.subr.bf16.mxu0 0
      %1170 = vmatpush2.bf16.msra.mxu0 0
      %1171 = vmatprep.subr.bf16.mxu0 0
      %1172 = vmatpush2.bf16.msra.mxu0 0
      %1173 = vmatprep.subr.bf16.mxu0 0
      %1174 = vmatpush2.bf16.msra.mxu0 0
      %1175 = vmatprep.mubr.bf16.mxu0 0
      %1176 = vmatmul.mubr.bf16.gmra.mxu0 %v1087
      %v1177 = vpop.f32.mrf.mxu0
      %v1178 = vadd.f32 0.0, %v1177
      %v1179 = vpop.f32.mrf.mxu0
      %v1180 = vpop.f32.mrf.mxu0
      %v1181 = vadd.f32 0.0, %v1180
      %v1182 = vpop.f32.mrf.mxu0
      %1183 = vmatprep.mubr.bf16.mxu0 0
      %1184 = vmatmul.mubr.bf16.gmra.mxu0 %v1090
      %v1185 = vpop.f32.mrf.mxu0
      %v1186 = vadd.f32 0.0, %v1185
      %v1187 = vpop.f32.mrf.mxu0
      %v1188 = vpop.f32.mrf.mxu0
      %v1189 = vadd.f32 0.0, %v1188
      %v1190 = vpop.f32.mrf.mxu0
      %1191 = vmatprep.mubr.bf16.mxu0 0
      %1192 = vmatmul.mubr.bf16.gmra.mxu0 %v1093
      %v1193 = vpop.f32.mrf.mxu0
      %v1194 = vadd.f32 0.0, %v1193
      %v1195 = vpop.f32.mrf.mxu0
      %v1196 = vpop.f32.mrf.mxu0
      %v1197 = vadd.f32 0.0, %v1196
      %v1198 = vpop.f32.mrf.mxu0
      %1199 = vmatprep.mubr.bf16.mxu0 0
      %1200 = vmatmul.mubr.bf16.gmra.mxu0 %v1096
      %v1201 = vpop.f32.mrf.mxu0
      %v1202 = vadd.f32 0.0, %v1201
      %v1203 = vpop.f32.mrf.mxu0
      %v1204 = vpop.f32.mrf.mxu0
      %v1205 = vadd.f32 0.0, %v1204
      %v1206 = vpop.f32.mrf.mxu0
      %1207 = vmatprep.mubr.bf16.mxu0 0
      %1208 = vmatmul.mubr.bf16.gmra.mxu0 %v1099
      %v1209 = vpop.f32.mrf.mxu0
      %v1210 = vadd.f32 0.0, %v1209
      %v1211 = vpop.f32.mrf.mxu0
      %v1212 = vpop.f32.mrf.mxu0
      %v1213 = vadd.f32 0.0, %v1212
      %v1214 = vpop.f32.mrf.mxu0
      %1215 = vmatprep.mubr.bf16.mxu0 0
      %1216 = vmatmul.mubr.bf16.gmra.mxu0 %v1102
      %v1217 = vpop.f32.mrf.mxu0
      %v1218 = vadd.f32 0.0, %v1217
      %v1219 = vpop.f32.mrf.mxu0
      %v1220 = vpop.f32.mrf.mxu0
      %v1221 = vadd.f32 0.0, %v1220
      %v1222 = vpop.f32.mrf.mxu0
      %1223 = vmatprep.mubr.bf16.mxu0 0
      %1224 = vmatmul.mubr.bf16.gmra.mxu0 %v1105
      %v1225 = vpop.f32.mrf.mxu0
      %v1226 = vadd.f32 0.0, %v1225
      %v1227 = vpop.f32.mrf.mxu0
      %v1228 = vpop.f32.mrf.mxu0
      %v1229 = vadd.f32 0.0, %v1228
      %v1230 = vpop.f32.mrf.mxu0
      %1231 = vmatprep.mubr.bf16.mxu0 0
      %1232 = vmatmul.mubr.bf16.gmra.mxu0 %v1108
      %v1233 = vpop.f32.mrf.mxu0
      %v1234 = vadd.f32 0.0, %v1233
      %v1235 = vpop.f32.mrf.mxu0
      %v1236 = vpop.f32.mrf.mxu0
      %v1237 = vadd.f32 0.0, %v1236
      %v1238 = vpop.f32.mrf.mxu0
      %1239 = vmatprep.mubr.bf16.mxu0 0
      %1240 = vmatmul.mubr.bf16.gmra.mxu0 %v1111
      %v1241 = vpop.f32.mrf.mxu0
      %v1242 = vadd.f32 0.0, %v1241
      %v1243 = vpop.f32.mrf.mxu0
      %v1244 = vpop.f32.mrf.mxu0
      %v1245 = vadd.f32 0.0, %v1244
      %v1246 = vpop.f32.mrf.mxu0
      %1247 = vmatprep.mubr.bf16.mxu0 0
      %1248 = vmatmul.mubr.bf16.gmra.mxu0 %v1114
      %v1249 = vpop.f32.mrf.mxu0
      %v1250 = vadd.f32 0.0, %v1249
      %v1251 = vpop.f32.mrf.mxu0
      %v1252 = vpop.f32.mrf.mxu0
      %v1253 = vadd.f32 0.0, %v1252
      %v1254 = vpop.f32.mrf.mxu0
      %1255 = vmatprep.mubr.bf16.mxu0 0
      %1256 = vmatmul.mubr.bf16.gmra.mxu0 %v1117
      %v1257 = vpop.f32.mrf.mxu0
      %v1258 = vadd.f32 0.0, %v1257
      %v1259 = vpop.f32.mrf.mxu0
      %v1260 = vpop.f32.mrf.mxu0
      %v1261 = vadd.f32 0.0, %v1260
      %v1262 = vpop.f32.mrf.mxu0
      %1263 = vmatprep.mubr.bf16.mxu0 0
      %1264 = vmatmul.mubr.bf16.gmra.mxu0 %v1120
      %v1265 = vpop.f32.mrf.mxu0
      %v1266 = vadd.f32 0.0, %v1265
      %v1267 = vpop.f32.mrf.mxu0
      %v1268 = vpop.f32.mrf.mxu0
      %v1269 = vadd.f32 0.0, %v1268
      %v1270 = vpop.f32.mrf.mxu0
      %1271 = vmatprep.mubr.bf16.mxu0 0
      %1272 = vmatmul.mubr.bf16.gmra.mxu0 %v1123
      %v1273 = vpop.f32.mrf.mxu0
      %v1274 = vadd.f32 0.0, %v1273
      %v1275 = vpop.f32.mrf.mxu0
      %v1276 = vpop.f32.mrf.mxu0
      %v1277 = vadd.f32 0.0, %v1276
      %v1278 = vpop.f32.mrf.mxu0
      %1279 = vmatprep.mubr.bf16.mxu0 0
      %1280 = vmatmul.mubr.bf16.gmra.mxu0 %v1126
      %v1281 = vpop.f32.mrf.mxu0
      %v1282 = vadd.f32 0.0, %v1281
      %v1283 = vpop.f32.mrf.mxu0
      %v1284 = vpop.f32.mrf.mxu0
      %v1285 = vadd.f32 0.0, %v1284
      %v1286 = vpop.f32.mrf.mxu0
      %1287 = vmatprep.mubr.bf16.mxu0 0
      %1288 = vmatmul.mubr.bf16.gmra.mxu0 %v1129
      %v1289 = vpop.f32.mrf.mxu0
      %v1290 = vadd.f32 0.0, %v1289
      %v1291 = vpop.f32.mrf.mxu0
      %v1292 = vpop.f32.mrf.mxu0
      %v1293 = vadd.f32 0.0, %v1292
      %v1294 = vpop.f32.mrf.mxu0
      %1295 = vmatprep.mubr.bf16.mxu0 0
      %1296 = vmatmul.mubr.bf16.gmra.mxu0 %v1132
      %v1297 = vpop.f32.mrf.mxu0
      %v1298 = vadd.f32 0.0, %v1297
      %v1299 = vpop.f32.mrf.mxu0
      %v1300 = vpop.f32.mrf.mxu0
      %v1301 = vadd.f32 0.0, %v1300
      %v1302 = vpop.f32.mrf.mxu0
      %1303 = vmatprep.mubr.bf16.mxu0 0
      %1304 = vmatmul.mubr.bf16.gmra.mxu0 %v1135
      %v1305 = vpop.f32.mrf.mxu0
      %v1306 = vadd.f32 0.0, %v1305
      %v1307 = vpop.f32.mrf.mxu0
      %v1308 = vpop.f32.mrf.mxu0
      %v1309 = vadd.f32 0.0, %v1308
      %v1310 = vpop.f32.mrf.mxu0
      %1311 = vmatprep.mubr.bf16.mxu0 0
      %1312 = vmatmul.mubr.bf16.gmra.mxu0 %v1138
      %v1313 = vpop.f32.mrf.mxu0
      %v1314 = vadd.f32 0.0, %v1313
      %v1315 = vpop.f32.mrf.mxu0
      %v1316 = vpop.f32.mrf.mxu0
      %v1317 = vadd.f32 0.0, %v1316
      %v1318 = vpop.f32.mrf.mxu0
      %1319 = vdwg.mxu0
      %v1320 = vadd.f32 %v900, %v1178
      %v1321 = vadd.f32 %v903, %v1181
      %v1322 = vadd.f32 %v908, %v1186
      %v1323 = vadd.f32 %v911, %v1189
      %v1324 = vadd.f32 %v916, %v1194
      %v1325 = vadd.f32 %v919, %v1197
      %v1326 = vadd.f32 %v924, %v1202
      %v1327 = vadd.f32 %v927, %v1205
      %v1328 = vadd.f32 %v932, %v1210
      %v1329 = vadd.f32 %v935, %v1213
      %v1330 = vadd.f32 %v940, %v1218
      %v1331 = vadd.f32 %v943, %v1221
      %v1332 = vadd.f32 %v948, %v1226
      %v1333 = vadd.f32 %v951, %v1229
      %v1334 = vadd.f32 %v956, %v1234
      %v1335 = vadd.f32 %v959, %v1237
      %v1336 = vadd.f32 %v964, %v1242
      %v1337 = vadd.f32 %v967, %v1245
      %v1338 = vadd.f32 %v972, %v1250
      %v1339 = vadd.f32 %v975, %v1253
      %v1340 = vadd.f32 %v980, %v1258
      %v1341 = vadd.f32 %v983, %v1261
      %v1342 = vadd.f32 %v988, %v1266
      %v1343 = vadd.f32 %v991, %v1269
      %v1344 = vadd.f32 %v996, %v1274
      %v1345 = vadd.f32 %v999, %v1277
      %v1346 = vadd.f32 %v1004, %v1282
      %v1347 = vadd.f32 %v1007, %v1285
      %v1348 = vadd.f32 %v1012, %v1290
      %v1349 = vadd.f32 %v1015, %v1293
      %v1350 = vadd.f32 %v1020, %v1298
      %v1351 = vadd.f32 %v1023, %v1301
      %v1352 = vadd.f32 %v1028, %v1306
      %v1353 = vadd.f32 %v1031, %v1309
      %v1354 = vadd.f32 %v1036, %v1314
      %v1355 = vadd.f32 %v1039, %v1317
      %v1356 = vld [vmem:[%s3] sm:$0x1]
      %v1358 = vlaneseq
      %v1359 = vshrl.u32 %v1358, 7
      %v1360 = vsub.s32 0, %v1359
      %v1361 = vrot.slane %v1356, %v1360
      %v1363 = vadd.f32 %v1320, %v1361
      %v1364 = vadd.f32 %v1321, %v1361
      %v1365 = vadd.f32 %v1322, %v1361
      %v1366 = vadd.f32 %v1323, %v1361
      %v1367 = vadd.f32 %v1324, %v1361
      %v1368 = vadd.f32 %v1325, %v1361
      %v1369 = vadd.f32 %v1326, %v1361
      %v1370 = vadd.f32 %v1327, %v1361
      %v1371 = vadd.f32 %v1328, %v1361
      %v1372 = vadd.f32 %v1329, %v1361
      %v1373 = vadd.f32 %v1330, %v1361
      %v1374 = vadd.f32 %v1331, %v1361
      %v1375 = vadd.f32 %v1332, %v1361
      %v1376 = vadd.f32 %v1333, %v1361
      %v1377 = vadd.f32 %v1334, %v1361
      %v1378 = vadd.f32 %v1335, %v1361
      %v1379 = vadd.f32 %v1336, %v1361
      %v1380 = vadd.f32 %v1337, %v1361
      %v1381 = vadd.f32 %v1338, %v1361
      %v1382 = vadd.f32 %v1339, %v1361
      %v1383 = vadd.f32 %v1340, %v1361
      %v1384 = vadd.f32 %v1341, %v1361
      %v1385 = vadd.f32 %v1342, %v1361
      %v1386 = vadd.f32 %v1343, %v1361
      %v1387 = vadd.f32 %v1344, %v1361
      %v1388 = vadd.f32 %v1345, %v1361
      %v1389 = vadd.f32 %v1346, %v1361
      %v1390 = vadd.f32 %v1347, %v1361
      %v1391 = vadd.f32 %v1348, %v1361
      %v1392 = vadd.f32 %v1349, %v1361
      %v1393 = vadd.f32 %v1350, %v1361
      %v1394 = vadd.f32 %v1351, %v1361
      %v1395 = vadd.f32 %v1352, %v1361
      %v1396 = vadd.f32 %v1353, %v1361
      %v1397 = vadd.f32 %v1354, %v1361
      %v1398 = vadd.f32 %v1355, %v1361
      %v1399 = vmax.f32 %v1363, 0.0
      %v1400 = vmax.f32 %v1364, 0.0
      %v1401 = vmax.f32 %v1365, 0.0
      %v1402 = vmax.f32 %v1366, 0.0
      %v1403 = vmax.f32 %v1367, 0.0
      %v1404 = vmax.f32 %v1368, 0.0
      %v1405 = vmax.f32 %v1369, 0.0
      %v1406 = vmax.f32 %v1370, 0.0
      %v1407 = vmax.f32 %v1371, 0.0
      %v1408 = vmax.f32 %v1372, 0.0
      %v1409 = vmax.f32 %v1373, 0.0
      %v1410 = vmax.f32 %v1374, 0.0
      %v1411 = vmax.f32 %v1375, 0.0
      %v1412 = vmax.f32 %v1376, 0.0
      %v1413 = vmax.f32 %v1377, 0.0
      %v1414 = vmax.f32 %v1378, 0.0
      %v1415 = vmax.f32 %v1379, 0.0
      %v1416 = vmax.f32 %v1380, 0.0
      %v1417 = vmax.f32 %v1381, 0.0
      %v1418 = vmax.f32 %v1382, 0.0
      %v1419 = vmax.f32 %v1383, 0.0
      %v1420 = vmax.f32 %v1384, 0.0
      %v1421 = vmax.f32 %v1385, 0.0
      %v1422 = vmax.f32 %v1386, 0.0
      %v1423 = vmax.f32 %v1387, 0.0
      %v1424 = vmax.f32 %v1388, 0.0
      %v1425 = vmax.f32 %v1389, 0.0
      %v1426 = vmax.f32 %v1390, 0.0
      %v1427 = vmax.f32 %v1391, 0.0
      %v1428 = vmax.f32 %v1392, 0.0
      %v1429 = vmax.f32 %v1393, 0.0
      %v1430 = vmax.f32 %v1394, 0.0
      %v1431 = vmax.f32 %v1395, 0.0
      %v1432 = vmax.f32 %v1396, 0.0
      %v1433 = vmax.f32 %v1397, 0.0
      %v1434 = vmax.f32 %v1398, 0.0
      %1435 = vst.msk [vmem:[%s224] sm:$0xff] %vm531, %v1399
      %1436 = vst.msk [vmem:[%s224 + $0x8] sm:$0xff] %vm531, %v1400
      %1437 = vst.msk [vmem:[%s224 + $0x10] sm:$0xff] %vm531, %v1401
      %1438 = vst.msk [vmem:[%s224 + $0x18] sm:$0xff] %vm531, %v1402
      %1439 = vst.msk [vmem:[%s224 + $0x20] sm:$0xff] %vm531, %v1403
      %1440 = vst.msk [vmem:[%s224 + $0x28] sm:$0xff] %vm531, %v1404
      %1441 = vst.msk [vmem:[%s224 + $0x30] sm:$0xff] %vm531, %v1405
      %1442 = vst.msk [vmem:[%s224 + $0x38] sm:$0xff] %vm531, %v1406
      %1443 = vst.msk [vmem:[%s224 + $0x40] sm:$0xff] %vm531, %v1407
      %1444 = vst.msk [vmem:[%s224 + $0x48] sm:$0xff] %vm531, %v1408
      %1445 = vst.msk [vmem:[%s224 + $0x50] sm:$0xff] %vm531, %v1409
      %1446 = vst.msk [vmem:[%s224 + $0x58] sm:$0xff] %vm531, %v1410
      %1447 = vst.msk [vmem:[%s224 + $0x60] sm:$0xff] %vm531, %v1411
      %1448 = vst.msk [vmem:[%s224 + $0x68] sm:$0xff] %vm531, %v1412
      %1449 = vst.msk [vmem:[%s224 + $0x70] sm:$0xff] %vm531, %v1413
      %1450 = vst.msk [vmem:[%s224 + $0x78] sm:$0xff] %vm531, %v1414
      %1451 = vst.msk [vmem:[%s224 + $0x80] sm:$0xff] %vm531, %v1415
      %1452 = vst.msk [vmem:[%s224 + $0x88] sm:$0xff] %vm531, %v1416
      %1453 = vst.msk [vmem:[%s224 + $0x90] sm:$0xff] %vm531, %v1417
      %1454 = vst.msk [vmem:[%s224 + $0x98] sm:$0xff] %vm531, %v1418
      %1455 = vst.msk [vmem:[%s224 + $0xa0] sm:$0xff] %vm531, %v1419
      %1456 = vst.msk [vmem:[%s224 + $0xa8] sm:$0xff] %vm531, %v1420
      %1457 = vst.msk [vmem:[%s224 + $0xb0] sm:$0xff] %vm531, %v1421
      %1458 = vst.msk [vmem:[%s224 + $0xb8] sm:$0xff] %vm531, %v1422
      %1459 = vst.msk [vmem:[%s224 + $0xc0] sm:$0xff] %vm531, %v1423
      %1460 = vst.msk [vmem:[%s224 + $0xc8] sm:$0xff] %vm531, %v1424
      %1461 = vst.msk [vmem:[%s224 + $0xd0] sm:$0xff] %vm531, %v1425
      %1462 = vst.msk [vmem:[%s224 + $0xd8] sm:$0xff] %vm531, %v1426
      %1463 = vst.msk [vmem:[%s224 + $0xe0] sm:$0xff] %vm531, %v1427
      %1464 = vst.msk [vmem:[%s224 + $0xe8] sm:$0xff] %vm531, %v1428
      %1465 = vst.msk [vmem:[%s224 + $0xf0] sm:$0xff] %vm531, %v1429
      %1466 = vst.msk [vmem:[%s224 + $0xf8] sm:$0xff] %vm531, %v1430
      %1467 = vst.msk [vmem:[%s224 + $0x100] sm:$0xff] %vm531, %v1431
      %1468 = vst.msk [vmem:[%s224 + $0x108] sm:$0xff] %vm531, %v1432
      %1469 = vst.msk [vmem:[%s224 + $0x110] sm:$0xff] %vm531, %v1433
      %1470 = vst.msk [vmem:[%s224 + $0x118] sm:$0xff] %vm531, %v1434
      %v1471 = vld [vmem:[%s219] sm:$0xf]
      %v1472 = vld [vmem:[%s219 + $0x4] sm:$0xf]
      %v1473 = vld [vmem:[%s219 + $0x8] sm:$0xf]
      %v1474 = vld [vmem:[%s219 + $0xc] sm:$0xf]
      %v1475 = vld [vmem:[%s219 + $0x10] sm:$0xf]
      %v1476 = vld [vmem:[%s219 + $0x14] sm:$0xf]
      %v1477 = vld [vmem:[%s219 + $0x18] sm:$0xf]
      %v1478 = vld [vmem:[%s219 + $0x1c] sm:$0xf]
      %v1479 = vld [vmem:[%s219 + $0x20] sm:$0xf]
      %v1480 = vld [vmem:[%s219 + $0x24] sm:$0xf]
      %v1481 = vld [vmem:[%s219 + $0x28] sm:$0xf]
      %v1482 = vld [vmem:[%s219 + $0x2c] sm:$0xf]
      %v1483 = vld [vmem:[%s219 + $0x30] sm:$0xf]
      %v1484 = vld [vmem:[%s219 + $0x34] sm:$0xf]
      %v1485 = vld [vmem:[%s219 + $0x38] sm:$0xf]
      %v1486 = vld [vmem:[%s219 + $0x3c] sm:$0xf]
      %v1487 = vld [vmem:[%s219 + $0x40] sm:$0xf]
      %v1488 = vld [vmem:[%s219 + $0x44] sm:$0xf]
      %v1489 = vld [vmem:[%s219 + $0x48] sm:$0xf]
      %v1490 = vld [vmem:[%s219 + $0x4c] sm:$0xf]
      %v1491 = vld [vmem:[%s219 + $0x50] sm:$0xf]
      %v1492 = vld [vmem:[%s219 + $0x54] sm:$0xf]
      %v1493 = vld [vmem:[%s219 + $0x58] sm:$0xf]
      %v1494 = vld [vmem:[%s219 + $0x5c] sm:$0xf]
      %v1495 = vld [vmem:[%s219 + $0x60] sm:$0xf]
      %v1496 = vld [vmem:[%s219 + $0x64] sm:$0xf]
      %v1497 = vld [vmem:[%s219 + $0x68] sm:$0xf]
      %v1498 = vld [vmem:[%s219 + $0x6c] sm:$0xf]
      %v1499 = vld [vmem:[%s219 + $0x70] sm:$0xf]
      %v1500 = vld [vmem:[%s219 + $0x74] sm:$0xf]
      %v1501 = vld [vmem:[%s219 + $0x78] sm:$0xf]
      %v1502 = vld [vmem:[%s219 + $0x7c] sm:$0xf]
      %v1503 = vld [vmem:[%s219 + $0x80] sm:$0xf]
      %v1504 = vld [vmem:[%s219 + $0x84] sm:$0xf]
      %v1505 = vld [vmem:[%s219 + $0x88] sm:$0xf]
      %v1506 = vld [vmem:[%s219 + $0x8c] sm:$0xf]
      %v1507 = vld [vmem:[%s219 + $0x90] sm:$0x1]
      %v1508 = vld [vmem:[%s2] sm:$0xf]
      %v1509 = vld [vmem:[%s219 + $0x8] sm:$0xe]
      %v1510 = vld [vmem:[%s219 + $0x90] sm:$0xf]
      %v1511 = vld [vmem:[%s219 + $0x94] sm:$0xf]
      %v1512 = vld [vmem:[%s219 + $0x98] sm:$0x3]
      %s1513 = scalar_lea.vmem %s2, 4
      %v1514 = vld [vmem:[%s1513] sm:$0xf]
      %v1552 = vunpack.c.l.b16 %v1509
      %v1553 = vunpack.c.l.b16 %v1474
      %v1554 = vunpack.c.l.b16 %v1475
      %v1555 = vunpack.c.l.b16 %v1476
      %v1556 = vunpack.c.l.b16 %v1477
      %v1557 = vunpack.c.l.b16 %v1478
      %v1558 = vunpack.c.l.b16 %v1479
      %v1559 = vunpack.c.l.b16 %v1480
      %v1560 = vunpack.c.l.b16 %v1481
      %v1561 = vunpack.c.l.b16 %v1482
      %v1562 = vunpack.c.l.b16 %v1483
      %v1563 = vunpack.c.l.b16 %v1484
      %v1564 = vunpack.c.l.b16 %v1485
      %v1565 = vunpack.c.l.b16 %v1486
      %v1566 = vunpack.c.l.b16 %v1487
      %v1567 = vunpack.c.l.b16 %v1488
      %v1568 = vunpack.c.l.b16 %v1489
      %v1569 = vunpack.c.l.b16 %v1490
      %v1570 = vunpack.c.l.b16 %v1491
      %v1571 = vunpack.c.l.b16 %v1492
      %v1572 = vunpack.c.l.b16 %v1493
      %v1573 = vunpack.c.l.b16 %v1494
      %v1574 = vunpack.c.l.b16 %v1495
      %v1575 = vunpack.c.l.b16 %v1496
      %v1576 = vunpack.c.l.b16 %v1497
      %v1577 = vunpack.c.l.b16 %v1498
      %v1578 = vunpack.c.l.b16 %v1499
      %v1579 = vunpack.c.l.b16 %v1500
      %v1580 = vunpack.c.l.b16 %v1501
      %v1581 = vunpack.c.l.b16 %v1502
      %v1582 = vunpack.c.l.b16 %v1503
      %v1583 = vunpack.c.l.b16 %v1504
      %v1584 = vunpack.c.l.b16 %v1505
      %v1585 = vunpack.c.l.b16 %v1506
      %v1586 = vunpack.c.l.b16 %v1510
      %v1587 = vunpack.c.l.b16 %v1511
      %v1588 = vunpack.c.l.b16 %v1512
      %v1589 = vpack.c.b16 %v1553, %v1552
      %v1590 = vpack.c.b16 %v1555, %v1554
      %v1591 = vpack.c.b16 %v1557, %v1556
      %v1592 = vpack.c.b16 %v1559, %v1558
      %v1593 = vpack.c.b16 %v1561, %v1560
      %v1594 = vpack.c.b16 %v1563, %v1562
      %v1595 = vpack.c.b16 %v1565, %v1564
      %v1596 = vpack.c.b16 %v1567, %v1566
      %v1597 = vpack.c.b16 %v1569, %v1568
      %v1598 = vpack.c.b16 %v1571, %v1570
      %v1599 = vpack.c.b16 %v1573, %v1572
      %v1600 = vpack.c.b16 %v1575, %v1574
      %v1601 = vpack.c.b16 %v1577, %v1576
      %v1602 = vpack.c.b16 %v1579, %v1578
      %v1603 = vpack.c.b16 %v1581, %v1580
      %v1604 = vpack.c.b16 %v1583, %v1582
      %v1605 = vpack.c.b16 %v1585, %v1584
      %v1606 = vpack.c.b16 %v1587, %v1586
      %v1607 = vpack.c.b16 %v1588, %v1588
      %v1609 = vshrl.u32 %v1589, 16
      %v1611 = vrot.slane %v1609, 1
      %v1612 = vshll.u32 %v1589, 16
      %v1614 = vrot.slane %v1612, 2
      %v1615 = vor.u32 %v1611, %v1614
      %v1617 = vshrl.u32 %v1590, 16
      %v1619 = vrot.slane %v1617, 1
      %v1620 = vshll.u32 %v1590, 16
      %v1622 = vrot.slane %v1620, 2
      %v1623 = vor.u32 %v1619, %v1622
      %v1624 = vsel %vm360, %v1615, %v1623
      %v1626 = vshrl.u32 %v1591, 16
      %v1628 = vrot.slane %v1626, 1
      %v1629 = vshll.u32 %v1591, 16
      %v1631 = vrot.slane %v1629, 2
      %v1632 = vor.u32 %v1628, %v1631
      %v1633 = vsel %vm360, %v1623, %v1632
      %v1635 = vshrl.u32 %v1592, 16
      %v1637 = vrot.slane %v1635, 1
      %v1638 = vshll.u32 %v1592, 16
      %v1640 = vrot.slane %v1638, 2
      %v1641 = vor.u32 %v1637, %v1640
      %v1642 = vsel %vm360, %v1632, %v1641
      %v1644 = vshrl.u32 %v1593, 16
      %v1646 = vrot.slane %v1644, 1
      %v1647 = vshll.u32 %v1593, 16
      %v1649 = vrot.slane %v1647, 2
      %v1650 = vor.u32 %v1646, %v1649
      %v1651 = vsel %vm360, %v1641, %v1650
      %v1653 = vshrl.u32 %v1594, 16
      %v1655 = vrot.slane %v1653, 1
      %v1656 = vshll.u32 %v1594, 16
      %v1658 = vrot.slane %v1656, 2
      %v1659 = vor.u32 %v1655, %v1658
      %v1660 = vsel %vm360, %v1650, %v1659
      %v1662 = vshrl.u32 %v1595, 16
      %v1664 = vrot.slane %v1662, 1
      %v1665 = vshll.u32 %v1595, 16
      %v1667 = vrot.slane %v1665, 2
      %v1668 = vor.u32 %v1664, %v1667
      %v1669 = vsel %vm360, %v1659, %v1668
      %v1671 = vshrl.u32 %v1596, 16
      %v1673 = vrot.slane %v1671, 1
      %v1674 = vshll.u32 %v1596, 16
      %v1676 = vrot.slane %v1674, 2
      %v1677 = vor.u32 %v1673, %v1676
      %v1678 = vsel %vm360, %v1668, %v1677
      %v1680 = vshrl.u32 %v1597, 16
      %v1682 = vrot.slane %v1680, 1
      %v1683 = vshll.u32 %v1597, 16
      %v1685 = vrot.slane %v1683, 2
      %v1686 = vor.u32 %v1682, %v1685
      %v1687 = vsel %vm360, %v1677, %v1686
      %v1689 = vshrl.u32 %v1598, 16
      %v1691 = vrot.slane %v1689, 1
      %v1692 = vshll.u32 %v1598, 16
      %v1694 = vrot.slane %v1692, 2
      %v1695 = vor.u32 %v1691, %v1694
      %v1696 = vsel %vm360, %v1686, %v1695
      %v1698 = vshrl.u32 %v1599, 16
      %v1700 = vrot.slane %v1698, 1
      %v1701 = vshll.u32 %v1599, 16
      %v1703 = vrot.slane %v1701, 2
      %v1704 = vor.u32 %v1700, %v1703
      %v1705 = vsel %vm360, %v1695, %v1704
      %v1707 = vshrl.u32 %v1600, 16
      %v1709 = vrot.slane %v1707, 1
      %v1710 = vshll.u32 %v1600, 16
      %v1712 = vrot.slane %v1710, 2
      %v1713 = vor.u32 %v1709, %v1712
      %v1714 = vsel %vm360, %v1704, %v1713
      %v1716 = vshrl.u32 %v1601, 16
      %v1718 = vrot.slane %v1716, 1
      %v1719 = vshll.u32 %v1601, 16
      %v1721 = vrot.slane %v1719, 2
      %v1722 = vor.u32 %v1718, %v1721
      %v1723 = vsel %vm360, %v1713, %v1722
      %v1725 = vshrl.u32 %v1602, 16
      %v1727 = vrot.slane %v1725, 1
      %v1728 = vshll.u32 %v1602, 16
      %v1730 = vrot.slane %v1728, 2
      %v1731 = vor.u32 %v1727, %v1730
      %v1732 = vsel %vm360, %v1722, %v1731
      %v1734 = vshrl.u32 %v1603, 16
      %v1736 = vrot.slane %v1734, 1
      %v1737 = vshll.u32 %v1603, 16
      %v1739 = vrot.slane %v1737, 2
      %v1740 = vor.u32 %v1736, %v1739
      %v1741 = vsel %vm360, %v1731, %v1740
      %v1743 = vshrl.u32 %v1604, 16
      %v1745 = vrot.slane %v1743, 1
      %v1746 = vshll.u32 %v1604, 16
      %v1748 = vrot.slane %v1746, 2
      %v1749 = vor.u32 %v1745, %v1748
      %v1750 = vsel %vm360, %v1740, %v1749
      %v1752 = vshrl.u32 %v1605, 16
      %v1754 = vrot.slane %v1752, 1
      %v1755 = vshll.u32 %v1605, 16
      %v1757 = vrot.slane %v1755, 2
      %v1758 = vor.u32 %v1754, %v1757
      %v1759 = vsel %vm360, %v1749, %v1758
      %v1761 = vshrl.u32 %v1606, 16
      %v1763 = vrot.slane %v1761, 1
      %v1764 = vshll.u32 %v1606, 16
      %v1766 = vrot.slane %v1764, 2
      %v1767 = vor.u32 %v1763, %v1766
      %v1768 = vsel %vm360, %v1758, %v1767
      %v1770 = vshrl.u32 %v1607, 16
      %v1772 = vrot.slane %v1770, 1
      %v1773 = vshll.u32 %v1607, 16
      %v1775 = vrot.slane %v1773, 2
      %v1776 = vor.u32 %v1772, %v1775
      %v1777 = vsel %vm360, %v1767, %v1776
      %v1779 = vsel %vm531, %v1624, 0
      %v1782 = vsel %vm531, %v1633, 0
      %v1785 = vsel %vm531, %v1642, 0
      %v1788 = vsel %vm531, %v1651, 0
      %v1791 = vsel %vm531, %v1660, 0
      %v1794 = vsel %vm531, %v1669, 0
      %v1797 = vsel %vm531, %v1678, 0
      %v1800 = vsel %vm531, %v1687, 0
      %v1803 = vsel %vm531, %v1696, 0
      %v1806 = vsel %vm531, %v1705, 0
      %v1809 = vsel %vm531, %v1714, 0
      %v1812 = vsel %vm531, %v1723, 0
      %v1815 = vsel %vm531, %v1732, 0
      %v1818 = vsel %vm531, %v1741, 0
      %v1821 = vsel %vm531, %v1750, 0
      %v1824 = vsel %vm531, %v1759, 0
      %v1827 = vsel %vm531, %v1768, 0
      %v1830 = vsel %vm531, %v1777, 0
      %v1833 = vsel %vm586, %v1514, 0
      %1835 = vmatprep.subr.bf16.mxu0 0
      %1836 = vmatpush1.bf16.msra.mxu0 0
      %1837 = vmatprep.subr.bf16.mxu0 0
      %1838 = vmatpush1.bf16.msra.mxu0 0
      %1839 = vmatprep.subr.bf16.mxu0 0
      %1840 = vmatpush1.bf16.msra.mxu0 0
      %1841 = vmatprep.subr.bf16.mxu0 0
      %1842 = vmatpush1.bf16.msra.mxu0 0
      %1843 = vmatprep.subr.bf16.mxu0 0
      %1844 = vmatpush1.bf16.msra.mxu0 0
      %1845 = vmatprep.subr.bf16.mxu0 0
      %1846 = vmatpush1.bf16.msra.mxu0 0
      %1847 = vmatprep.subr.bf16.mxu0 0
      %1848 = vmatpush1.bf16.msra.mxu0 0
      %1849 = vmatprep.subr.bf16.mxu0 0
      %1850 = vmatpush1.bf16.msra.mxu0 %v1833
      %1851 = vmatprep.subr.bf16.mxu0 0
      %1852 = vmatpush2.bf16.msra.mxu0 0
      %1853 = vmatprep.subr.bf16.mxu0 0
      %1854 = vmatpush2.bf16.msra.mxu0 0
      %1855 = vmatprep.subr.bf16.mxu0 0
      %1856 = vmatpush2.bf16.msra.mxu0 0
      %1857 = vmatprep.subr.bf16.mxu0 0
      %1858 = vmatpush2.bf16.msra.mxu0 0
      %1859 = vmatprep.subr.bf16.mxu0 0
      %1860 = vmatpush2.bf16.msra.mxu0 0
      %1861 = vmatprep.subr.bf16.mxu0 0
      %1862 = vmatpush2.bf16.msra.mxu0 0
      %1863 = vmatprep.subr.bf16.mxu0 0
      %1864 = vmatpush2.bf16.msra.mxu0 0
      %1865 = vmatprep.subr.bf16.mxu0 0
      %1866 = vmatpush2.bf16.msra.mxu0 0
      %1867 = vmatprep.mubr.bf16.mxu0 0
      %1868 = vmatmul.mubr.bf16.gmra.mxu0 %v1779
      %v1869 = vpop.f32.mrf.mxu0
      %v1870 = vadd.f32 0.0, %v1869
      %v1871 = vpop.f32.mrf.mxu0
      %v1872 = vpop.f32.mrf.mxu0
      %v1873 = vadd.f32 0.0, %v1872
      %v1874 = vpop.f32.mrf.mxu0
      %1875 = vmatprep.mubr.bf16.mxu0 0
      %1876 = vmatmul.mubr.bf16.gmra.mxu0 %v1782
      %v1877 = vpop.f32.mrf.mxu0
      %v1878 = vadd.f32 0.0, %v1877
      %v1879 = vpop.f32.mrf.mxu0
      %v1880 = vpop.f32.mrf.mxu0
      %v1881 = vadd.f32 0.0, %v1880
      %v1882 = vpop.f32.mrf.mxu0
      %1883 = vmatprep.mubr.bf16.mxu0 0
      %1884 = vmatmul.mubr.bf16.gmra.mxu0 %v1785
      %v1885 = vpop.f32.mrf.mxu0
      %v1886 = vadd.f32 0.0, %v1885
      %v1887 = vpop.f32.mrf.mxu0
      %v1888 = vpop.f32.mrf.mxu0
      %v1889 = vadd.f32 0.0, %v1888
      %v1890 = vpop.f32.mrf.mxu0
      %1891 = vmatprep.mubr.bf16.mxu0 0
      %1892 = vmatmul.mubr.bf16.gmra.mxu0 %v1788
      %v1893 = vpop.f32.mrf.mxu0
      %v1894 = vadd.f32 0.0, %v1893
      %v1895 = vpop.f32.mrf.mxu0
      %v1896 = vpop.f32.mrf.mxu0
      %v1897 = vadd.f32 0.0, %v1896
      %v1898 = vpop.f32.mrf.mxu0
      %1899 = vmatprep.mubr.bf16.mxu0 0
      %1900 = vmatmul.mubr.bf16.gmra.mxu0 %v1791
      %v1901 = vpop.f32.mrf.mxu0
      %v1902 = vadd.f32 0.0, %v1901
      %v1903 = vpop.f32.mrf.mxu0
      %v1904 = vpop.f32.mrf.mxu0
      %v1905 = vadd.f32 0.0, %v1904
      %v1906 = vpop.f32.mrf.mxu0
      %1907 = vmatprep.mubr.bf16.mxu0 0
      %1908 = vmatmul.mubr.bf16.gmra.mxu0 %v1794
      %v1909 = vpop.f32.mrf.mxu0
      %v1910 = vadd.f32 0.0, %v1909
      %v1911 = vpop.f32.mrf.mxu0
      %v1912 = vpop.f32.mrf.mxu0
      %v1913 = vadd.f32 0.0, %v1912
      %v1914 = vpop.f32.mrf.mxu0
      %1915 = vmatprep.mubr.bf16.mxu0 0
      %1916 = vmatmul.mubr.bf16.gmra.mxu0 %v1797
      %v1917 = vpop.f32.mrf.mxu0
      %v1918 = vadd.f32 0.0, %v1917
      %v1919 = vpop.f32.mrf.mxu0
      %v1920 = vpop.f32.mrf.mxu0
      %v1921 = vadd.f32 0.0, %v1920
      %v1922 = vpop.f32.mrf.mxu0
      %1923 = vmatprep.mubr.bf16.mxu0 0
      %1924 = vmatmul.mubr.bf16.gmra.mxu0 %v1800
      %v1925 = vpop.f32.mrf.mxu0
      %v1926 = vadd.f32 0.0, %v1925
      %v1927 = vpop.f32.mrf.mxu0
      %v1928 = vpop.f32.mrf.mxu0
      %v1929 = vadd.f32 0.0, %v1928
      %v1930 = vpop.f32.mrf.mxu0
      %1931 = vmatprep.mubr.bf16.mxu0 0
      %1932 = vmatmul.mubr.bf16.gmra.mxu0 %v1803
      %v1933 = vpop.f32.mrf.mxu0
      %v1934 = vadd.f32 0.0, %v1933
      %v1935 = vpop.f32.mrf.mxu0
      %v1936 = vpop.f32.mrf.mxu0
      %v1937 = vadd.f32 0.0, %v1936
      %v1938 = vpop.f32.mrf.mxu0
      %1939 = vmatprep.mubr.bf16.mxu0 0
      %1940 = vmatmul.mubr.bf16.gmra.mxu0 %v1806
      %v1941 = vpop.f32.mrf.mxu0
      %v1942 = vadd.f32 0.0, %v1941
      %v1943 = vpop.f32.mrf.mxu0
      %v1944 = vpop.f32.mrf.mxu0
      %v1945 = vadd.f32 0.0, %v1944
      %v1946 = vpop.f32.mrf.mxu0
      %1947 = vmatprep.mubr.bf16.mxu0 0
      %1948 = vmatmul.mubr.bf16.gmra.mxu0 %v1809
      %v1949 = vpop.f32.mrf.mxu0
      %v1950 = vadd.f32 0.0, %v1949
      %v1951 = vpop.f32.mrf.mxu0
      %v1952 = vpop.f32.mrf.mxu0
      %v1953 = vadd.f32 0.0, %v1952
      %v1954 = vpop.f32.mrf.mxu0
      %1955 = vmatprep.mubr.bf16.mxu0 0
      %1956 = vmatmul.mubr.bf16.gmra.mxu0 %v1812
      %v1957 = vpop.f32.mrf.mxu0
      %v1958 = vadd.f32 0.0, %v1957
      %v1959 = vpop.f32.mrf.mxu0
      %v1960 = vpop.f32.mrf.mxu0
      %v1961 = vadd.f32 0.0, %v1960
      %v1962 = vpop.f32.mrf.mxu0
      %1963 = vmatprep.mubr.bf16.mxu0 0
      %1964 = vmatmul.mubr.bf16.gmra.mxu0 %v1815
      %v1965 = vpop.f32.mrf.mxu0
      %v1966 = vadd.f32 0.0, %v1965
      %v1967 = vpop.f32.mrf.mxu0
      %v1968 = vpop.f32.mrf.mxu0
      %v1969 = vadd.f32 0.0, %v1968
      %v1970 = vpop.f32.mrf.mxu0
      %1971 = vmatprep.mubr.bf16.mxu0 0
      %1972 = vmatmul.mubr.bf16.gmra.mxu0 %v1818
      %v1973 = vpop.f32.mrf.mxu0
      %v1974 = vadd.f32 0.0, %v1973
      %v1975 = vpop.f32.mrf.mxu0
      %v1976 = vpop.f32.mrf.mxu0
      %v1977 = vadd.f32 0.0, %v1976
      %v1978 = vpop.f32.mrf.mxu0
      %1979 = vmatprep.mubr.bf16.mxu0 0
      %1980 = vmatmul.mubr.bf16.gmra.mxu0 %v1821
      %v1981 = vpop.f32.mrf.mxu0
      %v1982 = vadd.f32 0.0, %v1981
      %v1983 = vpop.f32.mrf.mxu0
      %v1984 = vpop.f32.mrf.mxu0
      %v1985 = vadd.f32 0.0, %v1984
      %v1986 = vpop.f32.mrf.mxu0
      %1987 = vmatprep.mubr.bf16.mxu0 0
      %1988 = vmatmul.mubr.bf16.gmra.mxu0 %v1824
      %v1989 = vpop.f32.mrf.mxu0
      %v1990 = vadd.f32 0.0, %v1989
      %v1991 = vpop.f32.mrf.mxu0
      %v1992 = vpop.f32.mrf.mxu0
      %v1993 = vadd.f32 0.0, %v1992
      %v1994 = vpop.f32.mrf.mxu0
      %1995 = vmatprep.mubr.bf16.mxu0 0
      %1996 = vmatmul.mubr.bf16.gmra.mxu0 %v1827
      %v1997 = vpop.f32.mrf.mxu0
      %v1998 = vadd.f32 0.0, %v1997
      %v1999 = vpop.f32.mrf.mxu0
      %v2000 = vpop.f32.mrf.mxu0
      %v2001 = vadd.f32 0.0, %v2000
      %v2002 = vpop.f32.mrf.mxu0
      %2003 = vmatprep.mubr.bf16.mxu0 0
      %2004 = vmatmul.mubr.bf16.gmra.mxu0 %v1830
      %v2005 = vpop.f32.mrf.mxu0
      %v2006 = vadd.f32 0.0, %v2005
      %v2007 = vpop.f32.mrf.mxu0
      %v2008 = vpop.f32.mrf.mxu0
      %v2009 = vadd.f32 0.0, %v2008
      %v2010 = vpop.f32.mrf.mxu0
      %2011 = vdwg.mxu0
      %v2016 = vunpack.c.l.b16 %v1471
      %v2017 = vunpack.c.l.b16 %v1472
      %v2018 = vunpack.c.l.b16 %v1473
      %v2019 = vunpack.c.l.b16 %v1507
      %v2020 = vpack.c.b16 %v2017, %v2016
      %v2021 = vpack.c.b16 %v1553, %v2018
      %v2022 = vpack.c.b16 %v2019, %v2019
      %vm2023 = vsmask.f32 7424
      %v2025 = vshrl.u32 %v2020, 16
      %v2027 = vshll.u32 %v2020, 16
      %v2029 = vrot.slane %v2027, 1
      %v2030 = vor.u32 %v2025, %v2029
      %v2032 = vshll.u32 %v2021, 16
      %v2034 = vrot.slane %v2032, 1
      %v2035 = vsel %vm2023, %v2030, %v2034
      %v2036 = vshrl.u32 %v2021, 16
      %v2038 = vor.u32 %v2036, %v2034
      %v2039 = vrot.slane %v1620, 1
      %v2040 = vsel %vm2023, %v2038, %v2039
      %v2041 = vor.u32 %v1617, %v2039
      %v2042 = vrot.slane %v1629, 1
      %v2043 = vsel %vm2023, %v2041, %v2042
      %v2044 = vor.u32 %v1626, %v2042
      %v2045 = vrot.slane %v1638, 1
      %v2046 = vsel %vm2023, %v2044, %v2045
      %v2047 = vor.u32 %v1635, %v2045
      %v2048 = vrot.slane %v1647, 1
      %v2049 = vsel %vm2023, %v2047, %v2048
      %v2050 = vor.u32 %v1644, %v2048
      %v2051 = vrot.slane %v1656, 1
      %v2052 = vsel %vm2023, %v2050, %v2051
      %v2053 = vor.u32 %v1653, %v2051
      %v2054 = vrot.slane %v1665, 1
      %v2055 = vsel %vm2023, %v2053, %v2054
      %v2056 = vor.u32 %v1662, %v2054
      %v2057 = vrot.slane %v1674, 1
      %v2058 = vsel %vm2023, %v2056, %v2057
      %v2059 = vor.u32 %v1671, %v2057
      %v2060 = vrot.slane %v1683, 1
      %v2061 = vsel %vm2023, %v2059, %v2060
      %v2062 = vor.u32 %v1680, %v2060
      %v2063 = vrot.slane %v1692, 1
      %v2064 = vsel %vm2023, %v2062, %v2063
      %v2065 = vor.u32 %v1689, %v2063
      %v2066 = vrot.slane %v1701, 1
      %v2067 = vsel %vm2023, %v2065, %v2066
      %v2068 = vor.u32 %v1698, %v2066
      %v2069 = vrot.slane %v1710, 1
      %v2070 = vsel %vm2023, %v2068, %v2069
      %v2071 = vor.u32 %v1707, %v2069
      %v2072 = vrot.slane %v1719, 1
      %v2073 = vsel %vm2023, %v2071, %v2072
      %v2074 = vor.u32 %v1716, %v2072
      %v2075 = vrot.slane %v1728, 1
      %v2076 = vsel %vm2023, %v2074, %v2075
      %v2077 = vor.u32 %v1725, %v2075
      %v2078 = vrot.slane %v1737, 1
      %v2079 = vsel %vm2023, %v2077, %v2078
      %v2080 = vor.u32 %v1734, %v2078
      %v2081 = vrot.slane %v1746, 1
      %v2082 = vsel %vm2023, %v2080, %v2081
      %v2083 = vor.u32 %v1743, %v2081
      %v2084 = vrot.slane %v1755, 1
      %v2085 = vsel %vm2023, %v2083, %v2084
      %v2086 = vor.u32 %v1752, %v2084
      %v2088 = vshll.u32 %v2022, 16
      %v2090 = vrot.slane %v2088, 1
      %v2091 = vsel %vm2023, %v2086, %v2090
      %v2093 = vsel %vm531, %v2035, 0
      %v2096 = vsel %vm531, %v2040, 0
      %v2099 = vsel %vm531, %v2043, 0
      %v2102 = vsel %vm531, %v2046, 0
      %v2105 = vsel %vm531, %v2049, 0
      %v2108 = vsel %vm531, %v2052, 0
      %v2111 = vsel %vm531, %v2055, 0
      %v2114 = vsel %vm531, %v2058, 0
      %v2117 = vsel %vm531, %v2061, 0
      %v2120 = vsel %vm531, %v2064, 0
      %v2123 = vsel %vm531, %v2067, 0
      %v2126 = vsel %vm531, %v2070, 0
      %v2129 = vsel %vm531, %v2073, 0
      %v2132 = vsel %vm531, %v2076, 0
      %v2135 = vsel %vm531, %v2079, 0
      %v2138 = vsel %vm531, %v2082, 0
      %v2141 = vsel %vm531, %v2085, 0
      %v2144 = vsel %vm531, %v2091, 0
      %v2147 = vsel %vm586, %v1508, 0
      %2149 = vmatprep.subr.bf16.mxu0 0
      %2150 = vmatpush1.bf16.msra.mxu0 0
      %2151 = vmatprep.subr.bf16.mxu0 0
      %2152 = vmatpush1.bf16.msra.mxu0 0
      %2153 = vmatprep.subr.bf16.mxu0 0
      %2154 = vmatpush1.bf16.msra.mxu0 0
      %2155 = vmatprep.subr.bf16.mxu0 0
      %2156 = vmatpush1.bf16.msra.mxu0 0
      %2157 = vmatprep.subr.bf16.mxu0 0
      %2158 = vmatpush1.bf16.msra.mxu0 0
      %2159 = vmatprep.subr.bf16.mxu0 0
      %2160 = vmatpush1.bf16.msra.mxu0 0
      %2161 = vmatprep.subr.bf16.mxu0 0
      %2162 = vmatpush1.bf16.msra.mxu0 0
      %2163 = vmatprep.subr.bf16.mxu0 0
      %2164 = vmatpush1.bf16.msra.mxu0 %v2147
      %2165 = vmatprep.subr.bf16.mxu0 0
      %2166 = vmatpush2.bf16.msra.mxu0 0
      %2167 = vmatprep.subr.bf16.mxu0 0
      %2168 = vmatpush2.bf16.msra.mxu0 0
      %2169 = vmatprep.subr.bf16.mxu0 0
      %2170 = vmatpush2.bf16.msra.mxu0 0
      %2171 = vmatprep.subr.bf16.mxu0 0
      %2172 = vmatpush2.bf16.msra.mxu0 0
      %2173 = vmatprep.subr.bf16.mxu0 0
      %2174 = vmatpush2.bf16.msra.mxu0 0
      %2175 = vmatprep.subr.bf16.mxu0 0
      %2176 = vmatpush2.bf16.msra.mxu0 0
      %2177 = vmatprep.subr.bf16.mxu0 0
      %2178 = vmatpush2.bf16.msra.mxu0 0
      %2179 = vmatprep.subr.bf16.mxu0 0
      %2180 = vmatpush2.bf16.msra.mxu0 0
      %2181 = vmatprep.mubr.bf16.mxu0 0
      %2182 = vmatmul.mubr.bf16.gmra.mxu0 %v2093
      %v2183 = vpop.f32.mrf.mxu0
      %v2184 = vadd.f32 %v1870, %v2183
      %v2185 = vpop.f32.mrf.mxu0
      %v2186 = vpop.f32.mrf.mxu0
      %v2187 = vadd.f32 %v1873, %v2186
      %v2188 = vpop.f32.mrf.mxu0
      %2189 = vmatprep.mubr.bf16.mxu0 0
      %2190 = vmatmul.mubr.bf16.gmra.mxu0 %v2096
      %v2191 = vpop.f32.mrf.mxu0
      %v2192 = vadd.f32 %v1878, %v2191
      %v2193 = vpop.f32.mrf.mxu0
      %v2194 = vpop.f32.mrf.mxu0
      %v2195 = vadd.f32 %v1881, %v2194
      %v2196 = vpop.f32.mrf.mxu0
      %2197 = vmatprep.mubr.bf16.mxu0 0
      %2198 = vmatmul.mubr.bf16.gmra.mxu0 %v2099
      %v2199 = vpop.f32.mrf.mxu0
      %v2200 = vadd.f32 %v1886, %v2199
      %v2201 = vpop.f32.mrf.mxu0
      %v2202 = vpop.f32.mrf.mxu0
      %v2203 = vadd.f32 %v1889, %v2202
      %v2204 = vpop.f32.mrf.mxu0
      %2205 = vmatprep.mubr.bf16.mxu0 0
      %2206 = vmatmul.mubr.bf16.gmra.mxu0 %v2102
      %v2207 = vpop.f32.mrf.mxu0
      %v2208 = vadd.f32 %v1894, %v2207
      %v2209 = vpop.f32.mrf.mxu0
      %v2210 = vpop.f32.mrf.mxu0
      %v2211 = vadd.f32 %v1897, %v2210
      %v2212 = vpop.f32.mrf.mxu0
      %2213 = vmatprep.mubr.bf16.mxu0 0
      %2214 = vmatmul.mubr.bf16.gmra.mxu0 %v2105
      %v2215 = vpop.f32.mrf.mxu0
      %v2216 = vadd.f32 %v1902, %v2215
      %v2217 = vpop.f32.mrf.mxu0
      %v2218 = vpop.f32.mrf.mxu0
      %v2219 = vadd.f32 %v1905, %v2218
      %v2220 = vpop.f32.mrf.mxu0
      %2221 = vmatprep.mubr.bf16.mxu0 0
      %2222 = vmatmul.mubr.bf16.gmra.mxu0 %v2108
      %v2223 = vpop.f32.mrf.mxu0
      %v2224 = vadd.f32 %v1910, %v2223
      %v2225 = vpop.f32.mrf.mxu0
      %v2226 = vpop.f32.mrf.mxu0
      %v2227 = vadd.f32 %v1913, %v2226
      %v2228 = vpop.f32.mrf.mxu0
      %2229 = vmatprep.mubr.bf16.mxu0 0
      %2230 = vmatmul.mubr.bf16.gmra.mxu0 %v2111
      %v2231 = vpop.f32.mrf.mxu0
      %v2232 = vadd.f32 %v1918, %v2231
      %v2233 = vpop.f32.mrf.mxu0
      %v2234 = vpop.f32.mrf.mxu0
      %v2235 = vadd.f32 %v1921, %v2234
      %v2236 = vpop.f32.mrf.mxu0
      %2237 = vmatprep.mubr.bf16.mxu0 0
      %2238 = vmatmul.mubr.bf16.gmra.mxu0 %v2114
      %v2239 = vpop.f32.mrf.mxu0
      %v2240 = vadd.f32 %v1926, %v2239
      %v2241 = vpop.f32.mrf.mxu0
      %v2242 = vpop.f32.mrf.mxu0
      %v2243 = vadd.f32 %v1929, %v2242
      %v2244 = vpop.f32.mrf.mxu0
      %2245 = vmatprep.mubr.bf16.mxu0 0
      %2246 = vmatmul.mubr.bf16.gmra.mxu0 %v2117
      %v2247 = vpop.f32.mrf.mxu0
      %v2248 = vadd.f32 %v1934, %v2247
      %v2249 = vpop.f32.mrf.mxu0
      %v2250 = vpop.f32.mrf.mxu0
      %v2251 = vadd.f32 %v1937, %v2250
      %v2252 = vpop.f32.mrf.mxu0
      %2253 = vmatprep.mubr.bf16.mxu0 0
      %2254 = vmatmul.mubr.bf16.gmra.mxu0 %v2120
      %v2255 = vpop.f32.mrf.mxu0
      %v2256 = vadd.f32 %v1942, %v2255
      %v2257 = vpop.f32.mrf.mxu0
      %v2258 = vpop.f32.mrf.mxu0
      %v2259 = vadd.f32 %v1945, %v2258
      %v2260 = vpop.f32.mrf.mxu0
      %2261 = vmatprep.mubr.bf16.mxu0 0
      %2262 = vmatmul.mubr.bf16.gmra.mxu0 %v2123
      %v2263 = vpop.f32.mrf.mxu0
      %v2264 = vadd.f32 %v1950, %v2263
      %v2265 = vpop.f32.mrf.mxu0
      %v2266 = vpop.f32.mrf.mxu0
      %v2267 = vadd.f32 %v1953, %v2266
      %v2268 = vpop.f32.mrf.mxu0
      %2269 = vmatprep.mubr.bf16.mxu0 0
      %2270 = vmatmul.mubr.bf16.gmra.mxu0 %v2126
      %v2271 = vpop.f32.mrf.mxu0
      %v2272 = vadd.f32 %v1958, %v2271
      %v2273 = vpop.f32.mrf.mxu0
      %v2274 = vpop.f32.mrf.mxu0
      %v2275 = vadd.f32 %v1961, %v2274
      %v2276 = vpop.f32.mrf.mxu0
      %2277 = vmatprep.mubr.bf16.mxu0 0
      %2278 = vmatmul.mubr.bf16.gmra.mxu0 %v2129
      %v2279 = vpop.f32.mrf.mxu0
      %v2280 = vadd.f32 %v1966, %v2279
      %v2281 = vpop.f32.mrf.mxu0
      %v2282 = vpop.f32.mrf.mxu0
      %v2283 = vadd.f32 %v1969, %v2282
      %v2284 = vpop.f32.mrf.mxu0
      %2285 = vmatprep.mubr.bf16.mxu0 0
      %2286 = vmatmul.mubr.bf16.gmra.mxu0 %v2132
      %v2287 = vpop.f32.mrf.mxu0
      %v2288 = vadd.f32 %v1974, %v2287
      %v2289 = vpop.f32.mrf.mxu0
      %v2290 = vpop.f32.mrf.mxu0
      %v2291 = vadd.f32 %v1977, %v2290
      %v2292 = vpop.f32.mrf.mxu0
      %2293 = vmatprep.mubr.bf16.mxu0 0
      %2294 = vmatmul.mubr.bf16.gmra.mxu0 %v2135
      %v2295 = vpop.f32.mrf.mxu0
      %v2296 = vadd.f32 %v1982, %v2295
      %v2297 = vpop.f32.mrf.mxu0
      %v2298 = vpop.f32.mrf.mxu0
      %v2299 = vadd.f32 %v1985, %v2298
      %v2300 = vpop.f32.mrf.mxu0
      %2301 = vmatprep.mubr.bf16.mxu0 0
      %2302 = vmatmul.mubr.bf16.gmra.mxu0 %v2138
      %v2303 = vpop.f32.mrf.mxu0
      %v2304 = vadd.f32 %v1990, %v2303
      %v2305 = vpop.f32.mrf.mxu0
      %v2306 = vpop.f32.mrf.mxu0
      %v2307 = vadd.f32 %v1993, %v2306
      %v2308 = vpop.f32.mrf.mxu0
      %2309 = vmatprep.mubr.bf16.mxu0 0
      %2310 = vmatmul.mubr.bf16.gmra.mxu0 %v2141
      %v2311 = vpop.f32.mrf.mxu0
      %v2312 = vadd.f32 %v1998, %v2311
      %v2313 = vpop.f32.mrf.mxu0
      %v2314 = vpop.f32.mrf.mxu0
      %v2315 = vadd.f32 %v2001, %v2314
      %v2316 = vpop.f32.mrf.mxu0
      %2317 = vmatprep.mubr.bf16.mxu0 0
      %2318 = vmatmul.mubr.bf16.gmra.mxu0 %v2144
      %v2319 = vpop.f32.mrf.mxu0
      %v2320 = vadd.f32 %v2006, %v2319
      %v2321 = vpop.f32.mrf.mxu0
      %v2322 = vpop.f32.mrf.mxu0
      %v2323 = vadd.f32 %v2009, %v2322
      %v2324 = vpop.f32.mrf.mxu0
      %2325 = vdwg.mxu0
      %v2326 = vld [vmem:[%s219 + $0x10] sm:$0xc]
      %v2327 = vld [vmem:[%s219 + $0x14] sm:$0xf]
      %v2328 = vld [vmem:[%s219 + $0x18] sm:$0xf]
      %v2329 = vld [vmem:[%s219 + $0x1c] sm:$0xf]
      %v2330 = vld [vmem:[%s219 + $0x20] sm:$0xf]
      %v2331 = vld [vmem:[%s219 + $0x24] sm:$0xf]
      %v2332 = vld [vmem:[%s219 + $0x28] sm:$0xf]
      %v2333 = vld [vmem:[%s219 + $0x2c] sm:$0xf]
      %v2334 = vld [vmem:[%s219 + $0x30] sm:$0xf]
      %v2335 = vld [vmem:[%s219 + $0x34] sm:$0xf]
      %v2336 = vld [vmem:[%s219 + $0x38] sm:$0xf]
      %v2337 = vld [vmem:[%s219 + $0x3c] sm:$0xf]
      %v2338 = vld [vmem:[%s219 + $0x40] sm:$0xf]
      %v2339 = vld [vmem:[%s219 + $0x44] sm:$0xf]
      %v2340 = vld [vmem:[%s219 + $0x48] sm:$0xf]
      %v2341 = vld [vmem:[%s219 + $0x4c] sm:$0xf]
      %v2342 = vld [vmem:[%s219 + $0x50] sm:$0xf]
      %v2343 = vld [vmem:[%s219 + $0x54] sm:$0xf]
      %v2344 = vld [vmem:[%s219 + $0x58] sm:$0xf]
      %v2345 = vld [vmem:[%s219 + $0x5c] sm:$0xf]
      %v2346 = vld [vmem:[%s219 + $0x60] sm:$0xf]
      %v2347 = vld [vmem:[%s219 + $0x64] sm:$0xf]
      %v2348 = vld [vmem:[%s219 + $0x68] sm:$0xf]
      %v2349 = vld [vmem:[%s219 + $0x6c] sm:$0xf]
      %v2350 = vld [vmem:[%s219 + $0x70] sm:$0xf]
      %v2351 = vld [vmem:[%s219 + $0x74] sm:$0xf]
      %v2352 = vld [vmem:[%s219 + $0x78] sm:$0xf]
      %v2353 = vld [vmem:[%s219 + $0x7c] sm:$0xf]
      %v2354 = vld [vmem:[%s219 + $0x80] sm:$0xf]
      %v2355 = vld [vmem:[%s219 + $0x84] sm:$0xf]
      %v2356 = vld [vmem:[%s219 + $0x88] sm:$0xf]
      %v2357 = vld [vmem:[%s219 + $0x8c] sm:$0xf]
      %v2358 = vld [vmem:[%s219 + $0x90] sm:$0xf]
      %v2359 = vld [vmem:[%s219 + $0x94] sm:$0xf]
      %v2360 = vld [vmem:[%s219 + $0x98] sm:$0xf]
      %v2361 = vld [vmem:[%s219 + $0x9c] sm:$0xf]
      %v2362 = vld [vmem:[%s219 + $0xa0] sm:$0x7]
      %s2363 = scalar_lea.vmem %s2, 8
      %v2364 = vld [vmem:[%s2363] sm:$0xf]
      %v2402 = vunpack.c.l.b16 %v2326
      %v2403 = vunpack.c.l.b16 %v2327
      %v2404 = vunpack.c.l.b16 %v2328
      %v2405 = vunpack.c.l.b16 %v2329
      %v2406 = vunpack.c.l.b16 %v2330
      %v2407 = vunpack.c.l.b16 %v2331
      %v2408 = vunpack.c.l.b16 %v2332
      %v2409 = vunpack.c.l.b16 %v2333
      %v2410 = vunpack.c.l.b16 %v2334
      %v2411 = vunpack.c.l.b16 %v2335
      %v2412 = vunpack.c.l.b16 %v2336
      %v2413 = vunpack.c.l.b16 %v2337
      %v2414 = vunpack.c.l.b16 %v2338
      %v2415 = vunpack.c.l.b16 %v2339
      %v2416 = vunpack.c.l.b16 %v2340
      %v2417 = vunpack.c.l.b16 %v2341
      %v2418 = vunpack.c.l.b16 %v2342
      %v2419 = vunpack.c.l.b16 %v2343
      %v2420 = vunpack.c.l.b16 %v2344
      %v2421 = vunpack.c.l.b16 %v2345
      %v2422 = vunpack.c.l.b16 %v2346
      %v2423 = vunpack.c.l.b16 %v2347
      %v2424 = vunpack.c.l.b16 %v2348
      %v2425 = vunpack.c.l.b16 %v2349
      %v2426 = vunpack.c.l.b16 %v2350
      %v2427 = vunpack.c.l.b16 %v2351
      %v2428 = vunpack.c.l.b16 %v2352
      %v2429 = vunpack.c.l.b16 %v2353
      %v2430 = vunpack.c.l.b16 %v2354
      %v2431 = vunpack.c.l.b16 %v2355
      %v2432 = vunpack.c.l.b16 %v2356
      %v2433 = vunpack.c.l.b16 %v2357
      %v2434 = vunpack.c.l.b16 %v2358
      %v2435 = vunpack.c.l.b16 %v2359
      %v2436 = vunpack.c.l.b16 %v2360
      %v2437 = vunpack.c.l.b16 %v2361
      %v2438 = vunpack.c.l.b16 %v2362
      %v2439 = vpack.c.b16 %v2403, %v2402
      %v2440 = vpack.c.b16 %v2405, %v2404
      %v2441 = vpack.c.b16 %v2407, %v2406
      %v2442 = vpack.c.b16 %v2409, %v2408
      %v2443 = vpack.c.b16 %v2411, %v2410
      %v2444 = vpack.c.b16 %v2413, %v2412
      %v2445 = vpack.c.b16 %v2415, %v2414
      %v2446 = vpack.c.b16 %v2417, %v2416
      %v2447 = vpack.c.b16 %v2419, %v2418
      %v2448 = vpack.c.b16 %v2421, %v2420
      %v2449 = vpack.c.b16 %v2423, %v2422
      %v2450 = vpack.c.b16 %v2425, %v2424
      %v2451 = vpack.c.b16 %v2427, %v2426
      %v2452 = vpack.c.b16 %v2429, %v2428
      %v2453 = vpack.c.b16 %v2431, %v2430
      %v2454 = vpack.c.b16 %v2433, %v2432
      %v2455 = vpack.c.b16 %v2435, %v2434
      %v2456 = vpack.c.b16 %v2437, %v2436
      %v2457 = vpack.c.b16 %v2438, %v2438
      %vm2458 = vsmask.f32 5376
      %v2460 = vshrl.u32 %v2439, 16
      %v2462 = vrot.slane %v2460, 2
      %v2463 = vshll.u32 %v2439, 16
      %v2465 = vrot.slane %v2463, 3
      %v2466 = vor.u32 %v2462, %v2465
      %v2468 = vshrl.u32 %v2440, 16
      %v2470 = vrot.slane %v2468, 2
      %v2471 = vshll.u32 %v2440, 16
      %v2473 = vrot.slane %v2471, 3
      %v2474 = vor.u32 %v2470, %v2473
      %v2475 = vsel %vm2458, %v2466, %v2474
      %v2477 = vshrl.u32 %v2441, 16
      %v2479 = vrot.slane %v2477, 2
      %v2480 = vshll.u32 %v2441, 16
      %v2482 = vrot.slane %v2480, 3
      %v2483 = vor.u32 %v2479, %v2482
      %v2484 = vsel %vm2458, %v2474, %v2483
      %v2486 = vshrl.u32 %v2442, 16
      %v2488 = vrot.slane %v2486, 2
      %v2489 = vshll.u32 %v2442, 16
      %v2491 = vrot.slane %v2489, 3
      %v2492 = vor.u32 %v2488, %v2491
      %v2493 = vsel %vm2458, %v2483, %v2492
      %v2495 = vshrl.u32 %v2443, 16
      %v2497 = vrot.slane %v2495, 2
      %v2498 = vshll.u32 %v2443, 16
      %v2500 = vrot.slane %v2498, 3
      %v2501 = vor.u32 %v2497, %v2500
      %v2502 = vsel %vm2458, %v2492, %v2501
      %v2504 = vshrl.u32 %v2444, 16
      %v2506 = vrot.slane %v2504, 2
      %v2507 = vshll.u32 %v2444, 16
      %v2509 = vrot.slane %v2507, 3
      %v2510 = vor.u32 %v2506, %v2509
      %v2511 = vsel %vm2458, %v2501, %v2510
      %v2513 = vshrl.u32 %v2445, 16
      %v2515 = vrot.slane %v2513, 2
      %v2516 = vshll.u32 %v2445, 16
      %v2518 = vrot.slane %v2516, 3
      %v2519 = vor.u32 %v2515, %v2518
      %v2520 = vsel %vm2458, %v2510, %v2519
      %v2522 = vshrl.u32 %v2446, 16
      %v2524 = vrot.slane %v2522, 2
      %v2525 = vshll.u32 %v2446, 16
      %v2527 = vrot.slane %v2525, 3
      %v2528 = vor.u32 %v2524, %v2527
      %v2529 = vsel %vm2458, %v2519, %v2528
      %v2531 = vshrl.u32 %v2447, 16
      %v2533 = vrot.slane %v2531, 2
      %v2534 = vshll.u32 %v2447, 16
      %v2536 = vrot.slane %v2534, 3
      %v2537 = vor.u32 %v2533, %v2536
      %v2538 = vsel %vm2458, %v2528, %v2537
      %v2540 = vshrl.u32 %v2448, 16
      %v2542 = vrot.slane %v2540, 2
      %v2543 = vshll.u32 %v2448, 16
      %v2545 = vrot.slane %v2543, 3
      %v2546 = vor.u32 %v2542, %v2545
      %v2547 = vsel %vm2458, %v2537, %v2546
      %v2549 = vshrl.u32 %v2449, 16
      %v2551 = vrot.slane %v2549, 2
      %v2552 = vshll.u32 %v2449, 16
      %v2554 = vrot.slane %v2552, 3
      %v2555 = vor.u32 %v2551, %v2554
      %v2556 = vsel %vm2458, %v2546, %v2555
      %v2558 = vshrl.u32 %v2450, 16
      %v2560 = vrot.slane %v2558, 2
      %v2561 = vshll.u32 %v2450, 16
      %v2563 = vrot.slane %v2561, 3
      %v2564 = vor.u32 %v2560, %v2563
      %v2565 = vsel %vm2458, %v2555, %v2564
      %v2567 = vshrl.u32 %v2451, 16
      %v2569 = vrot.slane %v2567, 2
      %v2570 = vshll.u32 %v2451, 16
      %v2572 = vrot.slane %v2570, 3
      %v2573 = vor.u32 %v2569, %v2572
      %v2574 = vsel %vm2458, %v2564, %v2573
      %v2576 = vshrl.u32 %v2452, 16
      %v2578 = vrot.slane %v2576, 2
      %v2579 = vshll.u32 %v2452, 16
      %v2581 = vrot.slane %v2579, 3
      %v2582 = vor.u32 %v2578, %v2581
      %v2583 = vsel %vm2458, %v2573, %v2582
      %v2585 = vshrl.u32 %v2453, 16
      %v2587 = vrot.slane %v2585, 2
      %v2588 = vshll.u32 %v2453, 16
      %v2590 = vrot.slane %v2588, 3
      %v2591 = vor.u32 %v2587, %v2590
      %v2592 = vsel %vm2458, %v2582, %v2591
      %v2594 = vshrl.u32 %v2454, 16
      %v2596 = vrot.slane %v2594, 2
      %v2597 = vshll.u32 %v2454, 16
      %v2599 = vrot.slane %v2597, 3
      %v2600 = vor.u32 %v2596, %v2599
      %v2601 = vsel %vm2458, %v2591, %v2600
      %v2603 = vshrl.u32 %v2455, 16
      %v2605 = vrot.slane %v2603, 2
      %v2606 = vshll.u32 %v2455, 16
      %v2608 = vrot.slane %v2606, 3
      %v2609 = vor.u32 %v2605, %v2608
      %v2610 = vsel %vm2458, %v2600, %v2609
      %v2612 = vshrl.u32 %v2456, 16
      %v2614 = vrot.slane %v2612, 2
      %v2615 = vshll.u32 %v2456, 16
      %v2617 = vrot.slane %v2615, 3
      %v2618 = vor.u32 %v2614, %v2617
      %v2619 = vsel %vm2458, %v2609, %v2618
      %v2621 = vshrl.u32 %v2457, 16
      %v2623 = vrot.slane %v2621, 2
      %v2624 = vshll.u32 %v2457, 16
      %v2626 = vrot.slane %v2624, 3
      %v2627 = vor.u32 %v2623, %v2626
      %v2628 = vsel %vm2458, %v2618, %v2627
      %v2630 = vsel %vm531, %v2475, 0
      %v2633 = vsel %vm531, %v2484, 0
      %v2636 = vsel %vm531, %v2493, 0
      %v2639 = vsel %vm531, %v2502, 0
      %v2642 = vsel %vm531, %v2511, 0
      %v2645 = vsel %vm531, %v2520, 0
      %v2648 = vsel %vm531, %v2529, 0
      %v2651 = vsel %vm531, %v2538, 0
      %v2654 = vsel %vm531, %v2547, 0
      %v2657 = vsel %vm531, %v2556, 0
      %v2660 = vsel %vm531, %v2565, 0
      %v2663 = vsel %vm531, %v2574, 0
      %v2666 = vsel %vm531, %v2583, 0
      %v2669 = vsel %vm531, %v2592, 0
      %v2672 = vsel %vm531, %v2601, 0
      %v2675 = vsel %vm531, %v2610, 0
      %v2678 = vsel %vm531, %v2619, 0
      %v2681 = vsel %vm531, %v2628, 0
      %v2684 = vsel %vm586, %v2364, 0
      %2686 = vmatprep.subr.bf16.mxu0 0
      %2687 = vmatpush1.bf16.msra.mxu0 0
      %2688 = vmatprep.subr.bf16.mxu0 0
      %2689 = vmatpush1.bf16.msra.mxu0 0
      %2690 = vmatprep.subr.bf16.mxu0 0
      %2691 = vmatpush1.bf16.msra.mxu0 0
      %2692 = vmatprep.subr.bf16.mxu0 0
      %2693 = vmatpush1.bf16.msra.mxu0 0
      %2694 = vmatprep.subr.bf16.mxu0 0
      %2695 = vmatpush1.bf16.msra.mxu0 0
      %2696 = vmatprep.subr.bf16.mxu0 0
      %2697 = vmatpush1.bf16.msra.mxu0 0
      %2698 = vmatprep.subr.bf16.mxu0 0
      %2699 = vmatpush1.bf16.msra.mxu0 0
      %2700 = vmatprep.subr.bf16.mxu0 0
      %2701 = vmatpush1.bf16.msra.mxu0 %v2684
      %2702 = vmatprep.subr.bf16.mxu0 0
      %2703 = vmatpush2.bf16.msra.mxu0 0
      %2704 = vmatprep.subr.bf16.mxu0 0
      %2705 = vmatpush2.bf16.msra.mxu0 0
      %2706 = vmatprep.subr.bf16.mxu0 0
      %2707 = vmatpush2.bf16.msra.mxu0 0
      %2708 = vmatprep.subr.bf16.mxu0 0
      %2709 = vmatpush2.bf16.msra.mxu0 0
      %2710 = vmatprep.subr.bf16.mxu0 0
      %2711 = vmatpush2.bf16.msra.mxu0 0
      %2712 = vmatprep.subr.bf16.mxu0 0
      %2713 = vmatpush2.bf16.msra.mxu0 0
      %2714 = vmatprep.subr.bf16.mxu0 0
      %2715 = vmatpush2.bf16.msra.mxu0 0
      %2716 = vmatprep.subr.bf16.mxu0 0
      %2717 = vmatpush2.bf16.msra.mxu0 0
      %2718 = vmatprep.mubr.bf16.mxu0 0
      %2719 = vmatmul.mubr.bf16.gmra.mxu0 %v2630
      %v2720 = vpop.f32.mrf.mxu0
      %v2721 = vadd.f32 0.0, %v2720
      %v2722 = vpop.f32.mrf.mxu0
      %v2723 = vpop.f32.mrf.mxu0
      %v2724 = vadd.f32 0.0, %v2723
      %v2725 = vpop.f32.mrf.mxu0
      %2726 = vmatprep.mubr.bf16.mxu0 0
      %2727 = vmatmul.mubr.bf16.gmra.mxu0 %v2633
      %v2728 = vpop.f32.mrf.mxu0
      %v2729 = vadd.f32 0.0, %v2728
      %v2730 = vpop.f32.mrf.mxu0
      %v2731 = vpop.f32.mrf.mxu0
      %v2732 = vadd.f32 0.0, %v2731
      %v2733 = vpop.f32.mrf.mxu0
      %2734 = vmatprep.mubr.bf16.mxu0 0
      %2735 = vmatmul.mubr.bf16.gmra.mxu0 %v2636
      %v2736 = vpop.f32.mrf.mxu0
      %v2737 = vadd.f32 0.0, %v2736
      %v2738 = vpop.f32.mrf.mxu0
      %v2739 = vpop.f32.mrf.mxu0
      %v2740 = vadd.f32 0.0, %v2739
      %v2741 = vpop.f32.mrf.mxu0
      %2742 = vmatprep.mubr.bf16.mxu0 0
      %2743 = vmatmul.mubr.bf16.gmra.mxu0 %v2639
      %v2744 = vpop.f32.mrf.mxu0
      %v2745 = vadd.f32 0.0, %v2744
      %v2746 = vpop.f32.mrf.mxu0
      %v2747 = vpop.f32.mrf.mxu0
      %v2748 = vadd.f32 0.0, %v2747
      %v2749 = vpop.f32.mrf.mxu0
      %2750 = vmatprep.mubr.bf16.mxu0 0
      %2751 = vmatmul.mubr.bf16.gmra.mxu0 %v2642
      %v2752 = vpop.f32.mrf.mxu0
      %v2753 = vadd.f32 0.0, %v2752
      %v2754 = vpop.f32.mrf.mxu0
      %v2755 = vpop.f32.mrf.mxu0
      %v2756 = vadd.f32 0.0, %v2755
      %v2757 = vpop.f32.mrf.mxu0
      %2758 = vmatprep.mubr.bf16.mxu0 0
      %2759 = vmatmul.mubr.bf16.gmra.mxu0 %v2645
      %v2760 = vpop.f32.mrf.mxu0
      %v2761 = vadd.f32 0.0, %v2760
      %v2762 = vpop.f32.mrf.mxu0
      %v2763 = vpop.f32.mrf.mxu0
      %v2764 = vadd.f32 0.0, %v2763
      %v2765 = vpop.f32.mrf.mxu0
      %2766 = vmatprep.mubr.bf16.mxu0 0
      %2767 = vmatmul.mubr.bf16.gmra.mxu0 %v2648
      %v2768 = vpop.f32.mrf.mxu0
      %v2769 = vadd.f32 0.0, %v2768
      %v2770 = vpop.f32.mrf.mxu0
      %v2771 = vpop.f32.mrf.mxu0
      %v2772 = vadd.f32 0.0, %v2771
      %v2773 = vpop.f32.mrf.mxu0
      %2774 = vmatprep.mubr.bf16.mxu0 0
      %2775 = vmatmul.mubr.bf16.gmra.mxu0 %v2651
      %v2776 = vpop.f32.mrf.mxu0
      %v2777 = vadd.f32 0.0, %v2776
      %v2778 = vpop.f32.mrf.mxu0
      %v2779 = vpop.f32.mrf.mxu0
      %v2780 = vadd.f32 0.0, %v2779
      %v2781 = vpop.f32.mrf.mxu0
      %2782 = vmatprep.mubr.bf16.mxu0 0
      %2783 = vmatmul.mubr.bf16.gmra.mxu0 %v2654
      %v2784 = vpop.f32.mrf.mxu0
      %v2785 = vadd.f32 0.0, %v2784
      %v2786 = vpop.f32.mrf.mxu0
      %v2787 = vpop.f32.mrf.mxu0
      %v2788 = vadd.f32 0.0, %v2787
      %v2789 = vpop.f32.mrf.mxu0
      %2790 = vmatprep.mubr.bf16.mxu0 0
      %2791 = vmatmul.mubr.bf16.gmra.mxu0 %v2657
      %v2792 = vpop.f32.mrf.mxu0
      %v2793 = vadd.f32 0.0, %v2792
      %v2794 = vpop.f32.mrf.mxu0
      %v2795 = vpop.f32.mrf.mxu0
      %v2796 = vadd.f32 0.0, %v2795
      %v2797 = vpop.f32.mrf.mxu0
      %2798 = vmatprep.mubr.bf16.mxu0 0
      %2799 = vmatmul.mubr.bf16.gmra.mxu0 %v2660
      %v2800 = vpop.f32.mrf.mxu0
      %v2801 = vadd.f32 0.0, %v2800
      %v2802 = vpop.f32.mrf.mxu0
      %v2803 = vpop.f32.mrf.mxu0
      %v2804 = vadd.f32 0.0, %v2803
      %v2805 = vpop.f32.mrf.mxu0
      %2806 = vmatprep.mubr.bf16.mxu0 0
      %2807 = vmatmul.mubr.bf16.gmra.mxu0 %v2663
      %v2808 = vpop.f32.mrf.mxu0
      %v2809 = vadd.f32 0.0, %v2808
      %v2810 = vpop.f32.mrf.mxu0
      %v2811 = vpop.f32.mrf.mxu0
      %v2812 = vadd.f32 0.0, %v2811
      %v2813 = vpop.f32.mrf.mxu0
      %2814 = vmatprep.mubr.bf16.mxu0 0
      %2815 = vmatmul.mubr.bf16.gmra.mxu0 %v2666
      %v2816 = vpop.f32.mrf.mxu0
      %v2817 = vadd.f32 0.0, %v2816
      %v2818 = vpop.f32.mrf.mxu0
      %v2819 = vpop.f32.mrf.mxu0
      %v2820 = vadd.f32 0.0, %v2819
      %v2821 = vpop.f32.mrf.mxu0
      %2822 = vmatprep.mubr.bf16.mxu0 0
      %2823 = vmatmul.mubr.bf16.gmra.mxu0 %v2669
      %v2824 = vpop.f32.mrf.mxu0
      %v2825 = vadd.f32 0.0, %v2824
      %v2826 = vpop.f32.mrf.mxu0
      %v2827 = vpop.f32.mrf.mxu0
      %v2828 = vadd.f32 0.0, %v2827
      %v2829 = vpop.f32.mrf.mxu0
      %2830 = vmatprep.mubr.bf16.mxu0 0
      %2831 = vmatmul.mubr.bf16.gmra.mxu0 %v2672
      %v2832 = vpop.f32.mrf.mxu0
      %v2833 = vadd.f32 0.0, %v2832
      %v2834 = vpop.f32.mrf.mxu0
      %v2835 = vpop.f32.mrf.mxu0
      %v2836 = vadd.f32 0.0, %v2835
      %v2837 = vpop.f32.mrf.mxu0
      %2838 = vmatprep.mubr.bf16.mxu0 0
      %2839 = vmatmul.mubr.bf16.gmra.mxu0 %v2675
      %v2840 = vpop.f32.mrf.mxu0
      %v2841 = vadd.f32 0.0, %v2840
      %v2842 = vpop.f32.mrf.mxu0
      %v2843 = vpop.f32.mrf.mxu0
      %v2844 = vadd.f32 0.0, %v2843
      %v2845 = vpop.f32.mrf.mxu0
      %2846 = vmatprep.mubr.bf16.mxu0 0
      %2847 = vmatmul.mubr.bf16.gmra.mxu0 %v2678
      %v2848 = vpop.f32.mrf.mxu0
      %v2849 = vadd.f32 0.0, %v2848
      %v2850 = vpop.f32.mrf.mxu0
      %v2851 = vpop.f32.mrf.mxu0
      %v2852 = vadd.f32 0.0, %v2851
      %v2853 = vpop.f32.mrf.mxu0
      %2854 = vmatprep.mubr.bf16.mxu0 0
      %2855 = vmatmul.mubr.bf16.gmra.mxu0 %v2681
      %v2856 = vpop.f32.mrf.mxu0
      %v2857 = vadd.f32 0.0, %v2856
      %v2858 = vpop.f32.mrf.mxu0
      %v2859 = vpop.f32.mrf.mxu0
      %v2860 = vadd.f32 0.0, %v2859
      %v2861 = vpop.f32.mrf.mxu0
      %2862 = vdwg.mxu0
      %v2863 = vadd.f32 %v2184, %v2721
      %v2864 = vadd.f32 %v2187, %v2724
      %v2865 = vadd.f32 %v2192, %v2729
      %v2866 = vadd.f32 %v2195, %v2732
      %v2867 = vadd.f32 %v2200, %v2737
      %v2868 = vadd.f32 %v2203, %v2740
      %v2869 = vadd.f32 %v2208, %v2745
      %v2870 = vadd.f32 %v2211, %v2748
      %v2871 = vadd.f32 %v2216, %v2753
      %v2872 = vadd.f32 %v2219, %v2756
      %v2873 = vadd.f32 %v2224, %v2761
      %v2874 = vadd.f32 %v2227, %v2764
      %v2875 = vadd.f32 %v2232, %v2769
      %v2876 = vadd.f32 %v2235, %v2772
      %v2877 = vadd.f32 %v2240, %v2777
      %v2878 = vadd.f32 %v2243, %v2780
      %v2879 = vadd.f32 %v2248, %v2785
      %v2880 = vadd.f32 %v2251, %v2788
      %v2881 = vadd.f32 %v2256, %v2793
      %v2882 = vadd.f32 %v2259, %v2796
      %v2883 = vadd.f32 %v2264, %v2801
      %v2884 = vadd.f32 %v2267, %v2804
      %v2885 = vadd.f32 %v2272, %v2809
      %v2886 = vadd.f32 %v2275, %v2812
      %v2887 = vadd.f32 %v2280, %v2817
      %v2888 = vadd.f32 %v2283, %v2820
      %v2889 = vadd.f32 %v2288, %v2825
      %v2890 = vadd.f32 %v2291, %v2828
      %v2891 = vadd.f32 %v2296, %v2833
      %v2892 = vadd.f32 %v2299, %v2836
      %v2893 = vadd.f32 %v2304, %v2841
      %v2894 = vadd.f32 %v2307, %v2844
      %v2895 = vadd.f32 %v2312, %v2849
      %v2896 = vadd.f32 %v2315, %v2852
      %v2897 = vadd.f32 %v2320, %v2857
      %v2898 = vadd.f32 %v2323, %v2860
      %v2899 = vld [vmem:[%s4] sm:$0x1]
      %v2901 = vlaneseq
      %v2902 = vshrl.u32 %v2901, 7
      %v2903 = vsub.s32 0, %v2902
      %v2904 = vrot.slane %v2899, %v2903
      %v2906 = vadd.f32 %v2863, %v2904
      %v2907 = vadd.f32 %v2864, %v2904
      %v2908 = vadd.f32 %v2865, %v2904
      %v2909 = vadd.f32 %v2866, %v2904
      %v2910 = vadd.f32 %v2867, %v2904
      %v2911 = vadd.f32 %v2868, %v2904
      %v2912 = vadd.f32 %v2869, %v2904
      %v2913 = vadd.f32 %v2870, %v2904
      %v2914 = vadd.f32 %v2871, %v2904
      %v2915 = vadd.f32 %v2872, %v2904
      %v2916 = vadd.f32 %v2873, %v2904
      %v2917 = vadd.f32 %v2874, %v2904
      %v2918 = vadd.f32 %v2875, %v2904
      %v2919 = vadd.f32 %v2876, %v2904
      %v2920 = vadd.f32 %v2877, %v2904
      %v2921 = vadd.f32 %v2878, %v2904
      %v2922 = vadd.f32 %v2879, %v2904
      %v2923 = vadd.f32 %v2880, %v2904
      %v2924 = vadd.f32 %v2881, %v2904
      %v2925 = vadd.f32 %v2882, %v2904
      %v2926 = vadd.f32 %v2883, %v2904
      %v2927 = vadd.f32 %v2884, %v2904
      %v2928 = vadd.f32 %v2885, %v2904
      %v2929 = vadd.f32 %v2886, %v2904
      %v2930 = vadd.f32 %v2887, %v2904
      %v2931 = vadd.f32 %v2888, %v2904
      %v2932 = vadd.f32 %v2889, %v2904
      %v2933 = vadd.f32 %v2890, %v2904
      %v2934 = vadd.f32 %v2891, %v2904
      %v2935 = vadd.f32 %v2892, %v2904
      %v2936 = vadd.f32 %v2893, %v2904
      %v2937 = vadd.f32 %v2894, %v2904
      %v2938 = vadd.f32 %v2895, %v2904
      %v2939 = vadd.f32 %v2896, %v2904
      %v2940 = vadd.f32 %v2897, %v2904
      %v2941 = vadd.f32 %v2898, %v2904
      %v2942 = vmax.f32 %v2906, 0.0
      %v2943 = vmax.f32 %v2907, 0.0
      %v2944 = vmax.f32 %v2908, 0.0
      %v2945 = vmax.f32 %v2909, 0.0
      %v2946 = vmax.f32 %v2910, 0.0
      %v2947 = vmax.f32 %v2911, 0.0
      %v2948 = vmax.f32 %v2912, 0.0
      %v2949 = vmax.f32 %v2913, 0.0
      %v2950 = vmax.f32 %v2914, 0.0
      %v2951 = vmax.f32 %v2915, 0.0
      %v2952 = vmax.f32 %v2916, 0.0
      %v2953 = vmax.f32 %v2917, 0.0
      %v2954 = vmax.f32 %v2918, 0.0
      %v2955 = vmax.f32 %v2919, 0.0
      %v2956 = vmax.f32 %v2920, 0.0
      %v2957 = vmax.f32 %v2921, 0.0
      %v2958 = vmax.f32 %v2922, 0.0
      %v2959 = vmax.f32 %v2923, 0.0
      %v2960 = vmax.f32 %v2924, 0.0
      %v2961 = vmax.f32 %v2925, 0.0
      %v2962 = vmax.f32 %v2926, 0.0
      %v2963 = vmax.f32 %v2927, 0.0
      %v2964 = vmax.f32 %v2928, 0.0
      %v2965 = vmax.f32 %v2929, 0.0
      %v2966 = vmax.f32 %v2930, 0.0
      %v2967 = vmax.f32 %v2931, 0.0
      %v2968 = vmax.f32 %v2932, 0.0
      %v2969 = vmax.f32 %v2933, 0.0
      %v2970 = vmax.f32 %v2934, 0.0
      %v2971 = vmax.f32 %v2935, 0.0
      %v2972 = vmax.f32 %v2936, 0.0
      %v2973 = vmax.f32 %v2937, 0.0
      %v2974 = vmax.f32 %v2938, 0.0
      %v2975 = vmax.f32 %v2939, 0.0
      %v2976 = vmax.f32 %v2940, 0.0
      %v2977 = vmax.f32 %v2941, 0.0
      %3014 = vrot.lane.b32.xlu0 %v2942, 8
      %v3015 = vpop.permute.xlu0 %3014
      %3016 = vrot.lane.b32.xlu0 %v2943, 8
      %v3017 = vpop.permute.xlu0 %3016
      %3018 = vrot.lane.b32.xlu0 %v2944, 8
      %v3019 = vpop.permute.xlu0 %3018
      %3020 = vrot.lane.b32.xlu0 %v2945, 8
      %v3021 = vpop.permute.xlu0 %3020
      %3022 = vrot.lane.b32.xlu0 %v2946, 8
      %v3023 = vpop.permute.xlu0 %3022
      %3024 = vrot.lane.b32.xlu0 %v2947, 8
      %v3025 = vpop.permute.xlu0 %3024
      %3026 = vrot.lane.b32.xlu0 %v2948, 8
      %v3027 = vpop.permute.xlu0 %3026
      %3028 = vrot.lane.b32.xlu0 %v2949, 8
      %v3029 = vpop.permute.xlu0 %3028
      %3030 = vrot.lane.b32.xlu0 %v2950, 8
      %v3031 = vpop.permute.xlu0 %3030
      %3032 = vrot.lane.b32.xlu0 %v2951, 8
      %v3033 = vpop.permute.xlu0 %3032
      %3034 = vrot.lane.b32.xlu0 %v2952, 8
      %v3035 = vpop.permute.xlu0 %3034
      %3036 = vrot.lane.b32.xlu0 %v2953, 8
      %v3037 = vpop.permute.xlu0 %3036
      %3038 = vrot.lane.b32.xlu0 %v2954, 8
      %v3039 = vpop.permute.xlu0 %3038
      %3040 = vrot.lane.b32.xlu0 %v2955, 8
      %v3041 = vpop.permute.xlu0 %3040
      %3042 = vrot.lane.b32.xlu0 %v2956, 8
      %v3043 = vpop.permute.xlu0 %3042
      %3044 = vrot.lane.b32.xlu0 %v2957, 8
      %v3045 = vpop.permute.xlu0 %3044
      %3046 = vrot.lane.b32.xlu0 %v2958, 8
      %v3047 = vpop.permute.xlu0 %3046
      %3048 = vrot.lane.b32.xlu0 %v2959, 8
      %v3049 = vpop.permute.xlu0 %3048
      %3050 = vrot.lane.b32.xlu0 %v2960, 8
      %v3051 = vpop.permute.xlu0 %3050
      %3052 = vrot.lane.b32.xlu0 %v2961, 8
      %v3053 = vpop.permute.xlu0 %3052
      %3054 = vrot.lane.b32.xlu0 %v2962, 8
      %v3055 = vpop.permute.xlu0 %3054
      %3056 = vrot.lane.b32.xlu0 %v2963, 8
      %v3057 = vpop.permute.xlu0 %3056
      %3058 = vrot.lane.b32.xlu0 %v2964, 8
      %v3059 = vpop.permute.xlu0 %3058
      %3060 = vrot.lane.b32.xlu0 %v2965, 8
      %v3061 = vpop.permute.xlu0 %3060
      %3062 = vrot.lane.b32.xlu0 %v2966, 8
      %v3063 = vpop.permute.xlu0 %3062
      %3064 = vrot.lane.b32.xlu0 %v2967, 8
      %v3065 = vpop.permute.xlu0 %3064
      %3066 = vrot.lane.b32.xlu0 %v2968, 8
      %v3067 = vpop.permute.xlu0 %3066
      %3068 = vrot.lane.b32.xlu0 %v2969, 8
      %v3069 = vpop.permute.xlu0 %3068
      %3070 = vrot.lane.b32.xlu0 %v2970, 8
      %v3071 = vpop.permute.xlu0 %3070
      %3072 = vrot.lane.b32.xlu0 %v2971, 8
      %v3073 = vpop.permute.xlu0 %3072
      %3074 = vrot.lane.b32.xlu0 %v2972, 8
      %v3075 = vpop.permute.xlu0 %3074
      %3076 = vrot.lane.b32.xlu0 %v2973, 8
      %v3077 = vpop.permute.xlu0 %3076
      %3078 = vrot.lane.b32.xlu0 %v2974, 8
      %v3079 = vpop.permute.xlu0 %3078
      %3080 = vrot.lane.b32.xlu0 %v2975, 8
      %v3081 = vpop.permute.xlu0 %3080
      %3082 = vrot.lane.b32.xlu0 %v2976, 8
      %v3083 = vpop.permute.xlu0 %3082
      %3084 = vrot.lane.b32.xlu0 %v2977, 8
      %v3085 = vpop.permute.xlu0 %3084
      %vm3122 = vcmask 130112
      %3123 = vst.msk [vmem:[%s224] sm:$0xff] %vm3122, %v3015
      %3124 = vst.msk [vmem:[%s224 + $0x8] sm:$0xff] %vm3122, %v3017
      %3125 = vst.msk [vmem:[%s224 + $0x10] sm:$0xff] %vm3122, %v3019
      %3126 = vst.msk [vmem:[%s224 + $0x18] sm:$0xff] %vm3122, %v3021
      %3127 = vst.msk [vmem:[%s224 + $0x20] sm:$0xff] %vm3122, %v3023
      %3128 = vst.msk [vmem:[%s224 + $0x28] sm:$0xff] %vm3122, %v3025
      %3129 = vst.msk [vmem:[%s224 + $0x30] sm:$0xff] %vm3122, %v3027
      %3130 = vst.msk [vmem:[%s224 + $0x38] sm:$0xff] %vm3122, %v3029
      %3131 = vst.msk [vmem:[%s224 + $0x40] sm:$0xff] %vm3122, %v3031
      %3132 = vst.msk [vmem:[%s224 + $0x48] sm:$0xff] %vm3122, %v3033
      %3133 = vst.msk [vmem:[%s224 + $0x50] sm:$0xff] %vm3122, %v3035
      %3134 = vst.msk [vmem:[%s224 + $0x58] sm:$0xff] %vm3122, %v3037
      %3135 = vst.msk [vmem:[%s224 + $0x60] sm:$0xff] %vm3122, %v3039
      %3136 = vst.msk [vmem:[%s224 + $0x68] sm:$0xff] %vm3122, %v3041
      %3137 = vst.msk [vmem:[%s224 + $0x70] sm:$0xff] %vm3122, %v3043
      %3138 = vst.msk [vmem:[%s224 + $0x78] sm:$0xff] %vm3122, %v3045
      %3139 = vst.msk [vmem:[%s224 + $0x80] sm:$0xff] %vm3122, %v3047
      %3140 = vst.msk [vmem:[%s224 + $0x88] sm:$0xff] %vm3122, %v3049
      %3141 = vst.msk [vmem:[%s224 + $0x90] sm:$0xff] %vm3122, %v3051
      %3142 = vst.msk [vmem:[%s224 + $0x98] sm:$0xff] %vm3122, %v3053
      %3143 = vst.msk [vmem:[%s224 + $0xa0] sm:$0xff] %vm3122, %v3055
      %3144 = vst.msk [vmem:[%s224 + $0xa8] sm:$0xff] %vm3122, %v3057
      %3145 = vst.msk [vmem:[%s224 + $0xb0] sm:$0xff] %vm3122, %v3059
      %3146 = vst.msk [vmem:[%s224 + $0xb8] sm:$0xff] %vm3122, %v3061
      %3147 = vst.msk [vmem:[%s224 + $0xc0] sm:$0xff] %vm3122, %v3063
      %3148 = vst.msk [vmem:[%s224 + $0xc8] sm:$0xff] %vm3122, %v3065
      %3149 = vst.msk [vmem:[%s224 + $0xd0] sm:$0xff] %vm3122, %v3067
      %3150 = vst.msk [vmem:[%s224 + $0xd8] sm:$0xff] %vm3122, %v3069
      %3151 = vst.msk [vmem:[%s224 + $0xe0] sm:$0xff] %vm3122, %v3071
      %3152 = vst.msk [vmem:[%s224 + $0xe8] sm:$0xff] %vm3122, %v3073
      %3153 = vst.msk [vmem:[%s224 + $0xf0] sm:$0xff] %vm3122, %v3075
      %3154 = vst.msk [vmem:[%s224 + $0xf8] sm:$0xff] %vm3122, %v3077
      %3155 = vst.msk [vmem:[%s224 + $0x100] sm:$0xff] %vm3122, %v3079
      %3156 = vst.msk [vmem:[%s224 + $0x108] sm:$0xff] %vm3122, %v3081
      %3157 = vst.msk [vmem:[%s224 + $0x110] sm:$0xff] %vm3122, %v3083
      %3158 = vst.msk [vmem:[%s224 + $0x118] sm:$0xff] %vm3122, %v3085
      %p3159 = scmp.lt.s32.totalorder %s16, 1
      %s3160 = scalar_select %p3159, %s16, 1
      %s3161 = smul.addr %s3160, 36
      %s3162 = smul.addr %s3161, 8
      %s3163 = scalar_lea.vmem %s5, %s3162
      // Predicated region
      $region41: #{inception_c_forward.7} parent=39 // pred_check
        %p3164 = pneg %p144
      $region42: #{inception_c_forward.7} parent=39 // pred_check_branch
        %3166 = sbr.rel (%p3164) target = $region44
      $region43: #{inception_c_forward.7} parent=39 // pred_region
        _
      $region44: #{inception_c_forward.7} parent=39 // pred_fallthru
        _
    $region40: #{inception_c_forward.7} parent=5 // pred_fallthru
      _
    %p3167 = scmp.le.s32.totalorder 2, %s11
    // Predicated region
    $region45: #{inception_c_forward.7} parent=5 // pred_check
      %p3168 = pneg %p3167
    $region46: #{inception_c_forward.7} parent=5 // pred_check_branch
      %3170 = sbr.rel (%p3168) target = $region48
    $region47: #{inception_c_forward.7} parent=5 // pred_region
      %s3171 = ssub.s32 %s11, 2
      // Predicated region
      $region49: #{inception_c_forward.7} parent=47 // pred_check
        %p3172 = pneg %p150
      $region50: #{inception_c_forward.7} parent=47 // pred_check_branch
        %3174 = sbr.rel (%p3172) target = $region52
      $region51: #{inception_c_forward.7} parent=47 // pred_region
        %p3175 = scmp.lt.s32.totalorder %s17, 1
        %s3176 = scalar_select %p3175, %s17, 1
        %s3177 = smul.addr %s3176, 36
        %s3178 = smul.addr %s3177, 8
        %s3179 = scalar_lea.vmem %s5, %s3178
      $region52: #{inception_c_forward.7} parent=47 // pred_fallthru
        _
    $region48: #{inception_c_forward.7} parent=5 // pred_fallthru
      _
  $region6: #{inception_c_forward.7} parent=0 // loop_footer
    %s15 = sadd.s32 1, %s11
  $region7: #{inception_c_forward.7} parent=0 // loop_footer_branch
    %10 = sbr.rel target = $region3
  $region8: #{inception_c_forward.7} parent=0 // loop_exit
    _

</llo_original>
